<compile_context>
chip_gen: v7x
topology: tpu7x:2x2x1
jax: 0.10.0
libtpu: 0.0.40
codegen_flags: <defaults>
</compile_context>

<pallas_src>
import functools
import math

import jax
import jax.numpy as jnp
from jax.experimental import pallas as pl
from jax.experimental.pallas import tpu as pltpu

EPS = 1e-5
EMB = 128          # emb_dim (cls_token is (1,1,128), decoder in_dim=128)
PROT_HID = 1024    # LLM_type != 'esm'
DRUG_IN = 75


# ----------------------------------------------------------------------------
# Tiling helpers
# ----------------------------------------------------------------------------

def _pick_row_tile(m):
    """Largest row tile that divides m (keeps BN-stat accumulation exact)."""
    for t in (512, 256, 128, 64, 32, 16, 8):
        if m % t == 0:
            return t
    return m


def _pick_graph_pack(b, n):
    """Pack G graphs per grid step so G*N rows approach an MXU-friendly M."""
    target = max(1, 256 // max(n, 1))
    g = 1
    for cand in range(1, b + 1):
        if b % cand == 0 and cand <= target:
            g = cand
    return g


# ----------------------------------------------------------------------------
# Kernel 1: drug extractor (init_transform + 3 residual GCN layers) fused with
#           the aggregation K/V projections.  Grid over packs of G graphs.
# ----------------------------------------------------------------------------

def _drug_kernel(adj_ref, x_ref, w0_ref, gw_ref, gb_ref, wk_ref, wv_ref,
                 kd_ref, vd_ref):
    g, n, d = x_ref.shape                                   # (G, N, 128)
    adj = adj_ref[...].astype(jnp.bfloat16)                 # (G, N, N)
    x = x_ref[...].reshape(g * n, d).astype(jnp.bfloat16)   # (G*N, 128)

    # init_transform: Linear(75->128, bias=False); K zero-padded to 128.
    h = jnp.dot(x, w0_ref[...], preferred_element_type=jnp.float32)

    gb_all = gb_ref[...]                                    # (3, 128) f32
    for layer in range(3):
        # A @ (h @ W): associativity batches the dense GEMM over G*N rows.
        hw = jnp.dot(h.astype(jnp.bfloat16), gw_ref[layer],
                     preferred_element_type=jnp.float32)    # (G*N, 128)
        msg = jnp.einsum('gnm,gmd->gnd', adj,
                         hw.reshape(g, n, d).astype(jnp.bfloat16),
                         preferred_element_type=jnp.float32)
        h = jnp.maximum(msg.reshape(g * n, d) + gb_all[layer:layer + 1, :],
                        0.0) + h

    hb = h.astype(jnp.bfloat16)
    kd_ref[...] = jnp.dot(hb, wk_ref[...],
                          preferred_element_type=jnp.float32).reshape(g, n, d)
    vd_ref[...] = jnp.dot(hb, wv_ref[...],
                          preferred_element_type=jnp.float32).reshape(g, n, d)


def drug_extractor_kv(adj, x, p):
    b, n, d = x.shape
    assert d == EMB
    g = _pick_graph_pack(b, n)
    kd, vd = pl.pallas_call(
        _drug_kernel,
        grid=(b // g,),
        in_specs=[
            pl.BlockSpec((g, n, n), lambda i: (i, 0, 0)),
            pl.BlockSpec((g, n, EMB), lambda i: (i, 0, 0)),
            pl.BlockSpec((EMB, EMB), lambda i: (0, 0)),        # init_w (bf16)
            pl.BlockSpec((3, EMB, EMB), lambda i: (0, 0, 0)),  # gcn_w (bf16)
            pl.BlockSpec((3, EMB), lambda i: (0, 0)),          # gcn_b (f32)
            pl.BlockSpec((EMB, EMB), lambda i: (0, 0)),        # wk (bf16)
            pl.BlockSpec((EMB, EMB), lambda i: (0, 0)),        # wv (bf16)
        ],
        out_specs=[
            pl.BlockSpec((g, n, EMB), lambda i: (i, 0, 0)),
            pl.BlockSpec((g, n, EMB), lambda i: (i, 0, 0)),
        ],
        out_shape=[jax.ShapeDtypeStruct((b, n, EMB), jnp.float32),
                   jax.ShapeDtypeStruct((b, n, EMB), jnp.float32)],
        compiler_params=pltpu.CompilerParams(
            dimension_semantics=("parallel",)),
    )(adj, x, p["init_w"], p["gcn_w"], p["gcn_b"], p["wk"], p["wv"])
    return kd, vd


# ----------------------------------------------------------------------------
# Kernel 2: protein Linear + ReLU, row-tiled, with cross-tile BN-stat
#           accumulation (sum / sum-of-squares over ALL rows).
# ----------------------------------------------------------------------------

def _prot_stage1_kernel(x_ref, w_ref, b_ref, y_ref, stats_ref):
    @pl.when(pl.program_id(0) == 0)
    def _():
        stats_ref[...] = jnp.zeros_like(stats_ref)

    y = jnp.dot(x_ref[...], w_ref[...],
                preferred_element_type=jnp.float32) + b_ref[...]
    y = jnp.maximum(y, 0.0)
    y_ref[...] = y
    s = jnp.sum(y, axis=0, keepdims=True)
    ss = jnp.sum(y * y, axis=0, keepdims=True)
    stats_ref[...] += jnp.concatenate([s, ss], axis=0)


def protein_stage1(x, w, b):
    m = x.shape[0]
    tm = _pick_row_tile(m)
    y, stats = pl.pallas_call(
        _prot_stage1_kernel,
        grid=(m // tm,),
        in_specs=[
            pl.BlockSpec((tm, PROT_HID), lambda i: (i, 0)),
            pl.BlockSpec((PROT_HID, EMB), lambda i: (0, 0)),
            pl.BlockSpec((1, EMB), lambda i: (0, 0)),
        ],
        out_specs=[
            pl.BlockSpec((tm, EMB), lambda i: (i, 0)),
            pl.BlockSpec((2, EMB), lambda i: (0, 0)),   # resident accumulator
        ],
        out_shape=[jax.ShapeDtypeStruct((m, EMB), jnp.float32),
                   jax.ShapeDtypeStruct((2, EMB), jnp.float32)],
        compiler_params=pltpu.CompilerParams(
            dimension_semantics=("arbitrary",)),        # stats accumulation
    )(x, w, b)
    return y, stats


# ----------------------------------------------------------------------------
# Kernel 3: protein BatchNorm apply fused with the batched K/V projections.
# ----------------------------------------------------------------------------

def _prot_kv_kernel(y_ref, stats_ref, g_ref, be_ref, wk_ref, wv_ref,
                    kp_ref, vp_ref, *, inv_m):
    stats = stats_ref[...]
    mean = stats[0:1, :] * inv_m
    var = stats[1:2, :] * inv_m - mean * mean
    v = (y_ref[...] - mean) * jax.lax.rsqrt(var + EPS) * g_ref[...] + be_ref[...]
    vb = v.astype(jnp.bfloat16)
    kp_ref[...] = jnp.dot(vb, wk_ref[...], preferred_element_type=jnp.float32)
    vp_ref[...] = jnp.dot(vb, wv_ref[...], preferred_element_type=jnp.float32)


def protein_kv(y, stats, g, be, wk, wv):
    m = y.shape[0]
    tm = _pick_row_tile(m)
    kp, vp = pl.pallas_call(
        functools.partial(_prot_kv_kernel, inv_m=1.0 / m),
        grid=(m // tm,),
        in_specs=[
            pl.BlockSpec((tm, EMB), lambda i: (i, 0)),
            pl.BlockSpec((2, EMB), lambda i: (0, 0)),
            pl.BlockSpec((1, EMB), lambda i: (0, 0)),
            pl.BlockSpec((1, EMB), lambda i: (0, 0)),
            pl.BlockSpec((EMB, EMB), lambda i: (0, 0)),
            pl.BlockSpec((EMB, EMB), lambda i: (0, 0)),
        ],
        out_specs=[
            pl.BlockSpec((tm, EMB), lambda i: (i, 0)),
            pl.BlockSpec((tm, EMB), lambda i: (i, 0)),
        ],
        out_shape=[jax.ShapeDtypeStruct((m, EMB), jnp.float32),
                   jax.ShapeDtypeStruct((m, EMB), jnp.float32)],
        compiler_params=pltpu.CompilerParams(
            dimension_semantics=("parallel",)),
    )(y, stats, g, be, wk, wv)
    return kp, vp


# ----------------------------------------------------------------------------
# Kernel 4: cls cross-attention (q hoisted, batch-invariant) + output
#           projection + full decoder (batch BatchNorm needs all rows anyway).
# ----------------------------------------------------------------------------

def _attn_decoder_kernel(kd_ref, vd_ref, kp_ref, vp_ref, cls_ref,
                         wq_ref, wo_ref,
                         w1, b1, g1, be1, w2, b2, g2, be2,
                         w3, b3, g3, be3, w4, b4, o_ref):
    b = kd_ref.shape[0]
    cls = cls_ref[...]                                            # (1, EMB)
    # q is identical across the batch (same cls token): compute once.
    q = jnp.dot(cls.astype(jnp.bfloat16), wq_ref[...],
                preferred_element_type=jnp.float32)               # (1, EMB)
    qb = jnp.broadcast_to(q.reshape(1, 1, EMB), (b, 1, EMB))
    scale = 1.0 / math.sqrt(EMB)

    sd = jnp.einsum('bqd,bkd->bqk', qb, kd_ref[...],
                    preferred_element_type=jnp.float32) * scale   # (b,1,N)
    sp = jnp.einsum('bqd,bkd->bqk', qb, kp_ref[...],
                    preferred_element_type=jnp.float32) * scale   # (b,1,L)
    m = jnp.maximum(jnp.max(sd, axis=-1, keepdims=True),
                    jnp.max(sp, axis=-1, keepdims=True))          # (b,1,1)
    ed = jnp.exp(sd - m)
    ep = jnp.exp(sp - m)
    denom = (jnp.sum(ed, axis=-1, keepdims=True)
             + jnp.sum(ep, axis=-1, keepdims=True))               # (b,1,1)
    ctx = (jnp.einsum('bqk,bkd->bqd', ed, vd_ref[...],
                      preferred_element_type=jnp.float32)
           + jnp.einsum('bqk,bkd->bqd', ep, vp_ref[...],
                        preferred_element_type=jnp.float32)) / denom
    cls_out = jnp.dot(ctx.reshape(b, EMB).astype(jnp.bfloat16), wo_ref[...],
                      preferred_element_type=jnp.float32) + cls   # (b, EMB)

    def bn(y, gg, bb):
        mean = jnp.mean(y, axis=0, keepdims=True)
        var = jnp.mean((y - mean) ** 2, axis=0, keepdims=True)
        return (y - mean) * jax.lax.rsqrt(var + EPS) * gg[...] + bb[...]

    h = jnp.maximum(jnp.dot(cls_out.astype(jnp.bfloat16), w1[...],
                            preferred_element_type=jnp.float32) + b1[...], 0.0)
    h = bn(h, g1, be1)
    h = jnp.maximum(jnp.dot(h.astype(jnp.bfloat16), w2[...],
                            preferred_element_type=jnp.float32) + b2[...], 0.0)
    h = bn(h, g2, be2)
    h = jnp.maximum(jnp.dot(h.astype(jnp.bfloat16), w3[...],
                            preferred_element_type=jnp.float32) + b3[...], 0.0)
    h = bn(h, g3, be3)
    o_ref[...] = jnp.dot(h.astype(jnp.bfloat16), w4[...],
                         preferred_element_type=jnp.float32) + b4[...]


def attn_decoder(kd, vd, kp, vp, cls, wq, wo, dec):
    b = kd.shape[0]
    return pl.pallas_call(
        _attn_decoder_kernel,
        out_shape=jax.ShapeDtypeStruct((b, 1), jnp.float32),
    )(kd, vd, kp, vp, cls, wq, wo,
      dec["w1"], dec["b1"], dec["g1"], dec["be1"],
      dec["w2"], dec["b2"], dec["g2"], dec["be2"],
      dec["w3"], dec["b3"], dec["g3"], dec["be3"],
      dec["w4"], dec["b4"])


# ----------------------------------------------------------------------------
# Parameters (deterministic synthetic init; matmul weights stored in bf16)
# ----------------------------------------------------------------------------

def init_params(key):
    ks = jax.random.split(key, 16)

    def rnd(k, shape, fan_in):
        return jax.random.normal(k, shape, jnp.float32) / math.sqrt(fan_in)

    p = {}
    # MolecularGCN.init_transform: Linear(75 -> 128, bias=False); last output
    # unit's weights zeroed (weight[-1].fill_(0)).  K padded 75 -> 128.
    init_w = rnd(ks[0], (DRUG_IN, EMB), DRUG_IN).at[:, -1].set(0.0)
    init_w = jnp.pad(init_w, ((0, EMB - DRUG_IN), (0, 0)))
    p["init_w"] = init_w.astype(jnp.bfloat16)
    # GCN: 3 layers of (128 -> 128)
    p["gcn_w"] = rnd(ks[1], (3, EMB, EMB), EMB).astype(jnp.bfloat16)
    p["gcn_b"] = jnp.zeros((3, EMB), jnp.float32)
    # ProteinCNN: Linear(1024 -> 128) + BatchNorm1d(128)
    p["p_w"] = rnd(ks[2], (PROT_HID, EMB), PROT_HID).astype(jnp.bfloat16)
    p["p_b"] = jnp.zeros((1, EMB), jnp.float32)
    p["p_g"] = jnp.ones((1, EMB), jnp.float32)
    p["p_be"] = jnp.zeros((1, EMB), jnp.float32)
    # cls token + aggregation (depth=1 cross attention)
    p["cls"] = jax.random.normal(ks[3], (1, 1, EMB), jnp.float32)
    p["wq"] = rnd(ks[4], (EMB, EMB), EMB).astype(jnp.bfloat16)
    p["wk"] = rnd(ks[5], (EMB, EMB), EMB).astype(jnp.bfloat16)
    p["wv"] = rnd(ks[6], (EMB, EMB), EMB).astype(jnp.bfloat16)
    p["wo"] = rnd(ks[7], (EMB, EMB), EMB).astype(jnp.bfloat16)
    # Decoder(128, 1024, 256, 1)
    p["dec"] = {
        "w1": rnd(ks[8], (128, 1024), 128).astype(jnp.bfloat16),
        "b1": jnp.zeros((1, 1024), jnp.float32),
        "g1": jnp.ones((1, 1024), jnp.float32),
        "be1": jnp.zeros((1, 1024), jnp.float32),
        "w2": rnd(ks[9], (1024, 1024), 1024).astype(jnp.bfloat16),
        "b2": jnp.zeros((1, 1024), jnp.float32),
        "g2": jnp.ones((1, 1024), jnp.float32),
        "be2": jnp.zeros((1, 1024), jnp.float32),
        "w3": rnd(ks[10], (1024, 256), 1024).astype(jnp.bfloat16),
        "b3": jnp.zeros((1, 256), jnp.float32),
        "g3": jnp.ones((1, 256), jnp.float32),
        "be3": jnp.zeros((1, 256), jnp.float32),
        "w4": rnd(ks[11], (256, 1), 256).astype(jnp.bfloat16),
        "b4": jnp.zeros((1, 1), jnp.float32),
    }
    return p


# ----------------------------------------------------------------------------
# Full forward
# ----------------------------------------------------------------------------

def model_forward(params, adj, node_feats, v_p):
    b, n, _ = node_feats.shape
    l = v_p.shape[1]
    # pad drug node features 75 -> 128 (zeros are inert against padded init_w)
    x = jnp.pad(node_feats, ((0, 0), (0, 0), (0, EMB - DRUG_IN)))
    # --- drug extractor (init linear + 3-layer GCN) fused with K/V proj ---
    kd, vd = drug_extractor_kv(adj, x, params)                    # (b,n,128) x2
    # --- protein extractor: Linear + ReLU (+ BN stats), then BN + K/V ---
    xp = v_p.reshape(b * l, PROT_HID).astype(jnp.bfloat16)
    y, stats = protein_stage1(xp, params["p_w"], params["p_b"])
    kp, vp = protein_kv(y, stats, params["p_g"], params["p_be"],
                        params["wk"], params["wv"])
    kp = kp.reshape(b, l, EMB)
    vp = vp.reshape(b, l, EMB)
    # --- cls-token aggregation + decoder (task != 'cluster'), fused ---
    score = attn_decoder(kd, vd, kp, vp, params["cls"].reshape(1, EMB),
                         params["wq"], params["wo"], params["dec"])  # (b,1)
    return score


if __name__ == "__main__":
    key = jax.random.PRNGKey(0)
    kparam, ka, kn, kvp = jax.random.split(key, 4)

    B, N, L = 2, 16, 8
    params = init_params(kparam)

    # dense symmetric-normalized adjacency with self loops
    A = (jax.random.uniform(ka, (B, N, N)) < 0.3).astype(jnp.float32)
    A = jnp.maximum(A, jnp.transpose(A, (0, 2, 1)))
    A = A + jnp.eye(N, dtype=jnp.float32)[None]
    dinv = 1.0 / jnp.sqrt(A.sum(-1))
    adj = A * dinv[:, :, None] * dinv[:, None, :]

    node_feats = jax.random.normal(kn, (B, N, DRUG_IN), jnp.float32)
    v_p = jax.random.normal(kvp, (B, L, PROT_HID), jnp.float32)

    score = jax.jit(model_forward)(params, adj, node_feats, v_p)
    jax.block_until_ready(score)
    assert score.shape == (B, 1) and score.dtype == jnp.float32
    print("KERNEL_OK")
</pallas_src>

<mosaic_0001>
module attributes {stable_mosaic.version = 11 : i64} {
  func.func @_prot_stage1_kernel(%arg0: i32, %arg1: memref<16x1024xbf16, #tpu.memory_space<vmem>>, %arg2: memref<1024x128xbf16, #tpu.memory_space<vmem>>, %arg3: memref<1x128xf32, #tpu.memory_space<vmem>>, %arg4: memref<16x128xf32, #tpu.memory_space<vmem>>, %arg5: memref<2x128xf32, #tpu.memory_space<vmem>>) attributes {dimension_semantics = [#tpu.dimension_semantics<arbitrary>], iteration_bounds = array<i64: 1>, scalar_prefetch = 0 : i64, scratch_operands = 0 : i64, tpu.core_type = #tpu.core_type<tc>, window_params = [{transform_indices = @transform_0, window_bounds = array<i64: 16, 1024>}, {pipeline_mode = #tpu.pipeline_mode<synchronous>, transform_indices = @transform_1, window_bounds = array<i64: 1024, 128>}, {pipeline_mode = #tpu.pipeline_mode<synchronous>, transform_indices = @transform_2, window_bounds = array<i64: 1, 128>}, {transform_indices = @transform_3, window_bounds = array<i64: 16, 128>}, {pipeline_mode = #tpu.pipeline_mode<synchronous>, transform_indices = @transform_4, window_bounds = array<i64: 2, 128>}]} {
    %c0_i32 = arith.constant 0 : i32
    %0 = arith.cmpi eq, %arg0, %c0_i32 : i32
    %1 = arith.extui %0 : i1 to i32
    %c0_i32_0 = arith.constant 0 : i32
    %2 = arith.cmpi ne, %1, %c0_i32_0 : i32
    scf.if %2 {
      %cst_15 = arith.constant 0.000000e+00 : f32
      %21 = vector.broadcast %cst_15 : f32 to vector<2x128xf32>
      %c0_16 = arith.constant 0 : index
      %c0_17 = arith.constant 0 : index
      %22 = vector.load %arg5[%c0_16, %c0_17] : memref<2x128xf32, #tpu.memory_space<vmem>>, vector<2x128xf32>
      tpu.vector_store %arg5[%c0_16, %c0_17], %21 {strides = array<i32>} : memref<2x128xf32, #tpu.memory_space<vmem>>, vector<2x128xf32>,
    } else {
    }
    %c0 = arith.constant 0 : index
    %c0_1 = arith.constant 0 : index
    %3 = vector.load %arg1[%c0, %c0_1] : memref<16x1024xbf16, #tpu.memory_space<vmem>>, vector<16x1024xbf16>
    %c0_2 = arith.constant 0 : index
    %c0_3 = arith.constant 0 : index
    %4 = vector.load %arg2[%c0_2, %c0_3] : memref<1024x128xbf16, #tpu.memory_space<vmem>>, vector<1024x128xbf16>
    %cst = arith.constant dense<0.000000e+00> : vector<16x128xf32>
    %5 = tpu.matmul %3, %4, %cst {dimension_numbers = #tpu.dot_dimension_numbers<[1], [0], [0], [1], [0, 0, 1, 1], [], []>} : vector<16x1024xbf16>, vector<1024x128xbf16>, vector<16x128xf32> -> vector<16x128xf32>
    %c0_4 = arith.constant 0 : index
    %c0_5 = arith.constant 0 : index
    %6 = vector.load %arg3[%c0_4, %c0_5] : memref<1x128xf32, #tpu.memory_space<vmem>>, vector<1x128xf32>
    %7 = vector.broadcast %6 : vector<1x128xf32> to vector<16x128xf32>
    %8 = arith.addf %5, %7 : vector<16x128xf32>
    %cst_6 = arith.constant 0.000000e+00 : f32
    %9 = vector.broadcast %cst_6 : f32 to vector<16x128xf32>
    %10 = arith.maximumf %8, %9 : vector<16x128xf32>
    %c0_7 = arith.constant 0 : index
    %c0_8 = arith.constant 0 : index
    %11 = vector.load %arg4[%c0_7, %c0_8] : memref<16x128xf32, #tpu.memory_space<vmem>>, vector<16x128xf32>
    tpu.vector_store %arg4[%c0_7, %c0_8], %10 {strides = array<i32>} : memref<16x128xf32, #tpu.memory_space<vmem>>, vector<16x128xf32>,
    %cst_9 = arith.constant dense<0.000000e+00> : vector<128xf32>
    %12 = vector.multi_reduction <add>, %10, %cst_9 [0] : vector<16x128xf32> to vector<128xf32>
    %13 = vector.shape_cast %12 : vector<128xf32> to vector<1x128xf32>
    %14 = arith.mulf %10, %10 : vector<16x128xf32>
    %cst_10 = arith.constant dense<0.000000e+00> : vector<128xf32>
    %15 = vector.multi_reduction <add>, %14, %cst_10 [0] : vector<16x128xf32> to vector<128xf32>
    %16 = vector.shape_cast %15 : vector<128xf32> to vector<1x128xf32>
    %c0_11 = arith.constant 0 : index
    %c0_12 = arith.constant 0 : index
    %17 = vector.load %arg5[%c0_11, %c0_12] : memref<2x128xf32, #tpu.memory_space<vmem>>, vector<2x128xf32>
    %18 = tpu.concatenate %13, %16 in 0 : vector<1x128xf32>, vector<1x128xf32> -> vector<2x128xf32>
    %19 = arith.addf %17, %18 : vector<2x128xf32>
    %c0_13 = arith.constant 0 : index
    %c0_14 = arith.constant 0 : index
    %20 = vector.load %arg5[%c0_13, %c0_14] : memref<2x128xf32, #tpu.memory_space<vmem>>, vector<2x128xf32>
    tpu.vector_store %arg5[%c0_13, %c0_14], %19 {strides = array<i32>} : memref<2x128xf32, #tpu.memory_space<vmem>>, vector<2x128xf32>,
    return
  }
  func.func @transform_0(%arg0: i32) -> (i32, i32) {
    %c0_i32 = arith.constant 0 : i32
    %c0_i32_0 = arith.constant 0 : i32
    return %arg0, %c0_i32 : i32, i32
  }
  func.func @transform_1(%arg0: i32) -> (i32, i32) {
    %c0_i32 = arith.constant 0 : i32
    %c0_i32_0 = arith.constant 0 : i32
    %c0_i32_1 = arith.constant 0 : i32
    return %c0_i32, %c0_i32_0 : i32, i32
  }
  func.func @transform_2(%arg0: i32) -> (i32, i32) {
    %c0_i32 = arith.constant 0 : i32
    %c0_i32_0 = arith.constant 0 : i32
    %c0_i32_1 = arith.constant 0 : i32
    return %c0_i32, %c0_i32_0 : i32, i32
  }
  func.func @transform_3(%arg0: i32) -> (i32, i32) {
    %c0_i32 = arith.constant 0 : i32
    %c0_i32_0 = arith.constant 0 : i32
    return %arg0, %c0_i32 : i32, i32
  }
  func.func @transform_4(%arg0: i32) -> (i32, i32) {
    %c0_i32 = arith.constant 0 : i32
    %c0_i32_0 = arith.constant 0 : i32
    %c0_i32_1 = arith.constant 0 : i32
    return %c0_i32, %c0_i32_0 : i32, i32
  }
}

module attributes {stable_mosaic.version = 11 : i64} {
  func.func @_drug_kernel(%arg0: i32, %arg1: memref<2x16x16xf32, #tpu.memory_space<vmem>>, %arg2: memref<2x16x128xf32, #tpu.memory_space<vmem>>, %arg3: memref<128x128xbf16, #tpu.memory_space<vmem>>, %arg4: memref<3x128x128xbf16, #tpu.memory_space<vmem>>, %arg5: memref<3x128xf32, #tpu.memory_space<vmem>>, %arg6: memref<128x128xbf16, #tpu.memory_space<vmem>>, %arg7: memref<128x128xbf16, #tpu.memory_space<vmem>>, %arg8: memref<2x16x128xf32, #tpu.memory_space<vmem>>, %arg9: memref<2x16x128xf32, #tpu.memory_space<vmem>>) attributes {dimension_semantics = [#tpu.dimension_semantics<parallel>], iteration_bounds = array<i64: 1>, scalar_prefetch = 0 : i64, scratch_operands = 0 : i64, tpu.core_type = #tpu.core_type<tc>, window_params = [{transform_indices = @transform_0, window_bounds = array<i64: 2, 16, 16>}, {transform_indices = @transform_1, window_bounds = array<i64: 2, 16, 128>}, {pipeline_mode = #tpu.pipeline_mode<synchronous>, transform_indices = @transform_2, window_bounds = array<i64: 128, 128>}, {pipeline_mode = #tpu.pipeline_mode<synchronous>, transform_indices = @transform_3, window_bounds = array<i64: 3, 128, 128>}, {pipeline_mode = #tpu.pipeline_mode<synchronous>, transform_indices = @transform_4, window_bounds = array<i64: 3, 128>}, {pipeline_mode = #tpu.pipeline_mode<synchronous>, transform_indices = @transform_5, window_bounds = array<i64: 128, 128>}, {pipeline_mode = #tpu.pipeline_mode<synchronous>, transform_indices = @transform_6, window_bounds = array<i64: 128, 128>}, {transform_indices = @transform_7, window_bounds = array<i64: 2, 16, 128>}, {transform_indices = @transform_8, window_bounds = array<i64: 2, 16, 128>}]} {
    %c0 = arith.constant 0 : index
    %c0_0 = arith.constant 0 : index
    %c0_1 = arith.constant 0 : index
    %0 = vector.load %arg1[%c0, %c0_0, %c0_1] : memref<2x16x16xf32, #tpu.memory_space<vmem>>, vector<2x16x16xf32>
    %1 = arith.truncf %0 : vector<2x16x16xf32> to vector<2x16x16xbf16>
    %c0_2 = arith.constant 0 : index
    %c0_3 = arith.constant 0 : index
    %c0_4 = arith.constant 0 : index
    %2 = vector.load %arg2[%c0_2, %c0_3, %c0_4] : memref<2x16x128xf32, #tpu.memory_space<vmem>>, vector<2x16x128xf32>
    %3 = vector.shape_cast %2 : vector<2x16x128xf32> to vector<32x128xf32>
    %4 = arith.truncf %3 : vector<32x128xf32> to vector<32x128xbf16>
    %c0_5 = arith.constant 0 : index
    %c0_6 = arith.constant 0 : index
    %5 = vector.load %arg3[%c0_5, %c0_6] : memref<128x128xbf16, #tpu.memory_space<vmem>>, vector<128x128xbf16>
    %cst = arith.constant dense<0.000000e+00> : vector<32x128xf32>
    %6 = tpu.matmul %4, %5, %cst {dimension_numbers = #tpu.dot_dimension_numbers<[1], [0], [0], [1], [0, 0, 1, 1], [], []>} : vector<32x128xbf16>, vector<128x128xbf16>, vector<32x128xf32> -> vector<32x128xf32>
    %c0_7 = arith.constant 0 : index
    %c0_8 = arith.constant 0 : index
    %7 = vector.load %arg5[%c0_7, %c0_8] : memref<3x128xf32, #tpu.memory_space<vmem>>, vector<3x128xf32>
    %8 = arith.truncf %6 : vector<32x128xf32> to vector<32x128xbf16>
    %c0_9 = arith.constant 0 : index
    %c0_10 = arith.constant 0 : index
    %c0_11 = arith.constant 0 : index
    %9 = vector.load %arg4[%c0_9, %c0_10, %c0_11] : memref<3x128x128xbf16, #tpu.memory_space<vmem>>, vector<1x128x128xbf16>
    %10 = vector.shape_cast %9 : vector<1x128x128xbf16> to vector<128x128xbf16>
    %cst_12 = arith.constant dense<0.000000e+00> : vector<32x128xf32>
    %11 = tpu.matmul %8, %10, %cst_12 {dimension_numbers = #tpu.dot_dimension_numbers<[1], [0], [0], [1], [0, 0, 1, 1], [], []>} : vector<32x128xbf16>, vector<128x128xbf16>, vector<32x128xf32> -> vector<32x128xf32>
    %12 = vector.shape_cast %11 : vector<32x128xf32> to vector<2x16x128xf32>
    %13 = arith.truncf %12 : vector<2x16x128xf32> to vector<2x16x128xbf16>
    "tpu.trace_start"() <{level = 10 : i32, message = "gnm,gmd->gnd"}> : () -> ()
    %cst_13 = arith.constant dense<0.000000e+00> : vector<2x16x128xf32>
    %14 = tpu.matmul %1, %13, %cst_13 {dimension_numbers = #tpu.dot_dimension_numbers<[2], [1], [1], [2], [0, 0, 0, 1, 1, 2], [0], [0]>} : vector<2x16x16xbf16>, vector<2x16x128xbf16>, vector<2x16x128xf32> -> vector<2x16x128xf32>
    "tpu.trace_stop"() : () -> ()
    %15 = vector.shape_cast %14 : vector<2x16x128xf32> to vector<32x128xf32>
    %16 = vector.extract_strided_slice %7 {offsets = [0, 0], sizes = [1, 128], strides = [1, 1]} : vector<3x128xf32> to vector<1x128xf32>
    %17 = vector.broadcast %16 : vector<1x128xf32> to vector<32x128xf32>
    %18 = arith.addf %15, %17 : vector<32x128xf32>
    %cst_14 = arith.constant 0.000000e+00 : f32
    %19 = vector.broadcast %cst_14 : f32 to vector<32x128xf32>
    %20 = arith.maximumf %18, %19 : vector<32x128xf32>
    %21 = arith.addf %20, %6 : vector<32x128xf32>
    %22 = arith.truncf %21 : vector<32x128xf32> to vector<32x128xbf16>
    %c1 = arith.constant 1 : index
    %c0_15 = arith.constant 0 : index
    %c0_16 = arith.constant 0 : index
    %23 = vector.load %arg4[%c1, %c0_15, %c0_16] : memref<3x128x128xbf16, #tpu.memory_space<vmem>>, vector<1x128x128xbf16>
    %24 = vector.shape_cast %23 : vector<1x128x128xbf16> to vector<128x128xbf16>
    %cst_17 = arith.constant dense<0.000000e+00> : vector<32x128xf32>
    %25 = tpu.matmul %22, %24, %cst_17 {dimension_numbers = #tpu.dot_dimension_numbers<[1], [0], [0], [1], [0, 0, 1, 1], [], []>} : vector<32x128xbf16>, vector<128x128xbf16>, vector<32x128xf32> -> vector<32x128xf32>
    %26 = vector.shape_cast %25 : vector<32x128xf32> to vector<2x16x128xf32>
    %27 = arith.truncf %26 : vector<2x16x128xf32> to vector<2x16x128xbf16>
    "tpu.trace_start"() <{level = 10 : i32, message = "gnm,gmd->gnd"}> : () -> ()
    %cst_18 = arith.constant dense<0.000000e+00> : vector<2x16x128xf32>
    %28 = tpu.matmul %1, %27, %cst_18 {dimension_numbers = #tpu.dot_dimension_numbers<[2], [1], [1], [2], [0, 0, 0, 1, 1, 2], [0], [0]>} : vector<2x16x16xbf16>, vector<2x16x128xbf16>, vector<2x16x128xf32> -> vector<2x16x128xf32>
    "tpu.trace_stop"() : () -> ()
    %29 = vector.shape_cast %28 : vector<2x16x128xf32> to vector<32x128xf32>
    %30 = vector.extract_strided_slice %7 {offsets = [1, 0], sizes = [1, 128], strides = [1, 1]} : vector<3x128xf32> to vector<1x128xf32>
    %31 = vector.broadcast %30 : vector<1x128xf32> to vector<32x128xf32>
    %32 = arith.addf %29, %31 : vector<32x128xf32>
    %cst_19 = arith.constant 0.000000e+00 : f32
    %33 = vector.broadcast %cst_19 : f32 to vector<32x128xf32>
    %34 = arith.maximumf %32, %33 : vector<32x128xf32>
    %35 = arith.addf %34, %21 : vector<32x128xf32>
    %36 = arith.truncf %35 : vector<32x128xf32> to vector<32x128xbf16>
    %c2 = arith.constant 2 : index
    %c0_20 = arith.constant 0 : index
    %c0_21 = arith.constant 0 : index
    %37 = vector.load %arg4[%c2, %c0_20, %c0_21] : memref<3x128x128xbf16, #tpu.memory_space<vmem>>, vector<1x128x128xbf16>
    %38 = vector.shape_cast %37 : vector<1x128x128xbf16> to vector<128x128xbf16>
    %cst_22 = arith.constant dense<0.000000e+00> : vector<32x128xf32>
    %39 = tpu.matmul %36, %38, %cst_22 {dimension_numbers = #tpu.dot_dimension_numbers<[1], [0], [0], [1], [0, 0, 1, 1], [], []>} : vector<32x128xbf16>, vector<128x128xbf16>, vector<32x128xf32> -> vector<32x128xf32>
    %40 = vector.shape_cast %39 : vector<32x128xf32> to vector<2x16x128xf32>
    %41 = arith.truncf %40 : vector<2x16x128xf32> to vector<2x16x128xbf16>
    "tpu.trace_start"() <{level = 10 : i32, message = "gnm,gmd->gnd"}> : () -> ()
    %cst_23 = arith.constant dense<0.000000e+00> : vector<2x16x128xf32>
    %42 = tpu.matmul %1, %41, %cst_23 {dimension_numbers = #tpu.dot_dimension_numbers<[2], [1], [1], [2], [0, 0, 0, 1, 1, 2], [0], [0]>} : vector<2x16x16xbf16>, vector<2x16x128xbf16>, vector<2x16x128xf32> -> vector<2x16x128xf32>
    "tpu.trace_stop"() : () -> ()
    %43 = vector.shape_cast %42 : vector<2x16x128xf32> to vector<32x128xf32>
    %44 = vector.extract_strided_slice %7 {offsets = [2, 0], sizes = [1, 128], strides = [1, 1]} : vector<3x128xf32> to vector<1x128xf32>
    %45 = vector.broadcast %44 : vector<1x128xf32> to vector<32x128xf32>
    %46 = arith.addf %43, %45 : vector<32x128xf32>
    %cst_24 = arith.constant 0.000000e+00 : f32
    %47 = vector.broadcast %cst_24 : f32 to vector<32x128xf32>
    %48 = arith.maximumf %46, %47 : vector<32x128xf32>
    %49 = arith.addf %48, %35 : vector<32x128xf32>
    %50 = arith.truncf %49 : vector<32x128xf32> to vector<32x128xbf16>
    %c0_25 = arith.constant 0 : index
    %c0_26 = arith.constant 0 : index
    %51 = vector.load %arg6[%c0_25, %c0_26] : memref<128x128xbf16, #tpu.memory_space<vmem>>, vector<128x128xbf16>
    %cst_27 = arith.constant dense<0.000000e+00> : vector<32x128xf32>
    %52 = tpu.matmul %50, %51, %cst_27 {dimension_numbers = #tpu.dot_dimension_numbers<[1], [0], [0], [1], [0, 0, 1, 1], [], []>} : vector<32x128xbf16>, vector<128x128xbf16>, vector<32x128xf32> -> vector<32x128xf32>
    %53 = vector.shape_cast %52 : vector<32x128xf32> to vector<2x16x128xf32>
    %c0_28 = arith.constant 0 : index
    %c0_29 = arith.constant 0 : index
    %c0_30 = arith.constant 0 : index
    %54 = vector.load %arg8[%c0_28, %c0_29, %c0_30] : memref<2x16x128xf32, #tpu.memory_space<vmem>>, vector<2x16x128xf32>
    tpu.vector_store %arg8[%c0_28, %c0_29, %c0_30], %53 {strides = array<i32>} : memref<2x16x128xf32, #tpu.memory_space<vmem>>, vector<2x16x128xf32>,
    %c0_31 = arith.constant 0 : index
    %c0_32 = arith.constant 0 : index
    %55 = vector.load %arg7[%c0_31, %c0_32] : memref<128x128xbf16, #tpu.memory_space<vmem>>, vector<128x128xbf16>
    %cst_33 = arith.constant dense<0.000000e+00> : vector<32x128xf32>
    %56 = tpu.matmul %50, %55, %cst_33 {dimension_numbers = #tpu.dot_dimension_numbers<[1], [0], [0], [1], [0, 0, 1, 1], [], []>} : vector<32x128xbf16>, vector<128x128xbf16>, vector<32x128xf32> -> vector<32x128xf32>
    %57 = vector.shape_cast %56 : vector<32x128xf32> to vector<2x16x128xf32>
    %c0_34 = arith.constant 0 : index
    %c0_35 = arith.constant 0 : index
    %c0_36 = arith.constant 0 : index
    %58 = vector.load %arg9[%c0_34, %c0_35, %c0_36] : memref<2x16x128xf32, #tpu.memory_space<vmem>>, vector<2x16x128xf32>
    tpu.vector_store %arg9[%c0_34, %c0_35, %c0_36], %57 {strides = array<i32>} : memref<2x16x128xf32, #tpu.memory_space<vmem>>, vector<2x16x128xf32>,
    return
  }
  func.func @transform_0(%arg0: i32) -> (i32, i32, i32) {
    %c0_i32 = arith.constant 0 : i32
    %c0_i32_0 = arith.constant 0 : i32
    %c0_i32_1 = arith.constant 0 : i32
    return %arg0, %c0_i32, %c0_i32_0 : i32, i32, i32
  }
  func.func @transform_1(%arg0: i32) -> (i32, i32, i32) {
    %c0_i32 = arith.constant 0 : i32
    %c0_i32_0 = arith.constant 0 : i32
    %c0_i32_1 = arith.constant 0 : i32
    return %arg0, %c0_i32, %c0_i32_0 : i32, i32, i32
  }
  func.func @transform_2(%arg0: i32) -> (i32, i32) {
    %c0_i32 = arith.constant 0 : i32
    %c0_i32_0 = arith.constant 0 : i32
    %c0_i32_1 = arith.constant 0 : i32
    return %c0_i32, %c0_i32_0 : i32, i32
  }
  func.func @transform_3(%arg0: i32) -> (i32, i32, i32) {
    %c0_i32 = arith.constant 0 : i32
    %c0_i32_0 = arith.constant 0 : i32
    %c0_i32_1 = arith.constant 0 : i32
    %c0_i32_2 = arith.constant 0 : i32
    return %c0_i32, %c0_i32_0, %c0_i32_1 : i32, i32, i32
  }
  func.func @transform_4(%arg0: i32) -> (i32, i32) {
    %c0_i32 = arith.constant 0 : i32
    %c0_i32_0 = arith.constant 0 : i32
    %c0_i32_1 = arith.constant 0 : i32
    return %c0_i32, %c0_i32_0 : i32, i32
  }
  func.func @transform_5(%arg0: i32) -> (i32, i32) {
    %c0_i32 = arith.constant 0 : i32
    %c0_i32_0 = arith.constant 0 : i32
    %c0_i32_1 = arith.constant 0 : i32
    return %c0_i32, %c0_i32_0 : i32, i32
  }
  func.func @transform_6(%arg0: i32) -> (i32, i32) {
    %c0_i32 = arith.constant 0 : i32
    %c0_i32_0 = arith.constant 0 : i32
    %c0_i32_1 = arith.constant 0 : i32
    return %c0_i32, %c0_i32_0 : i32, i32
  }
  func.func @transform_7(%arg0: i32) -> (i32, i32, i32) {
    %c0_i32 = arith.constant 0 : i32
    %c0_i32_0 = arith.constant 0 : i32
    %c0_i32_1 = arith.constant 0 : i32
    return %arg0, %c0_i32, %c0_i32_0 : i32, i32, i32
  }
  func.func @transform_8(%arg0: i32) -> (i32, i32, i32) {
    %c0_i32 = arith.constant 0 : i32
    %c0_i32_0 = arith.constant 0 : i32
    %c0_i32_1 = arith.constant 0 : i32
    return %arg0, %c0_i32, %c0_i32_0 : i32, i32, i32
  }
}

module attributes {stable_mosaic.version = 11 : i64} {
  func.func @_prot_kv_kernel(%arg0: i32, %arg1: memref<16x128xf32, #tpu.memory_space<vmem>>, %arg2: memref<2x128xf32, #tpu.memory_space<vmem>>, %arg3: memref<1x128xf32, #tpu.memory_space<vmem>>, %arg4: memref<1x128xf32, #tpu.memory_space<vmem>>, %arg5: memref<128x128xbf16, #tpu.memory_space<vmem>>, %arg6: memref<128x128xbf16, #tpu.memory_space<vmem>>, %arg7: memref<16x128xf32, #tpu.memory_space<vmem>>, %arg8: memref<16x128xf32, #tpu.memory_space<vmem>>) attributes {dimension_semantics = [#tpu.dimension_semantics<parallel>], iteration_bounds = array<i64: 1>, scalar_prefetch = 0 : i64, scratch_operands = 0 : i64, tpu.core_type = #tpu.core_type<tc>, window_params = [{transform_indices = @transform_0, window_bounds = array<i64: 16, 128>}, {pipeline_mode = #tpu.pipeline_mode<synchronous>, transform_indices = @transform_1, window_bounds = array<i64: 2, 128>}, {pipeline_mode = #tpu.pipeline_mode<synchronous>, transform_indices = @transform_2, window_bounds = array<i64: 1, 128>}, {pipeline_mode = #tpu.pipeline_mode<synchronous>, transform_indices = @transform_3, window_bounds = array<i64: 1, 128>}, {pipeline_mode = #tpu.pipeline_mode<synchronous>, transform_indices = @transform_4, window_bounds = array<i64: 128, 128>}, {pipeline_mode = #tpu.pipeline_mode<synchronous>, transform_indices = @transform_5, window_bounds = array<i64: 128, 128>}, {transform_indices = @transform_6, window_bounds = array<i64: 16, 128>}, {transform_indices = @transform_7, window_bounds = array<i64: 16, 128>}]} {
    %c0 = arith.constant 0 : index
    %c0_0 = arith.constant 0 : index
    %0 = vector.load %arg2[%c0, %c0_0] : memref<2x128xf32, #tpu.memory_space<vmem>>, vector<2x128xf32>
    %1 = vector.extract_strided_slice %0 {offsets = [0, 0], sizes = [1, 128], strides = [1, 1]} : vector<2x128xf32> to vector<1x128xf32>
    %cst = arith.constant 6.250000e-02 : f32
    %2 = vector.broadcast %cst : f32 to vector<1x128xf32>
    %3 = arith.mulf %1, %2 : vector<1x128xf32>
    %4 = vector.extract_strided_slice %0 {offsets = [1, 0], sizes = [1, 128], strides = [1, 1]} : vector<2x128xf32> to vector<1x128xf32>
    %cst_1 = arith.constant 6.250000e-02 : f32
    %5 = vector.broadcast %cst_1 : f32 to vector<1x128xf32>
    %6 = arith.mulf %4, %5 : vector<1x128xf32>
    %7 = arith.mulf %3, %3 : vector<1x128xf32>
    %8 = arith.subf %6, %7 : vector<1x128xf32>
    %c0_2 = arith.constant 0 : index
    %c0_3 = arith.constant 0 : index
    %9 = vector.load %arg1[%c0_2, %c0_3] : memref<16x128xf32, #tpu.memory_space<vmem>>, vector<16x128xf32>
    %10 = vector.broadcast %3 : vector<1x128xf32> to vector<16x128xf32>
    %11 = arith.subf %9, %10 : vector<16x128xf32>
    %cst_4 = arith.constant 9.99999974E-6 : f32
    %12 = vector.broadcast %cst_4 : f32 to vector<1x128xf32>
    %13 = arith.addf %8, %12 : vector<1x128xf32>
    %14 = math.rsqrt %13 : vector<1x128xf32>
    %15 = vector.broadcast %14 : vector<1x128xf32> to vector<16x128xf32>
    %16 = arith.mulf %11, %15 : vector<16x128xf32>
    %c0_5 = arith.constant 0 : index
    %c0_6 = arith.constant 0 : index
    %17 = vector.load %arg3[%c0_5, %c0_6] : memref<1x128xf32, #tpu.memory_space<vmem>>, vector<1x128xf32>
    %18 = vector.broadcast %17 : vector<1x128xf32> to vector<16x128xf32>
    %19 = arith.mulf %16, %18 : vector<16x128xf32>
    %c0_7 = arith.constant 0 : index
    %c0_8 = arith.constant 0 : index
    %20 = vector.load %arg4[%c0_7, %c0_8] : memref<1x128xf32, #tpu.memory_space<vmem>>, vector<1x128xf32>
    %21 = vector.broadcast %20 : vector<1x128xf32> to vector<16x128xf32>
    %22 = arith.addf %19, %21 : vector<16x128xf32>
    %23 = arith.truncf %22 : vector<16x128xf32> to vector<16x128xbf16>
    %c0_9 = arith.constant 0 : index
    %c0_10 = arith.constant 0 : index
    %24 = vector.load %arg5[%c0_9, %c0_10] : memref<128x128xbf16, #tpu.memory_space<vmem>>, vector<128x128xbf16>
    %cst_11 = arith.constant dense<0.000000e+00> : vector<16x128xf32>
    %25 = tpu.matmul %23, %24, %cst_11 {dimension_numbers = #tpu.dot_dimension_numbers<[1], [0], [0], [1], [0, 0, 1, 1], [], []>} : vector<16x128xbf16>, vector<128x128xbf16>, vector<16x128xf32> -> vector<16x128xf32>
    %c0_12 = arith.constant 0 : index
    %c0_13 = arith.constant 0 : index
    %26 = vector.load %arg7[%c0_12, %c0_13] : memref<16x128xf32, #tpu.memory_space<vmem>>, vector<16x128xf32>
    tpu.vector_store %arg7[%c0_12, %c0_13], %25 {strides = array<i32>} : memref<16x128xf32, #tpu.memory_space<vmem>>, vector<16x128xf32>,
    %c0_14 = arith.constant 0 : index
    %c0_15 = arith.constant 0 : index
    %27 = vector.load %arg6[%c0_14, %c0_15] : memref<128x128xbf16, #tpu.memory_space<vmem>>, vector<128x128xbf16>
    %cst_16 = arith.constant dense<0.000000e+00> : vector<16x128xf32>
    %28 = tpu.matmul %23, %27, %cst_16 {dimension_numbers = #tpu.dot_dimension_numbers<[1], [0], [0], [1], [0, 0, 1, 1], [], []>} : vector<16x128xbf16>, vector<128x128xbf16>, vector<16x128xf32> -> vector<16x128xf32>
    %c0_17 = arith.constant 0 : index
    %c0_18 = arith.constant 0 : index
    %29 = vector.load %arg8[%c0_17, %c0_18] : memref<16x128xf32, #tpu.memory_space<vmem>>, vector<16x128xf32>
    tpu.vector_store %arg8[%c0_17, %c0_18], %28 {strides = array<i32>} : memref<16x128xf32, #tpu.memory_space<vmem>>, vector<16x128xf32>,
    return
  }
  func.func @transform_0(%arg0: i32) -> (i32, i32) {
    %c0_i32 = arith.constant 0 : i32
    %c0_i32_0 = arith.constant 0 : i32
    return %arg0, %c0_i32 : i32, i32
  }
  func.func @transform_1(%arg0: i32) -> (i32, i32) {
    %c0_i32 = arith.constant 0 : i32
    %c0_i32_0 = arith.constant 0 : i32
    %c0_i32_1 = arith.constant 0 : i32
    return %c0_i32, %c0_i32_0 : i32, i32
  }
  func.func @transform_2(%arg0: i32) -> (i32, i32) {
    %c0_i32 = arith.constant 0 : i32
    %c0_i32_0 = arith.constant 0 : i32
    %c0_i32_1 = arith.constant 0 : i32
    return %c0_i32, %c0_i32_0 : i32, i32
  }
  func.func @transform_3(%arg0: i32) -> (i32, i32) {
    %c0_i32 = arith.constant 0 : i32
    %c0_i32_0 = arith.constant 0 : i32
    %c0_i32_1 = arith.constant 0 : i32
    return %c0_i32, %c0_i32_0 : i32, i32
  }
  func.func @transform_4(%arg0: i32) -> (i32, i32) {
    %c0_i32 = arith.constant 0 : i32
    %c0_i32_0 = arith.constant 0 : i32
    %c0_i32_1 = arith.constant 0 : i32
    return %c0_i32, %c0_i32_0 : i32, i32
  }
  func.func @transform_5(%arg0: i32) -> (i32, i32) {
    %c0_i32 = arith.constant 0 : i32
    %c0_i32_0 = arith.constant 0 : i32
    %c0_i32_1 = arith.constant 0 : i32
    return %c0_i32, %c0_i32_0 : i32, i32
  }
  func.func @transform_6(%arg0: i32) -> (i32, i32) {
    %c0_i32 = arith.constant 0 : i32
    %c0_i32_0 = arith.constant 0 : i32
    return %arg0, %c0_i32 : i32, i32
  }
  func.func @transform_7(%arg0: i32) -> (i32, i32) {
    %c0_i32 = arith.constant 0 : i32
    %c0_i32_0 = arith.constant 0 : i32
    return %arg0, %c0_i32 : i32, i32
  }
}

module attributes {stable_mosaic.version = 11 : i64} {
  func.func @_attn_decoder_kernel(%arg0: memref<2x16x128xf32, #tpu.memory_space<vmem>>, %arg1: memref<2x16x128xf32, #tpu.memory_space<vmem>>, %arg2: memref<2x8x128xf32, #tpu.memory_space<vmem>>, %arg3: memref<2x8x128xf32, #tpu.memory_space<vmem>>, %arg4: memref<1x128xf32, #tpu.memory_space<vmem>>, %arg5: memref<128x128xbf16, #tpu.memory_space<vmem>>, %arg6: memref<128x128xbf16, #tpu.memory_space<vmem>>, %arg7: memref<128x1024xbf16, #tpu.memory_space<vmem>>, %arg8: memref<1x1024xf32, #tpu.memory_space<vmem>>, %arg9: memref<1x1024xf32, #tpu.memory_space<vmem>>, %arg10: memref<1x1024xf32, #tpu.memory_space<vmem>>, %arg11: memref<1024x1024xbf16, #tpu.memory_space<vmem>>, %arg12: memref<1x1024xf32, #tpu.memory_space<vmem>>, %arg13: memref<1x1024xf32, #tpu.memory_space<vmem>>, %arg14: memref<1x1024xf32, #tpu.memory_space<vmem>>, %arg15: memref<1024x256xbf16, #tpu.memory_space<vmem>>, %arg16: memref<1x256xf32, #tpu.memory_space<vmem>>, %arg17: memref<1x256xf32, #tpu.memory_space<vmem>>, %arg18: memref<1x256xf32, #tpu.memory_space<vmem>>, %arg19: memref<256x1xbf16, #tpu.memory_space<vmem>>, %arg20: memref<1x1xf32, #tpu.memory_space<vmem>>, %arg21: memref<2x1xf32, #tpu.memory_space<vmem>>) attributes {dimension_semantics = [], scalar_prefetch = 0 : i64, scratch_operands = 0 : i64, tpu.core_type = #tpu.core_type<tc>} {
    %c0 = arith.constant 0 : index
    %c0_0 = arith.constant 0 : index
    %0 = vector.load %arg4[%c0, %c0_0] : memref<1x128xf32, #tpu.memory_space<vmem>>, vector<1x128xf32>
    %1 = arith.truncf %0 : vector<1x128xf32> to vector<1x128xbf16>
    %c0_1 = arith.constant 0 : index
    %c0_2 = arith.constant 0 : index
    %2 = vector.load %arg5[%c0_1, %c0_2] : memref<128x128xbf16, #tpu.memory_space<vmem>>, vector<128x128xbf16>
    %cst = arith.constant dense<0.000000e+00> : vector<1x128xf32>
    %3 = tpu.matmul %1, %2, %cst {dimension_numbers = #tpu.dot_dimension_numbers<[1], [0], [0], [1], [0, 0, 1, 1], [], []>} : vector<1x128xbf16>, vector<128x128xbf16>, vector<1x128xf32> -> vector<1x128xf32>
    %4 = vector.shape_cast %3 : vector<1x128xf32> to vector<1x1x128xf32>
    %5 = vector.shape_cast %4 : vector<1x1x128xf32> to vector<1x1x128xf32>
    %6 = vector.broadcast %5 : vector<1x1x128xf32> to vector<2x1x128xf32>
    %c0_3 = arith.constant 0 : index
    %c0_4 = arith.constant 0 : index
    %c0_5 = arith.constant 0 : index
    %7 = vector.load %arg0[%c0_3, %c0_4, %c0_5] : memref<2x16x128xf32, #tpu.memory_space<vmem>>, vector<2x16x128xf32>
    "tpu.trace_start"() <{level = 10 : i32, message = "bqd,bkd->bqk"}> : () -> ()
    %cst_6 = arith.constant dense<0.000000e+00> : vector<2x1x16xf32>
    %8 = tpu.matmul %6, %7, %cst_6 {dimension_numbers = #tpu.dot_dimension_numbers<[2], [2], [1], [1], [0, 0, 0, 1, 1, 1], [0], [0]>} : vector<2x1x128xf32>, vector<2x16x128xf32>, vector<2x1x16xf32> -> vector<2x1x16xf32>
    "tpu.trace_stop"() : () -> ()
    %cst_7 = arith.constant 0.0883883461 : f32
    %9 = vector.broadcast %cst_7 : f32 to vector<2x1x16xf32>
    %10 = arith.mulf %8, %9 : vector<2x1x16xf32>
    %c0_8 = arith.constant 0 : index
    %c0_9 = arith.constant 0 : index
    %c0_10 = arith.constant 0 : index
    %11 = vector.load %arg2[%c0_8, %c0_9, %c0_10] : memref<2x8x128xf32, #tpu.memory_space<vmem>>, vector<2x8x128xf32>
    "tpu.trace_start"() <{level = 10 : i32, message = "bqd,bkd->bqk"}> : () -> ()
    %cst_11 = arith.constant dense<0.000000e+00> : vector<2x1x8xf32>
    %12 = tpu.matmul %6, %11, %cst_11 {dimension_numbers = #tpu.dot_dimension_numbers<[2], [2], [1], [1], [0, 0, 0, 1, 1, 1], [0], [0]>} : vector<2x1x128xf32>, vector<2x8x128xf32>, vector<2x1x8xf32> -> vector<2x1x8xf32>
    "tpu.trace_stop"() : () -> ()
    %cst_12 = arith.constant 0.0883883461 : f32
    %13 = vector.broadcast %cst_12 : f32 to vector<2x1x8xf32>
    %14 = arith.mulf %12, %13 : vector<2x1x8xf32>
    %cst_13 = arith.constant dense<0xFF800000> : vector<2x1xf32>
    %15 = vector.multi_reduction <maximumf>, %10, %cst_13 [2] : vector<2x1x16xf32> to vector<2x1xf32>
    %16 = vector.shape_cast %15 : vector<2x1xf32> to vector<2x1x1xf32>
    %cst_14 = arith.constant dense<0xFF800000> : vector<2x1xf32>
    %17 = vector.multi_reduction <maximumf>, %14, %cst_14 [2] : vector<2x1x8xf32> to vector<2x1xf32>
    %18 = vector.shape_cast %17 : vector<2x1xf32> to vector<2x1x1xf32>
    %19 = arith.maximumf %16, %18 : vector<2x1x1xf32>
    %20 = vector.broadcast %19 : vector<2x1x1xf32> to vector<2x1x16xf32>
    %21 = arith.subf %10, %20 : vector<2x1x16xf32>
    %22 = math.exp %21 : vector<2x1x16xf32>
    %23 = vector.broadcast %19 : vector<2x1x1xf32> to vector<2x1x8xf32>
    %24 = arith.subf %14, %23 : vector<2x1x8xf32>
    %25 = math.exp %24 : vector<2x1x8xf32>
    %cst_15 = arith.constant dense<0.000000e+00> : vector<2x1xf32>
    %26 = vector.multi_reduction <add>, %22, %cst_15 [2] : vector<2x1x16xf32> to vector<2x1xf32>
    %27 = vector.shape_cast %26 : vector<2x1xf32> to vector<2x1x1xf32>
    %cst_16 = arith.constant dense<0.000000e+00> : vector<2x1xf32>
    %28 = vector.multi_reduction <add>, %25, %cst_16 [2] : vector<2x1x8xf32> to vector<2x1xf32>
    %29 = vector.shape_cast %28 : vector<2x1xf32> to vector<2x1x1xf32>
    %30 = arith.addf %27, %29 : vector<2x1x1xf32>
    %c0_17 = arith.constant 0 : index
    %c0_18 = arith.constant 0 : index
    %c0_19 = arith.constant 0 : index
    %31 = vector.load %arg1[%c0_17, %c0_18, %c0_19] : memref<2x16x128xf32, #tpu.memory_space<vmem>>, vector<2x16x128xf32>
    "tpu.trace_start"() <{level = 10 : i32, message = "bqk,bkd->bqd"}> : () -> ()
    %cst_20 = arith.constant dense<0.000000e+00> : vector<2x1x128xf32>
    %32 = tpu.matmul %22, %31, %cst_20 {dimension_numbers = #tpu.dot_dimension_numbers<[2], [1], [1], [2], [0, 0, 0, 1, 1, 2], [0], [0]>} : vector<2x1x16xf32>, vector<2x16x128xf32>, vector<2x1x128xf32> -> vector<2x1x128xf32>
    "tpu.trace_stop"() : () -> ()
    %c0_21 = arith.constant 0 : index
    %c0_22 = arith.constant 0 : index
    %c0_23 = arith.constant 0 : index
    %33 = vector.load %arg3[%c0_21, %c0_22, %c0_23] : memref<2x8x128xf32, #tpu.memory_space<vmem>>, vector<2x8x128xf32>
    "tpu.trace_start"() <{level = 10 : i32, message = "bqk,bkd->bqd"}> : () -> ()
    %cst_24 = arith.constant dense<0.000000e+00> : vector<2x1x128xf32>
    %34 = tpu.matmul %25, %33, %cst_24 {dimension_numbers = #tpu.dot_dimension_numbers<[2], [1], [1], [2], [0, 0, 0, 1, 1, 2], [0], [0]>} : vector<2x1x8xf32>, vector<2x8x128xf32>, vector<2x1x128xf32> -> vector<2x1x128xf32>
    "tpu.trace_stop"() : () -> ()
    %35 = arith.addf %32, %34 : vector<2x1x128xf32>
    %36 = vector.broadcast %30 : vector<2x1x1xf32> to vector<2x1x128xf32>
    %37 = arith.divf %35, %36 : vector<2x1x128xf32>
    %38 = vector.shape_cast %37 : vector<2x1x128xf32> to vector<2x128xf32>
    %39 = arith.truncf %38 : vector<2x128xf32> to vector<2x128xbf16>
    %c0_25 = arith.constant 0 : index
    %c0_26 = arith.constant 0 : index
    %40 = vector.load %arg6[%c0_25, %c0_26] : memref<128x128xbf16, #tpu.memory_space<vmem>>, vector<128x128xbf16>
    %cst_27 = arith.constant dense<0.000000e+00> : vector<2x128xf32>
    %41 = tpu.matmul %39, %40, %cst_27 {dimension_numbers = #tpu.dot_dimension_numbers<[1], [0], [0], [1], [0, 0, 1, 1], [], []>} : vector<2x128xbf16>, vector<128x128xbf16>, vector<2x128xf32> -> vector<2x128xf32>
    %42 = vector.broadcast %0 : vector<1x128xf32> to vector<2x128xf32>
    %43 = arith.addf %41, %42 : vector<2x128xf32>
    %44 = arith.truncf %43 : vector<2x128xf32> to vector<2x128xbf16>
    %c0_28 = arith.constant 0 : index
    %c0_29 = arith.constant 0 : index
    %45 = vector.load %arg7[%c0_28, %c0_29] : memref<128x1024xbf16, #tpu.memory_space<vmem>>, vector<128x1024xbf16>
    %cst_30 = arith.constant dense<0.000000e+00> : vector<2x1024xf32>
    %46 = tpu.matmul %44, %45, %cst_30 {dimension_numbers = #tpu.dot_dimension_numbers<[1], [0], [0], [1], [0, 0, 1, 1], [], []>} : vector<2x128xbf16>, vector<128x1024xbf16>, vector<2x1024xf32> -> vector<2x1024xf32>
    %c0_31 = arith.constant 0 : index
    %c0_32 = arith.constant 0 : index
    %47 = vector.load %arg8[%c0_31, %c0_32] : memref<1x1024xf32, #tpu.memory_space<vmem>>, vector<1x1024xf32>
    %48 = vector.broadcast %47 : vector<1x1024xf32> to vector<2x1024xf32>
    %49 = arith.addf %46, %48 : vector<2x1024xf32>
    %cst_33 = arith.constant 0.000000e+00 : f32
    %50 = vector.broadcast %cst_33 : f32 to vector<2x1024xf32>
    %51 = arith.maximumf %49, %50 : vector<2x1024xf32>
    %cst_34 = arith.constant dense<0.000000e+00> : vector<1024xf32>
    %52 = vector.multi_reduction <add>, %51, %cst_34 [0] : vector<2x1024xf32> to vector<1024xf32>
    %53 = vector.shape_cast %52 : vector<1024xf32> to vector<1x1024xf32>
    %cst_35 = arith.constant 2.000000e+00 : f32
    %54 = vector.broadcast %cst_35 : f32 to vector<1x1024xf32>
    %55 = arith.divf %53, %54 : vector<1x1024xf32>
    %56 = vector.broadcast %55 : vector<1x1024xf32> to vector<2x1024xf32>
    %57 = arith.subf %51, %56 : vector<2x1024xf32>
    %58 = arith.mulf %57, %57 : vector<2x1024xf32>
    %cst_36 = arith.constant dense<0.000000e+00> : vector<1024xf32>
    %59 = vector.multi_reduction <add>, %58, %cst_36 [0] : vector<2x1024xf32> to vector<1024xf32>
    %60 = vector.shape_cast %59 : vector<1024xf32> to vector<1x1024xf32>
    %cst_37 = arith.constant 2.000000e+00 : f32
    %61 = vector.broadcast %cst_37 : f32 to vector<1x1024xf32>
    %62 = arith.divf %60, %61 : vector<1x1024xf32>
    %63 = vector.broadcast %55 : vector<1x1024xf32> to vector<2x1024xf32>
    %64 = arith.subf %51, %63 : vector<2x1024xf32>
    %cst_38 = arith.constant 9.99999974E-6 : f32
    %65 = vector.broadcast %cst_38 : f32 to vector<1x1024xf32>
    %66 = arith.addf %62, %65 : vector<1x1024xf32>
    %67 = math.rsqrt %66 : vector<1x1024xf32>
    %68 = vector.broadcast %67 : vector<1x1024xf32> to vector<2x1024xf32>
    %69 = arith.mulf %64, %68 : vector<2x1024xf32>
    %c0_39 = arith.constant 0 : index
    %c0_40 = arith.constant 0 : index
    %70 = vector.load %arg9[%c0_39, %c0_40] : memref<1x1024xf32, #tpu.memory_space<vmem>>, vector<1x1024xf32>
    %71 = vector.broadcast %70 : vector<1x1024xf32> to vector<2x1024xf32>
    %72 = arith.mulf %69, %71 : vector<2x1024xf32>
    %c0_41 = arith.constant 0 : index
    %c0_42 = arith.constant 0 : index
    %73 = vector.load %arg10[%c0_41, %c0_42] : memref<1x1024xf32, #tpu.memory_space<vmem>>, vector<1x1024xf32>
    %74 = vector.broadcast %73 : vector<1x1024xf32> to vector<2x1024xf32>
    %75 = arith.addf %72, %74 : vector<2x1024xf32>
    %76 = arith.truncf %75 : vector<2x1024xf32> to vector<2x1024xbf16>
    %c0_43 = arith.constant 0 : index
    %c0_44 = arith.constant 0 : index
    %77 = vector.load %arg11[%c0_43, %c0_44] : memref<1024x1024xbf16, #tpu.memory_space<vmem>>, vector<1024x1024xbf16>
    %cst_45 = arith.constant dense<0.000000e+00> : vector<2x1024xf32>
    %78 = tpu.matmul %76, %77, %cst_45 {dimension_numbers = #tpu.dot_dimension_numbers<[1], [0], [0], [1], [0, 0, 1, 1], [], []>} : vector<2x1024xbf16>, vector<1024x1024xbf16>, vector<2x1024xf32> -> vector<2x1024xf32>
    %c0_46 = arith.constant 0 : index
    %c0_47 = arith.constant 0 : index
    %79 = vector.load %arg12[%c0_46, %c0_47] : memref<1x1024xf32, #tpu.memory_space<vmem>>, vector<1x1024xf32>
    %80 = vector.broadcast %79 : vector<1x1024xf32> to vector<2x1024xf32>
    %81 = arith.addf %78, %80 : vector<2x1024xf32>
    %cst_48 = arith.constant 0.000000e+00 : f32
    %82 = vector.broadcast %cst_48 : f32 to vector<2x1024xf32>
    %83 = arith.maximumf %81, %82 : vector<2x1024xf32>
    %cst_49 = arith.constant dense<0.000000e+00> : vector<1024xf32>
    %84 = vector.multi_reduction <add>, %83, %cst_49 [0] : vector<2x1024xf32> to vector<1024xf32>
    %85 = vector.shape_cast %84 : vector<1024xf32> to vector<1x1024xf32>
    %cst_50 = arith.constant 2.000000e+00 : f32
    %86 = vector.broadcast %cst_50 : f32 to vector<1x1024xf32>
    %87 = arith.divf %85, %86 : vector<1x1024xf32>
    %88 = vector.broadcast %87 : vector<1x1024xf32> to vector<2x1024xf32>
    %89 = arith.subf %83, %88 : vector<2x1024xf32>
    %90 = arith.mulf %89, %89 : vector<2x1024xf32>
    %cst_51 = arith.constant dense<0.000000e+00> : vector<1024xf32>
    %91 = vector.multi_reduction <add>, %90, %cst_51 [0] : vector<2x1024xf32> to vector<1024xf32>
    %92 = vector.shape_cast %91 : vector<1024xf32> to vector<1x1024xf32>
    %cst_52 = arith.constant 2.000000e+00 : f32
    %93 = vector.broadcast %cst_52 : f32 to vector<1x1024xf32>
    %94 = arith.divf %92, %93 : vector<1x1024xf32>
    %95 = vector.broadcast %87 : vector<1x1024xf32> to vector<2x1024xf32>
    %96 = arith.subf %83, %95 : vector<2x1024xf32>
    %cst_53 = arith.constant 9.99999974E-6 : f32
    %97 = vector.broadcast %cst_53 : f32 to vector<1x1024xf32>
    %98 = arith.addf %94, %97 : vector<1x1024xf32>
    %99 = math.rsqrt %98 : vector<1x1024xf32>
    %100 = vector.broadcast %99 : vector<1x1024xf32> to vector<2x1024xf32>
    %101 = arith.mulf %96, %100 : vector<2x1024xf32>
    %c0_54 = arith.constant 0 : index
    %c0_55 = arith.constant 0 : index
    %102 = vector.load %arg13[%c0_54, %c0_55] : memref<1x1024xf32, #tpu.memory_space<vmem>>, vector<1x1024xf32>
    %103 = vector.broadcast %102 : vector<1x1024xf32> to vector<2x1024xf32>
    %104 = arith.mulf %101, %103 : vector<2x1024xf32>
    %c0_56 = arith.constant 0 : index
    %c0_57 = arith.constant 0 : index
    %105 = vector.load %arg14[%c0_56, %c0_57] : memref<1x1024xf32, #tpu.memory_space<vmem>>, vector<1x1024xf32>
    %106 = vector.broadcast %105 : vector<1x1024xf32> to vector<2x1024xf32>
    %107 = arith.addf %104, %106 : vector<2x1024xf32>
    %108 = arith.truncf %107 : vector<2x1024xf32> to vector<2x1024xbf16>
    %c0_58 = arith.constant 0 : index
    %c0_59 = arith.constant 0 : index
    %109 = vector.load %arg15[%c0_58, %c0_59] : memref<1024x256xbf16, #tpu.memory_space<vmem>>, vector<1024x256xbf16>
    %cst_60 = arith.constant dense<0.000000e+00> : vector<2x256xf32>
    %110 = tpu.matmul %108, %109, %cst_60 {dimension_numbers = #tpu.dot_dimension_numbers<[1], [0], [0], [1], [0, 0, 1, 1], [], []>} : vector<2x1024xbf16>, vector<1024x256xbf16>, vector<2x256xf32> -> vector<2x256xf32>
    %c0_61 = arith.constant 0 : index
    %c0_62 = arith.constant 0 : index
    %111 = vector.load %arg16[%c0_61, %c0_62] : memref<1x256xf32, #tpu.memory_space<vmem>>, vector<1x256xf32>
    %112 = vector.broadcast %111 : vector<1x256xf32> to vector<2x256xf32>
    %113 = arith.addf %110, %112 : vector<2x256xf32>
    %cst_63 = arith.constant 0.000000e+00 : f32
    %114 = vector.broadcast %cst_63 : f32 to vector<2x256xf32>
    %115 = arith.maximumf %113, %114 : vector<2x256xf32>
    %cst_64 = arith.constant dense<0.000000e+00> : vector<256xf32>
    %116 = vector.multi_reduction <add>, %115, %cst_64 [0] : vector<2x256xf32> to vector<256xf32>
    %117 = vector.shape_cast %116 : vector<256xf32> to vector<1x256xf32>
    %cst_65 = arith.constant 2.000000e+00 : f32
    %118 = vector.broadcast %cst_65 : f32 to vector<1x256xf32>
    %119 = arith.divf %117, %118 : vector<1x256xf32>
    %120 = vector.broadcast %119 : vector<1x256xf32> to vector<2x256xf32>
    %121 = arith.subf %115, %120 : vector<2x256xf32>
    %122 = arith.mulf %121, %121 : vector<2x256xf32>
    %cst_66 = arith.constant dense<0.000000e+00> : vector<256xf32>
    %123 = vector.multi_reduction <add>, %122, %cst_66 [0] : vector<2x256xf32> to vector<256xf32>
    %124 = vector.shape_cast %123 : vector<256xf32> to vector<1x256xf32>
    %cst_67 = arith.constant 2.000000e+00 : f32
    %125 = vector.broadcast %cst_67 : f32 to vector<1x256xf32>
    %126 = arith.divf %124, %125 : vector<1x256xf32>
    %127 = vector.broadcast %119 : vector<1x256xf32> to vector<2x256xf32>
    %128 = arith.subf %115, %127 : vector<2x256xf32>
    %cst_68 = arith.constant 9.99999974E-6 : f32
    %129 = vector.broadcast %cst_68 : f32 to vector<1x256xf32>
    %130 = arith.addf %126, %129 : vector<1x256xf32>
    %131 = math.rsqrt %130 : vector<1x256xf32>
    %132 = vector.broadcast %131 : vector<1x256xf32> to vector<2x256xf32>
    %133 = arith.mulf %128, %132 : vector<2x256xf32>
    %c0_69 = arith.constant 0 : index
    %c0_70 = arith.constant 0 : index
    %134 = vector.load %arg17[%c0_69, %c0_70] : memref<1x256xf32, #tpu.memory_space<vmem>>, vector<1x256xf32>
    %135 = vector.broadcast %134 : vector<1x256xf32> to vector<2x256xf32>
    %136 = arith.mulf %133, %135 : vector<2x256xf32>
    %c0_71 = arith.constant 0 : index
    %c0_72 = arith.constant 0 : index
    %137 = vector.load %arg18[%c0_71, %c0_72] : memref<1x256xf32, #tpu.memory_space<vmem>>, vector<1x256xf32>
    %138 = vector.broadcast %137 : vector<1x256xf32> to vector<2x256xf32>
    %139 = arith.addf %136, %138 : vector<2x256xf32>
    %140 = arith.truncf %139 : vector<2x256xf32> to vector<2x256xbf16>
    %c0_73 = arith.constant 0 : index
    %c0_74 = arith.constant 0 : index
    %141 = vector.load %arg19[%c0_73, %c0_74] : memref<256x1xbf16, #tpu.memory_space<vmem>>, vector<256x1xbf16>
    %cst_75 = arith.constant dense<0.000000e+00> : vector<2x1xf32>
    %142 = tpu.matmul %140, %141, %cst_75 {dimension_numbers = #tpu.dot_dimension_numbers<[1], [0], [0], [1], [0, 0, 1, 1], [], []>} : vector<2x256xbf16>, vector<256x1xbf16>, vector<2x1xf32> -> vector<2x1xf32>
    %c0_76 = arith.constant 0 : index
    %c0_77 = arith.constant 0 : index
    %143 = vector.load %arg20[%c0_76, %c0_77] : memref<1x1xf32, #tpu.memory_space<vmem>>, vector<1x1xf32>
    %144 = vector.broadcast %143 : vector<1x1xf32> to vector<2x1xf32>
    %145 = arith.addf %142, %144 : vector<2x1xf32>
    %c0_78 = arith.constant 0 : index
    %c0_79 = arith.constant 0 : index
    %146 = vector.load %arg21[%c0_78, %c0_79] : memref<2x1xf32, #tpu.memory_space<vmem>>, vector<2x1xf32>
    tpu.vector_store %arg21[%c0_78, %c0_79], %145 {strides = array<i32>} : memref<2x1xf32, #tpu.memory_space<vmem>>, vector<2x1xf32>,
    return
  }
}

</mosaic_0001>

<llo_original>
// kernel: model_forward.6
$region0: #{model_forward.6}
  #allocation0 [shape = 'u32[]', space=smem, size = 0x4, offset = 0x4, fixed_abs, tag = 'smem constant byte address 0x4 - core index']
  #allocation1 [shape = 'u32[144,128]{1,0:T(1,128)}', space=vmem, size = 0x12000, scoped, tag = 'internal scratch']
  %s0 = inlined_call_operand.vmem [shape: f32[16,128], index: 0, kind: input, shape index: {}]
  %s1 = inlined_call_operand.vmem [shape: f32[2,128], index: 1, kind: input, shape index: {}]
  %s2 = inlined_call_operand.hbm [shape: f32[1,128], index: 2, kind: input, shape index: {}]
  %s3 = inlined_call_operand.hbm [shape: f32[1,128], index: 3, kind: input, shape index: {}]
  %s4 = inlined_call_operand.hbm [shape: bf16[128,128], index: 4, kind: input, shape index: {}]
  %s5 = inlined_call_operand.hbm [shape: bf16[128,128], index: 5, kind: input, shape index: {}]
  %s6 = inlined_call_operand.vmem [shape: f32[16,128], index: 6, kind: output, shape index: {0}]
  %s7 = inlined_call_operand.vmem [shape: f32[16,128], index: 7, kind: output, shape index: {1}]
  %8 = xla_tuple %s6, %s7
  %s9 = sld [smem:[#allocation0]]
  $region58: #{model_forward.6} parent=0
    _
  %s11 = ssub.s32 1, %s9
  %s12 = scalar_select 0, %s11, %s9
  $region1: #{model_forward.6} parent=0
    #allocation2 [shape = 'u8[512]{0}', space=vmem, size = 0x400, scoped, tag = 'input window, operand 2, single buffered']
    #allocation3 [shape = 's32[1]{0}', space=sflag, size = 0x4, scoped, tag = 'scoped memory for model_forward.6']
    #allocation4 [shape = 'u8[512]{0}', space=vmem, size = 0x400, scoped, tag = 'input window, operand 3, single buffered']
    #allocation5 [shape = 's32[1]{0}', space=sflag, size = 0x4, scoped, tag = 'scoped memory for model_forward.6']
    #allocation6 [shape = 'u8[32768]{0}', space=vmem, size = 0x8000, scoped, tag = 'input window, operand 4, single buffered']
    #allocation7 [shape = 'u8[32768]{0}', space=vmem, size = 0x8000, scoped, tag = 'input window, operand 5, single buffered']
    #allocation8 [shape = 's32[1]{0}', space=sflag, size = 0x4, scoped, tag = 'scoped memory for model_forward.6']
    %13 = vsyncpa [#allocation3], 0
    %14 = vsyncpa [#allocation5], 0
    %15 = vsyncpa [#allocation8], 0
    // Predicated region
    $region2: #{model_forward.6} parent=1 // pred_check
      _
    $region3: #{model_forward.6} parent=1 // pred_check_branch
      %17 = sbr.rel (0) target = $region5
    $region4: #{model_forward.6} parent=1 // pred_region
      _
    $region5: #{model_forward.6} parent=1 // pred_fallthru
      _
    // Predicated region
    $region6: #{model_forward.6} parent=1 // pred_check
      _
    $region7: #{model_forward.6} parent=1 // pred_check_branch
      %19 = sbr.rel (0) target = $region9
    $region8: #{model_forward.6} parent=1 // pred_region
      _
    $region9: #{model_forward.6} parent=1 // pred_fallthru
      _
    // Predicated region
    $region10: #{model_forward.6} parent=1 // pred_check
      _
    $region11: #{model_forward.6} parent=1 // pred_check_branch
      %21 = sbr.rel (0) target = $region13
    $region12: #{model_forward.6} parent=1 // pred_region
      %s23 = ssub.s32 16, 16
      %24 = vsyncadd [#allocation3], %s23
      %s26 = sshll.u32 [#allocation2], 4
      %s27 = int_to_ptr.vmem [resolvable:$true] %s26
      %29 = dma.hbm_to_vmem [thread:$0]  %s2, 16, %s27, [#allocation3]
    $region13: #{model_forward.6} parent=1 // pred_fallthru
      _
    // Predicated region
    $region14: #{model_forward.6} parent=1 // pred_check
      _
    $region15: #{model_forward.6} parent=1 // pred_check_branch
      %31 = sbr.rel (0) target = $region17
    $region16: #{model_forward.6} parent=1 // pred_region
      %s33 = ssub.s32 16, 16
      %34 = vsyncadd [#allocation5], %s33
      %s36 = sshll.u32 [#allocation4], 4
      %s37 = int_to_ptr.vmem [resolvable:$true] %s36
      %39 = dma.hbm_to_vmem [thread:$0]  %s3, 16, %s37, [#allocation5]
    $region17: #{model_forward.6} parent=1 // pred_fallthru
      _
    // Predicated region
    $region18: #{model_forward.6} parent=1 // pred_check
      _
    $region19: #{model_forward.6} parent=1 // pred_check_branch
      %41 = sbr.rel (0) target = $region21
    $region20: #{model_forward.6} parent=1 // pred_region
      %s43 = ssub.s32 1024, 1024
      %44 = vsyncadd [#allocation5], %s43
      %s45 = sshll.u32 [#allocation6], 4
      %s46 = int_to_ptr.vmem [resolvable:$true] %s45
      %51 = dma.hbm_to_vmem [thread:$0]  %s4, 1024, %s46, [#allocation5], 64, 64, 4
    $region21: #{model_forward.6} parent=1 // pred_fallthru
      _
    // Predicated region
    $region22: #{model_forward.6} parent=1 // pred_check
      _
    $region23: #{model_forward.6} parent=1 // pred_check_branch
      %53 = sbr.rel (0) target = $region25
    $region24: #{model_forward.6} parent=1 // pred_region
      %s55 = ssub.s32 1024, 1024
      %56 = vsyncadd [#allocation8], %s55
      %s57 = sshll.u32 [#allocation7], 4
      %s58 = int_to_ptr.vmem [resolvable:$true] %s57
      %63 = dma.hbm_to_vmem [thread:$0]  %s5, 1024, %s58, [#allocation8], 64, 64, 4
    $region25: #{model_forward.6} parent=1 // pred_fallthru
      _
    // Predicated region
    $region26: #{model_forward.6} parent=1 // pred_check
      _
    $region27: #{model_forward.6} parent=1 // pred_check_branch
      %65 = sbr.rel (0) target = $region29
    $region28: #{model_forward.6} parent=1 // pred_region
      %66 = dma.done [#allocation3], 16
    $region29: #{model_forward.6} parent=1 // pred_fallthru
      _
    // Predicated region
    $region30: #{model_forward.6} parent=1 // pred_check
      _
    $region31: #{model_forward.6} parent=1 // pred_check_branch
      %68 = sbr.rel (0) target = $region33
    $region32: #{model_forward.6} parent=1 // pred_region
      %69 = dma.done [#allocation5], 16
    $region33: #{model_forward.6} parent=1 // pred_fallthru
      _
    // Predicated region
    $region34: #{model_forward.6} parent=1 // pred_check
      _
    $region35: #{model_forward.6} parent=1 // pred_check_branch
      %71 = sbr.rel (0) target = $region37
    $region36: #{model_forward.6} parent=1 // pred_region
      %72 = dma.done [#allocation5], 1024
    $region37: #{model_forward.6} parent=1 // pred_fallthru
      _
    // Predicated region
    $region38: #{model_forward.6} parent=1 // pred_check
      _
    $region39: #{model_forward.6} parent=1 // pred_check_branch
      %74 = sbr.rel (0) target = $region41
    $region40: #{model_forward.6} parent=1 // pred_region
      %75 = dma.done [#allocation8], 1024
    $region41: #{model_forward.6} parent=1 // pred_fallthru
      _
    %v77 = vld [vmem:[%s1] sm:$0x3]
    %v78 = vmul.f32 %v77, 0.0625
    %v79 = vmul.f32 %v78, %v78
    %v81 = vrot.slane %v79, 7
    %v83 = vsub.f32 %v78, %v81
    %v84 = vld [vmem:[%s0] sm:$0xff]
    %v85 = vld [vmem:[%s0 + $0x8] sm:$0xff]
    %v86 = vlaneseq
    %v87 = vshrl.u32 %v86, 7
    %v88 = vsub.s32 0, %v87
    %v89 = vrot.slane %v78, %v88
    %v90 = vsub.f32 %v84, %v89
    %v91 = vsub.f32 %v85, %v89
    %v92 = vadd.f32 %v83, 1e-05
    %v93 = vrsqrt.pop %v92
    %v94 = vlaneseq
    %v95 = vshrl.u32 %v94, 7
    %v96 = vsub.s32 1, %v95
    %v97 = vrot.slane %v93, %v96
    %v98 = vmul.f32 %v90, %v97
    %v99 = vmul.f32 %v91, %v97
    %v100 = vld [vmem:[#allocation2] sm:$0x1]
    %v102 = vlaneseq
    %v103 = vshrl.u32 %v102, 7
    %v104 = vsub.s32 0, %v103
    %v105 = vrot.slane %v100, %v104
    %v107 = vmul.f32 %v98, %v105
    %v108 = vmul.f32 %v99, %v105
    %v109 = vld [vmem:[#allocation4] sm:$0x1]
    %v111 = vlaneseq
    %v112 = vshrl.u32 %v111, 7
    %v113 = vsub.s32 0, %v112
    %v114 = vrot.slane %v109, %v113
    %v116 = vadd.f32 %v107, %v114
    %v117 = vadd.f32 %v108, %v114
    %v118 = vpack.c.bf16 %v117, %v116
    %v119 = vld [vmem:[#allocation6] sm:$0xf]
    %v120 = vld [vmem:[#allocation6 + $0x4] sm:$0xf]
    %v121 = vld [vmem:[#allocation6 + $0x8] sm:$0xf]
    %v122 = vld [vmem:[#allocation6 + $0xc] sm:$0xf]
    %v123 = vld [vmem:[#allocation6 + $0x10] sm:$0xf]
    %v124 = vld [vmem:[#allocation6 + $0x14] sm:$0xf]
    %v125 = vld [vmem:[#allocation6 + $0x18] sm:$0xf]
    %v126 = vld [vmem:[#allocation6 + $0x1c] sm:$0xf]
    %v127 = vld [vmem:[#allocation6 + $0x20] sm:$0xf]
    %v128 = vld [vmem:[#allocation6 + $0x24] sm:$0xf]
    %v129 = vld [vmem:[#allocation6 + $0x28] sm:$0xf]
    %v130 = vld [vmem:[#allocation6 + $0x2c] sm:$0xf]
    %v131 = vld [vmem:[#allocation6 + $0x30] sm:$0xf]
    %v132 = vld [vmem:[#allocation6 + $0x34] sm:$0xf]
    %v133 = vld [vmem:[#allocation6 + $0x38] sm:$0xf]
    %v134 = vld [vmem:[#allocation6 + $0x3c] sm:$0xf]
    %v151 = vunpack.c.l.b16 %v119
    %v152 = vunpack.c.l.b16 %v120
    %v153 = vunpack.c.l.b16 %v121
    %v154 = vunpack.c.l.b16 %v122
    %v155 = vunpack.c.l.b16 %v123
    %v156 = vunpack.c.l.b16 %v124
    %v157 = vunpack.c.l.b16 %v125
    %v158 = vunpack.c.l.b16 %v126
    %v159 = vunpack.c.l.b16 %v127
    %v160 = vunpack.c.l.b16 %v128
    %v161 = vunpack.c.l.b16 %v129
    %v162 = vunpack.c.l.b16 %v130
    %v163 = vunpack.c.l.b16 %v131
    %v164 = vunpack.c.l.b16 %v132
    %v165 = vunpack.c.l.b16 %v133
    %v166 = vunpack.c.l.b16 %v134
    %v167 = vpack.c.b16 %v152, %v151
    %v168 = vpack.c.b16 %v154, %v153
    %v169 = vpack.c.b16 %v156, %v155
    %v170 = vpack.c.b16 %v158, %v157
    %v171 = vpack.c.b16 %v160, %v159
    %v172 = vpack.c.b16 %v162, %v161
    %v173 = vpack.c.b16 %v164, %v163
    %v174 = vpack.c.b16 %v166, %v165
    %183 = vmatprep.subr.bf16.mxu0 0
    %184 = vmatpush1.bf16.msra.mxu0 %v167
    %185 = vmatprep.subr.bf16.mxu0 0
    %186 = vmatpush1.bf16.msra.mxu0 %v168
    %187 = vmatprep.subr.bf16.mxu0 0
    %188 = vmatpush1.bf16.msra.mxu0 %v169
    %189 = vmatprep.subr.bf16.mxu0 0
    %190 = vmatpush1.bf16.msra.mxu0 %v170
    %191 = vmatprep.subr.bf16.mxu0 0
    %192 = vmatpush1.bf16.msra.mxu0 %v171
    %193 = vmatprep.subr.bf16.mxu0 0
    %194 = vmatpush1.bf16.msra.mxu0 %v172
    %195 = vmatprep.subr.bf16.mxu0 0
    %196 = vmatpush1.bf16.msra.mxu0 %v173
    %197 = vmatprep.subr.bf16.mxu0 0
    %198 = vmatpush1.bf16.msra.mxu0 %v174
    %199 = vmatprep.subr.bf16.mxu0 0
    %200 = vmatpush1.bf16.msra.mxu0 0
    %201 = vmatprep.subr.bf16.mxu0 0
    %202 = vmatpush1.bf16.msra.mxu0 0
    %203 = vmatprep.subr.bf16.mxu0 0
    %204 = vmatpush1.bf16.msra.mxu0 0
    %205 = vmatprep.subr.bf16.mxu0 0
    %206 = vmatpush1.bf16.msra.mxu0 0
    %207 = vmatprep.subr.bf16.mxu0 0
    %208 = vmatpush1.bf16.msra.mxu0 0
    %209 = vmatprep.subr.bf16.mxu0 0
    %210 = vmatpush1.bf16.msra.mxu0 0
    %211 = vmatprep.subr.bf16.mxu0 0
    %212 = vmatpush1.bf16.msra.mxu0 0
    %213 = vmatprep.subr.bf16.mxu0 0
    %214 = vmatpush1.bf16.msra.mxu0 0
    %215 = vmatprep.mubr.bf16.mxu0 0
    %216 = vmatmul.mubr.bf16.gmra.mrb[0].mxu0 %v118
    %v217 = vpop.f32.mrb[0].mxu0
    %v218 = vadd.f32 0.0, %v217
    %v219 = vpop.f32.mrb[0].mxu0
    %v220 = vpop.f32.mrb[0].mxu0
    %v221 = vadd.f32 0.0, %v220
    %v222 = vpop.f32.mrb[0].mxu0
    %223 = vdwg.mxu0
    %224 = vst [vmem:[%s6] sm:$0xff] %v218
    %225 = vst [vmem:[%s6 + $0x8] sm:$0xff] %v221
    %v226 = vld [vmem:[#allocation7] sm:$0xf]
    %v227 = vld [vmem:[#allocation7 + $0x4] sm:$0xf]
    %v228 = vld [vmem:[#allocation7 + $0x8] sm:$0xf]
    %v229 = vld [vmem:[#allocation7 + $0xc] sm:$0xf]
    %v230 = vld [vmem:[#allocation7 + $0x10] sm:$0xf]
    %v231 = vld [vmem:[#allocation7 + $0x14] sm:$0xf]
    %v232 = vld [vmem:[#allocation7 + $0x18] sm:$0xf]
    %v233 = vld [vmem:[#allocation7 + $0x1c] sm:$0xf]
    %v234 = vld [vmem:[#allocation7 + $0x20] sm:$0xf]
    %v235 = vld [vmem:[#allocation7 + $0x24] sm:$0xf]
    %v236 = vld [vmem:[#allocation7 + $0x28] sm:$0xf]
    %v237 = vld [vmem:[#allocation7 + $0x2c] sm:$0xf]
    %v238 = vld [vmem:[#allocation7 + $0x30] sm:$0xf]
    %v239 = vld [vmem:[#allocation7 + $0x34] sm:$0xf]
    %v240 = vld [vmem:[#allocation7 + $0x38] sm:$0xf]
    %v241 = vld [vmem:[#allocation7 + $0x3c] sm:$0xf]
    %v258 = vunpack.c.l.b16 %v226
    %v259 = vunpack.c.l.b16 %v227
    %v260 = vunpack.c.l.b16 %v228
    %v261 = vunpack.c.l.b16 %v229
    %v262 = vunpack.c.l.b16 %v230
    %v263 = vunpack.c.l.b16 %v231
    %v264 = vunpack.c.l.b16 %v232
    %v265 = vunpack.c.l.b16 %v233
    %v266 = vunpack.c.l.b16 %v234
    %v267 = vunpack.c.l.b16 %v235
    %v268 = vunpack.c.l.b16 %v236
    %v269 = vunpack.c.l.b16 %v237
    %v270 = vunpack.c.l.b16 %v238
    %v271 = vunpack.c.l.b16 %v239
    %v272 = vunpack.c.l.b16 %v240
    %v273 = vunpack.c.l.b16 %v241
    %v274 = vpack.c.b16 %v259, %v258
    %v275 = vpack.c.b16 %v261, %v260
    %v276 = vpack.c.b16 %v263, %v262
    %v277 = vpack.c.b16 %v265, %v264
    %v278 = vpack.c.b16 %v267, %v266
    %v279 = vpack.c.b16 %v269, %v268
    %v280 = vpack.c.b16 %v271, %v270
    %v281 = vpack.c.b16 %v273, %v272
    %290 = vmatprep.subr.bf16.mxu0 0
    %291 = vmatpush1.bf16.msra.mxu0 %v274
    %292 = vmatprep.subr.bf16.mxu0 0
    %293 = vmatpush1.bf16.msra.mxu0 %v275
    %294 = vmatprep.subr.bf16.mxu0 0
    %295 = vmatpush1.bf16.msra.mxu0 %v276
    %296 = vmatprep.subr.bf16.mxu0 0
    %297 = vmatpush1.bf16.msra.mxu0 %v277
    %298 = vmatprep.subr.bf16.mxu0 0
    %299 = vmatpush1.bf16.msra.mxu0 %v278
    %300 = vmatprep.subr.bf16.mxu0 0
    %301 = vmatpush1.bf16.msra.mxu0 %v279
    %302 = vmatprep.subr.bf16.mxu0 0
    %303 = vmatpush1.bf16.msra.mxu0 %v280
    %304 = vmatprep.subr.bf16.mxu0 0
    %305 = vmatpush1.bf16.msra.mxu0 %v281
    %306 = vmatprep.subr.bf16.mxu0 0
    %307 = vmatpush1.bf16.msra.mxu0 0
    %308 = vmatprep.subr.bf16.mxu0 0
    %309 = vmatpush1.bf16.msra.mxu0 0
    %310 = vmatprep.subr.bf16.mxu0 0
    %311 = vmatpush1.bf16.msra.mxu0 0
    %312 = vmatprep.subr.bf16.mxu0 0
    %313 = vmatpush1.bf16.msra.mxu0 0
    %314 = vmatprep.subr.bf16.mxu0 0
    %315 = vmatpush1.bf16.msra.mxu0 0
    %316 = vmatprep.subr.bf16.mxu0 0
    %317 = vmatpush1.bf16.msra.mxu0 0
    %318 = vmatprep.subr.bf16.mxu0 0
    %319 = vmatpush1.bf16.msra.mxu0 0
    %320 = vmatprep.subr.bf16.mxu0 0
    %321 = vmatpush1.bf16.msra.mxu0 0
    %322 = vmatprep.mubr.bf16.mxu0 0
    %323 = vmatmul.mubr.bf16.gmra.mrb[0].mxu0 %v118
    %v324 = vpop.f32.mrb[0].mxu0
    %v325 = vadd.f32 0.0, %v324
    %v326 = vpop.f32.mrb[0].mxu0
    %v327 = vpop.f32.mrb[0].mxu0
    %v328 = vadd.f32 0.0, %v327
    %v329 = vpop.f32.mrb[0].mxu0
    %330 = vdwg.mxu0
    %331 = vst [vmem:[%s7] sm:$0xff] %v325
    %332 = vst [vmem:[%s7 + $0x8] sm:$0xff] %v328
    // Predicated region
    $region42: #{model_forward.6} parent=1 // pred_check
      _
    $region43: #{model_forward.6} parent=1 // pred_check_branch
      %334 = sbr.rel (0) target = $region45
    $region44: #{model_forward.6} parent=1 // pred_region
      _
    $region45: #{model_forward.6} parent=1 // pred_fallthru
      _
    // Predicated region
    $region46: #{model_forward.6} parent=1 // pred_check
      _
    $region47: #{model_forward.6} parent=1 // pred_check_branch
      %336 = sbr.rel (0) target = $region49
    $region48: #{model_forward.6} parent=1 // pred_region
      _
    $region49: #{model_forward.6} parent=1 // pred_fallthru
      _
    // Predicated region
    $region50: #{model_forward.6} parent=1 // pred_check
      _
    $region51: #{model_forward.6} parent=1 // pred_check_branch
      %338 = sbr.rel (0) target = $region53
    $region52: #{model_forward.6} parent=1 // pred_region
      _
    $region53: #{model_forward.6} parent=1 // pred_fallthru
      _
    // Predicated region
    $region54: #{model_forward.6} parent=1 // pred_check
      _
    $region55: #{model_forward.6} parent=1 // pred_check_branch
      %340 = sbr.rel (0) target = $region57
    $region56: #{model_forward.6} parent=1 // pred_region
      _
    $region57: #{model_forward.6} parent=1 // pred_fallthru
      _
    %341 = vsyncpa [#allocation3], 1
    %342 = vsyncpa [#allocation5], 1
    %343 = vsyncpa [#allocation8], 1

// kernel: model_forward.5
$region0: #{model_forward.5}
  #allocation0 [shape = 'u32[]', space=smem, size = 0x4, offset = 0x4, fixed_abs, tag = 'smem constant byte address 0x4 - core index']
  #allocation1 [shape = 'u32[144,128]{1,0:T(1,128)}', space=vmem, size = 0x12000, scoped, tag = 'internal scratch']
  %s0 = inlined_call_operand.vmem [shape: bf16[16,1024], index: 0, kind: input, shape index: {}]
  %s1 = inlined_call_operand.hbm [shape: bf16[1024,128], index: 1, kind: input, shape index: {}]
  %s2 = inlined_call_operand.hbm [shape: f32[1,128], index: 2, kind: input, shape index: {}]
  %s3 = inlined_call_operand.vmem [shape: f32[16,128], index: 3, kind: output, shape index: {0}]
  %s4 = inlined_call_operand.vmem [shape: f32[2,128], index: 4, kind: output, shape index: {1}]
  %5 = xla_tuple %s3, %s4
  %s6 = sld [smem:[#allocation0]]
  $region42: #{model_forward.5} parent=0
    _
  %s8 = ssub.s32 1, %s6
  %s9 = scalar_select 0, %s8, %s6
  $region1: #{model_forward.5} parent=0
    #allocation2 [shape = 'u8[262144]{0}', space=vmem, size = 0x40000, scoped, tag = 'input window, operand 1, single buffered']
    #allocation3 [shape = 's32[1]{0}', space=sflag, size = 0x4, scoped, tag = 'scoped memory for model_forward.5']
    #allocation4 [shape = 'u8[512]{0}', space=vmem, size = 0x400, scoped, tag = 'input window, operand 2, single buffered']
    #allocation5 [shape = 's32[1]{0}', space=sflag, size = 0x4, scoped, tag = 'scoped memory for model_forward.5']
    %10 = vsyncpa [#allocation3], 0
    %11 = vsyncpa [#allocation5], 0
    // Predicated region
    $region2: #{model_forward.5} parent=1 // pred_check
      _
    $region3: #{model_forward.5} parent=1 // pred_check_branch
      %13 = sbr.rel (0) target = $region5
    $region4: #{model_forward.5} parent=1 // pred_region
      _
    $region5: #{model_forward.5} parent=1 // pred_fallthru
      _
    // Predicated region
    $region6: #{model_forward.5} parent=1 // pred_check
      _
    $region7: #{model_forward.5} parent=1 // pred_check_branch
      %15 = sbr.rel (0) target = $region9
    $region8: #{model_forward.5} parent=1 // pred_region
      %s17 = ssub.s32 8192, 8192
      %18 = vsyncadd [#allocation3], %s17
      %s19 = sshll.u32 [#allocation2], 4
      %s20 = int_to_ptr.vmem [resolvable:$true] %s19
      %25 = dma.hbm_to_vmem [thread:$0]  %s1, 8192, %s20, [#allocation3], 64, 64, 4
    $region9: #{model_forward.5} parent=1 // pred_fallthru
      _
    // Predicated region
    $region10: #{model_forward.5} parent=1 // pred_check
      _
    $region11: #{model_forward.5} parent=1 // pred_check_branch
      %27 = sbr.rel (0) target = $region13
    $region12: #{model_forward.5} parent=1 // pred_region
      %s29 = ssub.s32 16, 16
      %30 = vsyncadd [#allocation5], %s29
      %s32 = sshll.u32 [#allocation4], 4
      %s33 = int_to_ptr.vmem [resolvable:$true] %s32
      %35 = dma.hbm_to_vmem [thread:$0]  %s2, 16, %s33, [#allocation5]
    $region13: #{model_forward.5} parent=1 // pred_fallthru
      _
    // Predicated region
    $region14: #{model_forward.5} parent=1 // pred_check
      _
    $region15: #{model_forward.5} parent=1 // pred_check_branch
      %37 = sbr.rel (0) target = $region17
    $region16: #{model_forward.5} parent=1 // pred_region
      %38 = dma.done [#allocation3], 8192
    $region17: #{model_forward.5} parent=1 // pred_fallthru
      _
    // Predicated region
    $region18: #{model_forward.5} parent=1 // pred_check
      _
    $region19: #{model_forward.5} parent=1 // pred_check_branch
      %40 = sbr.rel (0) target = $region21
    $region20: #{model_forward.5} parent=1 // pred_region
      %41 = dma.done [#allocation5], 16
    $region21: #{model_forward.5} parent=1 // pred_fallthru
      _
    %p43 = scmp.eq.s32.totalorder 0, 0
    // Predicated region
    $region22: #{model_forward.5} parent=1 // pred_check
      %p44 = pneg %p43
    $region23: #{model_forward.5} parent=1 // pred_check_branch
      %46 = sbr.rel (%p44) target = $region25
    $region24: #{model_forward.5} parent=1 // pred_region
      %47 = vst [vmem:[%s4] sm:$0x3] 0.0
    $region25: #{model_forward.5} parent=1 // pred_fallthru
      _
    %v48 = vld [vmem:[%s0] sm:$0xff]
    %v49 = vld [vmem:[%s0 + $0x8] sm:$0xff]
    %v50 = vld [vmem:[%s0 + $0x10] sm:$0xff]
    %v51 = vld [vmem:[%s0 + $0x18] sm:$0xff]
    %v52 = vld [vmem:[%s0 + $0x20] sm:$0xff]
    %v53 = vld [vmem:[%s0 + $0x28] sm:$0xff]
    %v54 = vld [vmem:[%s0 + $0x30] sm:$0xff]
    %v55 = vld [vmem:[%s0 + $0x38] sm:$0xff]
    %v56 = vld [vmem:[#allocation2] sm:$0xf]
    %v57 = vld [vmem:[#allocation2 + $0x4] sm:$0xf]
    %v58 = vld [vmem:[#allocation2 + $0x8] sm:$0xf]
    %v59 = vld [vmem:[#allocation2 + $0xc] sm:$0xf]
    %v60 = vld [vmem:[#allocation2 + $0x10] sm:$0xf]
    %v61 = vld [vmem:[#allocation2 + $0x14] sm:$0xf]
    %v62 = vld [vmem:[#allocation2 + $0x18] sm:$0xf]
    %v63 = vld [vmem:[#allocation2 + $0x1c] sm:$0xf]
    %v64 = vld [vmem:[#allocation2 + $0x20] sm:$0xf]
    %v65 = vld [vmem:[#allocation2 + $0x24] sm:$0xf]
    %v66 = vld [vmem:[#allocation2 + $0x28] sm:$0xf]
    %v67 = vld [vmem:[#allocation2 + $0x2c] sm:$0xf]
    %v68 = vld [vmem:[#allocation2 + $0x30] sm:$0xf]
    %v69 = vld [vmem:[#allocation2 + $0x34] sm:$0xf]
    %v70 = vld [vmem:[#allocation2 + $0x38] sm:$0xf]
    %v71 = vld [vmem:[#allocation2 + $0x3c] sm:$0xf]
    %v72 = vld [vmem:[#allocation2 + $0x40] sm:$0xf]
    %v73 = vld [vmem:[#allocation2 + $0x44] sm:$0xf]
    %v74 = vld [vmem:[#allocation2 + $0x48] sm:$0xf]
    %v75 = vld [vmem:[#allocation2 + $0x4c] sm:$0xf]
    %v76 = vld [vmem:[#allocation2 + $0x50] sm:$0xf]
    %v77 = vld [vmem:[#allocation2 + $0x54] sm:$0xf]
    %v78 = vld [vmem:[#allocation2 + $0x58] sm:$0xf]
    %v79 = vld [vmem:[#allocation2 + $0x5c] sm:$0xf]
    %v80 = vld [vmem:[#allocation2 + $0x60] sm:$0xf]
    %v81 = vld [vmem:[#allocation2 + $0x64] sm:$0xf]
    %v82 = vld [vmem:[#allocation2 + $0x68] sm:$0xf]
    %v83 = vld [vmem:[#allocation2 + $0x6c] sm:$0xf]
    %v84 = vld [vmem:[#allocation2 + $0x70] sm:$0xf]
    %v85 = vld [vmem:[#allocation2 + $0x74] sm:$0xf]
    %v86 = vld [vmem:[#allocation2 + $0x78] sm:$0xf]
    %v87 = vld [vmem:[#allocation2 + $0x7c] sm:$0xf]
    %v88 = vld [vmem:[#allocation2 + $0x80] sm:$0xf]
    %v89 = vld [vmem:[#allocation2 + $0x84] sm:$0xf]
    %v90 = vld [vmem:[#allocation2 + $0x88] sm:$0xf]
    %v91 = vld [vmem:[#allocation2 + $0x8c] sm:$0xf]
    %v92 = vld [vmem:[#allocation2 + $0x90] sm:$0xf]
    %v93 = vld [vmem:[#allocation2 + $0x94] sm:$0xf]
    %v94 = vld [vmem:[#allocation2 + $0x98] sm:$0xf]
    %v95 = vld [vmem:[#allocation2 + $0x9c] sm:$0xf]
    %v96 = vld [vmem:[#allocation2 + $0xa0] sm:$0xf]
    %v97 = vld [vmem:[#allocation2 + $0xa4] sm:$0xf]
    %v98 = vld [vmem:[#allocation2 + $0xa8] sm:$0xf]
    %v99 = vld [vmem:[#allocation2 + $0xac] sm:$0xf]
    %v100 = vld [vmem:[#allocation2 + $0xb0] sm:$0xf]
    %v101 = vld [vmem:[#allocation2 + $0xb4] sm:$0xf]
    %v102 = vld [vmem:[#allocation2 + $0xb8] sm:$0xf]
    %v103 = vld [vmem:[#allocation2 + $0xbc] sm:$0xf]
    %v104 = vld [vmem:[#allocation2 + $0xc0] sm:$0xf]
    %v105 = vld [vmem:[#allocation2 + $0xc4] sm:$0xf]
    %v106 = vld [vmem:[#allocation2 + $0xc8] sm:$0xf]
    %v107 = vld [vmem:[#allocation2 + $0xcc] sm:$0xf]
    %v108 = vld [vmem:[#allocation2 + $0xd0] sm:$0xf]
    %v109 = vld [vmem:[#allocation2 + $0xd4] sm:$0xf]
    %v110 = vld [vmem:[#allocation2 + $0xd8] sm:$0xf]
    %v111 = vld [vmem:[#allocation2 + $0xdc] sm:$0xf]
    %v112 = vld [vmem:[#allocation2 + $0xe0] sm:$0xf]
    %v113 = vld [vmem:[#allocation2 + $0xe4] sm:$0xf]
    %v114 = vld [vmem:[#allocation2 + $0xe8] sm:$0xf]
    %v115 = vld [vmem:[#allocation2 + $0xec] sm:$0xf]
    %v116 = vld [vmem:[#allocation2 + $0xf0] sm:$0xf]
    %v117 = vld [vmem:[#allocation2 + $0xf4] sm:$0xf]
    %v118 = vld [vmem:[#allocation2 + $0xf8] sm:$0xf]
    %v119 = vld [vmem:[#allocation2 + $0xfc] sm:$0xf]
    %v120 = vld [vmem:[#allocation2 + $0x100] sm:$0xf]
    %v121 = vld [vmem:[#allocation2 + $0x104] sm:$0xf]
    %v122 = vld [vmem:[#allocation2 + $0x108] sm:$0xf]
    %v123 = vld [vmem:[#allocation2 + $0x10c] sm:$0xf]
    %v124 = vld [vmem:[#allocation2 + $0x110] sm:$0xf]
    %v125 = vld [vmem:[#allocation2 + $0x114] sm:$0xf]
    %v126 = vld [vmem:[#allocation2 + $0x118] sm:$0xf]
    %v127 = vld [vmem:[#allocation2 + $0x11c] sm:$0xf]
    %v128 = vld [vmem:[#allocation2 + $0x120] sm:$0xf]
    %v129 = vld [vmem:[#allocation2 + $0x124] sm:$0xf]
    %v130 = vld [vmem:[#allocation2 + $0x128] sm:$0xf]
    %v131 = vld [vmem:[#allocation2 + $0x12c] sm:$0xf]
    %v132 = vld [vmem:[#allocation2 + $0x130] sm:$0xf]
    %v133 = vld [vmem:[#allocation2 + $0x134] sm:$0xf]
    %v134 = vld [vmem:[#allocation2 + $0x138] sm:$0xf]
    %v135 = vld [vmem:[#allocation2 + $0x13c] sm:$0xf]
    %v136 = vld [vmem:[#allocation2 + $0x140] sm:$0xf]
    %v137 = vld [vmem:[#allocation2 + $0x144] sm:$0xf]
    %v138 = vld [vmem:[#allocation2 + $0x148] sm:$0xf]
    %v139 = vld [vmem:[#allocation2 + $0x14c] sm:$0xf]
    %v140 = vld [vmem:[#allocation2 + $0x150] sm:$0xf]
    %v141 = vld [vmem:[#allocation2 + $0x154] sm:$0xf]
    %v142 = vld [vmem:[#allocation2 + $0x158] sm:$0xf]
    %v143 = vld [vmem:[#allocation2 + $0x15c] sm:$0xf]
    %v144 = vld [vmem:[#allocation2 + $0x160] sm:$0xf]
    %v145 = vld [vmem:[#allocation2 + $0x164] sm:$0xf]
    %v146 = vld [vmem:[#allocation2 + $0x168] sm:$0xf]
    %v147 = vld [vmem:[#allocation2 + $0x16c] sm:$0xf]
    %v148 = vld [vmem:[#allocation2 + $0x170] sm:$0xf]
    %v149 = vld [vmem:[#allocation2 + $0x174] sm:$0xf]
    %v150 = vld [vmem:[#allocation2 + $0x178] sm:$0xf]
    %v151 = vld [vmem:[#allocation2 + $0x17c] sm:$0xf]
    %v152 = vld [vmem:[#allocation2 + $0x180] sm:$0xf]
    %v153 = vld [vmem:[#allocation2 + $0x184] sm:$0xf]
    %v154 = vld [vmem:[#allocation2 + $0x188] sm:$0xf]
    %v155 = vld [vmem:[#allocation2 + $0x18c] sm:$0xf]
    %v156 = vld [vmem:[#allocation2 + $0x190] sm:$0xf]
    %v157 = vld [vmem:[#allocation2 + $0x194] sm:$0xf]
    %v158 = vld [vmem:[#allocation2 + $0x198] sm:$0xf]
    %v159 = vld [vmem:[#allocation2 + $0x19c] sm:$0xf]
    %v160 = vld [vmem:[#allocation2 + $0x1a0] sm:$0xf]
    %v161 = vld [vmem:[#allocation2 + $0x1a4] sm:$0xf]
    %v162 = vld [vmem:[#allocation2 + $0x1a8] sm:$0xf]
    %v163 = vld [vmem:[#allocation2 + $0x1ac] sm:$0xf]
    %v164 = vld [vmem:[#allocation2 + $0x1b0] sm:$0xf]
    %v165 = vld [vmem:[#allocation2 + $0x1b4] sm:$0xf]
    %v166 = vld [vmem:[#allocation2 + $0x1b8] sm:$0xf]
    %v167 = vld [vmem:[#allocation2 + $0x1bc] sm:$0xf]
    %v168 = vld [vmem:[#allocation2 + $0x1c0] sm:$0xf]
    %v169 = vld [vmem:[#allocation2 + $0x1c4] sm:$0xf]
    %v170 = vld [vmem:[#allocation2 + $0x1c8] sm:$0xf]
    %v171 = vld [vmem:[#allocation2 + $0x1cc] sm:$0xf]
    %v172 = vld [vmem:[#allocation2 + $0x1d0] sm:$0xf]
    %v173 = vld [vmem:[#allocation2 + $0x1d4] sm:$0xf]
    %v174 = vld [vmem:[#allocation2 + $0x1d8] sm:$0xf]
    %v175 = vld [vmem:[#allocation2 + $0x1dc] sm:$0xf]
    %v176 = vld [vmem:[#allocation2 + $0x1e0] sm:$0xf]
    %v177 = vld [vmem:[#allocation2 + $0x1e4] sm:$0xf]
    %v178 = vld [vmem:[#allocation2 + $0x1e8] sm:$0xf]
    %v179 = vld [vmem:[#allocation2 + $0x1ec] sm:$0xf]
    %v180 = vld [vmem:[#allocation2 + $0x1f0] sm:$0xf]
    %v181 = vld [vmem:[#allocation2 + $0x1f4] sm:$0xf]
    %v182 = vld [vmem:[#allocation2 + $0x1f8] sm:$0xf]
    %v183 = vld [vmem:[#allocation2 + $0x1fc] sm:$0xf]
    %v184 = vld [vmem:[#allocation4] sm:$0x1]
    %v186 = vlaneseq
    %v187 = vshrl.u32 %v186, 7
    %v188 = vsub.s32 0, %v187
    %v189 = vrot.slane %v184, %v188
    %v199 = vunpack.c.l.b16 %v48
    %v200 = vunpack.c.h.b16 %v48
    %v201 = vunpack.c.l.b16 %v49
    %v202 = vunpack.c.h.b16 %v49
    %v203 = vunpack.c.l.b16 %v50
    %v204 = vunpack.c.h.b16 %v50
    %v205 = vunpack.c.l.b16 %v51
    %v206 = vunpack.c.h.b16 %v51
    %v207 = vunpack.c.l.b16 %v52
    %v208 = vunpack.c.h.b16 %v52
    %v209 = vunpack.c.l.b16 %v53
    %v210 = vunpack.c.h.b16 %v53
    %v211 = vunpack.c.l.b16 %v54
    %v212 = vunpack.c.h.b16 %v54
    %v213 = vunpack.c.l.b16 %v55
    %v214 = vunpack.c.h.b16 %v55
    %v215 = vpack.c.b16 %v207, %v199
    %v216 = vpack.c.b16 %v208, %v200
    %v217 = vpack.c.b16 %v209, %v201
    %v218 = vpack.c.b16 %v210, %v202
    %v219 = vpack.c.b16 %v211, %v203
    %v220 = vpack.c.b16 %v212, %v204
    %v221 = vpack.c.b16 %v213, %v205
    %v222 = vpack.c.b16 %v214, %v206
    %v359 = vunpack.c.l.b16 %v56
    %v360 = vunpack.c.l.b16 %v57
    %v361 = vunpack.c.l.b16 %v58
    %v362 = vunpack.c.l.b16 %v59
    %v363 = vunpack.c.l.b16 %v60
    %v364 = vunpack.c.l.b16 %v61
    %v365 = vunpack.c.l.b16 %v62
    %v366 = vunpack.c.l.b16 %v63
    %v367 = vunpack.c.l.b16 %v64
    %v368 = vunpack.c.l.b16 %v65
    %v369 = vunpack.c.l.b16 %v66
    %v370 = vunpack.c.l.b16 %v67
    %v371 = vunpack.c.l.b16 %v68
    %v372 = vunpack.c.l.b16 %v69
    %v373 = vunpack.c.l.b16 %v70
    %v374 = vunpack.c.l.b16 %v71
    %v375 = vunpack.c.l.b16 %v72
    %v376 = vunpack.c.l.b16 %v73
    %v377 = vunpack.c.l.b16 %v74
    %v378 = vunpack.c.l.b16 %v75
    %v379 = vunpack.c.l.b16 %v76
    %v380 = vunpack.c.l.b16 %v77
    %v381 = vunpack.c.l.b16 %v78
    %v382 = vunpack.c.l.b16 %v79
    %v383 = vunpack.c.l.b16 %v80
    %v384 = vunpack.c.l.b16 %v81
    %v385 = vunpack.c.l.b16 %v82
    %v386 = vunpack.c.l.b16 %v83
    %v387 = vunpack.c.l.b16 %v84
    %v388 = vunpack.c.l.b16 %v85
    %v389 = vunpack.c.l.b16 %v86
    %v390 = vunpack.c.l.b16 %v87
    %v391 = vunpack.c.l.b16 %v88
    %v392 = vunpack.c.l.b16 %v89
    %v393 = vunpack.c.l.b16 %v90
    %v394 = vunpack.c.l.b16 %v91
    %v395 = vunpack.c.l.b16 %v92
    %v396 = vunpack.c.l.b16 %v93
    %v397 = vunpack.c.l.b16 %v94
    %v398 = vunpack.c.l.b16 %v95
    %v399 = vunpack.c.l.b16 %v96
    %v400 = vunpack.c.l.b16 %v97
    %v401 = vunpack.c.l.b16 %v98
    %v402 = vunpack.c.l.b16 %v99
    %v403 = vunpack.c.l.b16 %v100
    %v404 = vunpack.c.l.b16 %v101
    %v405 = vunpack.c.l.b16 %v102
    %v406 = vunpack.c.l.b16 %v103
    %v407 = vunpack.c.l.b16 %v104
    %v408 = vunpack.c.l.b16 %v105
    %v409 = vunpack.c.l.b16 %v106
    %v410 = vunpack.c.l.b16 %v107
    %v411 = vunpack.c.l.b16 %v108
    %v412 = vunpack.c.l.b16 %v109
    %v413 = vunpack.c.l.b16 %v110
    %v414 = vunpack.c.l.b16 %v111
    %v415 = vunpack.c.l.b16 %v112
    %v416 = vunpack.c.l.b16 %v113
    %v417 = vunpack.c.l.b16 %v114
    %v418 = vunpack.c.l.b16 %v115
    %v419 = vunpack.c.l.b16 %v116
    %v420 = vunpack.c.l.b16 %v117
    %v421 = vunpack.c.l.b16 %v118
    %v422 = vunpack.c.l.b16 %v119
    %v423 = vunpack.c.l.b16 %v120
    %v424 = vunpack.c.l.b16 %v121
    %v425 = vunpack.c.l.b16 %v122
    %v426 = vunpack.c.l.b16 %v123
    %v427 = vunpack.c.l.b16 %v124
    %v428 = vunpack.c.l.b16 %v125
    %v429 = vunpack.c.l.b16 %v126
    %v430 = vunpack.c.l.b16 %v127
    %v431 = vunpack.c.l.b16 %v128
    %v432 = vunpack.c.l.b16 %v129
    %v433 = vunpack.c.l.b16 %v130
    %v434 = vunpack.c.l.b16 %v131
    %v435 = vunpack.c.l.b16 %v132
    %v436 = vunpack.c.l.b16 %v133
    %v437 = vunpack.c.l.b16 %v134
    %v438 = vunpack.c.l.b16 %v135
    %v439 = vunpack.c.l.b16 %v136
    %v440 = vunpack.c.l.b16 %v137
    %v441 = vunpack.c.l.b16 %v138
    %v442 = vunpack.c.l.b16 %v139
    %v443 = vunpack.c.l.b16 %v140
    %v444 = vunpack.c.l.b16 %v141
    %v445 = vunpack.c.l.b16 %v142
    %v446 = vunpack.c.l.b16 %v143
    %v447 = vunpack.c.l.b16 %v144
    %v448 = vunpack.c.l.b16 %v145
    %v449 = vunpack.c.l.b16 %v146
    %v450 = vunpack.c.l.b16 %v147
    %v451 = vunpack.c.l.b16 %v148
    %v452 = vunpack.c.l.b16 %v149
    %v453 = vunpack.c.l.b16 %v150
    %v454 = vunpack.c.l.b16 %v151
    %v455 = vunpack.c.l.b16 %v152
    %v456 = vunpack.c.l.b16 %v153
    %v457 = vunpack.c.l.b16 %v154
    %v458 = vunpack.c.l.b16 %v155
    %v459 = vunpack.c.l.b16 %v156
    %v460 = vunpack.c.l.b16 %v157
    %v461 = vunpack.c.l.b16 %v158
    %v462 = vunpack.c.l.b16 %v159
    %v463 = vunpack.c.l.b16 %v160
    %v464 = vunpack.c.l.b16 %v161
    %v465 = vunpack.c.l.b16 %v162
    %v466 = vunpack.c.l.b16 %v163
    %v467 = vunpack.c.l.b16 %v164
    %v468 = vunpack.c.l.b16 %v165
    %v469 = vunpack.c.l.b16 %v166
    %v470 = vunpack.c.l.b16 %v167
    %v471 = vunpack.c.l.b16 %v168
    %v472 = vunpack.c.l.b16 %v169
    %v473 = vunpack.c.l.b16 %v170
    %v474 = vunpack.c.l.b16 %v171
    %v475 = vunpack.c.l.b16 %v172
    %v476 = vunpack.c.l.b16 %v173
    %v477 = vunpack.c.l.b16 %v174
    %v478 = vunpack.c.l.b16 %v175
    %v479 = vunpack.c.l.b16 %v176
    %v480 = vunpack.c.l.b16 %v177
    %v481 = vunpack.c.l.b16 %v178
    %v482 = vunpack.c.l.b16 %v179
    %v483 = vunpack.c.l.b16 %v180
    %v484 = vunpack.c.l.b16 %v181
    %v485 = vunpack.c.l.b16 %v182
    %v486 = vunpack.c.l.b16 %v183
    %v487 = vpack.c.b16 %v360, %v359
    %v488 = vpack.c.b16 %v362, %v361
    %v489 = vpack.c.b16 %v364, %v363
    %v490 = vpack.c.b16 %v366, %v365
    %v491 = vpack.c.b16 %v368, %v367
    %v492 = vpack.c.b16 %v370, %v369
    %v493 = vpack.c.b16 %v372, %v371
    %v494 = vpack.c.b16 %v374, %v373
    %v495 = vpack.c.b16 %v376, %v375
    %v496 = vpack.c.b16 %v378, %v377
    %v497 = vpack.c.b16 %v380, %v379
    %v498 = vpack.c.b16 %v382, %v381
    %v499 = vpack.c.b16 %v384, %v383
    %v500 = vpack.c.b16 %v386, %v385
    %v501 = vpack.c.b16 %v388, %v387
    %v502 = vpack.c.b16 %v390, %v389
    %v503 = vpack.c.b16 %v392, %v391
    %v504 = vpack.c.b16 %v394, %v393
    %v505 = vpack.c.b16 %v396, %v395
    %v506 = vpack.c.b16 %v398, %v397
    %v507 = vpack.c.b16 %v400, %v399
    %v508 = vpack.c.b16 %v402, %v401
    %v509 = vpack.c.b16 %v404, %v403
    %v510 = vpack.c.b16 %v406, %v405
    %v511 = vpack.c.b16 %v408, %v407
    %v512 = vpack.c.b16 %v410, %v409
    %v513 = vpack.c.b16 %v412, %v411
    %v514 = vpack.c.b16 %v414, %v413
    %v515 = vpack.c.b16 %v416, %v415
    %v516 = vpack.c.b16 %v418, %v417
    %v517 = vpack.c.b16 %v420, %v419
    %v518 = vpack.c.b16 %v422, %v421
    %v519 = vpack.c.b16 %v424, %v423
    %v520 = vpack.c.b16 %v426, %v425
    %v521 = vpack.c.b16 %v428, %v427
    %v522 = vpack.c.b16 %v430, %v429
    %v523 = vpack.c.b16 %v432, %v431
    %v524 = vpack.c.b16 %v434, %v433
    %v525 = vpack.c.b16 %v436, %v435
    %v526 = vpack.c.b16 %v438, %v437
    %v527 = vpack.c.b16 %v440, %v439
    %v528 = vpack.c.b16 %v442, %v441
    %v529 = vpack.c.b16 %v444, %v443
    %v530 = vpack.c.b16 %v446, %v445
    %v531 = vpack.c.b16 %v448, %v447
    %v532 = vpack.c.b16 %v450, %v449
    %v533 = vpack.c.b16 %v452, %v451
    %v534 = vpack.c.b16 %v454, %v453
    %v535 = vpack.c.b16 %v456, %v455
    %v536 = vpack.c.b16 %v458, %v457
    %v537 = vpack.c.b16 %v460, %v459
    %v538 = vpack.c.b16 %v462, %v461
    %v539 = vpack.c.b16 %v464, %v463
    %v540 = vpack.c.b16 %v466, %v465
    %v541 = vpack.c.b16 %v468, %v467
    %v542 = vpack.c.b16 %v470, %v469
    %v543 = vpack.c.b16 %v472, %v471
    %v544 = vpack.c.b16 %v474, %v473
    %v545 = vpack.c.b16 %v476, %v475
    %v546 = vpack.c.b16 %v478, %v477
    %v547 = vpack.c.b16 %v480, %v479
    %v548 = vpack.c.b16 %v482, %v481
    %v549 = vpack.c.b16 %v484, %v483
    %v550 = vpack.c.b16 %v486, %v485
    %615 = vmatprep.subr.bf16.mxu0 0
    %616 = vmatpush1.bf16.msra.mxu0 %v487
    %617 = vmatprep.subr.bf16.mxu0 0
    %618 = vmatpush1.bf16.msra.mxu0 %v488
    %619 = vmatprep.subr.bf16.mxu0 0
    %620 = vmatpush1.bf16.msra.mxu0 %v489
    %621 = vmatprep.subr.bf16.mxu0 0
    %622 = vmatpush1.bf16.msra.mxu0 %v490
    %623 = vmatprep.subr.bf16.mxu0 0
    %624 = vmatpush1.bf16.msra.mxu0 %v491
    %625 = vmatprep.subr.bf16.mxu0 0
    %626 = vmatpush1.bf16.msra.mxu0 %v492
    %627 = vmatprep.subr.bf16.mxu0 0
    %628 = vmatpush1.bf16.msra.mxu0 %v493
    %629 = vmatprep.subr.bf16.mxu0 0
    %630 = vmatpush1.bf16.msra.mxu0 %v494
    %631 = vmatprep.subr.bf16.mxu0 0
    %632 = vmatpush1.bf16.msra.mxu0 %v495
    %633 = vmatprep.subr.bf16.mxu0 0
    %634 = vmatpush1.bf16.msra.mxu0 %v496
    %635 = vmatprep.subr.bf16.mxu0 0
    %636 = vmatpush1.bf16.msra.mxu0 %v497
    %637 = vmatprep.subr.bf16.mxu0 0
    %638 = vmatpush1.bf16.msra.mxu0 %v498
    %639 = vmatprep.subr.bf16.mxu0 0
    %640 = vmatpush1.bf16.msra.mxu0 %v499
    %641 = vmatprep.subr.bf16.mxu0 0
    %642 = vmatpush1.bf16.msra.mxu0 %v500
    %643 = vmatprep.subr.bf16.mxu0 0
    %644 = vmatpush1.bf16.msra.mxu0 %v501
    %645 = vmatprep.subr.bf16.mxu0 0
    %646 = vmatpush1.bf16.msra.mxu0 %v502
    %647 = vmatprep.mubr.bf16.mxu0 %v216
    %648 = vmatmul.mubr.bf16.gmra.mrb[0].mxu0 %v215
    %v649 = vpop.f32.mrb[0].mxu0
    %v650 = vadd.f32 %v189, %v649
    %v651 = vpop.f32.mrb[0].mxu0
    %v652 = vpop.f32.mrb[0].mxu0
    %v653 = vadd.f32 %v189, %v652
    %v654 = vpop.f32.mrb[0].mxu0
    %655 = vdwg.mxu0
    %656 = vmatprep.subr.bf16.mxu0 0
    %657 = vmatpush1.bf16.msra.mxu0 %v503
    %658 = vmatprep.subr.bf16.mxu0 0
    %659 = vmatpush1.bf16.msra.mxu0 %v504
    %660 = vmatprep.subr.bf16.mxu0 0
    %661 = vmatpush1.bf16.msra.mxu0 %v505
    %662 = vmatprep.subr.bf16.mxu0 0
    %663 = vmatpush1.bf16.msra.mxu0 %v506
    %664 = vmatprep.subr.bf16.mxu0 0
    %665 = vmatpush1.bf16.msra.mxu0 %v507
    %666 = vmatprep.subr.bf16.mxu0 0
    %667 = vmatpush1.bf16.msra.mxu0 %v508
    %668 = vmatprep.subr.bf16.mxu0 0
    %669 = vmatpush1.bf16.msra.mxu0 %v509
    %670 = vmatprep.subr.bf16.mxu0 0
    %671 = vmatpush1.bf16.msra.mxu0 %v510
    %672 = vmatprep.subr.bf16.mxu0 0
    %673 = vmatpush1.bf16.msra.mxu0 %v511
    %674 = vmatprep.subr.bf16.mxu0 0
    %675 = vmatpush1.bf16.msra.mxu0 %v512
    %676 = vmatprep.subr.bf16.mxu0 0
    %677 = vmatpush1.bf16.msra.mxu0 %v513
    %678 = vmatprep.subr.bf16.mxu0 0
    %679 = vmatpush1.bf16.msra.mxu0 %v514
    %680 = vmatprep.subr.bf16.mxu0 0
    %681 = vmatpush1.bf16.msra.mxu0 %v515
    %682 = vmatprep.subr.bf16.mxu0 0
    %683 = vmatpush1.bf16.msra.mxu0 %v516
    %684 = vmatprep.subr.bf16.mxu0 0
    %685 = vmatpush1.bf16.msra.mxu0 %v517
    %686 = vmatprep.subr.bf16.mxu0 0
    %687 = vmatpush1.bf16.msra.mxu0 %v518
    %688 = vmatprep.mubr.bf16.mxu0 %v218
    %689 = vmatmul.mubr.bf16.gmra.mrb[0].mxu0 %v217
    %v690 = vpop.f32.mrb[0].mxu0
    %v691 = vadd.f32 %v650, %v690
    %v692 = vpop.f32.mrb[0].mxu0
    %v693 = vpop.f32.mrb[0].mxu0
    %v694 = vadd.f32 %v653, %v693
    %v695 = vpop.f32.mrb[0].mxu0
    %696 = vdwg.mxu0
    %697 = vmatprep.subr.bf16.mxu0 0
    %698 = vmatpush1.bf16.msra.mxu0 %v519
    %699 = vmatprep.subr.bf16.mxu0 0
    %700 = vmatpush1.bf16.msra.mxu0 %v520
    %701 = vmatprep.subr.bf16.mxu0 0
    %702 = vmatpush1.bf16.msra.mxu0 %v521
    %703 = vmatprep.subr.bf16.mxu0 0
    %704 = vmatpush1.bf16.msra.mxu0 %v522
    %705 = vmatprep.subr.bf16.mxu0 0
    %706 = vmatpush1.bf16.msra.mxu0 %v523
    %707 = vmatprep.subr.bf16.mxu0 0
    %708 = vmatpush1.bf16.msra.mxu0 %v524
    %709 = vmatprep.subr.bf16.mxu0 0
    %710 = vmatpush1.bf16.msra.mxu0 %v525
    %711 = vmatprep.subr.bf16.mxu0 0
    %712 = vmatpush1.bf16.msra.mxu0 %v526
    %713 = vmatprep.subr.bf16.mxu0 0
    %714 = vmatpush1.bf16.msra.mxu0 %v527
    %715 = vmatprep.subr.bf16.mxu0 0
    %716 = vmatpush1.bf16.msra.mxu0 %v528
    %717 = vmatprep.subr.bf16.mxu0 0
    %718 = vmatpush1.bf16.msra.mxu0 %v529
    %719 = vmatprep.subr.bf16.mxu0 0
    %720 = vmatpush1.bf16.msra.mxu0 %v530
    %721 = vmatprep.subr.bf16.mxu0 0
    %722 = vmatpush1.bf16.msra.mxu0 %v531
    %723 = vmatprep.subr.bf16.mxu0 0
    %724 = vmatpush1.bf16.msra.mxu0 %v532
    %725 = vmatprep.subr.bf16.mxu0 0
    %726 = vmatpush1.bf16.msra.mxu0 %v533
    %727 = vmatprep.subr.bf16.mxu0 0
    %728 = vmatpush1.bf16.msra.mxu0 %v534
    %729 = vmatprep.mubr.bf16.mxu0 %v220
    %730 = vmatmul.mubr.bf16.gmra.mrb[0].mxu0 %v219
    %v731 = vpop.f32.mrb[0].mxu0
    %v732 = vadd.f32 %v691, %v731
    %v733 = vpop.f32.mrb[0].mxu0
    %v734 = vpop.f32.mrb[0].mxu0
    %v735 = vadd.f32 %v694, %v734
    %v736 = vpop.f32.mrb[0].mxu0
    %737 = vdwg.mxu0
    %738 = vmatprep.subr.bf16.mxu0 0
    %739 = vmatpush1.bf16.msra.mxu0 %v535
    %740 = vmatprep.subr.bf16.mxu0 0
    %741 = vmatpush1.bf16.msra.mxu0 %v536
    %742 = vmatprep.subr.bf16.mxu0 0
    %743 = vmatpush1.bf16.msra.mxu0 %v537
    %744 = vmatprep.subr.bf16.mxu0 0
    %745 = vmatpush1.bf16.msra.mxu0 %v538
    %746 = vmatprep.subr.bf16.mxu0 0
    %747 = vmatpush1.bf16.msra.mxu0 %v539
    %748 = vmatprep.subr.bf16.mxu0 0
    %749 = vmatpush1.bf16.msra.mxu0 %v540
    %750 = vmatprep.subr.bf16.mxu0 0
    %751 = vmatpush1.bf16.msra.mxu0 %v541
    %752 = vmatprep.subr.bf16.mxu0 0
    %753 = vmatpush1.bf16.msra.mxu0 %v542
    %754 = vmatprep.subr.bf16.mxu0 0
    %755 = vmatpush1.bf16.msra.mxu0 %v543
    %756 = vmatprep.subr.bf16.mxu0 0
    %757 = vmatpush1.bf16.msra.mxu0 %v544
    %758 = vmatprep.subr.bf16.mxu0 0
    %759 = vmatpush1.bf16.msra.mxu0 %v545
    %760 = vmatprep.subr.bf16.mxu0 0
    %761 = vmatpush1.bf16.msra.mxu0 %v546
    %762 = vmatprep.subr.bf16.mxu0 0
    %763 = vmatpush1.bf16.msra.mxu0 %v547
    %764 = vmatprep.subr.bf16.mxu0 0
    %765 = vmatpush1.bf16.msra.mxu0 %v548
    %766 = vmatprep.subr.bf16.mxu0 0
    %767 = vmatpush1.bf16.msra.mxu0 %v549
    %768 = vmatprep.subr.bf16.mxu0 0
    %769 = vmatpush1.bf16.msra.mxu0 %v550
    %770 = vmatprep.mubr.bf16.mxu0 %v222
    %771 = vmatmul.mubr.bf16.gmra.mrb[0].mxu0 %v221
    %v772 = vpop.f32.mrb[0].mxu0
    %v773 = vadd.f32 %v732, %v772
    %v774 = vpop.f32.mrb[0].mxu0
    %v775 = vpop.f32.mrb[0].mxu0
    %v776 = vadd.f32 %v735, %v775
    %v777 = vpop.f32.mrb[0].mxu0
    %778 = vdwg.mxu0
    %v779 = vmax.f32 %v773, 0.0
    %v780 = vmax.f32 %v776, 0.0
    %781 = vst [vmem:[%s3] sm:$0xff] %v779
    %782 = vst [vmem:[%s3 + $0x8] sm:$0xff] %v780
    %v783 = vadd.f32 %v779, %v780
    %v784 = vrot.slane %v783, 4
    %v785 = vadd.f32 %v783, %v784
    %v786 = vrot.slane %v785, 2
    %v787 = vadd.f32 %v785, %v786
    %v788 = vrot.slane %v787, 1
    %v789 = vadd.f32 %v787, %v788
    %v790 = vmul.f32 %v779, %v779
    %v791 = vmul.f32 %v780, %v780
    %v792 = vadd.f32 %v790, %v791
    %v793 = vrot.slane %v792, 4
    %v794 = vadd.f32 %v792, %v793
    %v795 = vrot.slane %v794, 2
    %v796 = vadd.f32 %v794, %v795
    %v797 = vrot.slane %v796, 1
    %v798 = vadd.f32 %v796, %v797
    %v799 = vld [vmem:[%s4] sm:$0x3]
    %vm800 = vcmask 1040384
    %v801 = vsel %vm800, %v789, %v798
    %v802 = vadd.f32 %v799, %v801
    %803 = vst [vmem:[%s4] sm:$0x3] %v802
    // Predicated region
    $region26: #{model_forward.5} parent=1 // pred_check
      _
    $region27: #{model_forward.5} parent=1 // pred_check_branch
      %805 = sbr.rel (0) target = $region29
    $region28: #{model_forward.5} parent=1 // pred_region
      _
    $region29: #{model_forward.5} parent=1 // pred_fallthru
      _
    // Predicated region
    $region30: #{model_forward.5} parent=1 // pred_check
      _
    $region31: #{model_forward.5} parent=1 // pred_check_branch
      %807 = sbr.rel (0) target = $region33
    $region32: #{model_forward.5} parent=1 // pred_region
      _
    $region33: #{model_forward.5} parent=1 // pred_fallthru
      _
    // Predicated region
    $region34: #{model_forward.5} parent=1 // pred_check
      _
    $region35: #{model_forward.5} parent=1 // pred_check_branch
      %809 = sbr.rel (0) target = $region37
    $region36: #{model_forward.5} parent=1 // pred_region
      _
    $region37: #{model_forward.5} parent=1 // pred_fallthru
      _
    // Predicated region
    $region38: #{model_forward.5} parent=1 // pred_check
      _
    $region39: #{model_forward.5} parent=1 // pred_check_branch
      %811 = sbr.rel (0) target = $region41
    $region40: #{model_forward.5} parent=1 // pred_region
      _
    $region41: #{model_forward.5} parent=1 // pred_fallthru
      _
    %812 = vsyncpa [#allocation3], 1
    %813 = vsyncpa [#allocation5], 1

// kernel: model_forward.4
$region0: #{model_forward.4}
  #allocation0 [shape = 'u32[]', space=smem, size = 0x4, offset = 0x4, fixed_abs, tag = 'smem constant byte address 0x4 - core index']
  #allocation1 [shape = 'u32[144,128]{1,0:T(1,128)}', space=vmem, size = 0x12000, scoped, tag = 'internal scratch']
  %s0 = inlined_call_operand.hbm [shape: f32[2,16,16], index: 0, kind: input, shape index: {}]
  %s1 = inlined_call_operand.vmem [shape: f32[2,16,128], index: 1, kind: input, shape index: {}]
  %s2 = inlined_call_operand.hbm [shape: bf16[128,128], index: 2, kind: input, shape index: {}]
  %s3 = inlined_call_operand.hbm [shape: bf16[3,128,128], index: 3, kind: input, shape index: {}]
  %s4 = inlined_call_operand.hbm [shape: f32[3,128], index: 4, kind: input, shape index: {}]
  %s5 = inlined_call_operand.hbm [shape: bf16[128,128], index: 5, kind: input, shape index: {}]
  %s6 = inlined_call_operand.hbm [shape: bf16[128,128], index: 6, kind: input, shape index: {}]
  %s7 = inlined_call_operand.vmem [shape: f32[2,16,128], index: 7, kind: output, shape index: {0}]
  %s8 = inlined_call_operand.vmem [shape: f32[2,16,128], index: 8, kind: output, shape index: {1}]
  %9 = xla_tuple %s7, %s8
  %s10 = sld [smem:[#allocation0]]
  $region70: #{model_forward.4} parent=0
    _
  %s12 = ssub.s32 1, %s10
  %s13 = scalar_select 0, %s12, %s10
  $region1: #{model_forward.4} parent=0
    #allocation2 [shape = 'u8[16384]{0}', space=vmem, size = 0x4000, scoped, tag = 'input window, operand 0, single buffered']
    #allocation3 [shape = 's32[1]{0}', space=sflag, size = 0x4, scoped, tag = 'scoped memory for model_forward.4']
    #allocation4 [shape = 'u8[32768]{0}', space=vmem, size = 0x8000, scoped, tag = 'input window, operand 2, single buffered']
    #allocation5 [shape = 's32[1]{0}', space=sflag, size = 0x4, scoped, tag = 'scoped memory for model_forward.4']
    #allocation6 [shape = 'u8[98304]{0}', space=vmem, size = 0x18000, scoped, tag = 'input window, operand 3, single buffered']
    #allocation7 [shape = 'u8[2048]{0}', space=vmem, size = 0x800, scoped, tag = 'input window, operand 4, single buffered']
    #allocation8 [shape = 's32[1]{0}', space=sflag, size = 0x4, scoped, tag = 'scoped memory for model_forward.4']
    #allocation9 [shape = 'u8[32768]{0}', space=vmem, size = 0x8000, scoped, tag = 'input window, operand 5, single buffered']
    #allocation10 [shape = 'u8[32768]{0}', space=vmem, size = 0x8000, scoped, tag = 'input window, operand 6, single buffered']
    #allocation11 [shape = 's32[1]{0}', space=sflag, size = 0x4, scoped, tag = 'scoped memory for model_forward.4']
    %14 = vsyncpa [#allocation3], 0
    %15 = vsyncpa [#allocation5], 0
    %16 = vsyncpa [#allocation8], 0
    %17 = vsyncpa [#allocation11], 0
    // Predicated region
    $region2: #{model_forward.4} parent=1 // pred_check
      _
    $region3: #{model_forward.4} parent=1 // pred_check_branch
      %19 = sbr.rel (0) target = $region5
    $region4: #{model_forward.4} parent=1 // pred_region
      %s21 = ssub.s32 512, 512
      %22 = vsyncadd [#allocation3], %s21
      %s23 = sshll.u32 [#allocation2], 4
      %s24 = int_to_ptr.vmem [resolvable:$true] %s23
      %29 = dma.hbm_to_vmem [thread:$0]  %s0, 512, %s24, [#allocation3], 128, 128, 8
    $region5: #{model_forward.4} parent=1 // pred_fallthru
      _
    // Predicated region
    $region6: #{model_forward.4} parent=1 // pred_check
      _
    $region7: #{model_forward.4} parent=1 // pred_check_branch
      %31 = sbr.rel (0) target = $region9
    $region8: #{model_forward.4} parent=1 // pred_region
      _
    $region9: #{model_forward.4} parent=1 // pred_fallthru
      _
    // Predicated region
    $region10: #{model_forward.4} parent=1 // pred_check
      _
    $region11: #{model_forward.4} parent=1 // pred_check_branch
      %33 = sbr.rel (0) target = $region13
    $region12: #{model_forward.4} parent=1 // pred_region
      %s35 = ssub.s32 1024, 1024
      %36 = vsyncadd [#allocation5], %s35
      %s37 = sshll.u32 [#allocation4], 4
      %s38 = int_to_ptr.vmem [resolvable:$true] %s37
      %43 = dma.hbm_to_vmem [thread:$0]  %s2, 1024, %s38, [#allocation5], 64, 64, 4
    $region13: #{model_forward.4} parent=1 // pred_fallthru
      _
    // Predicated region
    $region14: #{model_forward.4} parent=1 // pred_check
      _
    $region15: #{model_forward.4} parent=1 // pred_check_branch
      %45 = sbr.rel (0) target = $region17
    $region16: #{model_forward.4} parent=1 // pred_region
      %s47 = ssub.s32 3072, 3072
      %48 = vsyncadd [#allocation5], %s47
      %s49 = sshll.u32 [#allocation6], 4
      %s50 = int_to_ptr.vmem [resolvable:$true] %s49
      %55 = dma.hbm_to_vmem [thread:$0]  %s3, 3072, %s50, [#allocation5], 64, 64, 4
    $region17: #{model_forward.4} parent=1 // pred_fallthru
      _
    // Predicated region
    $region18: #{model_forward.4} parent=1 // pred_check
      _
    $region19: #{model_forward.4} parent=1 // pred_check_branch
      %57 = sbr.rel (0) target = $region21
    $region20: #{model_forward.4} parent=1 // pred_region
      %s59 = ssub.s32 64, 64
      %60 = vsyncadd [#allocation8], %s59
      %s62 = sshll.u32 [#allocation7], 4
      %s63 = int_to_ptr.vmem [resolvable:$true] %s62
      %65 = dma.hbm_to_vmem [thread:$0]  %s4, 64, %s63, [#allocation8]
    $region21: #{model_forward.4} parent=1 // pred_fallthru
      _
    // Predicated region
    $region22: #{model_forward.4} parent=1 // pred_check
      _
    $region23: #{model_forward.4} parent=1 // pred_check_branch
      %67 = sbr.rel (0) target = $region25
    $region24: #{model_forward.4} parent=1 // pred_region
      %s69 = ssub.s32 1024, 1024
      %70 = vsyncadd [#allocation8], %s69
      %s71 = sshll.u32 [#allocation9], 4
      %s72 = int_to_ptr.vmem [resolvable:$true] %s71
      %77 = dma.hbm_to_vmem [thread:$0]  %s5, 1024, %s72, [#allocation8], 64, 64, 4
    $region25: #{model_forward.4} parent=1 // pred_fallthru
      _
    // Predicated region
    $region26: #{model_forward.4} parent=1 // pred_check
      _
    $region27: #{model_forward.4} parent=1 // pred_check_branch
      %79 = sbr.rel (0) target = $region29
    $region28: #{model_forward.4} parent=1 // pred_region
      %s81 = ssub.s32 1024, 1024
      %82 = vsyncadd [#allocation11], %s81
      %s83 = sshll.u32 [#allocation10], 4
      %s84 = int_to_ptr.vmem [resolvable:$true] %s83
      %89 = dma.hbm_to_vmem [thread:$0]  %s6, 1024, %s84, [#allocation11], 64, 64, 4
    $region29: #{model_forward.4} parent=1 // pred_fallthru
      _
    // Predicated region
    $region30: #{model_forward.4} parent=1 // pred_check
      _
    $region31: #{model_forward.4} parent=1 // pred_check_branch
      %91 = sbr.rel (0) target = $region33
    $region32: #{model_forward.4} parent=1 // pred_region
      %92 = dma.done [#allocation3], 512
    $region33: #{model_forward.4} parent=1 // pred_fallthru
      _
    // Predicated region
    $region34: #{model_forward.4} parent=1 // pred_check
      _
    $region35: #{model_forward.4} parent=1 // pred_check_branch
      %94 = sbr.rel (0) target = $region37
    $region36: #{model_forward.4} parent=1 // pred_region
      %95 = dma.done [#allocation5], 1024
    $region37: #{model_forward.4} parent=1 // pred_fallthru
      _
    // Predicated region
    $region38: #{model_forward.4} parent=1 // pred_check
      _
    $region39: #{model_forward.4} parent=1 // pred_check_branch
      %97 = sbr.rel (0) target = $region41
    $region40: #{model_forward.4} parent=1 // pred_region
      %98 = dma.done [#allocation5], 3072
    $region41: #{model_forward.4} parent=1 // pred_fallthru
      _
    // Predicated region
    $region42: #{model_forward.4} parent=1 // pred_check
      _
    $region43: #{model_forward.4} parent=1 // pred_check_branch
      %100 = sbr.rel (0) target = $region45
    $region44: #{model_forward.4} parent=1 // pred_region
      %101 = dma.done [#allocation8], 64
    $region45: #{model_forward.4} parent=1 // pred_fallthru
      _
    // Predicated region
    $region46: #{model_forward.4} parent=1 // pred_check
      _
    $region47: #{model_forward.4} parent=1 // pred_check_branch
      %103 = sbr.rel (0) target = $region49
    $region48: #{model_forward.4} parent=1 // pred_region
      %104 = dma.done [#allocation8], 1024
    $region49: #{model_forward.4} parent=1 // pred_fallthru
      _
    // Predicated region
    $region50: #{model_forward.4} parent=1 // pred_check
      _
    $region51: #{model_forward.4} parent=1 // pred_check_branch
      %106 = sbr.rel (0) target = $region53
    $region52: #{model_forward.4} parent=1 // pred_region
      %107 = dma.done [#allocation11], 1024
    $region53: #{model_forward.4} parent=1 // pred_fallthru
      _
    %v109 = vld [vmem:[#allocation2] sm:$0xff]
    %v110 = vld [vmem:[#allocation2 + $0x8] sm:$0xff]
    %v111 = vld [vmem:[#allocation2 + $0x10] sm:$0xff]
    %v112 = vld [vmem:[#allocation2 + $0x18] sm:$0xff]
    %v113 = vpack.c.bf16 %v110, %v109
    %v114 = vpack.c.bf16 %v112, %v111
    %v115 = vld [vmem:[%s1] sm:$0xff]
    %v116 = vld [vmem:[%s1 + $0x8] sm:$0xff]
    %v117 = vld [vmem:[%s1 + $0x10] sm:$0xff]
    %v118 = vld [vmem:[%s1 + $0x18] sm:$0xff]
    %v119 = vpack.c.bf16 %v116, %v115
    %v120 = vpack.c.bf16 %v118, %v117
    %v121 = vld [vmem:[#allocation4] sm:$0xf]
    %v122 = vld [vmem:[#allocation4 + $0x4] sm:$0xf]
    %v123 = vld [vmem:[#allocation4 + $0x8] sm:$0xf]
    %v124 = vld [vmem:[#allocation4 + $0xc] sm:$0xf]
    %v125 = vld [vmem:[#allocation4 + $0x10] sm:$0xf]
    %v126 = vld [vmem:[#allocation4 + $0x14] sm:$0xf]
    %v127 = vld [vmem:[#allocation4 + $0x18] sm:$0xf]
    %v128 = vld [vmem:[#allocation4 + $0x1c] sm:$0xf]
    %v129 = vld [vmem:[#allocation4 + $0x20] sm:$0xf]
    %v130 = vld [vmem:[#allocation4 + $0x24] sm:$0xf]
    %v131 = vld [vmem:[#allocation4 + $0x28] sm:$0xf]
    %v132 = vld [vmem:[#allocation4 + $0x2c] sm:$0xf]
    %v133 = vld [vmem:[#allocation4 + $0x30] sm:$0xf]
    %v134 = vld [vmem:[#allocation4 + $0x34] sm:$0xf]
    %v135 = vld [vmem:[#allocation4 + $0x38] sm:$0xf]
    %v136 = vld [vmem:[#allocation4 + $0x3c] sm:$0xf]
    %v153 = vunpack.c.l.b16 %v121
    %v154 = vunpack.c.l.b16 %v122
    %v155 = vunpack.c.l.b16 %v123
    %v156 = vunpack.c.l.b16 %v124
    %v157 = vunpack.c.l.b16 %v125
    %v158 = vunpack.c.l.b16 %v126
    %v159 = vunpack.c.l.b16 %v127
    %v160 = vunpack.c.l.b16 %v128
    %v161 = vunpack.c.l.b16 %v129
    %v162 = vunpack.c.l.b16 %v130
    %v163 = vunpack.c.l.b16 %v131
    %v164 = vunpack.c.l.b16 %v132
    %v165 = vunpack.c.l.b16 %v133
    %v166 = vunpack.c.l.b16 %v134
    %v167 = vunpack.c.l.b16 %v135
    %v168 = vunpack.c.l.b16 %v136
    %v169 = vpack.c.b16 %v154, %v153
    %v170 = vpack.c.b16 %v156, %v155
    %v171 = vpack.c.b16 %v158, %v157
    %v172 = vpack.c.b16 %v160, %v159
    %v173 = vpack.c.b16 %v162, %v161
    %v174 = vpack.c.b16 %v164, %v163
    %v175 = vpack.c.b16 %v166, %v165
    %v176 = vpack.c.b16 %v168, %v167
    %185 = vmatprep.subr.bf16.mxu0 0
    %186 = vmatpush1.bf16.msra.mxu0 %v169
    %187 = vmatprep.subr.bf16.mxu0 0
    %188 = vmatpush1.bf16.msra.mxu0 %v170
    %189 = vmatprep.subr.bf16.mxu0 0
    %190 = vmatpush1.bf16.msra.mxu0 %v171
    %191 = vmatprep.subr.bf16.mxu0 0
    %192 = vmatpush1.bf16.msra.mxu0 %v172
    %193 = vmatprep.subr.bf16.mxu0 0
    %194 = vmatpush1.bf16.msra.mxu0 %v173
    %195 = vmatprep.subr.bf16.mxu0 0
    %196 = vmatpush1.bf16.msra.mxu0 %v174
    %197 = vmatprep.subr.bf16.mxu0 0
    %198 = vmatpush1.bf16.msra.mxu0 %v175
    %199 = vmatprep.subr.bf16.mxu0 0
    %200 = vmatpush1.bf16.msra.mxu0 %v176
    %201 = vmatprep.subr.bf16.mxu0 0
    %202 = vmatpush1.bf16.msra.mxu0 0
    %203 = vmatprep.subr.bf16.mxu0 0
    %204 = vmatpush1.bf16.msra.mxu0 0
    %205 = vmatprep.subr.bf16.mxu0 0
    %206 = vmatpush1.bf16.msra.mxu0 0
    %207 = vmatprep.subr.bf16.mxu0 0
    %208 = vmatpush1.bf16.msra.mxu0 0
    %209 = vmatprep.subr.bf16.mxu0 0
    %210 = vmatpush1.bf16.msra.mxu0 0
    %211 = vmatprep.subr.bf16.mxu0 0
    %212 = vmatpush1.bf16.msra.mxu0 0
    %213 = vmatprep.subr.bf16.mxu0 0
    %214 = vmatpush1.bf16.msra.mxu0 0
    %215 = vmatprep.subr.bf16.mxu0 0
    %216 = vmatpush1.bf16.msra.mxu0 0
    %217 = vmatprep.mubr.bf16.mxu0 0
    %218 = vmatmul.mubr.bf16.gmra.mrb[0].mxu0 %v119
    %v219 = vpop.f32.mrb[0].mxu0
    %v220 = vadd.f32 0.0, %v219
    %v221 = vpop.f32.mrb[0].mxu0
    %v222 = vpop.f32.mrb[0].mxu0
    %v223 = vadd.f32 0.0, %v222
    %v224 = vpop.f32.mrb[0].mxu0
    %225 = vmatprep.mubr.bf16.mxu0 0
    %226 = vmatmul.mubr.bf16.gmra.mrb[0].mxu0 %v120
    %v227 = vpop.f32.mrb[0].mxu0
    %v228 = vadd.f32 0.0, %v227
    %v229 = vpop.f32.mrb[0].mxu0
    %v230 = vpop.f32.mrb[0].mxu0
    %v231 = vadd.f32 0.0, %v230
    %v232 = vpop.f32.mrb[0].mxu0
    %233 = vdwg.mxu0
    %v234 = vld [vmem:[#allocation7] sm:$0x7]
    %v235 = vpack.c.bf16 %v223, %v220
    %v236 = vpack.c.bf16 %v231, %v228
    %v237 = vld [vmem:[#allocation6] sm:$0xf]
    %v238 = vld [vmem:[#allocation6 + $0x4] sm:$0xf]
    %v239 = vld [vmem:[#allocation6 + $0x8] sm:$0xf]
    %v240 = vld [vmem:[#allocation6 + $0xc] sm:$0xf]
    %v241 = vld [vmem:[#allocation6 + $0x10] sm:$0xf]
    %v242 = vld [vmem:[#allocation6 + $0x14] sm:$0xf]
    %v243 = vld [vmem:[#allocation6 + $0x18] sm:$0xf]
    %v244 = vld [vmem:[#allocation6 + $0x1c] sm:$0xf]
    %v245 = vld [vmem:[#allocation6 + $0x20] sm:$0xf]
    %v246 = vld [vmem:[#allocation6 + $0x24] sm:$0xf]
    %v247 = vld [vmem:[#allocation6 + $0x28] sm:$0xf]
    %v248 = vld [vmem:[#allocation6 + $0x2c] sm:$0xf]
    %v249 = vld [vmem:[#allocation6 + $0x30] sm:$0xf]
    %v250 = vld [vmem:[#allocation6 + $0x34] sm:$0xf]
    %v251 = vld [vmem:[#allocation6 + $0x38] sm:$0xf]
    %v252 = vld [vmem:[#allocation6 + $0x3c] sm:$0xf]
    %v269 = vunpack.c.l.b16 %v237
    %v270 = vunpack.c.l.b16 %v238
    %v271 = vunpack.c.l.b16 %v239
    %v272 = vunpack.c.l.b16 %v240
    %v273 = vunpack.c.l.b16 %v241
    %v274 = vunpack.c.l.b16 %v242
    %v275 = vunpack.c.l.b16 %v243
    %v276 = vunpack.c.l.b16 %v244
    %v277 = vunpack.c.l.b16 %v245
    %v278 = vunpack.c.l.b16 %v246
    %v279 = vunpack.c.l.b16 %v247
    %v280 = vunpack.c.l.b16 %v248
    %v281 = vunpack.c.l.b16 %v249
    %v282 = vunpack.c.l.b16 %v250
    %v283 = vunpack.c.l.b16 %v251
    %v284 = vunpack.c.l.b16 %v252
    %v285 = vpack.c.b16 %v270, %v269
    %v286 = vpack.c.b16 %v272, %v271
    %v287 = vpack.c.b16 %v274, %v273
    %v288 = vpack.c.b16 %v276, %v275
    %v289 = vpack.c.b16 %v278, %v277
    %v290 = vpack.c.b16 %v280, %v279
    %v291 = vpack.c.b16 %v282, %v281
    %v292 = vpack.c.b16 %v284, %v283
    %301 = vmatprep.subr.bf16.mxu0 0
    %302 = vmatpush1.bf16.msra.mxu0 %v285
    %303 = vmatprep.subr.bf16.mxu0 0
    %304 = vmatpush1.bf16.msra.mxu0 %v286
    %305 = vmatprep.subr.bf16.mxu0 0
    %306 = vmatpush1.bf16.msra.mxu0 %v287
    %307 = vmatprep.subr.bf16.mxu0 0
    %308 = vmatpush1.bf16.msra.mxu0 %v288
    %309 = vmatprep.subr.bf16.mxu0 0
    %310 = vmatpush1.bf16.msra.mxu0 %v289
    %311 = vmatprep.subr.bf16.mxu0 0
    %312 = vmatpush1.bf16.msra.mxu0 %v290
    %313 = vmatprep.subr.bf16.mxu0 0
    %314 = vmatpush1.bf16.msra.mxu0 %v291
    %315 = vmatprep.subr.bf16.mxu0 0
    %316 = vmatpush1.bf16.msra.mxu0 %v292
    %317 = vmatprep.subr.bf16.mxu0 0
    %318 = vmatpush1.bf16.msra.mxu0 0
    %319 = vmatprep.subr.bf16.mxu0 0
    %320 = vmatpush1.bf16.msra.mxu0 0
    %321 = vmatprep.subr.bf16.mxu0 0
    %322 = vmatpush1.bf16.msra.mxu0 0
    %323 = vmatprep.subr.bf16.mxu0 0
    %324 = vmatpush1.bf16.msra.mxu0 0
    %325 = vmatprep.subr.bf16.mxu0 0
    %326 = vmatpush1.bf16.msra.mxu0 0
    %327 = vmatprep.subr.bf16.mxu0 0
    %328 = vmatpush1.bf16.msra.mxu0 0
    %329 = vmatprep.subr.bf16.mxu0 0
    %330 = vmatpush1.bf16.msra.mxu0 0
    %331 = vmatprep.subr.bf16.mxu0 0
    %332 = vmatpush1.bf16.msra.mxu0 0
    %333 = vmatprep.mubr.bf16.mxu0 0
    %334 = vmatmul.mubr.bf16.gmra.mrb[0].mxu0 %v235
    %v335 = vpop.f32.mrb[0].mxu0
    %v336 = vadd.f32 0.0, %v335
    %v337 = vpop.f32.mrb[0].mxu0
    %v338 = vpop.f32.mrb[0].mxu0
    %v339 = vadd.f32 0.0, %v338
    %v340 = vpop.f32.mrb[0].mxu0
    %341 = vmatprep.mubr.bf16.mxu0 0
    %342 = vmatmul.mubr.bf16.gmra.mrb[0].mxu0 %v236
    %v343 = vpop.f32.mrb[0].mxu0
    %v344 = vadd.f32 0.0, %v343
    %v345 = vpop.f32.mrb[0].mxu0
    %v346 = vpop.f32.mrb[0].mxu0
    %v347 = vadd.f32 0.0, %v346
    %v348 = vpop.f32.mrb[0].mxu0
    %349 = vdwg.mxu0
    %v350 = vpack.c.bf16 %v339, %v336
    %v351 = vpack.c.bf16 %v347, %v344
    %vm352 = vcmask 130048
    %v354 = vsel %vm352, %v113, 0
    %356 = vmatprep.subr.bf16.mxu0 0
    %357 = vmatpush1.bf16.msra.mxu0 %v350
    %358 = vmatprep.subr.bf16.mxu0 0
    %359 = vmatpush1.bf16.msra.mxu0 0
    %360 = vmatprep.subr.bf16.mxu0 0
    %361 = vmatpush1.bf16.msra.mxu0 0
    %362 = vmatprep.subr.bf16.mxu0 0
    %363 = vmatpush1.bf16.msra.mxu0 0
    %364 = vmatprep.subr.bf16.mxu0 0
    %365 = vmatpush1.bf16.msra.mxu0 0
    %366 = vmatprep.subr.bf16.mxu0 0
    %367 = vmatpush1.bf16.msra.mxu0 0
    %368 = vmatprep.subr.bf16.mxu0 0
    %369 = vmatpush1.bf16.msra.mxu0 0
    %370 = vmatprep.subr.bf16.mxu0 0
    %371 = vmatpush1.bf16.msra.mxu0 0
    %372 = vmatprep.subr.bf16.mxu0 0
    %373 = vmatpush1.bf16.msra.mxu0 0
    %374 = vmatprep.subr.bf16.mxu0 0
    %375 = vmatpush1.bf16.msra.mxu0 0
    %376 = vmatprep.subr.bf16.mxu0 0
    %377 = vmatpush1.bf16.msra.mxu0 0
    %378 = vmatprep.subr.bf16.mxu0 0
    %379 = vmatpush1.bf16.msra.mxu0 0
    %380 = vmatprep.subr.bf16.mxu0 0
    %381 = vmatpush1.bf16.msra.mxu0 0
    %382 = vmatprep.subr.bf16.mxu0 0
    %383 = vmatpush1.bf16.msra.mxu0 0
    %384 = vmatprep.subr.bf16.mxu0 0
    %385 = vmatpush1.bf16.msra.mxu0 0
    %386 = vmatprep.subr.bf16.mxu0 0
    %387 = vmatpush1.bf16.msra.mxu0 0
    %388 = vmatprep.mubr.bf16.mxu0 0
    %389 = vmatmul.mubr.bf16.gmra.mrb[0].mxu0 %v354
    %v390 = vpop.f32.mrb[0].mxu0
    %v391 = vadd.f32 0.0, %v390
    %v392 = vpop.f32.mrb[0].mxu0
    %v393 = vpop.f32.mrb[0].mxu0
    %v394 = vadd.f32 0.0, %v393
    %v395 = vpop.f32.mrb[0].mxu0
    %396 = vdwg.mxu0
    %v398 = vsel %vm352, %v114, 0
    %400 = vmatprep.subr.bf16.mxu0 0
    %401 = vmatpush1.bf16.msra.mxu0 %v351
    %402 = vmatprep.subr.bf16.mxu0 0
    %403 = vmatpush1.bf16.msra.mxu0 0
    %404 = vmatprep.subr.bf16.mxu0 0
    %405 = vmatpush1.bf16.msra.mxu0 0
    %406 = vmatprep.subr.bf16.mxu0 0
    %407 = vmatpush1.bf16.msra.mxu0 0
    %408 = vmatprep.subr.bf16.mxu0 0
    %409 = vmatpush1.bf16.msra.mxu0 0
    %410 = vmatprep.subr.bf16.mxu0 0
    %411 = vmatpush1.bf16.msra.mxu0 0
    %412 = vmatprep.subr.bf16.mxu0 0
    %413 = vmatpush1.bf16.msra.mxu0 0
    %414 = vmatprep.subr.bf16.mxu0 0
    %415 = vmatpush1.bf16.msra.mxu0 0
    %416 = vmatprep.subr.bf16.mxu0 0
    %417 = vmatpush1.bf16.msra.mxu0 0
    %418 = vmatprep.subr.bf16.mxu0 0
    %419 = vmatpush1.bf16.msra.mxu0 0
    %420 = vmatprep.subr.bf16.mxu0 0
    %421 = vmatpush1.bf16.msra.mxu0 0
    %422 = vmatprep.subr.bf16.mxu0 0
    %423 = vmatpush1.bf16.msra.mxu0 0
    %424 = vmatprep.subr.bf16.mxu0 0
    %425 = vmatpush1.bf16.msra.mxu0 0
    %426 = vmatprep.subr.bf16.mxu0 0
    %427 = vmatpush1.bf16.msra.mxu0 0
    %428 = vmatprep.subr.bf16.mxu0 0
    %429 = vmatpush1.bf16.msra.mxu0 0
    %430 = vmatprep.subr.bf16.mxu0 0
    %431 = vmatpush1.bf16.msra.mxu0 0
    %432 = vmatprep.mubr.bf16.mxu0 0
    %433 = vmatmul.mubr.bf16.gmra.mrb[0].mxu0 %v398
    %v434 = vpop.f32.mrb[0].mxu0
    %v435 = vadd.f32 0.0, %v434
    %v436 = vpop.f32.mrb[0].mxu0
    %v437 = vpop.f32.mrb[0].mxu0
    %v438 = vadd.f32 0.0, %v437
    %v439 = vpop.f32.mrb[0].mxu0
    %440 = vdwg.mxu0
    %v441 = vlaneseq
    %v442 = vshrl.u32 %v441, 7
    %v443 = vsub.s32 0, %v442
    %v444 = vrot.slane %v234, %v443
    %v445 = vadd.f32 %v391, %v444
    %v446 = vadd.f32 %v394, %v444
    %v447 = vadd.f32 %v435, %v444
    %v448 = vadd.f32 %v438, %v444
    %v449 = vmax.f32 %v445, 0.0
    %v450 = vmax.f32 %v446, 0.0
    %v451 = vmax.f32 %v447, 0.0
    %v452 = vmax.f32 %v448, 0.0
    %v453 = vadd.f32 %v449, %v220
    %v454 = vadd.f32 %v450, %v223
    %v455 = vadd.f32 %v451, %v228
    %v456 = vadd.f32 %v452, %v231
    %v457 = vpack.c.bf16 %v454, %v453
    %v458 = vpack.c.bf16 %v456, %v455
    %s459 = scalar_lea.vmem [#allocation6], 64
    %v460 = vld [vmem:[%s459] sm:$0xf]
    %v461 = vld [vmem:[%s459 + $0x4] sm:$0xf]
    %v462 = vld [vmem:[%s459 + $0x8] sm:$0xf]
    %v463 = vld [vmem:[%s459 + $0xc] sm:$0xf]
    %v464 = vld [vmem:[%s459 + $0x10] sm:$0xf]
    %v465 = vld [vmem:[%s459 + $0x14] sm:$0xf]
    %v466 = vld [vmem:[%s459 + $0x18] sm:$0xf]
    %v467 = vld [vmem:[%s459 + $0x1c] sm:$0xf]
    %v468 = vld [vmem:[%s459 + $0x20] sm:$0xf]
    %v469 = vld [vmem:[%s459 + $0x24] sm:$0xf]
    %v470 = vld [vmem:[%s459 + $0x28] sm:$0xf]
    %v471 = vld [vmem:[%s459 + $0x2c] sm:$0xf]
    %v472 = vld [vmem:[%s459 + $0x30] sm:$0xf]
    %v473 = vld [vmem:[%s459 + $0x34] sm:$0xf]
    %v474 = vld [vmem:[%s459 + $0x38] sm:$0xf]
    %v475 = vld [vmem:[%s459 + $0x3c] sm:$0xf]
    %v492 = vunpack.c.l.b16 %v460
    %v493 = vunpack.c.l.b16 %v461
    %v494 = vunpack.c.l.b16 %v462
    %v495 = vunpack.c.l.b16 %v463
    %v496 = vunpack.c.l.b16 %v464
    %v497 = vunpack.c.l.b16 %v465
    %v498 = vunpack.c.l.b16 %v466
    %v499 = vunpack.c.l.b16 %v467
    %v500 = vunpack.c.l.b16 %v468
    %v501 = vunpack.c.l.b16 %v469
    %v502 = vunpack.c.l.b16 %v470
    %v503 = vunpack.c.l.b16 %v471
    %v504 = vunpack.c.l.b16 %v472
    %v505 = vunpack.c.l.b16 %v473
    %v506 = vunpack.c.l.b16 %v474
    %v507 = vunpack.c.l.b16 %v475
    %v508 = vpack.c.b16 %v493, %v492
    %v509 = vpack.c.b16 %v495, %v494
    %v510 = vpack.c.b16 %v497, %v496
    %v511 = vpack.c.b16 %v499, %v498
    %v512 = vpack.c.b16 %v501, %v500
    %v513 = vpack.c.b16 %v503, %v502
    %v514 = vpack.c.b16 %v505, %v504
    %v515 = vpack.c.b16 %v507, %v506
    %524 = vmatprep.subr.bf16.mxu0 0
    %525 = vmatpush1.bf16.msra.mxu0 %v508
    %526 = vmatprep.subr.bf16.mxu0 0
    %527 = vmatpush1.bf16.msra.mxu0 %v509
    %528 = vmatprep.subr.bf16.mxu0 0
    %529 = vmatpush1.bf16.msra.mxu0 %v510
    %530 = vmatprep.subr.bf16.mxu0 0
    %531 = vmatpush1.bf16.msra.mxu0 %v511
    %532 = vmatprep.subr.bf16.mxu0 0
    %533 = vmatpush1.bf16.msra.mxu0 %v512
    %534 = vmatprep.subr.bf16.mxu0 0
    %535 = vmatpush1.bf16.msra.mxu0 %v513
    %536 = vmatprep.subr.bf16.mxu0 0
    %537 = vmatpush1.bf16.msra.mxu0 %v514
    %538 = vmatprep.subr.bf16.mxu0 0
    %539 = vmatpush1.bf16.msra.mxu0 %v515
    %540 = vmatprep.subr.bf16.mxu0 0
    %541 = vmatpush1.bf16.msra.mxu0 0
    %542 = vmatprep.subr.bf16.mxu0 0
    %543 = vmatpush1.bf16.msra.mxu0 0
    %544 = vmatprep.subr.bf16.mxu0 0
    %545 = vmatpush1.bf16.msra.mxu0 0
    %546 = vmatprep.subr.bf16.mxu0 0
    %547 = vmatpush1.bf16.msra.mxu0 0
    %548 = vmatprep.subr.bf16.mxu0 0
    %549 = vmatpush1.bf16.msra.mxu0 0
    %550 = vmatprep.subr.bf16.mxu0 0
    %551 = vmatpush1.bf16.msra.mxu0 0
    %552 = vmatprep.subr.bf16.mxu0 0
    %553 = vmatpush1.bf16.msra.mxu0 0
    %554 = vmatprep.subr.bf16.mxu0 0
    %555 = vmatpush1.bf16.msra.mxu0 0
    %556 = vmatprep.mubr.bf16.mxu0 0
    %557 = vmatmul.mubr.bf16.gmra.mrb[0].mxu0 %v457
    %v558 = vpop.f32.mrb[0].mxu0
    %v559 = vadd.f32 0.0, %v558
    %v560 = vpop.f32.mrb[0].mxu0
    %v561 = vpop.f32.mrb[0].mxu0
    %v562 = vadd.f32 0.0, %v561
    %v563 = vpop.f32.mrb[0].mxu0
    %564 = vmatprep.mubr.bf16.mxu0 0
    %565 = vmatmul.mubr.bf16.gmra.mrb[0].mxu0 %v458
    %v566 = vpop.f32.mrb[0].mxu0
    %v567 = vadd.f32 0.0, %v566
    %v568 = vpop.f32.mrb[0].mxu0
    %v569 = vpop.f32.mrb[0].mxu0
    %v570 = vadd.f32 0.0, %v569
    %v571 = vpop.f32.mrb[0].mxu0
    %572 = vdwg.mxu0
    %v573 = vpack.c.bf16 %v562, %v559
    %v574 = vpack.c.bf16 %v570, %v567
    %575 = vmatprep.subr.bf16.mxu0 0
    %576 = vmatpush1.bf16.msra.mxu0 %v573
    %577 = vmatprep.subr.bf16.mxu0 0
    %578 = vmatpush1.bf16.msra.mxu0 0
    %579 = vmatprep.subr.bf16.mxu0 0
    %580 = vmatpush1.bf16.msra.mxu0 0
    %581 = vmatprep.subr.bf16.mxu0 0
    %582 = vmatpush1.bf16.msra.mxu0 0
    %583 = vmatprep.subr.bf16.mxu0 0
    %584 = vmatpush1.bf16.msra.mxu0 0
    %585 = vmatprep.subr.bf16.mxu0 0
    %586 = vmatpush1.bf16.msra.mxu0 0
    %587 = vmatprep.subr.bf16.mxu0 0
    %588 = vmatpush1.bf16.msra.mxu0 0
    %589 = vmatprep.subr.bf16.mxu0 0
    %590 = vmatpush1.bf16.msra.mxu0 0
    %591 = vmatprep.subr.bf16.mxu0 0
    %592 = vmatpush1.bf16.msra.mxu0 0
    %593 = vmatprep.subr.bf16.mxu0 0
    %594 = vmatpush1.bf16.msra.mxu0 0
    %595 = vmatprep.subr.bf16.mxu0 0
    %596 = vmatpush1.bf16.msra.mxu0 0
    %597 = vmatprep.subr.bf16.mxu0 0
    %598 = vmatpush1.bf16.msra.mxu0 0
    %599 = vmatprep.subr.bf16.mxu0 0
    %600 = vmatpush1.bf16.msra.mxu0 0
    %601 = vmatprep.subr.bf16.mxu0 0
    %602 = vmatpush1.bf16.msra.mxu0 0
    %603 = vmatprep.subr.bf16.mxu0 0
    %604 = vmatpush1.bf16.msra.mxu0 0
    %605 = vmatprep.subr.bf16.mxu0 0
    %606 = vmatpush1.bf16.msra.mxu0 0
    %607 = vmatprep.mubr.bf16.mxu0 0
    %608 = vmatmul.mubr.bf16.gmra.mrb[0].mxu0 %v354
    %v609 = vpop.f32.mrb[0].mxu0
    %v610 = vadd.f32 0.0, %v609
    %v611 = vpop.f32.mrb[0].mxu0
    %v612 = vpop.f32.mrb[0].mxu0
    %v613 = vadd.f32 0.0, %v612
    %v614 = vpop.f32.mrb[0].mxu0
    %615 = vdwg.mxu0
    %616 = vmatprep.subr.bf16.mxu0 0
    %617 = vmatpush1.bf16.msra.mxu0 %v574
    %618 = vmatprep.subr.bf16.mxu0 0
    %619 = vmatpush1.bf16.msra.mxu0 0
    %620 = vmatprep.subr.bf16.mxu0 0
    %621 = vmatpush1.bf16.msra.mxu0 0
    %622 = vmatprep.subr.bf16.mxu0 0
    %623 = vmatpush1.bf16.msra.mxu0 0
    %624 = vmatprep.subr.bf16.mxu0 0
    %625 = vmatpush1.bf16.msra.mxu0 0
    %626 = vmatprep.subr.bf16.mxu0 0
    %627 = vmatpush1.bf16.msra.mxu0 0
    %628 = vmatprep.subr.bf16.mxu0 0
    %629 = vmatpush1.bf16.msra.mxu0 0
    %630 = vmatprep.subr.bf16.mxu0 0
    %631 = vmatpush1.bf16.msra.mxu0 0
    %632 = vmatprep.subr.bf16.mxu0 0
    %633 = vmatpush1.bf16.msra.mxu0 0
    %634 = vmatprep.subr.bf16.mxu0 0
    %635 = vmatpush1.bf16.msra.mxu0 0
    %636 = vmatprep.subr.bf16.mxu0 0
    %637 = vmatpush1.bf16.msra.mxu0 0
    %638 = vmatprep.subr.bf16.mxu0 0
    %639 = vmatpush1.bf16.msra.mxu0 0
    %640 = vmatprep.subr.bf16.mxu0 0
    %641 = vmatpush1.bf16.msra.mxu0 0
    %642 = vmatprep.subr.bf16.mxu0 0
    %643 = vmatpush1.bf16.msra.mxu0 0
    %644 = vmatprep.subr.bf16.mxu0 0
    %645 = vmatpush1.bf16.msra.mxu0 0
    %646 = vmatprep.subr.bf16.mxu0 0
    %647 = vmatpush1.bf16.msra.mxu0 0
    %648 = vmatprep.mubr.bf16.mxu0 0
    %649 = vmatmul.mubr.bf16.gmra.mrb[0].mxu0 %v398
    %v650 = vpop.f32.mrb[0].mxu0
    %v651 = vadd.f32 0.0, %v650
    %v652 = vpop.f32.mrb[0].mxu0
    %v653 = vpop.f32.mrb[0].mxu0
    %v654 = vadd.f32 0.0, %v653
    %v655 = vpop.f32.mrb[0].mxu0
    %656 = vdwg.mxu0
    %v657 = vlaneseq
    %v658 = vshrl.u32 %v657, 7
    %v659 = vsub.s32 1, %v658
    %v660 = vrot.slane %v234, %v659
    %v661 = vadd.f32 %v610, %v660
    %v662 = vadd.f32 %v613, %v660
    %v663 = vadd.f32 %v651, %v660
    %v664 = vadd.f32 %v654, %v660
    %v665 = vmax.f32 %v661, 0.0
    %v666 = vmax.f32 %v662, 0.0
    %v667 = vmax.f32 %v663, 0.0
    %v668 = vmax.f32 %v664, 0.0
    %v669 = vadd.f32 %v665, %v453
    %v670 = vadd.f32 %v666, %v454
    %v671 = vadd.f32 %v667, %v455
    %v672 = vadd.f32 %v668, %v456
    %v673 = vpack.c.bf16 %v670, %v669
    %v674 = vpack.c.bf16 %v672, %v671
    %s675 = scalar_lea.vmem [#allocation6], 128
    %v676 = vld [vmem:[%s675] sm:$0xf]
    %v677 = vld [vmem:[%s675 + $0x4] sm:$0xf]
    %v678 = vld [vmem:[%s675 + $0x8] sm:$0xf]
    %v679 = vld [vmem:[%s675 + $0xc] sm:$0xf]
    %v680 = vld [vmem:[%s675 + $0x10] sm:$0xf]
    %v681 = vld [vmem:[%s675 + $0x14] sm:$0xf]
    %v682 = vld [vmem:[%s675 + $0x18] sm:$0xf]
    %v683 = vld [vmem:[%s675 + $0x1c] sm:$0xf]
    %v684 = vld [vmem:[%s675 + $0x20] sm:$0xf]
    %v685 = vld [vmem:[%s675 + $0x24] sm:$0xf]
    %v686 = vld [vmem:[%s675 + $0x28] sm:$0xf]
    %v687 = vld [vmem:[%s675 + $0x2c] sm:$0xf]
    %v688 = vld [vmem:[%s675 + $0x30] sm:$0xf]
    %v689 = vld [vmem:[%s675 + $0x34] sm:$0xf]
    %v690 = vld [vmem:[%s675 + $0x38] sm:$0xf]
    %v691 = vld [vmem:[%s675 + $0x3c] sm:$0xf]
    %v708 = vunpack.c.l.b16 %v676
    %v709 = vunpack.c.l.b16 %v677
    %v710 = vunpack.c.l.b16 %v678
    %v711 = vunpack.c.l.b16 %v679
    %v712 = vunpack.c.l.b16 %v680
    %v713 = vunpack.c.l.b16 %v681
    %v714 = vunpack.c.l.b16 %v682
    %v715 = vunpack.c.l.b16 %v683
    %v716 = vunpack.c.l.b16 %v684
    %v717 = vunpack.c.l.b16 %v685
    %v718 = vunpack.c.l.b16 %v686
    %v719 = vunpack.c.l.b16 %v687
    %v720 = vunpack.c.l.b16 %v688
    %v721 = vunpack.c.l.b16 %v689
    %v722 = vunpack.c.l.b16 %v690
    %v723 = vunpack.c.l.b16 %v691
    %v724 = vpack.c.b16 %v709, %v708
    %v725 = vpack.c.b16 %v711, %v710
    %v726 = vpack.c.b16 %v713, %v712
    %v727 = vpack.c.b16 %v715, %v714
    %v728 = vpack.c.b16 %v717, %v716
    %v729 = vpack.c.b16 %v719, %v718
    %v730 = vpack.c.b16 %v721, %v720
    %v731 = vpack.c.b16 %v723, %v722
    %740 = vmatprep.subr.bf16.mxu0 0
    %741 = vmatpush1.bf16.msra.mxu0 %v724
    %742 = vmatprep.subr.bf16.mxu0 0
    %743 = vmatpush1.bf16.msra.mxu0 %v725
    %744 = vmatprep.subr.bf16.mxu0 0
    %745 = vmatpush1.bf16.msra.mxu0 %v726
    %746 = vmatprep.subr.bf16.mxu0 0
    %747 = vmatpush1.bf16.msra.mxu0 %v727
    %748 = vmatprep.subr.bf16.mxu0 0
    %749 = vmatpush1.bf16.msra.mxu0 %v728
    %750 = vmatprep.subr.bf16.mxu0 0
    %751 = vmatpush1.bf16.msra.mxu0 %v729
    %752 = vmatprep.subr.bf16.mxu0 0
    %753 = vmatpush1.bf16.msra.mxu0 %v730
    %754 = vmatprep.subr.bf16.mxu0 0
    %755 = vmatpush1.bf16.msra.mxu0 %v731
    %756 = vmatprep.subr.bf16.mxu0 0
    %757 = vmatpush1.bf16.msra.mxu0 0
    %758 = vmatprep.subr.bf16.mxu0 0
    %759 = vmatpush1.bf16.msra.mxu0 0
    %760 = vmatprep.subr.bf16.mxu0 0
    %761 = vmatpush1.bf16.msra.mxu0 0
    %762 = vmatprep.subr.bf16.mxu0 0
    %763 = vmatpush1.bf16.msra.mxu0 0
    %764 = vmatprep.subr.bf16.mxu0 0
    %765 = vmatpush1.bf16.msra.mxu0 0
    %766 = vmatprep.subr.bf16.mxu0 0
    %767 = vmatpush1.bf16.msra.mxu0 0
    %768 = vmatprep.subr.bf16.mxu0 0
    %769 = vmatpush1.bf16.msra.mxu0 0
    %770 = vmatprep.subr.bf16.mxu0 0
    %771 = vmatpush1.bf16.msra.mxu0 0
    %772 = vmatprep.mubr.bf16.mxu0 0
    %773 = vmatmul.mubr.bf16.gmra.mrb[0].mxu0 %v673
    %v774 = vpop.f32.mrb[0].mxu0
    %v775 = vadd.f32 0.0, %v774
    %v776 = vpop.f32.mrb[0].mxu0
    %v777 = vpop.f32.mrb[0].mxu0
    %v778 = vadd.f32 0.0, %v777
    %v779 = vpop.f32.mrb[0].mxu0
    %780 = vmatprep.mubr.bf16.mxu0 0
    %781 = vmatmul.mubr.bf16.gmra.mrb[0].mxu0 %v674
    %v782 = vpop.f32.mrb[0].mxu0
    %v783 = vadd.f32 0.0, %v782
    %v784 = vpop.f32.mrb[0].mxu0
    %v785 = vpop.f32.mrb[0].mxu0
    %v786 = vadd.f32 0.0, %v785
    %v787 = vpop.f32.mrb[0].mxu0
    %788 = vdwg.mxu0
    %v789 = vpack.c.bf16 %v778, %v775
    %v790 = vpack.c.bf16 %v786, %v783
    %791 = vmatprep.subr.bf16.mxu0 0
    %792 = vmatpush1.bf16.msra.mxu0 %v789
    %793 = vmatprep.subr.bf16.mxu0 0
    %794 = vmatpush1.bf16.msra.mxu0 0
    %795 = vmatprep.subr.bf16.mxu0 0
    %796 = vmatpush1.bf16.msra.mxu0 0
    %797 = vmatprep.subr.bf16.mxu0 0
    %798 = vmatpush1.bf16.msra.mxu0 0
    %799 = vmatprep.subr.bf16.mxu0 0
    %800 = vmatpush1.bf16.msra.mxu0 0
    %801 = vmatprep.subr.bf16.mxu0 0
    %802 = vmatpush1.bf16.msra.mxu0 0
    %803 = vmatprep.subr.bf16.mxu0 0
    %804 = vmatpush1.bf16.msra.mxu0 0
    %805 = vmatprep.subr.bf16.mxu0 0
    %806 = vmatpush1.bf16.msra.mxu0 0
    %807 = vmatprep.subr.bf16.mxu0 0
    %808 = vmatpush1.bf16.msra.mxu0 0
    %809 = vmatprep.subr.bf16.mxu0 0
    %810 = vmatpush1.bf16.msra.mxu0 0
    %811 = vmatprep.subr.bf16.mxu0 0
    %812 = vmatpush1.bf16.msra.mxu0 0
    %813 = vmatprep.subr.bf16.mxu0 0
    %814 = vmatpush1.bf16.msra.mxu0 0
    %815 = vmatprep.subr.bf16.mxu0 0
    %816 = vmatpush1.bf16.msra.mxu0 0
    %817 = vmatprep.subr.bf16.mxu0 0
    %818 = vmatpush1.bf16.msra.mxu0 0
    %819 = vmatprep.subr.bf16.mxu0 0
    %820 = vmatpush1.bf16.msra.mxu0 0
    %821 = vmatprep.subr.bf16.mxu0 0
    %822 = vmatpush1.bf16.msra.mxu0 0
    %823 = vmatprep.mubr.bf16.mxu0 0
    %824 = vmatmul.mubr.bf16.gmra.mrb[0].mxu0 %v354
    %v825 = vpop.f32.mrb[0].mxu0
    %v826 = vadd.f32 0.0, %v825
    %v827 = vpop.f32.mrb[0].mxu0
    %v828 = vpop.f32.mrb[0].mxu0
    %v829 = vadd.f32 0.0, %v828
    %v830 = vpop.f32.mrb[0].mxu0
    %831 = vdwg.mxu0
    %832 = vmatprep.subr.bf16.mxu0 0
    %833 = vmatpush1.bf16.msra.mxu0 %v790
    %834 = vmatprep.subr.bf16.mxu0 0
    %835 = vmatpush1.bf16.msra.mxu0 0
    %836 = vmatprep.subr.bf16.mxu0 0
    %837 = vmatpush1.bf16.msra.mxu0 0
    %838 = vmatprep.subr.bf16.mxu0 0
    %839 = vmatpush1.bf16.msra.mxu0 0
    %840 = vmatprep.subr.bf16.mxu0 0
    %841 = vmatpush1.bf16.msra.mxu0 0
    %842 = vmatprep.subr.bf16.mxu0 0
    %843 = vmatpush1.bf16.msra.mxu0 0
    %844 = vmatprep.subr.bf16.mxu0 0
    %845 = vmatpush1.bf16.msra.mxu0 0
    %846 = vmatprep.subr.bf16.mxu0 0
    %847 = vmatpush1.bf16.msra.mxu0 0
    %848 = vmatprep.subr.bf16.mxu0 0
    %849 = vmatpush1.bf16.msra.mxu0 0
    %850 = vmatprep.subr.bf16.mxu0 0
    %851 = vmatpush1.bf16.msra.mxu0 0
    %852 = vmatprep.subr.bf16.mxu0 0
    %853 = vmatpush1.bf16.msra.mxu0 0
    %854 = vmatprep.subr.bf16.mxu0 0
    %855 = vmatpush1.bf16.msra.mxu0 0
    %856 = vmatprep.subr.bf16.mxu0 0
    %857 = vmatpush1.bf16.msra.mxu0 0
    %858 = vmatprep.subr.bf16.mxu0 0
    %859 = vmatpush1.bf16.msra.mxu0 0
    %860 = vmatprep.subr.bf16.mxu0 0
    %861 = vmatpush1.bf16.msra.mxu0 0
    %862 = vmatprep.subr.bf16.mxu0 0
    %863 = vmatpush1.bf16.msra.mxu0 0
    %864 = vmatprep.mubr.bf16.mxu0 0
    %865 = vmatmul.mubr.bf16.gmra.mrb[0].mxu0 %v398
    %v866 = vpop.f32.mrb[0].mxu0
    %v867 = vadd.f32 0.0, %v866
    %v868 = vpop.f32.mrb[0].mxu0
    %v869 = vpop.f32.mrb[0].mxu0
    %v870 = vadd.f32 0.0, %v869
    %v871 = vpop.f32.mrb[0].mxu0
    %872 = vdwg.mxu0
    %v873 = vlaneseq
    %v874 = vshrl.u32 %v873, 7
    %v875 = vsub.s32 2, %v874
    %v876 = vrot.slane %v234, %v875
    %v877 = vadd.f32 %v826, %v876
    %v878 = vadd.f32 %v829, %v876
    %v879 = vadd.f32 %v867, %v876
    %v880 = vadd.f32 %v870, %v876
    %v881 = vmax.f32 %v877, 0.0
    %v882 = vmax.f32 %v878, 0.0
    %v883 = vmax.f32 %v879, 0.0
    %v884 = vmax.f32 %v880, 0.0
    %v885 = vadd.f32 %v881, %v669
    %v886 = vadd.f32 %v882, %v670
    %v887 = vadd.f32 %v883, %v671
    %v888 = vadd.f32 %v884, %v672
    %v889 = vpack.c.bf16 %v886, %v885
    %v890 = vpack.c.bf16 %v888, %v887
    %v891 = vld [vmem:[#allocation9] sm:$0xf]
    %v892 = vld [vmem:[#allocation9 + $0x4] sm:$0xf]
    %v893 = vld [vmem:[#allocation9 + $0x8] sm:$0xf]
    %v894 = vld [vmem:[#allocation9 + $0xc] sm:$0xf]
    %v895 = vld [vmem:[#allocation9 + $0x10] sm:$0xf]
    %v896 = vld [vmem:[#allocation9 + $0x14] sm:$0xf]
    %v897 = vld [vmem:[#allocation9 + $0x18] sm:$0xf]
    %v898 = vld [vmem:[#allocation9 + $0x1c] sm:$0xf]
    %v899 = vld [vmem:[#allocation9 + $0x20] sm:$0xf]
    %v900 = vld [vmem:[#allocation9 + $0x24] sm:$0xf]
    %v901 = vld [vmem:[#allocation9 + $0x28] sm:$0xf]
    %v902 = vld [vmem:[#allocation9 + $0x2c] sm:$0xf]
    %v903 = vld [vmem:[#allocation9 + $0x30] sm:$0xf]
    %v904 = vld [vmem:[#allocation9 + $0x34] sm:$0xf]
    %v905 = vld [vmem:[#allocation9 + $0x38] sm:$0xf]
    %v906 = vld [vmem:[#allocation9 + $0x3c] sm:$0xf]
    %v923 = vunpack.c.l.b16 %v891
    %v924 = vunpack.c.l.b16 %v892
    %v925 = vunpack.c.l.b16 %v893
    %v926 = vunpack.c.l.b16 %v894
    %v927 = vunpack.c.l.b16 %v895
    %v928 = vunpack.c.l.b16 %v896
    %v929 = vunpack.c.l.b16 %v897
    %v930 = vunpack.c.l.b16 %v898
    %v931 = vunpack.c.l.b16 %v899
    %v932 = vunpack.c.l.b16 %v900
    %v933 = vunpack.c.l.b16 %v901
    %v934 = vunpack.c.l.b16 %v902
    %v935 = vunpack.c.l.b16 %v903
    %v936 = vunpack.c.l.b16 %v904
    %v937 = vunpack.c.l.b16 %v905
    %v938 = vunpack.c.l.b16 %v906
    %v939 = vpack.c.b16 %v924, %v923
    %v940 = vpack.c.b16 %v926, %v925
    %v941 = vpack.c.b16 %v928, %v927
    %v942 = vpack.c.b16 %v930, %v929
    %v943 = vpack.c.b16 %v932, %v931
    %v944 = vpack.c.b16 %v934, %v933
    %v945 = vpack.c.b16 %v936, %v935
    %v946 = vpack.c.b16 %v938, %v937
    %955 = vmatprep.subr.bf16.mxu0 0
    %956 = vmatpush1.bf16.msra.mxu0 %v939
    %957 = vmatprep.subr.bf16.mxu0 0
    %958 = vmatpush1.bf16.msra.mxu0 %v940
    %959 = vmatprep.subr.bf16.mxu0 0
    %960 = vmatpush1.bf16.msra.mxu0 %v941
    %961 = vmatprep.subr.bf16.mxu0 0
    %962 = vmatpush1.bf16.msra.mxu0 %v942
    %963 = vmatprep.subr.bf16.mxu0 0
    %964 = vmatpush1.bf16.msra.mxu0 %v943
    %965 = vmatprep.subr.bf16.mxu0 0
    %966 = vmatpush1.bf16.msra.mxu0 %v944
    %967 = vmatprep.subr.bf16.mxu0 0
    %968 = vmatpush1.bf16.msra.mxu0 %v945
    %969 = vmatprep.subr.bf16.mxu0 0
    %970 = vmatpush1.bf16.msra.mxu0 %v946
    %971 = vmatprep.subr.bf16.mxu0 0
    %972 = vmatpush1.bf16.msra.mxu0 0
    %973 = vmatprep.subr.bf16.mxu0 0
    %974 = vmatpush1.bf16.msra.mxu0 0
    %975 = vmatprep.subr.bf16.mxu0 0
    %976 = vmatpush1.bf16.msra.mxu0 0
    %977 = vmatprep.subr.bf16.mxu0 0
    %978 = vmatpush1.bf16.msra.mxu0 0
    %979 = vmatprep.subr.bf16.mxu0 0
    %980 = vmatpush1.bf16.msra.mxu0 0
    %981 = vmatprep.subr.bf16.mxu0 0
    %982 = vmatpush1.bf16.msra.mxu0 0
    %983 = vmatprep.subr.bf16.mxu0 0
    %984 = vmatpush1.bf16.msra.mxu0 0
    %985 = vmatprep.subr.bf16.mxu0 0
    %986 = vmatpush1.bf16.msra.mxu0 0
    %987 = vmatprep.mubr.bf16.mxu0 0
    %988 = vmatmul.mubr.bf16.gmra.mrb[0].mxu0 %v889
    %v989 = vpop.f32.mrb[0].mxu0
    %v990 = vadd.f32 0.0, %v989
    %v991 = vpop.f32.mrb[0].mxu0
    %v992 = vpop.f32.mrb[0].mxu0
    %v993 = vadd.f32 0.0, %v992
    %v994 = vpop.f32.mrb[0].mxu0
    %995 = vmatprep.mubr.bf16.mxu0 0
    %996 = vmatmul.mubr.bf16.gmra.mrb[0].mxu0 %v890
    %v997 = vpop.f32.mrb[0].mxu0
    %v998 = vadd.f32 0.0, %v997
    %v999 = vpop.f32.mrb[0].mxu0
    %v1000 = vpop.f32.mrb[0].mxu0
    %v1001 = vadd.f32 0.0, %v1000
    %v1002 = vpop.f32.mrb[0].mxu0
    %1003 = vdwg.mxu0
    %1004 = vst [vmem:[%s7] sm:$0xff] %v990
    %1005 = vst [vmem:[%s7 + $0x8] sm:$0xff] %v993
    %1006 = vst [vmem:[%s7 + $0x10] sm:$0xff] %v998
    %1007 = vst [vmem:[%s7 + $0x18] sm:$0xff] %v1001
    %v1008 = vld [vmem:[#allocation10] sm:$0xf]
    %v1009 = vld [vmem:[#allocation10 + $0x4] sm:$0xf]
    %v1010 = vld [vmem:[#allocation10 + $0x8] sm:$0xf]
    %v1011 = vld [vmem:[#allocation10 + $0xc] sm:$0xf]
    %v1012 = vld [vmem:[#allocation10 + $0x10] sm:$0xf]
    %v1013 = vld [vmem:[#allocation10 + $0x14] sm:$0xf]
    %v1014 = vld [vmem:[#allocation10 + $0x18] sm:$0xf]
    %v1015 = vld [vmem:[#allocation10 + $0x1c] sm:$0xf]
    %v1016 = vld [vmem:[#allocation10 + $0x20] sm:$0xf]
    %v1017 = vld [vmem:[#allocation10 + $0x24] sm:$0xf]
    %v1018 = vld [vmem:[#allocation10 + $0x28] sm:$0xf]
    %v1019 = vld [vmem:[#allocation10 + $0x2c] sm:$0xf]
    %v1020 = vld [vmem:[#allocation10 + $0x30] sm:$0xf]
    %v1021 = vld [vmem:[#allocation10 + $0x34] sm:$0xf]
    %v1022 = vld [vmem:[#allocation10 + $0x38] sm:$0xf]
    %v1023 = vld [vmem:[#allocation10 + $0x3c] sm:$0xf]
    %v1040 = vunpack.c.l.b16 %v1008
    %v1041 = vunpack.c.l.b16 %v1009
    %v1042 = vunpack.c.l.b16 %v1010
    %v1043 = vunpack.c.l.b16 %v1011
    %v1044 = vunpack.c.l.b16 %v1012
    %v1045 = vunpack.c.l.b16 %v1013
    %v1046 = vunpack.c.l.b16 %v1014
    %v1047 = vunpack.c.l.b16 %v1015
    %v1048 = vunpack.c.l.b16 %v1016
    %v1049 = vunpack.c.l.b16 %v1017
    %v1050 = vunpack.c.l.b16 %v1018
    %v1051 = vunpack.c.l.b16 %v1019
    %v1052 = vunpack.c.l.b16 %v1020
    %v1053 = vunpack.c.l.b16 %v1021
    %v1054 = vunpack.c.l.b16 %v1022
    %v1055 = vunpack.c.l.b16 %v1023
    %v1056 = vpack.c.b16 %v1041, %v1040
    %v1057 = vpack.c.b16 %v1043, %v1042
    %v1058 = vpack.c.b16 %v1045, %v1044
    %v1059 = vpack.c.b16 %v1047, %v1046
    %v1060 = vpack.c.b16 %v1049, %v1048
    %v1061 = vpack.c.b16 %v1051, %v1050
    %v1062 = vpack.c.b16 %v1053, %v1052
    %v1063 = vpack.c.b16 %v1055, %v1054
    %1072 = vmatprep.subr.bf16.mxu0 0
    %1073 = vmatpush1.bf16.msra.mxu0 %v1056
    %1074 = vmatprep.subr.bf16.mxu0 0
    %1075 = vmatpush1.bf16.msra.mxu0 %v1057
    %1076 = vmatprep.subr.bf16.mxu0 0
    %1077 = vmatpush1.bf16.msra.mxu0 %v1058
    %1078 = vmatprep.subr.bf16.mxu0 0
    %1079 = vmatpush1.bf16.msra.mxu0 %v1059
    %1080 = vmatprep.subr.bf16.mxu0 0
    %1081 = vmatpush1.bf16.msra.mxu0 %v1060
    %1082 = vmatprep.subr.bf16.mxu0 0
    %1083 = vmatpush1.bf16.msra.mxu0 %v1061
    %1084 = vmatprep.subr.bf16.mxu0 0
    %1085 = vmatpush1.bf16.msra.mxu0 %v1062
    %1086 = vmatprep.subr.bf16.mxu0 0
    %1087 = vmatpush1.bf16.msra.mxu0 %v1063
    %1088 = vmatprep.subr.bf16.mxu0 0
    %1089 = vmatpush1.bf16.msra.mxu0 0
    %1090 = vmatprep.subr.bf16.mxu0 0
    %1091 = vmatpush1.bf16.msra.mxu0 0
    %1092 = vmatprep.subr.bf16.mxu0 0
    %1093 = vmatpush1.bf16.msra.mxu0 0
    %1094 = vmatprep.subr.bf16.mxu0 0
    %1095 = vmatpush1.bf16.msra.mxu0 0
    %1096 = vmatprep.subr.bf16.mxu0 0
    %1097 = vmatpush1.bf16.msra.mxu0 0
    %1098 = vmatprep.subr.bf16.mxu0 0
    %1099 = vmatpush1.bf16.msra.mxu0 0
    %1100 = vmatprep.subr.bf16.mxu0 0
    %1101 = vmatpush1.bf16.msra.mxu0 0
    %1102 = vmatprep.subr.bf16.mxu0 0
    %1103 = vmatpush1.bf16.msra.mxu0 0
    %1104 = vmatprep.mubr.bf16.mxu0 0
    %1105 = vmatmul.mubr.bf16.gmra.mrb[0].mxu0 %v889
    %v1106 = vpop.f32.mrb[0].mxu0
    %v1107 = vadd.f32 0.0, %v1106
    %v1108 = vpop.f32.mrb[0].mxu0
    %v1109 = vpop.f32.mrb[0].mxu0
    %v1110 = vadd.f32 0.0, %v1109
    %v1111 = vpop.f32.mrb[0].mxu0
    %1112 = vmatprep.mubr.bf16.mxu0 0
    %1113 = vmatmul.mubr.bf16.gmra.mrb[0].mxu0 %v890
    %v1114 = vpop.f32.mrb[0].mxu0
    %v1115 = vadd.f32 0.0, %v1114
    %v1116 = vpop.f32.mrb[0].mxu0
    %v1117 = vpop.f32.mrb[0].mxu0
    %v1118 = vadd.f32 0.0, %v1117
    %v1119 = vpop.f32.mrb[0].mxu0
    %1120 = vdwg.mxu0
    %1121 = vst [vmem:[%s8] sm:$0xff] %v1107
    %1122 = vst [vmem:[%s8 + $0x8] sm:$0xff] %v1110
    %1123 = vst [vmem:[%s8 + $0x10] sm:$0xff] %v1115
    %1124 = vst [vmem:[%s8 + $0x18] sm:$0xff] %v1118
    // Predicated region
    $region54: #{model_forward.4} parent=1 // pred_check
      _
    $region55: #{model_forward.4} parent=1 // pred_check_branch
      %1126 = sbr.rel (0) target = $region57
    $region56: #{model_forward.4} parent=1 // pred_region
      _
    $region57: #{model_forward.4} parent=1 // pred_fallthru
      _
    // Predicated region
    $region58: #{model_forward.4} parent=1 // pred_check
      _
    $region59: #{model_forward.4} parent=1 // pred_check_branch
      %1128 = sbr.rel (0) target = $region61
    $region60: #{model_forward.4} parent=1 // pred_region
      _
    $region61: #{model_forward.4} parent=1 // pred_fallthru
      _
    // Predicated region
    $region62: #{model_forward.4} parent=1 // pred_check
      _
    $region63: #{model_forward.4} parent=1 // pred_check_branch
      %1130 = sbr.rel (0) target = $region65
    $region64: #{model_forward.4} parent=1 // pred_region
      _
    $region65: #{model_forward.4} parent=1 // pred_fallthru
      _
    // Predicated region
    $region66: #{model_forward.4} parent=1 // pred_check
      _
    $region67: #{model_forward.4} parent=1 // pred_check_branch
      %1132 = sbr.rel (0) target = $region69
    $region68: #{model_forward.4} parent=1 // pred_region
      _
    $region69: #{model_forward.4} parent=1 // pred_fallthru
      _
    %1133 = vsyncpa [#allocation3], 1
    %1134 = vsyncpa [#allocation5], 1
    %1135 = vsyncpa [#allocation8], 1
    %1136 = vsyncpa [#allocation11], 1

// kernel: model_forward.7
$region0: #{model_forward.7}
  #allocation0 [shape = 'u32[]', space=smem, size = 0x4, offset = 0x4, fixed_abs, tag = 'smem constant byte address 0x4 - core index']
  #allocation1 [shape = 'u32[144,128]{1,0:T(1,128)}', space=vmem, size = 0x12000, scoped, tag = 'internal scratch']
  #allocation2 [shape = 'f32[1,1]{1,0:T(1,128)S(1)}', space=vmem, size = 0x200, scoped, tag = 'scoped memory for model_forward.7']
  %s0 = inlined_call_operand.vmem [shape: f32[2,16,128], index: 0, kind: input, shape index: {}]
  %s1 = inlined_call_operand.vmem [shape: f32[2,16,128], index: 1, kind: input, shape index: {}]
  %s2 = inlined_call_operand.vmem [shape: f32[2,8,128], index: 2, kind: input, shape index: {}]
  %s3 = inlined_call_operand.vmem [shape: f32[2,8,128], index: 3, kind: input, shape index: {}]
  %s4 = inlined_call_operand.hbm [shape: f32[1,128], index: 4, kind: input, shape index: {}]
  %s5 = inlined_call_operand.hbm [shape: bf16[128,128], index: 5, kind: input, shape index: {}]
  %s6 = inlined_call_operand.hbm [shape: bf16[128,128], index: 6, kind: input, shape index: {}]
  %s7 = inlined_call_operand.hbm [shape: bf16[128,1024], index: 7, kind: input, shape index: {}]
  %s8 = inlined_call_operand.hbm [shape: f32[1,1024], index: 8, kind: input, shape index: {}]
  %s9 = inlined_call_operand.hbm [shape: f32[1,1024], index: 9, kind: input, shape index: {}]
  %s10 = inlined_call_operand.hbm [shape: f32[1,1024], index: 10, kind: input, shape index: {}]
  %s11 = inlined_call_operand.hbm [shape: bf16[1024,1024], index: 11, kind: input, shape index: {}]
  %s12 = inlined_call_operand.hbm [shape: f32[1,1024], index: 12, kind: input, shape index: {}]
  %s13 = inlined_call_operand.hbm [shape: f32[1,1024], index: 13, kind: input, shape index: {}]
  %s14 = inlined_call_operand.hbm [shape: f32[1,1024], index: 14, kind: input, shape index: {}]
  %s15 = inlined_call_operand.hbm [shape: bf16[1024,256], index: 15, kind: input, shape index: {}]
  %s16 = inlined_call_operand.hbm [shape: f32[1,256], index: 16, kind: input, shape index: {}]
  %s17 = inlined_call_operand.hbm [shape: f32[1,256], index: 17, kind: input, shape index: {}]
  %s18 = inlined_call_operand.hbm [shape: f32[1,256], index: 18, kind: input, shape index: {}]
  %s19 = inlined_call_operand.vmem [shape: bf16[256,1], index: 19, kind: input, shape index: {}]
  %s20 = inlined_call_operand.<no memory space> [shape: f32[1,1], index: 20, kind: input, shape index: {}]
  %s21 = inlined_call_operand.vmem [shape: f32[2,1], index: 21, kind: output, shape index: {}]
  %s22 = sld [smem:[#allocation0]]
  $region154: #{model_forward.7} parent=0
    _
  %s24 = ssub.s32 1, %s22
  %s25 = scalar_select 0, %s24, %s22
  %v26 = vstv %s20
  %27 = vst [vmem:[#allocation2] sm:$0x1] %v26
  $region1: #{model_forward.7} parent=0
    #allocation3 [shape = 'u8[512]{0}', space=vmem, size = 0x400, scoped, tag = 'input window, operand 4, single buffered']
    #allocation4 [shape = 's32[1]{0}', space=sflag, size = 0x4, scoped, tag = 'scoped memory for model_forward.7']
    #allocation5 [shape = 'u8[32768]{0}', space=vmem, size = 0x8000, scoped, tag = 'input window, operand 5, single buffered']
    #allocation6 [shape = 's32[1]{0}', space=sflag, size = 0x4, scoped, tag = 'scoped memory for model_forward.7']
    #allocation7 [shape = 'u8[32768]{0}', space=vmem, size = 0x8000, scoped, tag = 'input window, operand 6, single buffered']
    #allocation8 [shape = 'u8[262144]{0}', space=vmem, size = 0x40000, scoped, tag = 'input window, operand 7, single buffered']
    #allocation9 [shape = 's32[1]{0}', space=sflag, size = 0x4, scoped, tag = 'scoped memory for model_forward.7']
    #allocation10 [shape = 'u8[4096]{0}', space=vmem, size = 0x1000, scoped, tag = 'input window, operand 8, single buffered']
    #allocation11 [shape = 'u8[4096]{0}', space=vmem, size = 0x1000, scoped, tag = 'input window, operand 9, single buffered']
    #allocation12 [shape = 's32[1]{0}', space=sflag, size = 0x4, scoped, tag = 'scoped memory for model_forward.7']
    #allocation13 [shape = 'u8[4096]{0}', space=vmem, size = 0x1000, scoped, tag = 'input window, operand 10, single buffered']
    #allocation14 [shape = 'u8[2097152]{0}', space=vmem, size = 0x200000, scoped, tag = 'input window, operand 11, single buffered']
    #allocation15 [shape = 's32[1]{0}', space=sflag, size = 0x4, scoped, tag = 'scoped memory for model_forward.7']
    #allocation16 [shape = 'u8[4096]{0}', space=vmem, size = 0x1000, scoped, tag = 'input window, operand 12, single buffered']
    #allocation17 [shape = 'u8[4096]{0}', space=vmem, size = 0x1000, scoped, tag = 'input window, operand 13, single buffered']
    #allocation18 [shape = 's32[1]{0}', space=sflag, size = 0x4, scoped, tag = 'scoped memory for model_forward.7']
    #allocation19 [shape = 'u8[4096]{0}', space=vmem, size = 0x1000, scoped, tag = 'input window, operand 14, single buffered']
    #allocation20 [shape = 'u8[524288]{0}', space=vmem, size = 0x80000, scoped, tag = 'input window, operand 15, single buffered']
    #allocation21 [shape = 's32[1]{0}', space=sflag, size = 0x4, scoped, tag = 'scoped memory for model_forward.7']
    #allocation22 [shape = 'u8[1024]{0}', space=vmem, size = 0x400, scoped, tag = 'input window, operand 16, single buffered']
    #allocation23 [shape = 'u8[1024]{0}', space=vmem, size = 0x400, scoped, tag = 'input window, operand 17, single buffered']
    #allocation24 [shape = 's32[1]{0}', space=sflag, size = 0x4, scoped, tag = 'scoped memory for model_forward.7']
    #allocation25 [shape = 'u8[1024]{0}', space=vmem, size = 0x400, scoped, tag = 'input window, operand 18, single buffered']
    %28 = vsyncpa [#allocation4], 0
    %29 = vsyncpa [#allocation6], 0
    %30 = vsyncpa [#allocation9], 0
    %31 = vsyncpa [#allocation12], 0
    %32 = vsyncpa [#allocation15], 0
    %33 = vsyncpa [#allocation18], 0
    %34 = vsyncpa [#allocation21], 0
    %35 = vsyncpa [#allocation24], 0
    // Predicated region
    $region2: #{model_forward.7} parent=1 // pred_check
      _
    $region3: #{model_forward.7} parent=1 // pred_check_branch
      %37 = sbr.rel (0) target = $region5
    $region4: #{model_forward.7} parent=1 // pred_region
      _
    $region5: #{model_forward.7} parent=1 // pred_fallthru
      _
    // Predicated region
    $region6: #{model_forward.7} parent=1 // pred_check
      _
    $region7: #{model_forward.7} parent=1 // pred_check_branch
      %39 = sbr.rel (0) target = $region9
    $region8: #{model_forward.7} parent=1 // pred_region
      _
    $region9: #{model_forward.7} parent=1 // pred_fallthru
      _
    // Predicated region
    $region10: #{model_forward.7} parent=1 // pred_check
      _
    $region11: #{model_forward.7} parent=1 // pred_check_branch
      %41 = sbr.rel (0) target = $region13
    $region12: #{model_forward.7} parent=1 // pred_region
      _
    $region13: #{model_forward.7} parent=1 // pred_fallthru
      _
    // Predicated region
    $region14: #{model_forward.7} parent=1 // pred_check
      _
    $region15: #{model_forward.7} parent=1 // pred_check_branch
      %43 = sbr.rel (0) target = $region17
    $region16: #{model_forward.7} parent=1 // pred_region
      _
    $region17: #{model_forward.7} parent=1 // pred_fallthru
      _
    // Predicated region
    $region18: #{model_forward.7} parent=1 // pred_check
      _
    $region19: #{model_forward.7} parent=1 // pred_check_branch
      %45 = sbr.rel (0) target = $region21
    $region20: #{model_forward.7} parent=1 // pred_region
      %s47 = ssub.s32 16, 16
      %48 = vsyncadd [#allocation4], %s47
      %s50 = sshll.u32 [#allocation3], 4
      %s51 = int_to_ptr.vmem [resolvable:$true] %s50
      %53 = dma.hbm_to_vmem [thread:$0]  %s4, 16, %s51, [#allocation4]
    $region21: #{model_forward.7} parent=1 // pred_fallthru
      _
    // Predicated region
    $region22: #{model_forward.7} parent=1 // pred_check
      _
    $region23: #{model_forward.7} parent=1 // pred_check_branch
      %55 = sbr.rel (0) target = $region25
    $region24: #{model_forward.7} parent=1 // pred_region
      %s57 = ssub.s32 1024, 1024
      %58 = vsyncadd [#allocation6], %s57
      %s59 = sshll.u32 [#allocation5], 4
      %s60 = int_to_ptr.vmem [resolvable:$true] %s59
      %65 = dma.hbm_to_vmem [thread:$0]  %s5, 1024, %s60, [#allocation6], 64, 64, 4
    $region25: #{model_forward.7} parent=1 // pred_fallthru
      _
    // Predicated region
    $region26: #{model_forward.7} parent=1 // pred_check
      _
    $region27: #{model_forward.7} parent=1 // pred_check_branch
      %67 = sbr.rel (0) target = $region29
    $region28: #{model_forward.7} parent=1 // pred_region
      %s69 = ssub.s32 1024, 1024
      %70 = vsyncadd [#allocation6], %s69
      %s71 = sshll.u32 [#allocation7], 4
      %s72 = int_to_ptr.vmem [resolvable:$true] %s71
      %77 = dma.hbm_to_vmem [thread:$0]  %s6, 1024, %s72, [#allocation6], 64, 64, 4
    $region29: #{model_forward.7} parent=1 // pred_fallthru
      _
    // Predicated region
    $region30: #{model_forward.7} parent=1 // pred_check
      _
    $region31: #{model_forward.7} parent=1 // pred_check_branch
      %79 = sbr.rel (0) target = $region33
    $region32: #{model_forward.7} parent=1 // pred_region
      %s81 = ssub.s32 8192, 8192
      %82 = vsyncadd [#allocation9], %s81
      %s83 = sshll.u32 [#allocation8], 4
      %s84 = int_to_ptr.vmem [resolvable:$true] %s83
      %89 = dma.hbm_to_vmem [thread:$0]  %s7, 8192, %s84, [#allocation9], 512, 512, 32
    $region33: #{model_forward.7} parent=1 // pred_fallthru
      _
    // Predicated region
    $region34: #{model_forward.7} parent=1 // pred_check
      _
    $region35: #{model_forward.7} parent=1 // pred_check_branch
      %91 = sbr.rel (0) target = $region37
    $region36: #{model_forward.7} parent=1 // pred_region
      %s93 = ssub.s32 128, 128
      %94 = vsyncadd [#allocation9], %s93
      %s96 = sshll.u32 [#allocation10], 4
      %s97 = int_to_ptr.vmem [resolvable:$true] %s96
      %99 = dma.hbm_to_vmem [thread:$0]  %s8, 128, %s97, [#allocation9]
    $region37: #{model_forward.7} parent=1 // pred_fallthru
      _
    // Predicated region
    $region38: #{model_forward.7} parent=1 // pred_check
      _
    $region39: #{model_forward.7} parent=1 // pred_check_branch
      %101 = sbr.rel (0) target = $region41
    $region40: #{model_forward.7} parent=1 // pred_region
      %s103 = ssub.s32 128, 128
      %104 = vsyncadd [#allocation12], %s103
      %s106 = sshll.u32 [#allocation11], 4
      %s107 = int_to_ptr.vmem [resolvable:$true] %s106
      %109 = dma.hbm_to_vmem [thread:$0]  %s9, 128, %s107, [#allocation12]
    $region41: #{model_forward.7} parent=1 // pred_fallthru
      _
    // Predicated region
    $region42: #{model_forward.7} parent=1 // pred_check
      _
    $region43: #{model_forward.7} parent=1 // pred_check_branch
      %111 = sbr.rel (0) target = $region45
    $region44: #{model_forward.7} parent=1 // pred_region
      %s113 = ssub.s32 128, 128
      %114 = vsyncadd [#allocation12], %s113
      %s116 = sshll.u32 [#allocation13], 4
      %s117 = int_to_ptr.vmem [resolvable:$true] %s116
      %119 = dma.hbm_to_vmem [thread:$0]  %s10, 128, %s117, [#allocation12]
    $region45: #{model_forward.7} parent=1 // pred_fallthru
      _
    // Predicated region
    $region46: #{model_forward.7} parent=1 // pred_check
      _
    $region47: #{model_forward.7} parent=1 // pred_check_branch
      %121 = sbr.rel (0) target = $region49
    $region48: #{model_forward.7} parent=1 // pred_region
      %s123 = ssub.s32 65536, 65536
      %124 = vsyncadd [#allocation15], %s123
      %s125 = sshll.u32 [#allocation14], 4
      %s126 = int_to_ptr.vmem [resolvable:$true] %s125
      %131 = dma.hbm_to_vmem [thread:$0]  %s11, 65536, %s126, [#allocation15], 512, 512, 32
    $region49: #{model_forward.7} parent=1 // pred_fallthru
      _
    // Predicated region
    $region50: #{model_forward.7} parent=1 // pred_check
      _
    $region51: #{model_forward.7} parent=1 // pred_check_branch
      %133 = sbr.rel (0) target = $region53
    $region52: #{model_forward.7} parent=1 // pred_region
      %s135 = ssub.s32 128, 128
      %136 = vsyncadd [#allocation15], %s135
      %s138 = sshll.u32 [#allocation16], 4
      %s139 = int_to_ptr.vmem [resolvable:$true] %s138
      %141 = dma.hbm_to_vmem [thread:$0]  %s12, 128, %s139, [#allocation15]
    $region53: #{model_forward.7} parent=1 // pred_fallthru
      _
    // Predicated region
    $region54: #{model_forward.7} parent=1 // pred_check
      _
    $region55: #{model_forward.7} parent=1 // pred_check_branch
      %143 = sbr.rel (0) target = $region57
    $region56: #{model_forward.7} parent=1 // pred_region
      %s145 = ssub.s32 128, 128
      %146 = vsyncadd [#allocation18], %s145
      %s148 = sshll.u32 [#allocation17], 4
      %s149 = int_to_ptr.vmem [resolvable:$true] %s148
      %151 = dma.hbm_to_vmem [thread:$0]  %s13, 128, %s149, [#allocation18]
    $region57: #{model_forward.7} parent=1 // pred_fallthru
      _
    // Predicated region
    $region58: #{model_forward.7} parent=1 // pred_check
      _
    $region59: #{model_forward.7} parent=1 // pred_check_branch
      %153 = sbr.rel (0) target = $region61
    $region60: #{model_forward.7} parent=1 // pred_region
      %s155 = ssub.s32 128, 128
      %156 = vsyncadd [#allocation18], %s155
      %s158 = sshll.u32 [#allocation19], 4
      %s159 = int_to_ptr.vmem [resolvable:$true] %s158
      %161 = dma.hbm_to_vmem [thread:$0]  %s14, 128, %s159, [#allocation18]
    $region61: #{model_forward.7} parent=1 // pred_fallthru
      _
    // Predicated region
    $region62: #{model_forward.7} parent=1 // pred_check
      _
    $region63: #{model_forward.7} parent=1 // pred_check_branch
      %163 = sbr.rel (0) target = $region65
    $region64: #{model_forward.7} parent=1 // pred_region
      %s165 = ssub.s32 16384, 16384
      %166 = vsyncadd [#allocation21], %s165
      %s167 = sshll.u32 [#allocation20], 4
      %s168 = int_to_ptr.vmem [resolvable:$true] %s167
      %173 = dma.hbm_to_vmem [thread:$0]  %s15, 16384, %s168, [#allocation21], 128, 128, 8
    $region65: #{model_forward.7} parent=1 // pred_fallthru
      _
    // Predicated region
    $region66: #{model_forward.7} parent=1 // pred_check
      _
    $region67: #{model_forward.7} parent=1 // pred_check_branch
      %175 = sbr.rel (0) target = $region69
    $region68: #{model_forward.7} parent=1 // pred_region
      %s177 = ssub.s32 32, 32
      %178 = vsyncadd [#allocation21], %s177
      %s180 = sshll.u32 [#allocation22], 4
      %s181 = int_to_ptr.vmem [resolvable:$true] %s180
      %183 = dma.hbm_to_vmem [thread:$0]  %s16, 32, %s181, [#allocation21]
    $region69: #{model_forward.7} parent=1 // pred_fallthru
      _
    // Predicated region
    $region70: #{model_forward.7} parent=1 // pred_check
      _
    $region71: #{model_forward.7} parent=1 // pred_check_branch
      %185 = sbr.rel (0) target = $region73
    $region72: #{model_forward.7} parent=1 // pred_region
      %s187 = ssub.s32 32, 32
      %188 = vsyncadd [#allocation24], %s187
      %s190 = sshll.u32 [#allocation23], 4
      %s191 = int_to_ptr.vmem [resolvable:$true] %s190
      %193 = dma.hbm_to_vmem [thread:$0]  %s17, 32, %s191, [#allocation24]
    $region73: #{model_forward.7} parent=1 // pred_fallthru
      _
    // Predicated region
    $region74: #{model_forward.7} parent=1 // pred_check
      _
    $region75: #{model_forward.7} parent=1 // pred_check_branch
      %195 = sbr.rel (0) target = $region77
    $region76: #{model_forward.7} parent=1 // pred_region
      %s197 = ssub.s32 32, 32
      %198 = vsyncadd [#allocation24], %s197
      %s200 = sshll.u32 [#allocation25], 4
      %s201 = int_to_ptr.vmem [resolvable:$true] %s200
      %203 = dma.hbm_to_vmem [thread:$0]  %s18, 32, %s201, [#allocation24]
    $region77: #{model_forward.7} parent=1 // pred_fallthru
      _
    // Predicated region
    $region78: #{model_forward.7} parent=1 // pred_check
      _
    $region79: #{model_forward.7} parent=1 // pred_check_branch
      %205 = sbr.rel (0) target = $region81
    $region80: #{model_forward.7} parent=1 // pred_region
      _
    $region81: #{model_forward.7} parent=1 // pred_fallthru
      _
    // Predicated region
    $region82: #{model_forward.7} parent=1 // pred_check
      _
    $region83: #{model_forward.7} parent=1 // pred_check_branch
      %207 = sbr.rel (0) target = $region85
    $region84: #{model_forward.7} parent=1 // pred_region
      _
    $region85: #{model_forward.7} parent=1 // pred_fallthru
      _
    // Predicated region
    $region86: #{model_forward.7} parent=1 // pred_check
      _
    $region87: #{model_forward.7} parent=1 // pred_check_branch
      %209 = sbr.rel (0) target = $region89
    $region88: #{model_forward.7} parent=1 // pred_region
      %210 = dma.done [#allocation4], 16
    $region89: #{model_forward.7} parent=1 // pred_fallthru
      _
    // Predicated region
    $region90: #{model_forward.7} parent=1 // pred_check
      _
    $region91: #{model_forward.7} parent=1 // pred_check_branch
      %212 = sbr.rel (0) target = $region93
    $region92: #{model_forward.7} parent=1 // pred_region
      %213 = dma.done [#allocation6], 1024
    $region93: #{model_forward.7} parent=1 // pred_fallthru
      _
    // Predicated region
    $region94: #{model_forward.7} parent=1 // pred_check
      _
    $region95: #{model_forward.7} parent=1 // pred_check_branch
      %215 = sbr.rel (0) target = $region97
    $region96: #{model_forward.7} parent=1 // pred_region
      %216 = dma.done [#allocation6], 1024
    $region97: #{model_forward.7} parent=1 // pred_fallthru
      _
    // Predicated region
    $region98: #{model_forward.7} parent=1 // pred_check
      _
    $region99: #{model_forward.7} parent=1 // pred_check_branch
      %218 = sbr.rel (0) target = $region101
    $region100: #{model_forward.7} parent=1 // pred_region
      %219 = dma.done [#allocation9], 8192
    $region101: #{model_forward.7} parent=1 // pred_fallthru
      _
    // Predicated region
    $region102: #{model_forward.7} parent=1 // pred_check
      _
    $region103: #{model_forward.7} parent=1 // pred_check_branch
      %221 = sbr.rel (0) target = $region105
    $region104: #{model_forward.7} parent=1 // pred_region
      %222 = dma.done [#allocation9], 128
    $region105: #{model_forward.7} parent=1 // pred_fallthru
      _
    // Predicated region
    $region106: #{model_forward.7} parent=1 // pred_check
      _
    $region107: #{model_forward.7} parent=1 // pred_check_branch
      %224 = sbr.rel (0) target = $region109
    $region108: #{model_forward.7} parent=1 // pred_region
      %225 = dma.done [#allocation12], 128
    $region109: #{model_forward.7} parent=1 // pred_fallthru
      _
    // Predicated region
    $region110: #{model_forward.7} parent=1 // pred_check
      _
    $region111: #{model_forward.7} parent=1 // pred_check_branch
      %227 = sbr.rel (0) target = $region113
    $region112: #{model_forward.7} parent=1 // pred_region
      %228 = dma.done [#allocation12], 128
    $region113: #{model_forward.7} parent=1 // pred_fallthru
      _
    // Predicated region
    $region114: #{model_forward.7} parent=1 // pred_check
      _
    $region115: #{model_forward.7} parent=1 // pred_check_branch
      %230 = sbr.rel (0) target = $region117
    $region116: #{model_forward.7} parent=1 // pred_region
      %231 = dma.done [#allocation15], 65536
    $region117: #{model_forward.7} parent=1 // pred_fallthru
      _
    // Predicated region
    $region118: #{model_forward.7} parent=1 // pred_check
      _
    $region119: #{model_forward.7} parent=1 // pred_check_branch
      %233 = sbr.rel (0) target = $region121
    $region120: #{model_forward.7} parent=1 // pred_region
      %234 = dma.done [#allocation15], 128
    $region121: #{model_forward.7} parent=1 // pred_fallthru
      _
    // Predicated region
    $region122: #{model_forward.7} parent=1 // pred_check
      _
    $region123: #{model_forward.7} parent=1 // pred_check_branch
      %236 = sbr.rel (0) target = $region125
    $region124: #{model_forward.7} parent=1 // pred_region
      %237 = dma.done [#allocation18], 128
    $region125: #{model_forward.7} parent=1 // pred_fallthru
      _
    // Predicated region
    $region126: #{model_forward.7} parent=1 // pred_check
      _
    $region127: #{model_forward.7} parent=1 // pred_check_branch
      %239 = sbr.rel (0) target = $region129
    $region128: #{model_forward.7} parent=1 // pred_region
      %240 = dma.done [#allocation18], 128
    $region129: #{model_forward.7} parent=1 // pred_fallthru
      _
    // Predicated region
    $region130: #{model_forward.7} parent=1 // pred_check
      _
    $region131: #{model_forward.7} parent=1 // pred_check_branch
      %242 = sbr.rel (0) target = $region133
    $region132: #{model_forward.7} parent=1 // pred_region
      %243 = dma.done [#allocation21], 16384
    $region133: #{model_forward.7} parent=1 // pred_fallthru
      _
    // Predicated region
    $region134: #{model_forward.7} parent=1 // pred_check
      _
    $region135: #{model_forward.7} parent=1 // pred_check_branch
      %245 = sbr.rel (0) target = $region137
    $region136: #{model_forward.7} parent=1 // pred_region
      %246 = dma.done [#allocation21], 32
    $region137: #{model_forward.7} parent=1 // pred_fallthru
      _
    // Predicated region
    $region138: #{model_forward.7} parent=1 // pred_check
      _
    $region139: #{model_forward.7} parent=1 // pred_check_branch
      %248 = sbr.rel (0) target = $region141
    $region140: #{model_forward.7} parent=1 // pred_region
      %249 = dma.done [#allocation24], 32
    $region141: #{model_forward.7} parent=1 // pred_fallthru
      _
    // Predicated region
    $region142: #{model_forward.7} parent=1 // pred_check
      _
    $region143: #{model_forward.7} parent=1 // pred_check_branch
      %251 = sbr.rel (0) target = $region145
    $region144: #{model_forward.7} parent=1 // pred_region
      %252 = dma.done [#allocation24], 32
    $region145: #{model_forward.7} parent=1 // pred_fallthru
      _
    %v254 = vld [vmem:[#allocation3] sm:$0x1]
    %v255 = vpack.c.bf16 %v254, %v254
    %v256 = vld [vmem:[#allocation5] sm:$0xf]
    %v257 = vld [vmem:[#allocation5 + $0x4] sm:$0xf]
    %v258 = vld [vmem:[#allocation5 + $0x8] sm:$0xf]
    %v259 = vld [vmem:[#allocation5 + $0xc] sm:$0xf]
    %v260 = vld [vmem:[#allocation5 + $0x10] sm:$0xf]
    %v261 = vld [vmem:[#allocation5 + $0x14] sm:$0xf]
    %v262 = vld [vmem:[#allocation5 + $0x18] sm:$0xf]
    %v263 = vld [vmem:[#allocation5 + $0x1c] sm:$0xf]
    %v264 = vld [vmem:[#allocation5 + $0x20] sm:$0xf]
    %v265 = vld [vmem:[#allocation5 + $0x24] sm:$0xf]
    %v266 = vld [vmem:[#allocation5 + $0x28] sm:$0xf]
    %v267 = vld [vmem:[#allocation5 + $0x2c] sm:$0xf]
    %v268 = vld [vmem:[#allocation5 + $0x30] sm:$0xf]
    %v269 = vld [vmem:[#allocation5 + $0x34] sm:$0xf]
    %v270 = vld [vmem:[#allocation5 + $0x38] sm:$0xf]
    %v271 = vld [vmem:[#allocation5 + $0x3c] sm:$0xf]
    %v288 = vunpack.c.l.b16 %v256
    %v289 = vunpack.c.l.b16 %v257
    %v290 = vunpack.c.l.b16 %v258
    %v291 = vunpack.c.l.b16 %v259
    %v292 = vunpack.c.l.b16 %v260
    %v293 = vunpack.c.l.b16 %v261
    %v294 = vunpack.c.l.b16 %v262
    %v295 = vunpack.c.l.b16 %v263
    %v296 = vunpack.c.l.b16 %v264
    %v297 = vunpack.c.l.b16 %v265
    %v298 = vunpack.c.l.b16 %v266
    %v299 = vunpack.c.l.b16 %v267
    %v300 = vunpack.c.l.b16 %v268
    %v301 = vunpack.c.l.b16 %v269
    %v302 = vunpack.c.l.b16 %v270
    %v303 = vunpack.c.l.b16 %v271
    %v304 = vpack.c.b16 %v289, %v288
    %v305 = vpack.c.b16 %v291, %v290
    %v306 = vpack.c.b16 %v293, %v292
    %v307 = vpack.c.b16 %v295, %v294
    %v308 = vpack.c.b16 %v297, %v296
    %v309 = vpack.c.b16 %v299, %v298
    %v310 = vpack.c.b16 %v301, %v300
    %v311 = vpack.c.b16 %v303, %v302
    %320 = vmatprep.subr.bf16.mxu0 0
    %321 = vmatpush1.bf16.msra.mxu0 %v304
    %322 = vmatprep.subr.bf16.mxu0 0
    %323 = vmatpush1.bf16.msra.mxu0 %v305
    %324 = vmatprep.subr.bf16.mxu0 0
    %325 = vmatpush1.bf16.msra.mxu0 %v306
    %326 = vmatprep.subr.bf16.mxu0 0
    %327 = vmatpush1.bf16.msra.mxu0 %v307
    %328 = vmatprep.subr.bf16.mxu0 0
    %329 = vmatpush1.bf16.msra.mxu0 %v308
    %330 = vmatprep.subr.bf16.mxu0 0
    %331 = vmatpush1.bf16.msra.mxu0 %v309
    %332 = vmatprep.subr.bf16.mxu0 0
    %333 = vmatpush1.bf16.msra.mxu0 %v310
    %334 = vmatprep.subr.bf16.mxu0 0
    %335 = vmatpush1.bf16.msra.mxu0 %v311
    %336 = vmatprep.subr.bf16.mxu0 0
    %337 = vmatpush1.bf16.msra.mxu0 0
    %338 = vmatprep.subr.bf16.mxu0 0
    %339 = vmatpush1.bf16.msra.mxu0 0
    %340 = vmatprep.subr.bf16.mxu0 0
    %341 = vmatpush1.bf16.msra.mxu0 0
    %342 = vmatprep.subr.bf16.mxu0 0
    %343 = vmatpush1.bf16.msra.mxu0 0
    %344 = vmatprep.subr.bf16.mxu0 0
    %345 = vmatpush1.bf16.msra.mxu0 0
    %346 = vmatprep.subr.bf16.mxu0 0
    %347 = vmatpush1.bf16.msra.mxu0 0
    %348 = vmatprep.subr.bf16.mxu0 0
    %349 = vmatpush1.bf16.msra.mxu0 0
    %350 = vmatprep.subr.bf16.mxu0 0
    %351 = vmatpush1.bf16.msra.mxu0 0
    %352 = vmatprep.mubr.bf16.mxu0 0
    %353 = vmatmul.mubr.bf16.gmra.mrb[0].mxu0 %v255
    %v354 = vpop.f32.mrb[0].mxu0
    %v355 = vadd.f32 0.0, %v354
    %v356 = vpop.f32.mrb[0].mxu0
    %v357 = vpop.f32.mrb[0].mxu0
    %v358 = vpop.f32.mrb[0].mxu0
    %359 = vdwg.mxu0
    %v360 = vld [vmem:[%s0] sm:$0xff]
    %v361 = vld [vmem:[%s0 + $0x8] sm:$0xff]
    %v362 = vld [vmem:[%s0 + $0x10] sm:$0xff]
    %v363 = vld [vmem:[%s0 + $0x18] sm:$0xff]
    %364 = vmatprep.subr.mxu0 0.0
    %365 = vmatpush1.xpose.msra.mxu0 %v360
    %366 = vmatprep.subr.mxu0 0.0
    %367 = vmatpush1.xpose.msra.mxu0 %v361
    %368 = vmatprep.subr.mxu0 0.0
    %369 = vmatpush1.xpose.msra.mxu0 0.0
    %370 = vmatprep.subr.mxu0 0.0
    %371 = vmatpush1.xpose.msra.mxu0 0.0
    %372 = vmatprep.subr.mxu0 0.0
    %373 = vmatpush1.xpose.msra.mxu0 0.0
    %374 = vmatprep.subr.mxu0 0.0
    %375 = vmatpush1.xpose.msra.mxu0 0.0
    %376 = vmatprep.subr.mxu0 0.0
    %377 = vmatpush1.xpose.msra.mxu0 0.0
    %378 = vmatprep.subr.mxu0 0.0
    %379 = vmatpush1.xpose.msra.mxu0 0.0
    %380 = vmatprep.subr.mxu0 0.0
    %381 = vmatpush1.xpose.msra.mxu0 0.0
    %382 = vmatprep.subr.mxu0 0.0
    %383 = vmatpush1.xpose.msra.mxu0 0.0
    %384 = vmatprep.subr.mxu0 0.0
    %385 = vmatpush1.xpose.msra.mxu0 0.0
    %386 = vmatprep.subr.mxu0 0.0
    %387 = vmatpush1.xpose.msra.mxu0 0.0
    %388 = vmatprep.subr.mxu0 0.0
    %389 = vmatpush1.xpose.msra.mxu0 0.0
    %390 = vmatprep.subr.mxu0 0.0
    %391 = vmatpush1.xpose.msra.mxu0 0.0
    %392 = vmatprep.subr.mxu0 0.0
    %393 = vmatpush1.xpose.msra.mxu0 0.0
    %394 = vmatprep.subr.mxu0 0.0
    %395 = vmatpush1.xpose.msra.mxu0 0.0
    %396 = vmatprep.subr.mxu0 0.0
    %397 = vmatpush1.xpose.msra.mxu0 0.0
    %398 = vmatprep.subr.mxu0 0.0
    %399 = vmatpush1.xpose.msra.mxu0 0.0
    %400 = vmatprep.subr.mxu0 0.0
    %401 = vmatpush1.xpose.msra.mxu0 0.0
    %402 = vmatprep.subr.mxu0 0.0
    %403 = vmatpush1.xpose.msra.mxu0 0.0
    %404 = vmatprep.subr.mxu0 0.0
    %405 = vmatpush1.xpose.msra.mxu0 0.0
    %406 = vmatprep.subr.mxu0 0.0
    %407 = vmatpush1.xpose.msra.mxu0 0.0
    %408 = vmatprep.subr.mxu0 0.0
    %409 = vmatpush1.xpose.msra.mxu0 0.0
    %410 = vmatprep.subr.mxu0 0.0
    %411 = vmatpush1.xpose.msra.mxu0 0.0
    %412 = vmatprep.subr.mxu0 0.0
    %413 = vmatpush1.xpose.msra.mxu0 0.0
    %414 = vmatprep.subr.mxu0 0.0
    %415 = vmatpush1.xpose.msra.mxu0 0.0
    %416 = vmatprep.subr.mxu0 0.0
    %417 = vmatpush1.xpose.msra.mxu0 0.0
    %418 = vmatprep.subr.mxu0 0.0
    %419 = vmatpush1.xpose.msra.mxu0 0.0
    %420 = vmatprep.subr.mxu0 0.0
    %421 = vmatpush1.xpose.msra.mxu0 0.0
    %422 = vmatprep.subr.mxu0 0.0
    %423 = vmatpush1.xpose.msra.mxu0 0.0
    %424 = vmatprep.subr.mxu0 0.0
    %425 = vmatpush1.xpose.msra.mxu0 0.0
    %426 = vmatprep.subr.mxu0 0.0
    %427 = vmatpush1.xpose.msra.mxu0 0.0
    %428 = vmatprep.mubr.f32.mxu0 0.0
    %429 = vmatmul.mubr.f32.gmra.mrb[0].mxu0 %v355
    %v430 = vpop.f32.mrb[0].mxu0
    %v431 = vadd.f32 0.0, %v430
    %v432 = vpop.f32.mrb[0].mxu0
    %433 = vdwg.mxu0
    %434 = vmatprep.subr.mxu0 0.0
    %435 = vmatpush1.xpose.msra.mxu0 %v362
    %436 = vmatprep.subr.mxu0 0.0
    %437 = vmatpush1.xpose.msra.mxu0 %v363
    %438 = vmatprep.subr.mxu0 0.0
    %439 = vmatpush1.xpose.msra.mxu0 0.0
    %440 = vmatprep.subr.mxu0 0.0
    %441 = vmatpush1.xpose.msra.mxu0 0.0
    %442 = vmatprep.subr.mxu0 0.0
    %443 = vmatpush1.xpose.msra.mxu0 0.0
    %444 = vmatprep.subr.mxu0 0.0
    %445 = vmatpush1.xpose.msra.mxu0 0.0
    %446 = vmatprep.subr.mxu0 0.0
    %447 = vmatpush1.xpose.msra.mxu0 0.0
    %448 = vmatprep.subr.mxu0 0.0
    %449 = vmatpush1.xpose.msra.mxu0 0.0
    %450 = vmatprep.subr.mxu0 0.0
    %451 = vmatpush1.xpose.msra.mxu0 0.0
    %452 = vmatprep.subr.mxu0 0.0
    %453 = vmatpush1.xpose.msra.mxu0 0.0
    %454 = vmatprep.subr.mxu0 0.0
    %455 = vmatpush1.xpose.msra.mxu0 0.0
    %456 = vmatprep.subr.mxu0 0.0
    %457 = vmatpush1.xpose.msra.mxu0 0.0
    %458 = vmatprep.subr.mxu0 0.0
    %459 = vmatpush1.xpose.msra.mxu0 0.0
    %460 = vmatprep.subr.mxu0 0.0
    %461 = vmatpush1.xpose.msra.mxu0 0.0
    %462 = vmatprep.subr.mxu0 0.0
    %463 = vmatpush1.xpose.msra.mxu0 0.0
    %464 = vmatprep.subr.mxu0 0.0
    %465 = vmatpush1.xpose.msra.mxu0 0.0
    %466 = vmatprep.subr.mxu0 0.0
    %467 = vmatpush1.xpose.msra.mxu0 0.0
    %468 = vmatprep.subr.mxu0 0.0
    %469 = vmatpush1.xpose.msra.mxu0 0.0
    %470 = vmatprep.subr.mxu0 0.0
    %471 = vmatpush1.xpose.msra.mxu0 0.0
    %472 = vmatprep.subr.mxu0 0.0
    %473 = vmatpush1.xpose.msra.mxu0 0.0
    %474 = vmatprep.subr.mxu0 0.0
    %475 = vmatpush1.xpose.msra.mxu0 0.0
    %476 = vmatprep.subr.mxu0 0.0
    %477 = vmatpush1.xpose.msra.mxu0 0.0
    %478 = vmatprep.subr.mxu0 0.0
    %479 = vmatpush1.xpose.msra.mxu0 0.0
    %480 = vmatprep.subr.mxu0 0.0
    %481 = vmatpush1.xpose.msra.mxu0 0.0
    %482 = vmatprep.subr.mxu0 0.0
    %483 = vmatpush1.xpose.msra.mxu0 0.0
    %484 = vmatprep.subr.mxu0 0.0
    %485 = vmatpush1.xpose.msra.mxu0 0.0
    %486 = vmatprep.subr.mxu0 0.0
    %487 = vmatpush1.xpose.msra.mxu0 0.0
    %488 = vmatprep.subr.mxu0 0.0
    %489 = vmatpush1.xpose.msra.mxu0 0.0
    %490 = vmatprep.subr.mxu0 0.0
    %491 = vmatpush1.xpose.msra.mxu0 0.0
    %492 = vmatprep.subr.mxu0 0.0
    %493 = vmatpush1.xpose.msra.mxu0 0.0
    %494 = vmatprep.subr.mxu0 0.0
    %495 = vmatpush1.xpose.msra.mxu0 0.0
    %496 = vmatprep.subr.mxu0 0.0
    %497 = vmatpush1.xpose.msra.mxu0 0.0
    %498 = vmatprep.mubr.f32.mxu0 0.0
    %499 = vmatmul.mubr.f32.gmra.mrb[0].mxu0 %v355
    %v500 = vpop.f32.mrb[0].mxu0
    %v501 = vadd.f32 0.0, %v500
    %v502 = vpop.f32.mrb[0].mxu0
    %503 = vdwg.mxu0
    %v504 = vmul.f32 %v431, 0.088388346
    %v505 = vmul.f32 %v501, 0.088388346
    %v506 = vld [vmem:[%s2] sm:$0xff]
    %v507 = vld [vmem:[%s2 + $0x8] sm:$0xff]
    %508 = vmatprep.subr.mxu0 0.0
    %509 = vmatpush1.xpose.msra.mxu0 %v506
    %510 = vmatprep.subr.mxu0 0.0
    %511 = vmatpush1.xpose.msra.mxu0 0.0
    %512 = vmatprep.subr.mxu0 0.0
    %513 = vmatpush1.xpose.msra.mxu0 0.0
    %514 = vmatprep.subr.mxu0 0.0
    %515 = vmatpush1.xpose.msra.mxu0 0.0
    %516 = vmatprep.subr.mxu0 0.0
    %517 = vmatpush1.xpose.msra.mxu0 0.0
    %518 = vmatprep.subr.mxu0 0.0
    %519 = vmatpush1.xpose.msra.mxu0 0.0
    %520 = vmatprep.subr.mxu0 0.0
    %521 = vmatpush1.xpose.msra.mxu0 0.0
    %522 = vmatprep.subr.mxu0 0.0
    %523 = vmatpush1.xpose.msra.mxu0 0.0
    %524 = vmatprep.subr.mxu0 0.0
    %525 = vmatpush1.xpose.msra.mxu0 0.0
    %526 = vmatprep.subr.mxu0 0.0
    %527 = vmatpush1.xpose.msra.mxu0 0.0
    %528 = vmatprep.subr.mxu0 0.0
    %529 = vmatpush1.xpose.msra.mxu0 0.0
    %530 = vmatprep.subr.mxu0 0.0
    %531 = vmatpush1.xpose.msra.mxu0 0.0
    %532 = vmatprep.subr.mxu0 0.0
    %533 = vmatpush1.xpose.msra.mxu0 0.0
    %534 = vmatprep.subr.mxu0 0.0
    %535 = vmatpush1.xpose.msra.mxu0 0.0
    %536 = vmatprep.subr.mxu0 0.0
    %537 = vmatpush1.xpose.msra.mxu0 0.0
    %538 = vmatprep.subr.mxu0 0.0
    %539 = vmatpush1.xpose.msra.mxu0 0.0
    %540 = vmatprep.subr.mxu0 0.0
    %541 = vmatpush1.xpose.msra.mxu0 0.0
    %542 = vmatprep.subr.mxu0 0.0
    %543 = vmatpush1.xpose.msra.mxu0 0.0
    %544 = vmatprep.subr.mxu0 0.0
    %545 = vmatpush1.xpose.msra.mxu0 0.0
    %546 = vmatprep.subr.mxu0 0.0
    %547 = vmatpush1.xpose.msra.mxu0 0.0
    %548 = vmatprep.subr.mxu0 0.0
    %549 = vmatpush1.xpose.msra.mxu0 0.0
    %550 = vmatprep.subr.mxu0 0.0
    %551 = vmatpush1.xpose.msra.mxu0 0.0
    %552 = vmatprep.subr.mxu0 0.0
    %553 = vmatpush1.xpose.msra.mxu0 0.0
    %554 = vmatprep.subr.mxu0 0.0
    %555 = vmatpush1.xpose.msra.mxu0 0.0
    %556 = vmatprep.subr.mxu0 0.0
    %557 = vmatpush1.xpose.msra.mxu0 0.0
    %558 = vmatprep.subr.mxu0 0.0
    %559 = vmatpush1.xpose.msra.mxu0 0.0
    %560 = vmatprep.subr.mxu0 0.0
    %561 = vmatpush1.xpose.msra.mxu0 0.0
    %562 = vmatprep.subr.mxu0 0.0
    %563 = vmatpush1.xpose.msra.mxu0 0.0
    %564 = vmatprep.subr.mxu0 0.0
    %565 = vmatpush1.xpose.msra.mxu0 0.0
    %566 = vmatprep.subr.mxu0 0.0
    %567 = vmatpush1.xpose.msra.mxu0 0.0
    %568 = vmatprep.subr.mxu0 0.0
    %569 = vmatpush1.xpose.msra.mxu0 0.0
    %570 = vmatprep.subr.mxu0 0.0
    %571 = vmatpush1.xpose.msra.mxu0 0.0
    %572 = vmatprep.mubr.f32.mxu0 0.0
    %573 = vmatmul.mubr.f32.gmra.mrb[0].mxu0 %v355
    %v574 = vpop.f32.mrb[0].mxu0
    %v575 = vadd.f32 0.0, %v574
    %v576 = vpop.f32.mrb[0].mxu0
    %577 = vdwg.mxu0
    %578 = vmatprep.subr.mxu0 0.0
    %579 = vmatpush1.xpose.msra.mxu0 %v507
    %580 = vmatprep.subr.mxu0 0.0
    %581 = vmatpush1.xpose.msra.mxu0 0.0
    %582 = vmatprep.subr.mxu0 0.0
    %583 = vmatpush1.xpose.msra.mxu0 0.0
    %584 = vmatprep.subr.mxu0 0.0
    %585 = vmatpush1.xpose.msra.mxu0 0.0
    %586 = vmatprep.subr.mxu0 0.0
    %587 = vmatpush1.xpose.msra.mxu0 0.0
    %588 = vmatprep.subr.mxu0 0.0
    %589 = vmatpush1.xpose.msra.mxu0 0.0
    %590 = vmatprep.subr.mxu0 0.0
    %591 = vmatpush1.xpose.msra.mxu0 0.0
    %592 = vmatprep.subr.mxu0 0.0
    %593 = vmatpush1.xpose.msra.mxu0 0.0
    %594 = vmatprep.subr.mxu0 0.0
    %595 = vmatpush1.xpose.msra.mxu0 0.0
    %596 = vmatprep.subr.mxu0 0.0
    %597 = vmatpush1.xpose.msra.mxu0 0.0
    %598 = vmatprep.subr.mxu0 0.0
    %599 = vmatpush1.xpose.msra.mxu0 0.0
    %600 = vmatprep.subr.mxu0 0.0
    %601 = vmatpush1.xpose.msra.mxu0 0.0
    %602 = vmatprep.subr.mxu0 0.0
    %603 = vmatpush1.xpose.msra.mxu0 0.0
    %604 = vmatprep.subr.mxu0 0.0
    %605 = vmatpush1.xpose.msra.mxu0 0.0
    %606 = vmatprep.subr.mxu0 0.0
    %607 = vmatpush1.xpose.msra.mxu0 0.0
    %608 = vmatprep.subr.mxu0 0.0
    %609 = vmatpush1.xpose.msra.mxu0 0.0
    %610 = vmatprep.subr.mxu0 0.0
    %611 = vmatpush1.xpose.msra.mxu0 0.0
    %612 = vmatprep.subr.mxu0 0.0
    %613 = vmatpush1.xpose.msra.mxu0 0.0
    %614 = vmatprep.subr.mxu0 0.0
    %615 = vmatpush1.xpose.msra.mxu0 0.0
    %616 = vmatprep.subr.mxu0 0.0
    %617 = vmatpush1.xpose.msra.mxu0 0.0
    %618 = vmatprep.subr.mxu0 0.0
    %619 = vmatpush1.xpose.msra.mxu0 0.0
    %620 = vmatprep.subr.mxu0 0.0
    %621 = vmatpush1.xpose.msra.mxu0 0.0
    %622 = vmatprep.subr.mxu0 0.0
    %623 = vmatpush1.xpose.msra.mxu0 0.0
    %624 = vmatprep.subr.mxu0 0.0
    %625 = vmatpush1.xpose.msra.mxu0 0.0
    %626 = vmatprep.subr.mxu0 0.0
    %627 = vmatpush1.xpose.msra.mxu0 0.0
    %628 = vmatprep.subr.mxu0 0.0
    %629 = vmatpush1.xpose.msra.mxu0 0.0
    %630 = vmatprep.subr.mxu0 0.0
    %631 = vmatpush1.xpose.msra.mxu0 0.0
    %632 = vmatprep.subr.mxu0 0.0
    %633 = vmatpush1.xpose.msra.mxu0 0.0
    %634 = vmatprep.subr.mxu0 0.0
    %635 = vmatpush1.xpose.msra.mxu0 0.0
    %636 = vmatprep.subr.mxu0 0.0
    %637 = vmatpush1.xpose.msra.mxu0 0.0
    %638 = vmatprep.subr.mxu0 0.0
    %639 = vmatpush1.xpose.msra.mxu0 0.0
    %640 = vmatprep.subr.mxu0 0.0
    %641 = vmatpush1.xpose.msra.mxu0 0.0
    %642 = vmatprep.mubr.f32.mxu0 0.0
    %643 = vmatmul.mubr.f32.gmra.mrb[0].mxu0 %v355
    %v644 = vpop.f32.mrb[0].mxu0
    %v645 = vadd.f32 0.0, %v644
    %v646 = vpop.f32.mrb[0].mxu0
    %647 = vdwg.mxu0
    %v648 = vmul.f32 %v575, 0.088388346
    %v649 = vmul.f32 %v645, 0.088388346
    %vm650 = vcmask 122880
    %v651 = vsel %vm650, %v504, -inf
    %652 = vmax.xlane.f32.xlu0 %v651
    %v653 = vpop.xlane.xlu0 %652
    %v654 = vsel %vm650, %v505, -inf
    %655 = vmax.xlane.f32.xlu0 %v654
    %v656 = vpop.xlane.xlu0 %655
    %vm657 = vcmask 57344
    %v658 = vsel %vm657, %v648, -inf
    %659 = vmax.xlane.f32.xlu0 %v658
    %v660 = vpop.xlane.xlu0 %659
    %v661 = vsel %vm657, %v649, -inf
    %662 = vmax.xlane.f32.xlu0 %v661
    %v663 = vpop.xlane.xlu0 %662
    %v664 = vmax.f32 %v653, %v660
    %v665 = vmax.f32 %v656, %v663
    %v666 = vsub.f32 %v504, %v664
    %v667 = vsub.f32 %v505, %v665
    %v668 = vmul.f32 %v666, 1.442695
    %v669 = vpow.pop %v668
    %v670 = vmul.f32 %v667, 1.442695
    %v671 = vpow.pop %v670
    %v672 = vsub.f32 %v648, %v664
    %v673 = vsub.f32 %v649, %v665
    %v674 = vmul.f32 %v672, 1.442695
    %v675 = vpow.pop %v674
    %v676 = vmul.f32 %v673, 1.442695
    %v677 = vpow.pop %v676
    %v678 = vsel %vm650, %v669, 0.0
    %679 = vadd.xlane.f32.xlu0 %v678
    %v680 = vpop.xlane.xlu0 %679
    %v681 = vsel %vm650, %v671, 0.0
    %682 = vadd.xlane.f32.xlu0 %v681
    %v683 = vpop.xlane.xlu0 %682
    %v684 = vsel %vm657, %v675, 0.0
    %685 = vadd.xlane.f32.xlu0 %v684
    %v686 = vpop.xlane.xlu0 %685
    %v687 = vsel %vm657, %v677, 0.0
    %688 = vadd.xlane.f32.xlu0 %v687
    %v689 = vpop.xlane.xlu0 %688
    %v690 = vadd.f32 %v680, %v686
    %v691 = vadd.f32 %v683, %v689
    %v692 = vld [vmem:[%s1] sm:$0xff]
    %v693 = vld [vmem:[%s1 + $0x8] sm:$0xff]
    %v694 = vld [vmem:[%s1 + $0x10] sm:$0xff]
    %v695 = vld [vmem:[%s1 + $0x18] sm:$0xff]
    %v696 = vld [vmem:[%s3] sm:$0xff]
    %v697 = vld [vmem:[%s3 + $0x8] sm:$0xff]
    %vm698 = vcmask 64512
    %v700 = vsel %vm698, %v675, 0
    %702 = vmatprep.subr.mxu0 0.0
    %703 = vmatpush1.msra.mxu0 %v696
    %704 = vmatprep.subr.mxu0 0.0
    %705 = vmatpush1.msra.mxu0 0.0
    %706 = vmatprep.subr.mxu0 0.0
    %707 = vmatpush1.msra.mxu0 0.0
    %708 = vmatprep.subr.mxu0 0.0
    %709 = vmatpush1.msra.mxu0 0.0
    %710 = vmatprep.subr.mxu0 0.0
    %711 = vmatpush1.msra.mxu0 0.0
    %712 = vmatprep.subr.mxu0 0.0
    %713 = vmatpush1.msra.mxu0 0.0
    %714 = vmatprep.subr.mxu0 0.0
    %715 = vmatpush1.msra.mxu0 0.0
    %716 = vmatprep.subr.mxu0 0.0
    %717 = vmatpush1.msra.mxu0 0.0
    %718 = vmatprep.subr.mxu0 0.0
    %719 = vmatpush1.msra.mxu0 0.0
    %720 = vmatprep.subr.mxu0 0.0
    %721 = vmatpush1.msra.mxu0 0.0
    %722 = vmatprep.subr.mxu0 0.0
    %723 = vmatpush1.msra.mxu0 0.0
    %724 = vmatprep.subr.mxu0 0.0
    %725 = vmatpush1.msra.mxu0 0.0
    %726 = vmatprep.subr.mxu0 0.0
    %727 = vmatpush1.msra.mxu0 0.0
    %728 = vmatprep.subr.mxu0 0.0
    %729 = vmatpush1.msra.mxu0 0.0
    %730 = vmatprep.subr.mxu0 0.0
    %731 = vmatpush1.msra.mxu0 0.0
    %732 = vmatprep.subr.mxu0 0.0
    %733 = vmatpush1.msra.mxu0 0.0
    %734 = vmatprep.subr.mxu0 0.0
    %735 = vmatpush1.msra.mxu0 0.0
    %736 = vmatprep.subr.mxu0 0.0
    %737 = vmatpush1.msra.mxu0 0.0
    %738 = vmatprep.subr.mxu0 0.0
    %739 = vmatpush1.msra.mxu0 0.0
    %740 = vmatprep.subr.mxu0 0.0
    %741 = vmatpush1.msra.mxu0 0.0
    %742 = vmatprep.subr.mxu0 0.0
    %743 = vmatpush1.msra.mxu0 0.0
    %744 = vmatprep.subr.mxu0 0.0
    %745 = vmatpush1.msra.mxu0 0.0
    %746 = vmatprep.subr.mxu0 0.0
    %747 = vmatpush1.msra.mxu0 0.0
    %748 = vmatprep.subr.mxu0 0.0
    %749 = vmatpush1.msra.mxu0 0.0
    %750 = vmatprep.subr.mxu0 0.0
    %751 = vmatpush1.msra.mxu0 0.0
    %752 = vmatprep.subr.mxu0 0.0
    %753 = vmatpush1.msra.mxu0 0.0
    %754 = vmatprep.subr.mxu0 0.0
    %755 = vmatpush1.msra.mxu0 0.0
    %756 = vmatprep.subr.mxu0 0.0
    %757 = vmatpush1.msra.mxu0 0.0
    %758 = vmatprep.subr.mxu0 0.0
    %759 = vmatpush1.msra.mxu0 0.0
    %760 = vmatprep.subr.mxu0 0.0
    %761 = vmatpush1.msra.mxu0 0.0
    %762 = vmatprep.subr.mxu0 0.0
    %763 = vmatpush1.msra.mxu0 0.0
    %764 = vmatprep.subr.mxu0 0.0
    %765 = vmatpush1.msra.mxu0 0.0
    %766 = vmatprep.mubr.f32.mxu0 0.0
    %767 = vmatmul.mubr.f32.gmra.mrb[0].mxu0 %v700
    %v768 = vpop.f32.mrb[0].mxu0
    %v769 = vadd.f32 0.0, %v768
    %v770 = vpop.f32.mrb[0].mxu0
    %771 = vdwg.mxu0
    %v773 = vsel %vm698, %v677, 0
    %775 = vmatprep.subr.mxu0 0.0
    %776 = vmatpush1.msra.mxu0 %v697
    %777 = vmatprep.subr.mxu0 0.0
    %778 = vmatpush1.msra.mxu0 0.0
    %779 = vmatprep.subr.mxu0 0.0
    %780 = vmatpush1.msra.mxu0 0.0
    %781 = vmatprep.subr.mxu0 0.0
    %782 = vmatpush1.msra.mxu0 0.0
    %783 = vmatprep.subr.mxu0 0.0
    %784 = vmatpush1.msra.mxu0 0.0
    %785 = vmatprep.subr.mxu0 0.0
    %786 = vmatpush1.msra.mxu0 0.0
    %787 = vmatprep.subr.mxu0 0.0
    %788 = vmatpush1.msra.mxu0 0.0
    %789 = vmatprep.subr.mxu0 0.0
    %790 = vmatpush1.msra.mxu0 0.0
    %791 = vmatprep.subr.mxu0 0.0
    %792 = vmatpush1.msra.mxu0 0.0
    %793 = vmatprep.subr.mxu0 0.0
    %794 = vmatpush1.msra.mxu0 0.0
    %795 = vmatprep.subr.mxu0 0.0
    %796 = vmatpush1.msra.mxu0 0.0
    %797 = vmatprep.subr.mxu0 0.0
    %798 = vmatpush1.msra.mxu0 0.0
    %799 = vmatprep.subr.mxu0 0.0
    %800 = vmatpush1.msra.mxu0 0.0
    %801 = vmatprep.subr.mxu0 0.0
    %802 = vmatpush1.msra.mxu0 0.0
    %803 = vmatprep.subr.mxu0 0.0
    %804 = vmatpush1.msra.mxu0 0.0
    %805 = vmatprep.subr.mxu0 0.0
    %806 = vmatpush1.msra.mxu0 0.0
    %807 = vmatprep.subr.mxu0 0.0
    %808 = vmatpush1.msra.mxu0 0.0
    %809 = vmatprep.subr.mxu0 0.0
    %810 = vmatpush1.msra.mxu0 0.0
    %811 = vmatprep.subr.mxu0 0.0
    %812 = vmatpush1.msra.mxu0 0.0
    %813 = vmatprep.subr.mxu0 0.0
    %814 = vmatpush1.msra.mxu0 0.0
    %815 = vmatprep.subr.mxu0 0.0
    %816 = vmatpush1.msra.mxu0 0.0
    %817 = vmatprep.subr.mxu0 0.0
    %818 = vmatpush1.msra.mxu0 0.0
    %819 = vmatprep.subr.mxu0 0.0
    %820 = vmatpush1.msra.mxu0 0.0
    %821 = vmatprep.subr.mxu0 0.0
    %822 = vmatpush1.msra.mxu0 0.0
    %823 = vmatprep.subr.mxu0 0.0
    %824 = vmatpush1.msra.mxu0 0.0
    %825 = vmatprep.subr.mxu0 0.0
    %826 = vmatpush1.msra.mxu0 0.0
    %827 = vmatprep.subr.mxu0 0.0
    %828 = vmatpush1.msra.mxu0 0.0
    %829 = vmatprep.subr.mxu0 0.0
    %830 = vmatpush1.msra.mxu0 0.0
    %831 = vmatprep.subr.mxu0 0.0
    %832 = vmatpush1.msra.mxu0 0.0
    %833 = vmatprep.subr.mxu0 0.0
    %834 = vmatpush1.msra.mxu0 0.0
    %835 = vmatprep.subr.mxu0 0.0
    %836 = vmatpush1.msra.mxu0 0.0
    %837 = vmatprep.subr.mxu0 0.0
    %838 = vmatpush1.msra.mxu0 0.0
    %839 = vmatprep.mubr.f32.mxu0 0.0
    %840 = vmatmul.mubr.f32.gmra.mrb[0].mxu0 %v773
    %v841 = vpop.f32.mrb[0].mxu0
    %v842 = vadd.f32 0.0, %v841
    %v843 = vpop.f32.mrb[0].mxu0
    %844 = vdwg.mxu0
    %vm845 = vcmask 130048
    %v847 = vsel %vm845, %v669, 0
    %849 = vmatprep.subr.mxu0 0.0
    %850 = vmatpush1.msra.mxu0 %v692
    %851 = vmatprep.subr.mxu0 0.0
    %852 = vmatpush1.msra.mxu0 %v693
    %853 = vmatprep.subr.mxu0 0.0
    %854 = vmatpush1.msra.mxu0 0.0
    %855 = vmatprep.subr.mxu0 0.0
    %856 = vmatpush1.msra.mxu0 0.0
    %857 = vmatprep.subr.mxu0 0.0
    %858 = vmatpush1.msra.mxu0 0.0
    %859 = vmatprep.subr.mxu0 0.0
    %860 = vmatpush1.msra.mxu0 0.0
    %861 = vmatprep.subr.mxu0 0.0
    %862 = vmatpush1.msra.mxu0 0.0
    %863 = vmatprep.subr.mxu0 0.0
    %864 = vmatpush1.msra.mxu0 0.0
    %865 = vmatprep.subr.mxu0 0.0
    %866 = vmatpush1.msra.mxu0 0.0
    %867 = vmatprep.subr.mxu0 0.0
    %868 = vmatpush1.msra.mxu0 0.0
    %869 = vmatprep.subr.mxu0 0.0
    %870 = vmatpush1.msra.mxu0 0.0
    %871 = vmatprep.subr.mxu0 0.0
    %872 = vmatpush1.msra.mxu0 0.0
    %873 = vmatprep.subr.mxu0 0.0
    %874 = vmatpush1.msra.mxu0 0.0
    %875 = vmatprep.subr.mxu0 0.0
    %876 = vmatpush1.msra.mxu0 0.0
    %877 = vmatprep.subr.mxu0 0.0
    %878 = vmatpush1.msra.mxu0 0.0
    %879 = vmatprep.subr.mxu0 0.0
    %880 = vmatpush1.msra.mxu0 0.0
    %881 = vmatprep.subr.mxu0 0.0
    %882 = vmatpush1.msra.mxu0 0.0
    %883 = vmatprep.subr.mxu0 0.0
    %884 = vmatpush1.msra.mxu0 0.0
    %885 = vmatprep.subr.mxu0 0.0
    %886 = vmatpush1.msra.mxu0 0.0
    %887 = vmatprep.subr.mxu0 0.0
    %888 = vmatpush1.msra.mxu0 0.0
    %889 = vmatprep.subr.mxu0 0.0
    %890 = vmatpush1.msra.mxu0 0.0
    %891 = vmatprep.subr.mxu0 0.0
    %892 = vmatpush1.msra.mxu0 0.0
    %893 = vmatprep.subr.mxu0 0.0
    %894 = vmatpush1.msra.mxu0 0.0
    %895 = vmatprep.subr.mxu0 0.0
    %896 = vmatpush1.msra.mxu0 0.0
    %897 = vmatprep.subr.mxu0 0.0
    %898 = vmatpush1.msra.mxu0 0.0
    %899 = vmatprep.subr.mxu0 0.0
    %900 = vmatpush1.msra.mxu0 0.0
    %901 = vmatprep.subr.mxu0 0.0
    %902 = vmatpush1.msra.mxu0 0.0
    %903 = vmatprep.subr.mxu0 0.0
    %904 = vmatpush1.msra.mxu0 0.0
    %905 = vmatprep.subr.mxu0 0.0
    %906 = vmatpush1.msra.mxu0 0.0
    %907 = vmatprep.subr.mxu0 0.0
    %908 = vmatpush1.msra.mxu0 0.0
    %909 = vmatprep.subr.mxu0 0.0
    %910 = vmatpush1.msra.mxu0 0.0
    %911 = vmatprep.subr.mxu0 0.0
    %912 = vmatpush1.msra.mxu0 0.0
    %913 = vmatprep.mubr.f32.mxu0 0.0
    %914 = vmatmul.mubr.f32.gmra.mrb[0].mxu0 %v847
    %v915 = vpop.f32.mrb[0].mxu0
    %v916 = vadd.f32 %v769, %v915
    %v917 = vpop.f32.mrb[0].mxu0
    %918 = vdwg.mxu0
    %v920 = vsel %vm845, %v671, 0
    %922 = vmatprep.subr.mxu0 0.0
    %923 = vmatpush1.msra.mxu0 %v694
    %924 = vmatprep.subr.mxu0 0.0
    %925 = vmatpush1.msra.mxu0 %v695
    %926 = vmatprep.subr.mxu0 0.0
    %927 = vmatpush1.msra.mxu0 0.0
    %928 = vmatprep.subr.mxu0 0.0
    %929 = vmatpush1.msra.mxu0 0.0
    %930 = vmatprep.subr.mxu0 0.0
    %931 = vmatpush1.msra.mxu0 0.0
    %932 = vmatprep.subr.mxu0 0.0
    %933 = vmatpush1.msra.mxu0 0.0
    %934 = vmatprep.subr.mxu0 0.0
    %935 = vmatpush1.msra.mxu0 0.0
    %936 = vmatprep.subr.mxu0 0.0
    %937 = vmatpush1.msra.mxu0 0.0
    %938 = vmatprep.subr.mxu0 0.0
    %939 = vmatpush1.msra.mxu0 0.0
    %940 = vmatprep.subr.mxu0 0.0
    %941 = vmatpush1.msra.mxu0 0.0
    %942 = vmatprep.subr.mxu0 0.0
    %943 = vmatpush1.msra.mxu0 0.0
    %944 = vmatprep.subr.mxu0 0.0
    %945 = vmatpush1.msra.mxu0 0.0
    %946 = vmatprep.subr.mxu0 0.0
    %947 = vmatpush1.msra.mxu0 0.0
    %948 = vmatprep.subr.mxu0 0.0
    %949 = vmatpush1.msra.mxu0 0.0
    %950 = vmatprep.subr.mxu0 0.0
    %951 = vmatpush1.msra.mxu0 0.0
    %952 = vmatprep.subr.mxu0 0.0
    %953 = vmatpush1.msra.mxu0 0.0
    %954 = vmatprep.subr.mxu0 0.0
    %955 = vmatpush1.msra.mxu0 0.0
    %956 = vmatprep.subr.mxu0 0.0
    %957 = vmatpush1.msra.mxu0 0.0
    %958 = vmatprep.subr.mxu0 0.0
    %959 = vmatpush1.msra.mxu0 0.0
    %960 = vmatprep.subr.mxu0 0.0
    %961 = vmatpush1.msra.mxu0 0.0
    %962 = vmatprep.subr.mxu0 0.0
    %963 = vmatpush1.msra.mxu0 0.0
    %964 = vmatprep.subr.mxu0 0.0
    %965 = vmatpush1.msra.mxu0 0.0
    %966 = vmatprep.subr.mxu0 0.0
    %967 = vmatpush1.msra.mxu0 0.0
    %968 = vmatprep.subr.mxu0 0.0
    %969 = vmatpush1.msra.mxu0 0.0
    %970 = vmatprep.subr.mxu0 0.0
    %971 = vmatpush1.msra.mxu0 0.0
    %972 = vmatprep.subr.mxu0 0.0
    %973 = vmatpush1.msra.mxu0 0.0
    %974 = vmatprep.subr.mxu0 0.0
    %975 = vmatpush1.msra.mxu0 0.0
    %976 = vmatprep.subr.mxu0 0.0
    %977 = vmatpush1.msra.mxu0 0.0
    %978 = vmatprep.subr.mxu0 0.0
    %979 = vmatpush1.msra.mxu0 0.0
    %980 = vmatprep.subr.mxu0 0.0
    %981 = vmatpush1.msra.mxu0 0.0
    %982 = vmatprep.subr.mxu0 0.0
    %983 = vmatpush1.msra.mxu0 0.0
    %984 = vmatprep.subr.mxu0 0.0
    %985 = vmatpush1.msra.mxu0 0.0
    %986 = vmatprep.mubr.f32.mxu0 0.0
    %987 = vmatmul.mubr.f32.gmra.mrb[0].mxu0 %v920
    %v988 = vpop.f32.mrb[0].mxu0
    %v989 = vadd.f32 %v842, %v988
    %v990 = vpop.f32.mrb[0].mxu0
    %991 = vdwg.mxu0
    %v992 = vrcp.pop %v690
    %v993 = vmul.f32 %v916, %v992
    %v994 = vrcp.pop %v691
    %v995 = vmul.f32 %v989, %v994
    %v996 = vpack.c.bf16 %v993, %v993
    %v997 = vpack.c.bf16 %v995, %v995
    %v998 = vld [vmem:[#allocation7] sm:$0xf]
    %v999 = vld [vmem:[#allocation7 + $0x4] sm:$0xf]
    %v1000 = vld [vmem:[#allocation7 + $0x8] sm:$0xf]
    %v1001 = vld [vmem:[#allocation7 + $0xc] sm:$0xf]
    %v1002 = vld [vmem:[#allocation7 + $0x10] sm:$0xf]
    %v1003 = vld [vmem:[#allocation7 + $0x14] sm:$0xf]
    %v1004 = vld [vmem:[#allocation7 + $0x18] sm:$0xf]
    %v1005 = vld [vmem:[#allocation7 + $0x1c] sm:$0xf]
    %v1006 = vld [vmem:[#allocation7 + $0x20] sm:$0xf]
    %v1007 = vld [vmem:[#allocation7 + $0x24] sm:$0xf]
    %v1008 = vld [vmem:[#allocation7 + $0x28] sm:$0xf]
    %v1009 = vld [vmem:[#allocation7 + $0x2c] sm:$0xf]
    %v1010 = vld [vmem:[#allocation7 + $0x30] sm:$0xf]
    %v1011 = vld [vmem:[#allocation7 + $0x34] sm:$0xf]
    %v1012 = vld [vmem:[#allocation7 + $0x38] sm:$0xf]
    %v1013 = vld [vmem:[#allocation7 + $0x3c] sm:$0xf]
    %v1015 = vlaneseq
    %v1016 = vshrl.u32 %v1015, 7
    %v1017 = vsub.s32 0, %v1016
    %v1018 = vrot.slane %v254, %v1017
    %v1022 = vunpack.c.l.b16 %v996
    %v1023 = vunpack.c.l.b16 %v997
    %v1024 = vrot.slane %v1023, 7
    %vm1025 = vcmask 1041409
    %v1026 = vsel %vm1025, %v1024, %v1022
    %v1027 = vpack.c.b16 %v1026, %v1026
    %v1045 = vunpack.c.l.b16 %v998
    %v1046 = vunpack.c.l.b16 %v999
    %v1047 = vunpack.c.l.b16 %v1000
    %v1048 = vunpack.c.l.b16 %v1001
    %v1049 = vunpack.c.l.b16 %v1002
    %v1050 = vunpack.c.l.b16 %v1003
    %v1051 = vunpack.c.l.b16 %v1004
    %v1052 = vunpack.c.l.b16 %v1005
    %v1053 = vunpack.c.l.b16 %v1006
    %v1054 = vunpack.c.l.b16 %v1007
    %v1055 = vunpack.c.l.b16 %v1008
    %v1056 = vunpack.c.l.b16 %v1009
    %v1057 = vunpack.c.l.b16 %v1010
    %v1058 = vunpack.c.l.b16 %v1011
    %v1059 = vunpack.c.l.b16 %v1012
    %v1060 = vunpack.c.l.b16 %v1013
    %v1061 = vpack.c.b16 %v1046, %v1045
    %v1062 = vpack.c.b16 %v1048, %v1047
    %v1063 = vpack.c.b16 %v1050, %v1049
    %v1064 = vpack.c.b16 %v1052, %v1051
    %v1065 = vpack.c.b16 %v1054, %v1053
    %v1066 = vpack.c.b16 %v1056, %v1055
    %v1067 = vpack.c.b16 %v1058, %v1057
    %v1068 = vpack.c.b16 %v1060, %v1059
    %1077 = vmatprep.subr.bf16.mxu0 0
    %1078 = vmatpush1.bf16.msra.mxu0 %v1061
    %1079 = vmatprep.subr.bf16.mxu0 0
    %1080 = vmatpush1.bf16.msra.mxu0 %v1062
    %1081 = vmatprep.subr.bf16.mxu0 0
    %1082 = vmatpush1.bf16.msra.mxu0 %v1063
    %1083 = vmatprep.subr.bf16.mxu0 0
    %1084 = vmatpush1.bf16.msra.mxu0 %v1064
    %1085 = vmatprep.subr.bf16.mxu0 0
    %1086 = vmatpush1.bf16.msra.mxu0 %v1065
    %1087 = vmatprep.subr.bf16.mxu0 0
    %1088 = vmatpush1.bf16.msra.mxu0 %v1066
    %1089 = vmatprep.subr.bf16.mxu0 0
    %1090 = vmatpush1.bf16.msra.mxu0 %v1067
    %1091 = vmatprep.subr.bf16.mxu0 0
    %1092 = vmatpush1.bf16.msra.mxu0 %v1068
    %1093 = vmatprep.subr.bf16.mxu0 0
    %1094 = vmatpush1.bf16.msra.mxu0 0
    %1095 = vmatprep.subr.bf16.mxu0 0
    %1096 = vmatpush1.bf16.msra.mxu0 0
    %1097 = vmatprep.subr.bf16.mxu0 0
    %1098 = vmatpush1.bf16.msra.mxu0 0
    %1099 = vmatprep.subr.bf16.mxu0 0
    %1100 = vmatpush1.bf16.msra.mxu0 0
    %1101 = vmatprep.subr.bf16.mxu0 0
    %1102 = vmatpush1.bf16.msra.mxu0 0
    %1103 = vmatprep.subr.bf16.mxu0 0
    %1104 = vmatpush1.bf16.msra.mxu0 0
    %1105 = vmatprep.subr.bf16.mxu0 0
    %1106 = vmatpush1.bf16.msra.mxu0 0
    %1107 = vmatprep.subr.bf16.mxu0 0
    %1108 = vmatpush1.bf16.msra.mxu0 0
    %1109 = vmatprep.mubr.bf16.mxu0 0
    %1110 = vmatmul.mubr.bf16.gmra.mrb[0].mxu0 %v1027
    %v1111 = vpop.f32.mrb[0].mxu0
    %v1112 = vadd.f32 %v1018, %v1111
    %v1113 = vpop.f32.mrb[0].mxu0
    %v1114 = vpop.f32.mrb[0].mxu0
    %v1115 = vpop.f32.mrb[0].mxu0
    %1116 = vdwg.mxu0
    %v1117 = vpack.c.bf16 %v1112, %v1112
    %v1118 = vld [vmem:[#allocation8] sm:$0xff]
    %v1119 = vld [vmem:[#allocation8 + $0x8] sm:$0xff]
    %v1120 = vld [vmem:[#allocation8 + $0x10] sm:$0xff]
    %v1121 = vld [vmem:[#allocation8 + $0x18] sm:$0xff]
    %v1122 = vld [vmem:[#allocation8 + $0x20] sm:$0xff]
    %v1123 = vld [vmem:[#allocation8 + $0x28] sm:$0xff]
    %v1124 = vld [vmem:[#allocation8 + $0x30] sm:$0xff]
    %v1125 = vld [vmem:[#allocation8 + $0x38] sm:$0xff]
    %v1126 = vld [vmem:[#allocation8 + $0x40] sm:$0xff]
    %v1127 = vld [vmem:[#allocation8 + $0x48] sm:$0xff]
    %v1128 = vld [vmem:[#allocation8 + $0x50] sm:$0xff]
    %v1129 = vld [vmem:[#allocation8 + $0x58] sm:$0xff]
    %v1130 = vld [vmem:[#allocation8 + $0x60] sm:$0xff]
    %v1131 = vld [vmem:[#allocation8 + $0x68] sm:$0xff]
    %v1132 = vld [vmem:[#allocation8 + $0x70] sm:$0xff]
    %v1133 = vld [vmem:[#allocation8 + $0x78] sm:$0xff]
    %v1134 = vld [vmem:[#allocation8 + $0x80] sm:$0xff]
    %v1135 = vld [vmem:[#allocation8 + $0x88] sm:$0xff]
    %v1136 = vld [vmem:[#allocation8 + $0x90] sm:$0xff]
    %v1137 = vld [vmem:[#allocation8 + $0x98] sm:$0xff]
    %v1138 = vld [vmem:[#allocation8 + $0xa0] sm:$0xff]
    %v1139 = vld [vmem:[#allocation8 + $0xa8] sm:$0xff]
    %v1140 = vld [vmem:[#allocation8 + $0xb0] sm:$0xff]
    %v1141 = vld [vmem:[#allocation8 + $0xb8] sm:$0xff]
    %v1142 = vld [vmem:[#allocation8 + $0xc0] sm:$0xff]
    %v1143 = vld [vmem:[#allocation8 + $0xc8] sm:$0xff]
    %v1144 = vld [vmem:[#allocation8 + $0xd0] sm:$0xff]
    %v1145 = vld [vmem:[#allocation8 + $0xd8] sm:$0xff]
    %v1146 = vld [vmem:[#allocation8 + $0xe0] sm:$0xff]
    %v1147 = vld [vmem:[#allocation8 + $0xe8] sm:$0xff]
    %v1148 = vld [vmem:[#allocation8 + $0xf0] sm:$0xff]
    %v1149 = vld [vmem:[#allocation8 + $0xf8] sm:$0xff]
    %v1150 = vld [vmem:[#allocation8 + $0x100] sm:$0xff]
    %v1151 = vld [vmem:[#allocation8 + $0x108] sm:$0xff]
    %v1152 = vld [vmem:[#allocation8 + $0x110] sm:$0xff]
    %v1153 = vld [vmem:[#allocation8 + $0x118] sm:$0xff]
    %v1154 = vld [vmem:[#allocation8 + $0x120] sm:$0xff]
    %v1155 = vld [vmem:[#allocation8 + $0x128] sm:$0xff]
    %v1156 = vld [vmem:[#allocation8 + $0x130] sm:$0xff]
    %v1157 = vld [vmem:[#allocation8 + $0x138] sm:$0xff]
    %v1158 = vld [vmem:[#allocation8 + $0x140] sm:$0xff]
    %v1159 = vld [vmem:[#allocation8 + $0x148] sm:$0xff]
    %v1160 = vld [vmem:[#allocation8 + $0x150] sm:$0xff]
    %v1161 = vld [vmem:[#allocation8 + $0x158] sm:$0xff]
    %v1162 = vld [vmem:[#allocation8 + $0x160] sm:$0xff]
    %v1163 = vld [vmem:[#allocation8 + $0x168] sm:$0xff]
    %v1164 = vld [vmem:[#allocation8 + $0x170] sm:$0xff]
    %v1165 = vld [vmem:[#allocation8 + $0x178] sm:$0xff]
    %v1166 = vld [vmem:[#allocation8 + $0x180] sm:$0xff]
    %v1167 = vld [vmem:[#allocation8 + $0x188] sm:$0xff]
    %v1168 = vld [vmem:[#allocation8 + $0x190] sm:$0xff]
    %v1169 = vld [vmem:[#allocation8 + $0x198] sm:$0xff]
    %v1170 = vld [vmem:[#allocation8 + $0x1a0] sm:$0xff]
    %v1171 = vld [vmem:[#allocation8 + $0x1a8] sm:$0xff]
    %v1172 = vld [vmem:[#allocation8 + $0x1b0] sm:$0xff]
    %v1173 = vld [vmem:[#allocation8 + $0x1b8] sm:$0xff]
    %v1174 = vld [vmem:[#allocation8 + $0x1c0] sm:$0xff]
    %v1175 = vld [vmem:[#allocation8 + $0x1c8] sm:$0xff]
    %v1176 = vld [vmem:[#allocation8 + $0x1d0] sm:$0xff]
    %v1177 = vld [vmem:[#allocation8 + $0x1d8] sm:$0xff]
    %v1178 = vld [vmem:[#allocation8 + $0x1e0] sm:$0xff]
    %v1179 = vld [vmem:[#allocation8 + $0x1e8] sm:$0xff]
    %v1180 = vld [vmem:[#allocation8 + $0x1f0] sm:$0xff]
    %v1181 = vld [vmem:[#allocation8 + $0x1f8] sm:$0xff]
    %v1182 = vld [vmem:[#allocation10] sm:$0xff]
    %v1184 = vlaneseq
    %v1185 = vshrl.u32 %v1184, 7
    %v1186 = vsub.s32 0, %v1185
    %v1187 = vrot.slane %v1182, %v1186
    %v1188 = vlaneseq
    %v1189 = vshrl.u32 %v1188, 7
    %v1190 = vsub.s32 1, %v1189
    %v1191 = vrot.slane %v1182, %v1190
    %v1192 = vlaneseq
    %v1193 = vshrl.u32 %v1192, 7
    %v1194 = vsub.s32 2, %v1193
    %v1195 = vrot.slane %v1182, %v1194
    %v1196 = vlaneseq
    %v1197 = vshrl.u32 %v1196, 7
    %v1198 = vsub.s32 3, %v1197
    %v1199 = vrot.slane %v1182, %v1198
    %v1200 = vlaneseq
    %v1201 = vshrl.u32 %v1200, 7
    %v1202 = vsub.s32 4, %v1201
    %v1203 = vrot.slane %v1182, %v1202
    %v1204 = vlaneseq
    %v1205 = vshrl.u32 %v1204, 7
    %v1206 = vsub.s32 5, %v1205
    %v1207 = vrot.slane %v1182, %v1206
    %v1208 = vlaneseq
    %v1209 = vshrl.u32 %v1208, 7
    %v1210 = vsub.s32 6, %v1209
    %v1211 = vrot.slane %v1182, %v1210
    %v1212 = vlaneseq
    %v1213 = vshrl.u32 %v1212, 7
    %v1214 = vsub.s32 7, %v1213
    %v1215 = vrot.slane %v1182, %v1214
    %v1288 = vunpack.c.l.b16 %v1118
    %v1289 = vunpack.c.h.b16 %v1118
    %v1290 = vunpack.c.l.b16 %v1119
    %v1291 = vunpack.c.h.b16 %v1119
    %v1292 = vunpack.c.l.b16 %v1120
    %v1293 = vunpack.c.h.b16 %v1120
    %v1294 = vunpack.c.l.b16 %v1121
    %v1295 = vunpack.c.h.b16 %v1121
    %v1296 = vunpack.c.l.b16 %v1122
    %v1297 = vunpack.c.h.b16 %v1122
    %v1298 = vunpack.c.l.b16 %v1123
    %v1299 = vunpack.c.h.b16 %v1123
    %v1300 = vunpack.c.l.b16 %v1124
    %v1301 = vunpack.c.h.b16 %v1124
    %v1302 = vunpack.c.l.b16 %v1125
    %v1303 = vunpack.c.h.b16 %v1125
    %v1304 = vunpack.c.l.b16 %v1126
    %v1305 = vunpack.c.h.b16 %v1126
    %v1306 = vunpack.c.l.b16 %v1127
    %v1307 = vunpack.c.h.b16 %v1127
    %v1308 = vunpack.c.l.b16 %v1128
    %v1309 = vunpack.c.h.b16 %v1128
    %v1310 = vunpack.c.l.b16 %v1129
    %v1311 = vunpack.c.h.b16 %v1129
    %v1312 = vunpack.c.l.b16 %v1130
    %v1313 = vunpack.c.h.b16 %v1130
    %v1314 = vunpack.c.l.b16 %v1131
    %v1315 = vunpack.c.h.b16 %v1131
    %v1316 = vunpack.c.l.b16 %v1132
    %v1317 = vunpack.c.h.b16 %v1132
    %v1318 = vunpack.c.l.b16 %v1133
    %v1319 = vunpack.c.h.b16 %v1133
    %v1320 = vunpack.c.l.b16 %v1134
    %v1321 = vunpack.c.h.b16 %v1134
    %v1322 = vunpack.c.l.b16 %v1135
    %v1323 = vunpack.c.h.b16 %v1135
    %v1324 = vunpack.c.l.b16 %v1136
    %v1325 = vunpack.c.h.b16 %v1136
    %v1326 = vunpack.c.l.b16 %v1137
    %v1327 = vunpack.c.h.b16 %v1137
    %v1328 = vunpack.c.l.b16 %v1138
    %v1329 = vunpack.c.h.b16 %v1138
    %v1330 = vunpack.c.l.b16 %v1139
    %v1331 = vunpack.c.h.b16 %v1139
    %v1332 = vunpack.c.l.b16 %v1140
    %v1333 = vunpack.c.h.b16 %v1140
    %v1334 = vunpack.c.l.b16 %v1141
    %v1335 = vunpack.c.h.b16 %v1141
    %v1336 = vunpack.c.l.b16 %v1142
    %v1337 = vunpack.c.h.b16 %v1142
    %v1338 = vunpack.c.l.b16 %v1143
    %v1339 = vunpack.c.h.b16 %v1143
    %v1340 = vunpack.c.l.b16 %v1144
    %v1341 = vunpack.c.h.b16 %v1144
    %v1342 = vunpack.c.l.b16 %v1145
    %v1343 = vunpack.c.h.b16 %v1145
    %v1344 = vunpack.c.l.b16 %v1146
    %v1345 = vunpack.c.h.b16 %v1146
    %v1346 = vunpack.c.l.b16 %v1147
    %v1347 = vunpack.c.h.b16 %v1147
    %v1348 = vunpack.c.l.b16 %v1148
    %v1349 = vunpack.c.h.b16 %v1148
    %v1350 = vunpack.c.l.b16 %v1149
    %v1351 = vunpack.c.h.b16 %v1149
    %v1352 = vunpack.c.l.b16 %v1150
    %v1353 = vunpack.c.h.b16 %v1150
    %v1354 = vunpack.c.l.b16 %v1151
    %v1355 = vunpack.c.h.b16 %v1151
    %v1356 = vunpack.c.l.b16 %v1152
    %v1357 = vunpack.c.h.b16 %v1152
    %v1358 = vunpack.c.l.b16 %v1153
    %v1359 = vunpack.c.h.b16 %v1153
    %v1360 = vunpack.c.l.b16 %v1154
    %v1361 = vunpack.c.h.b16 %v1154
    %v1362 = vunpack.c.l.b16 %v1155
    %v1363 = vunpack.c.h.b16 %v1155
    %v1364 = vunpack.c.l.b16 %v1156
    %v1365 = vunpack.c.h.b16 %v1156
    %v1366 = vunpack.c.l.b16 %v1157
    %v1367 = vunpack.c.h.b16 %v1157
    %v1368 = vunpack.c.l.b16 %v1158
    %v1369 = vunpack.c.h.b16 %v1158
    %v1370 = vunpack.c.l.b16 %v1159
    %v1371 = vunpack.c.h.b16 %v1159
    %v1372 = vunpack.c.l.b16 %v1160
    %v1373 = vunpack.c.h.b16 %v1160
    %v1374 = vunpack.c.l.b16 %v1161
    %v1375 = vunpack.c.h.b16 %v1161
    %v1376 = vunpack.c.l.b16 %v1162
    %v1377 = vunpack.c.h.b16 %v1162
    %v1378 = vunpack.c.l.b16 %v1163
    %v1379 = vunpack.c.h.b16 %v1163
    %v1380 = vunpack.c.l.b16 %v1164
    %v1381 = vunpack.c.h.b16 %v1164
    %v1382 = vunpack.c.l.b16 %v1165
    %v1383 = vunpack.c.h.b16 %v1165
    %v1384 = vunpack.c.l.b16 %v1166
    %v1385 = vunpack.c.h.b16 %v1166
    %v1386 = vunpack.c.l.b16 %v1167
    %v1387 = vunpack.c.h.b16 %v1167
    %v1388 = vunpack.c.l.b16 %v1168
    %v1389 = vunpack.c.h.b16 %v1168
    %v1390 = vunpack.c.l.b16 %v1169
    %v1391 = vunpack.c.h.b16 %v1169
    %v1392 = vunpack.c.l.b16 %v1170
    %v1393 = vunpack.c.h.b16 %v1170
    %v1394 = vunpack.c.l.b16 %v1171
    %v1395 = vunpack.c.h.b16 %v1171
    %v1396 = vunpack.c.l.b16 %v1172
    %v1397 = vunpack.c.h.b16 %v1172
    %v1398 = vunpack.c.l.b16 %v1173
    %v1399 = vunpack.c.h.b16 %v1173
    %v1400 = vunpack.c.l.b16 %v1174
    %v1401 = vunpack.c.h.b16 %v1174
    %v1402 = vunpack.c.l.b16 %v1175
    %v1403 = vunpack.c.h.b16 %v1175
    %v1404 = vunpack.c.l.b16 %v1176
    %v1405 = vunpack.c.h.b16 %v1176
    %v1406 = vunpack.c.l.b16 %v1177
    %v1407 = vunpack.c.h.b16 %v1177
    %v1408 = vunpack.c.l.b16 %v1178
    %v1409 = vunpack.c.h.b16 %v1178
    %v1410 = vunpack.c.l.b16 %v1179
    %v1411 = vunpack.c.h.b16 %v1179
    %v1412 = vunpack.c.l.b16 %v1180
    %v1413 = vunpack.c.h.b16 %v1180
    %v1414 = vunpack.c.l.b16 %v1181
    %v1415 = vunpack.c.h.b16 %v1181
    %v1416 = vpack.c.b16 %v1296, %v1288
    %v1417 = vpack.c.b16 %v1297, %v1289
    %v1418 = vpack.c.b16 %v1298, %v1290
    %v1419 = vpack.c.b16 %v1299, %v1291
    %v1420 = vpack.c.b16 %v1300, %v1292
    %v1421 = vpack.c.b16 %v1301, %v1293
    %v1422 = vpack.c.b16 %v1302, %v1294
    %v1423 = vpack.c.b16 %v1303, %v1295
    %v1424 = vpack.c.b16 %v1312, %v1304
    %v1425 = vpack.c.b16 %v1313, %v1305
    %v1426 = vpack.c.b16 %v1314, %v1306
    %v1427 = vpack.c.b16 %v1315, %v1307
    %v1428 = vpack.c.b16 %v1316, %v1308
    %v1429 = vpack.c.b16 %v1317, %v1309
    %v1430 = vpack.c.b16 %v1318, %v1310
    %v1431 = vpack.c.b16 %v1319, %v1311
    %v1432 = vpack.c.b16 %v1328, %v1320
    %v1433 = vpack.c.b16 %v1329, %v1321
    %v1434 = vpack.c.b16 %v1330, %v1322
    %v1435 = vpack.c.b16 %v1331, %v1323
    %v1436 = vpack.c.b16 %v1332, %v1324
    %v1437 = vpack.c.b16 %v1333, %v1325
    %v1438 = vpack.c.b16 %v1334, %v1326
    %v1439 = vpack.c.b16 %v1335, %v1327
    %v1440 = vpack.c.b16 %v1344, %v1336
    %v1441 = vpack.c.b16 %v1345, %v1337
    %v1442 = vpack.c.b16 %v1346, %v1338
    %v1443 = vpack.c.b16 %v1347, %v1339
    %v1444 = vpack.c.b16 %v1348, %v1340
    %v1445 = vpack.c.b16 %v1349, %v1341
    %v1446 = vpack.c.b16 %v1350, %v1342
    %v1447 = vpack.c.b16 %v1351, %v1343
    %v1448 = vpack.c.b16 %v1360, %v1352
    %v1449 = vpack.c.b16 %v1361, %v1353
    %v1450 = vpack.c.b16 %v1362, %v1354
    %v1451 = vpack.c.b16 %v1363, %v1355
    %v1452 = vpack.c.b16 %v1364, %v1356
    %v1453 = vpack.c.b16 %v1365, %v1357
    %v1454 = vpack.c.b16 %v1366, %v1358
    %v1455 = vpack.c.b16 %v1367, %v1359
    %v1456 = vpack.c.b16 %v1376, %v1368
    %v1457 = vpack.c.b16 %v1377, %v1369
    %v1458 = vpack.c.b16 %v1378, %v1370
    %v1459 = vpack.c.b16 %v1379, %v1371
    %v1460 = vpack.c.b16 %v1380, %v1372
    %v1461 = vpack.c.b16 %v1381, %v1373
    %v1462 = vpack.c.b16 %v1382, %v1374
    %v1463 = vpack.c.b16 %v1383, %v1375
    %v1464 = vpack.c.b16 %v1392, %v1384
    %v1465 = vpack.c.b16 %v1393, %v1385
    %v1466 = vpack.c.b16 %v1394, %v1386
    %v1467 = vpack.c.b16 %v1395, %v1387
    %v1468 = vpack.c.b16 %v1396, %v1388
    %v1469 = vpack.c.b16 %v1397, %v1389
    %v1470 = vpack.c.b16 %v1398, %v1390
    %v1471 = vpack.c.b16 %v1399, %v1391
    %v1472 = vpack.c.b16 %v1408, %v1400
    %v1473 = vpack.c.b16 %v1409, %v1401
    %v1474 = vpack.c.b16 %v1410, %v1402
    %v1475 = vpack.c.b16 %v1411, %v1403
    %v1476 = vpack.c.b16 %v1412, %v1404
    %v1477 = vpack.c.b16 %v1413, %v1405
    %v1478 = vpack.c.b16 %v1414, %v1406
    %v1479 = vpack.c.b16 %v1415, %v1407
    %1544 = vmatprep.subr.bf16.mxu0 %v1417
    %1545 = vmatpush1.bf16.msra.mxu0 %v1416
    %1546 = vmatprep.subr.bf16.mxu0 %v1425
    %1547 = vmatpush1.bf16.msra.mxu0 %v1424
    %1548 = vmatprep.subr.bf16.mxu0 %v1433
    %1549 = vmatpush1.bf16.msra.mxu0 %v1432
    %1550 = vmatprep.subr.bf16.mxu0 %v1441
    %1551 = vmatpush1.bf16.msra.mxu0 %v1440
    %1552 = vmatprep.subr.bf16.mxu0 %v1449
    %1553 = vmatpush1.bf16.msra.mxu0 %v1448
    %1554 = vmatprep.subr.bf16.mxu0 %v1457
    %1555 = vmatpush1.bf16.msra.mxu0 %v1456
    %1556 = vmatprep.subr.bf16.mxu0 %v1465
    %1557 = vmatpush1.bf16.msra.mxu0 %v1464
    %1558 = vmatprep.subr.bf16.mxu0 %v1473
    %1559 = vmatpush1.bf16.msra.mxu0 %v1472
    %1560 = vmatprep.subr.bf16.mxu0 0
    %1561 = vmatpush1.bf16.msra.mxu0 0
    %1562 = vmatprep.subr.bf16.mxu0 0
    %1563 = vmatpush1.bf16.msra.mxu0 0
    %1564 = vmatprep.subr.bf16.mxu0 0
    %1565 = vmatpush1.bf16.msra.mxu0 0
    %1566 = vmatprep.subr.bf16.mxu0 0
    %1567 = vmatpush1.bf16.msra.mxu0 0
    %1568 = vmatprep.subr.bf16.mxu0 0
    %1569 = vmatpush1.bf16.msra.mxu0 0
    %1570 = vmatprep.subr.bf16.mxu0 0
    %1571 = vmatpush1.bf16.msra.mxu0 0
    %1572 = vmatprep.subr.bf16.mxu0 0
    %1573 = vmatpush1.bf16.msra.mxu0 0
    %1574 = vmatprep.subr.bf16.mxu0 0
    %1575 = vmatpush1.bf16.msra.mxu0 0
    %1576 = vmatprep.mubr.bf16.mxu0 0
    %1577 = vmatmul.mubr.bf16.gmra.mrb[0].mxu0 %v1117
    %v1578 = vpop.f32.mrb[0].mxu0
    %v1579 = vadd.f32 %v1187, %v1578
    %v1580 = vpop.f32.mrb[0].mxu0
    %v1581 = vadd.f32 %v1191, %v1580
    %v1582 = vpop.f32.mrb[0].mxu0
    %v1583 = vpop.f32.mrb[0].mxu0
    %1584 = vdwg.mxu0
    %1585 = vmatprep.subr.bf16.mxu0 %v1419
    %1586 = vmatpush1.bf16.msra.mxu0 %v1418
    %1587 = vmatprep.subr.bf16.mxu0 %v1427
    %1588 = vmatpush1.bf16.msra.mxu0 %v1426
    %1589 = vmatprep.subr.bf16.mxu0 %v1435
    %1590 = vmatpush1.bf16.msra.mxu0 %v1434
    %1591 = vmatprep.subr.bf16.mxu0 %v1443
    %1592 = vmatpush1.bf16.msra.mxu0 %v1442
    %1593 = vmatprep.subr.bf16.mxu0 %v1451
    %1594 = vmatpush1.bf16.msra.mxu0 %v1450
    %1595 = vmatprep.subr.bf16.mxu0 %v1459
    %1596 = vmatpush1.bf16.msra.mxu0 %v1458
    %1597 = vmatprep.subr.bf16.mxu0 %v1467
    %1598 = vmatpush1.bf16.msra.mxu0 %v1466
    %1599 = vmatprep.subr.bf16.mxu0 %v1475
    %1600 = vmatpush1.bf16.msra.mxu0 %v1474
    %1601 = vmatprep.subr.bf16.mxu0 0
    %1602 = vmatpush1.bf16.msra.mxu0 0
    %1603 = vmatprep.subr.bf16.mxu0 0
    %1604 = vmatpush1.bf16.msra.mxu0 0
    %1605 = vmatprep.subr.bf16.mxu0 0
    %1606 = vmatpush1.bf16.msra.mxu0 0
    %1607 = vmatprep.subr.bf16.mxu0 0
    %1608 = vmatpush1.bf16.msra.mxu0 0
    %1609 = vmatprep.subr.bf16.mxu0 0
    %1610 = vmatpush1.bf16.msra.mxu0 0
    %1611 = vmatprep.subr.bf16.mxu0 0
    %1612 = vmatpush1.bf16.msra.mxu0 0
    %1613 = vmatprep.subr.bf16.mxu0 0
    %1614 = vmatpush1.bf16.msra.mxu0 0
    %1615 = vmatprep.subr.bf16.mxu0 0
    %1616 = vmatpush1.bf16.msra.mxu0 0
    %1617 = vmatprep.mubr.bf16.mxu0 0
    %1618 = vmatmul.mubr.bf16.gmra.mrb[0].mxu0 %v1117
    %v1619 = vpop.f32.mrb[0].mxu0
    %v1620 = vadd.f32 %v1195, %v1619
    %v1621 = vpop.f32.mrb[0].mxu0
    %v1622 = vadd.f32 %v1199, %v1621
    %v1623 = vpop.f32.mrb[0].mxu0
    %v1624 = vpop.f32.mrb[0].mxu0
    %1625 = vdwg.mxu0
    %1626 = vmatprep.subr.bf16.mxu0 %v1421
    %1627 = vmatpush1.bf16.msra.mxu0 %v1420
    %1628 = vmatprep.subr.bf16.mxu0 %v1429
    %1629 = vmatpush1.bf16.msra.mxu0 %v1428
    %1630 = vmatprep.subr.bf16.mxu0 %v1437
    %1631 = vmatpush1.bf16.msra.mxu0 %v1436
    %1632 = vmatprep.subr.bf16.mxu0 %v1445
    %1633 = vmatpush1.bf16.msra.mxu0 %v1444
    %1634 = vmatprep.subr.bf16.mxu0 %v1453
    %1635 = vmatpush1.bf16.msra.mxu0 %v1452
    %1636 = vmatprep.subr.bf16.mxu0 %v1461
    %1637 = vmatpush1.bf16.msra.mxu0 %v1460
    %1638 = vmatprep.subr.bf16.mxu0 %v1469
    %1639 = vmatpush1.bf16.msra.mxu0 %v1468
    %1640 = vmatprep.subr.bf16.mxu0 %v1477
    %1641 = vmatpush1.bf16.msra.mxu0 %v1476
    %1642 = vmatprep.subr.bf16.mxu0 0
    %1643 = vmatpush1.bf16.msra.mxu0 0
    %1644 = vmatprep.subr.bf16.mxu0 0
    %1645 = vmatpush1.bf16.msra.mxu0 0
    %1646 = vmatprep.subr.bf16.mxu0 0
    %1647 = vmatpush1.bf16.msra.mxu0 0
    %1648 = vmatprep.subr.bf16.mxu0 0
    %1649 = vmatpush1.bf16.msra.mxu0 0
    %1650 = vmatprep.subr.bf16.mxu0 0
    %1651 = vmatpush1.bf16.msra.mxu0 0
    %1652 = vmatprep.subr.bf16.mxu0 0
    %1653 = vmatpush1.bf16.msra.mxu0 0
    %1654 = vmatprep.subr.bf16.mxu0 0
    %1655 = vmatpush1.bf16.msra.mxu0 0
    %1656 = vmatprep.subr.bf16.mxu0 0
    %1657 = vmatpush1.bf16.msra.mxu0 0
    %1658 = vmatprep.mubr.bf16.mxu0 0
    %1659 = vmatmul.mubr.bf16.gmra.mrb[0].mxu0 %v1117
    %v1660 = vpop.f32.mrb[0].mxu0
    %v1661 = vadd.f32 %v1203, %v1660
    %v1662 = vpop.f32.mrb[0].mxu0
    %v1663 = vadd.f32 %v1207, %v1662
    %v1664 = vpop.f32.mrb[0].mxu0
    %v1665 = vpop.f32.mrb[0].mxu0
    %1666 = vdwg.mxu0
    %1667 = vmatprep.subr.bf16.mxu0 %v1423
    %1668 = vmatpush1.bf16.msra.mxu0 %v1422
    %1669 = vmatprep.subr.bf16.mxu0 %v1431
    %1670 = vmatpush1.bf16.msra.mxu0 %v1430
    %1671 = vmatprep.subr.bf16.mxu0 %v1439
    %1672 = vmatpush1.bf16.msra.mxu0 %v1438
    %1673 = vmatprep.subr.bf16.mxu0 %v1447
    %1674 = vmatpush1.bf16.msra.mxu0 %v1446
    %1675 = vmatprep.subr.bf16.mxu0 %v1455
    %1676 = vmatpush1.bf16.msra.mxu0 %v1454
    %1677 = vmatprep.subr.bf16.mxu0 %v1463
    %1678 = vmatpush1.bf16.msra.mxu0 %v1462
    %1679 = vmatprep.subr.bf16.mxu0 %v1471
    %1680 = vmatpush1.bf16.msra.mxu0 %v1470
    %1681 = vmatprep.subr.bf16.mxu0 %v1479
    %1682 = vmatpush1.bf16.msra.mxu0 %v1478
    %1683 = vmatprep.subr.bf16.mxu0 0
    %1684 = vmatpush1.bf16.msra.mxu0 0
    %1685 = vmatprep.subr.bf16.mxu0 0
    %1686 = vmatpush1.bf16.msra.mxu0 0
    %1687 = vmatprep.subr.bf16.mxu0 0
    %1688 = vmatpush1.bf16.msra.mxu0 0
    %1689 = vmatprep.subr.bf16.mxu0 0
    %1690 = vmatpush1.bf16.msra.mxu0 0
    %1691 = vmatprep.subr.bf16.mxu0 0
    %1692 = vmatpush1.bf16.msra.mxu0 0
    %1693 = vmatprep.subr.bf16.mxu0 0
    %1694 = vmatpush1.bf16.msra.mxu0 0
    %1695 = vmatprep.subr.bf16.mxu0 0
    %1696 = vmatpush1.bf16.msra.mxu0 0
    %1697 = vmatprep.subr.bf16.mxu0 0
    %1698 = vmatpush1.bf16.msra.mxu0 0
    %1699 = vmatprep.mubr.bf16.mxu0 0
    %1700 = vmatmul.mubr.bf16.gmra.mrb[0].mxu0 %v1117
    %v1701 = vpop.f32.mrb[0].mxu0
    %v1702 = vadd.f32 %v1211, %v1701
    %v1703 = vpop.f32.mrb[0].mxu0
    %v1704 = vadd.f32 %v1215, %v1703
    %v1705 = vpop.f32.mrb[0].mxu0
    %v1706 = vpop.f32.mrb[0].mxu0
    %1707 = vdwg.mxu0
    %v1708 = vmax.f32 %v1579, 0.0
    %v1709 = vmax.f32 %v1581, 0.0
    %v1710 = vmax.f32 %v1620, 0.0
    %v1711 = vmax.f32 %v1622, 0.0
    %v1712 = vmax.f32 %v1661, 0.0
    %v1713 = vmax.f32 %v1663, 0.0
    %v1714 = vmax.f32 %v1702, 0.0
    %v1715 = vmax.f32 %v1704, 0.0
    %vm1716 = vcmask 1041408
    %v1717 = vsel %vm1716, %v1708, 0.0
    %v1718 = vrot.slane %v1717, 4
    %v1719 = vadd.f32 %v1717, %v1718
    %v1720 = vrot.slane %v1719, 2
    %v1721 = vadd.f32 %v1719, %v1720
    %v1722 = vrot.slane %v1721, 1
    %v1723 = vadd.f32 %v1721, %v1722
    %v1724 = vsel %vm1716, %v1709, 0.0
    %v1725 = vrot.slane %v1724, 4
    %v1726 = vadd.f32 %v1724, %v1725
    %v1727 = vrot.slane %v1726, 2
    %v1728 = vadd.f32 %v1726, %v1727
    %v1729 = vrot.slane %v1728, 1
    %v1730 = vadd.f32 %v1728, %v1729
    %v1731 = vsel %vm1716, %v1710, 0.0
    %v1732 = vrot.slane %v1731, 4
    %v1733 = vadd.f32 %v1731, %v1732
    %v1734 = vrot.slane %v1733, 2
    %v1735 = vadd.f32 %v1733, %v1734
    %v1736 = vrot.slane %v1735, 1
    %v1737 = vadd.f32 %v1735, %v1736
    %v1738 = vsel %vm1716, %v1711, 0.0
    %v1739 = vrot.slane %v1738, 4
    %v1740 = vadd.f32 %v1738, %v1739
    %v1741 = vrot.slane %v1740, 2
    %v1742 = vadd.f32 %v1740, %v1741
    %v1743 = vrot.slane %v1742, 1
    %v1744 = vadd.f32 %v1742, %v1743
    %v1745 = vsel %vm1716, %v1712, 0.0
    %v1746 = vrot.slane %v1745, 4
    %v1747 = vadd.f32 %v1745, %v1746
    %v1748 = vrot.slane %v1747, 2
    %v1749 = vadd.f32 %v1747, %v1748
    %v1750 = vrot.slane %v1749, 1
    %v1751 = vadd.f32 %v1749, %v1750
    %v1752 = vsel %vm1716, %v1713, 0.0
    %v1753 = vrot.slane %v1752, 4
    %v1754 = vadd.f32 %v1752, %v1753
    %v1755 = vrot.slane %v1754, 2
    %v1756 = vadd.f32 %v1754, %v1755
    %v1757 = vrot.slane %v1756, 1
    %v1758 = vadd.f32 %v1756, %v1757
    %v1759 = vsel %vm1716, %v1714, 0.0
    %v1760 = vrot.slane %v1759, 4
    %v1761 = vadd.f32 %v1759, %v1760
    %v1762 = vrot.slane %v1761, 2
    %v1763 = vadd.f32 %v1761, %v1762
    %v1764 = vrot.slane %v1763, 1
    %v1765 = vadd.f32 %v1763, %v1764
    %v1766 = vsel %vm1716, %v1715, 0.0
    %v1767 = vrot.slane %v1766, 4
    %v1768 = vadd.f32 %v1766, %v1767
    %v1769 = vrot.slane %v1768, 2
    %v1770 = vadd.f32 %v1768, %v1769
    %v1771 = vrot.slane %v1770, 1
    %v1772 = vadd.f32 %v1770, %v1771
    %v1773 = vrcp.pop 2.0
    %v1774 = vmul.f32 %v1723, %v1773
    %v1775 = vmul.f32 %v1730, %v1773
    %v1776 = vmul.f32 %v1737, %v1773
    %v1777 = vmul.f32 %v1744, %v1773
    %v1778 = vmul.f32 %v1751, %v1773
    %v1779 = vmul.f32 %v1758, %v1773
    %v1780 = vmul.f32 %v1765, %v1773
    %v1781 = vmul.f32 %v1772, %v1773
    %v1782 = vsub.f32 %v1708, %v1774
    %v1783 = vsub.f32 %v1709, %v1775
    %v1784 = vsub.f32 %v1710, %v1776
    %v1785 = vsub.f32 %v1711, %v1777
    %v1786 = vsub.f32 %v1712, %v1778
    %v1787 = vsub.f32 %v1713, %v1779
    %v1788 = vsub.f32 %v1714, %v1780
    %v1789 = vsub.f32 %v1715, %v1781
    %v1790 = vmul.f32 %v1782, %v1782
    %v1791 = vmul.f32 %v1783, %v1783
    %v1792 = vmul.f32 %v1784, %v1784
    %v1793 = vmul.f32 %v1785, %v1785
    %v1794 = vmul.f32 %v1786, %v1786
    %v1795 = vmul.f32 %v1787, %v1787
    %v1796 = vmul.f32 %v1788, %v1788
    %v1797 = vmul.f32 %v1789, %v1789
    %v1798 = vsel %vm1716, %v1790, 0.0
    %v1799 = vrot.slane %v1798, 4
    %v1800 = vadd.f32 %v1798, %v1799
    %v1801 = vrot.slane %v1800, 2
    %v1802 = vadd.f32 %v1800, %v1801
    %v1803 = vrot.slane %v1802, 1
    %v1804 = vadd.f32 %v1802, %v1803
    %v1805 = vsel %vm1716, %v1791, 0.0
    %v1806 = vrot.slane %v1805, 4
    %v1807 = vadd.f32 %v1805, %v1806
    %v1808 = vrot.slane %v1807, 2
    %v1809 = vadd.f32 %v1807, %v1808
    %v1810 = vrot.slane %v1809, 1
    %v1811 = vadd.f32 %v1809, %v1810
    %v1812 = vsel %vm1716, %v1792, 0.0
    %v1813 = vrot.slane %v1812, 4
    %v1814 = vadd.f32 %v1812, %v1813
    %v1815 = vrot.slane %v1814, 2
    %v1816 = vadd.f32 %v1814, %v1815
    %v1817 = vrot.slane %v1816, 1
    %v1818 = vadd.f32 %v1816, %v1817
    %v1819 = vsel %vm1716, %v1793, 0.0
    %v1820 = vrot.slane %v1819, 4
    %v1821 = vadd.f32 %v1819, %v1820
    %v1822 = vrot.slane %v1821, 2
    %v1823 = vadd.f32 %v1821, %v1822
    %v1824 = vrot.slane %v1823, 1
    %v1825 = vadd.f32 %v1823, %v1824
    %v1826 = vsel %vm1716, %v1794, 0.0
    %v1827 = vrot.slane %v1826, 4
    %v1828 = vadd.f32 %v1826, %v1827
    %v1829 = vrot.slane %v1828, 2
    %v1830 = vadd.f32 %v1828, %v1829
    %v1831 = vrot.slane %v1830, 1
    %v1832 = vadd.f32 %v1830, %v1831
    %v1833 = vsel %vm1716, %v1795, 0.0
    %v1834 = vrot.slane %v1833, 4
    %v1835 = vadd.f32 %v1833, %v1834
    %v1836 = vrot.slane %v1835, 2
    %v1837 = vadd.f32 %v1835, %v1836
    %v1838 = vrot.slane %v1837, 1
    %v1839 = vadd.f32 %v1837, %v1838
    %v1840 = vsel %vm1716, %v1796, 0.0
    %v1841 = vrot.slane %v1840, 4
    %v1842 = vadd.f32 %v1840, %v1841
    %v1843 = vrot.slane %v1842, 2
    %v1844 = vadd.f32 %v1842, %v1843
    %v1845 = vrot.slane %v1844, 1
    %v1846 = vadd.f32 %v1844, %v1845
    %v1847 = vsel %vm1716, %v1797, 0.0
    %v1848 = vrot.slane %v1847, 4
    %v1849 = vadd.f32 %v1847, %v1848
    %v1850 = vrot.slane %v1849, 2
    %v1851 = vadd.f32 %v1849, %v1850
    %v1852 = vrot.slane %v1851, 1
    %v1853 = vadd.f32 %v1851, %v1852
    %v1854 = vmul.f32 %v1804, %v1773
    %v1855 = vmul.f32 %v1811, %v1773
    %v1856 = vmul.f32 %v1818, %v1773
    %v1857 = vmul.f32 %v1825, %v1773
    %v1858 = vmul.f32 %v1832, %v1773
    %v1859 = vmul.f32 %v1839, %v1773
    %v1860 = vmul.f32 %v1846, %v1773
    %v1861 = vmul.f32 %v1853, %v1773
    %v1862 = vadd.f32 %v1854, 1e-05
    %v1863 = vadd.f32 %v1855, 1e-05
    %v1864 = vadd.f32 %v1856, 1e-05
    %v1865 = vadd.f32 %v1857, 1e-05
    %v1866 = vadd.f32 %v1858, 1e-05
    %v1867 = vadd.f32 %v1859, 1e-05
    %v1868 = vadd.f32 %v1860, 1e-05
    %v1869 = vadd.f32 %v1861, 1e-05
    %v1870 = vrsqrt.pop %v1862
    %v1871 = vrsqrt.pop %v1863
    %v1872 = vrsqrt.pop %v1864
    %v1873 = vrsqrt.pop %v1865
    %v1874 = vrsqrt.pop %v1866
    %v1875 = vrsqrt.pop %v1867
    %v1876 = vrsqrt.pop %v1868
    %v1877 = vrsqrt.pop %v1869
    %v1878 = vmul.f32 %v1782, %v1870
    %v1879 = vmul.f32 %v1783, %v1871
    %v1880 = vmul.f32 %v1784, %v1872
    %v1881 = vmul.f32 %v1785, %v1873
    %v1882 = vmul.f32 %v1786, %v1874
    %v1883 = vmul.f32 %v1787, %v1875
    %v1884 = vmul.f32 %v1788, %v1876
    %v1885 = vmul.f32 %v1789, %v1877
    %v1886 = vld [vmem:[#allocation11] sm:$0xff]
    %v1888 = vlaneseq
    %v1889 = vshrl.u32 %v1888, 7
    %v1890 = vsub.s32 0, %v1889
    %v1891 = vrot.slane %v1886, %v1890
    %v1892 = vlaneseq
    %v1893 = vshrl.u32 %v1892, 7
    %v1894 = vsub.s32 1, %v1893
    %v1895 = vrot.slane %v1886, %v1894
    %v1896 = vlaneseq
    %v1897 = vshrl.u32 %v1896, 7
    %v1898 = vsub.s32 2, %v1897
    %v1899 = vrot.slane %v1886, %v1898
    %v1900 = vlaneseq
    %v1901 = vshrl.u32 %v1900, 7
    %v1902 = vsub.s32 3, %v1901
    %v1903 = vrot.slane %v1886, %v1902
    %v1904 = vlaneseq
    %v1905 = vshrl.u32 %v1904, 7
    %v1906 = vsub.s32 4, %v1905
    %v1907 = vrot.slane %v1886, %v1906
    %v1908 = vlaneseq
    %v1909 = vshrl.u32 %v1908, 7
    %v1910 = vsub.s32 5, %v1909
    %v1911 = vrot.slane %v1886, %v1910
    %v1912 = vlaneseq
    %v1913 = vshrl.u32 %v1912, 7
    %v1914 = vsub.s32 6, %v1913
    %v1915 = vrot.slane %v1886, %v1914
    %v1916 = vlaneseq
    %v1917 = vshrl.u32 %v1916, 7
    %v1918 = vsub.s32 7, %v1917
    %v1919 = vrot.slane %v1886, %v1918
    %v1928 = vmul.f32 %v1878, %v1891
    %v1929 = vmul.f32 %v1879, %v1895
    %v1930 = vmul.f32 %v1880, %v1899
    %v1931 = vmul.f32 %v1881, %v1903
    %v1932 = vmul.f32 %v1882, %v1907
    %v1933 = vmul.f32 %v1883, %v1911
    %v1934 = vmul.f32 %v1884, %v1915
    %v1935 = vmul.f32 %v1885, %v1919
    %v1936 = vld [vmem:[#allocation13] sm:$0xff]
    %v1938 = vlaneseq
    %v1939 = vshrl.u32 %v1938, 7
    %v1940 = vsub.s32 0, %v1939
    %v1941 = vrot.slane %v1936, %v1940
    %v1942 = vlaneseq
    %v1943 = vshrl.u32 %v1942, 7
    %v1944 = vsub.s32 1, %v1943
    %v1945 = vrot.slane %v1936, %v1944
    %v1946 = vlaneseq
    %v1947 = vshrl.u32 %v1946, 7
    %v1948 = vsub.s32 2, %v1947
    %v1949 = vrot.slane %v1936, %v1948
    %v1950 = vlaneseq
    %v1951 = vshrl.u32 %v1950, 7
    %v1952 = vsub.s32 3, %v1951
    %v1953 = vrot.slane %v1936, %v1952
    %v1954 = vlaneseq
    %v1955 = vshrl.u32 %v1954, 7
    %v1956 = vsub.s32 4, %v1955
    %v1957 = vrot.slane %v1936, %v1956
    %v1958 = vlaneseq
    %v1959 = vshrl.u32 %v1958, 7
    %v1960 = vsub.s32 5, %v1959
    %v1961 = vrot.slane %v1936, %v1960
    %v1962 = vlaneseq
    %v1963 = vshrl.u32 %v1962, 7
    %v1964 = vsub.s32 6, %v1963
    %v1965 = vrot.slane %v1936, %v1964
    %v1966 = vlaneseq
    %v1967 = vshrl.u32 %v1966, 7
    %v1968 = vsub.s32 7, %v1967
    %v1969 = vrot.slane %v1936, %v1968
    %v1978 = vadd.f32 %v1928, %v1941
    %v1979 = vadd.f32 %v1929, %v1945
    %v1980 = vadd.f32 %v1930, %v1949
    %v1981 = vadd.f32 %v1931, %v1953
    %v1982 = vadd.f32 %v1932, %v1957
    %v1983 = vadd.f32 %v1933, %v1961
    %v1984 = vadd.f32 %v1934, %v1965
    %v1985 = vadd.f32 %v1935, %v1969
    %v1986 = vpack.c.bf16 %v1978, %v1978
    %v1987 = vpack.c.bf16 %v1979, %v1979
    %v1988 = vpack.c.bf16 %v1980, %v1980
    %v1989 = vpack.c.bf16 %v1981, %v1981
    %v1990 = vpack.c.bf16 %v1982, %v1982
    %v1991 = vpack.c.bf16 %v1983, %v1983
    %v1992 = vpack.c.bf16 %v1984, %v1984
    %v1993 = vpack.c.bf16 %v1985, %v1985
    %v1994 = vld [vmem:[#allocation14] sm:$0xff]
    %v1995 = vld [vmem:[#allocation14 + $0x8] sm:$0xff]
    %v1996 = vld [vmem:[#allocation14 + $0x10] sm:$0xff]
    %v1997 = vld [vmem:[#allocation14 + $0x18] sm:$0xff]
    %v1998 = vld [vmem:[#allocation14 + $0x20] sm:$0xff]
    %v1999 = vld [vmem:[#allocation14 + $0x28] sm:$0xff]
    %v2000 = vld [vmem:[#allocation14 + $0x30] sm:$0xff]
    %v2001 = vld [vmem:[#allocation14 + $0x38] sm:$0xff]
    %v2002 = vld [vmem:[#allocation14 + $0x40] sm:$0xff]
    %v2003 = vld [vmem:[#allocation14 + $0x48] sm:$0xff]
    %v2004 = vld [vmem:[#allocation14 + $0x50] sm:$0xff]
    %v2005 = vld [vmem:[#allocation14 + $0x58] sm:$0xff]
    %v2006 = vld [vmem:[#allocation14 + $0x60] sm:$0xff]
    %v2007 = vld [vmem:[#allocation14 + $0x68] sm:$0xff]
    %v2008 = vld [vmem:[#allocation14 + $0x70] sm:$0xff]
    %v2009 = vld [vmem:[#allocation14 + $0x78] sm:$0xff]
    %v2010 = vld [vmem:[#allocation14 + $0x80] sm:$0xff]
    %v2011 = vld [vmem:[#allocation14 + $0x88] sm:$0xff]
    %v2012 = vld [vmem:[#allocation14 + $0x90] sm:$0xff]
    %v2013 = vld [vmem:[#allocation14 + $0x98] sm:$0xff]
    %v2014 = vld [vmem:[#allocation14 + $0xa0] sm:$0xff]
    %v2015 = vld [vmem:[#allocation14 + $0xa8] sm:$0xff]
    %v2016 = vld [vmem:[#allocation14 + $0xb0] sm:$0xff]
    %v2017 = vld [vmem:[#allocation14 + $0xb8] sm:$0xff]
    %v2018 = vld [vmem:[#allocation14 + $0xc0] sm:$0xff]
    %v2019 = vld [vmem:[#allocation14 + $0xc8] sm:$0xff]
    %v2020 = vld [vmem:[#allocation14 + $0xd0] sm:$0xff]
    %v2021 = vld [vmem:[#allocation14 + $0xd8] sm:$0xff]
    %v2022 = vld [vmem:[#allocation14 + $0xe0] sm:$0xff]
    %v2023 = vld [vmem:[#allocation14 + $0xe8] sm:$0xff]
    %v2024 = vld [vmem:[#allocation14 + $0xf0] sm:$0xff]
    %v2025 = vld [vmem:[#allocation14 + $0xf8] sm:$0xff]
    %v2026 = vld [vmem:[#allocation14 + $0x100] sm:$0xff]
    %v2027 = vld [vmem:[#allocation14 + $0x108] sm:$0xff]
    %v2028 = vld [vmem:[#allocation14 + $0x110] sm:$0xff]
    %v2029 = vld [vmem:[#allocation14 + $0x118] sm:$0xff]
    %v2030 = vld [vmem:[#allocation14 + $0x120] sm:$0xff]
    %v2031 = vld [vmem:[#allocation14 + $0x128] sm:$0xff]
    %v2032 = vld [vmem:[#allocation14 + $0x130] sm:$0xff]
    %v2033 = vld [vmem:[#allocation14 + $0x138] sm:$0xff]
    %v2034 = vld [vmem:[#allocation14 + $0x140] sm:$0xff]
    %v2035 = vld [vmem:[#allocation14 + $0x148] sm:$0xff]
    %v2036 = vld [vmem:[#allocation14 + $0x150] sm:$0xff]
    %v2037 = vld [vmem:[#allocation14 + $0x158] sm:$0xff]
    %v2038 = vld [vmem:[#allocation14 + $0x160] sm:$0xff]
    %v2039 = vld [vmem:[#allocation14 + $0x168] sm:$0xff]
    %v2040 = vld [vmem:[#allocation14 + $0x170] sm:$0xff]
    %v2041 = vld [vmem:[#allocation14 + $0x178] sm:$0xff]
    %v2042 = vld [vmem:[#allocation14 + $0x180] sm:$0xff]
    %v2043 = vld [vmem:[#allocation14 + $0x188] sm:$0xff]
    %v2044 = vld [vmem:[#allocation14 + $0x190] sm:$0xff]
    %v2045 = vld [vmem:[#allocation14 + $0x198] sm:$0xff]
    %v2046 = vld [vmem:[#allocation14 + $0x1a0] sm:$0xff]
    %v2047 = vld [vmem:[#allocation14 + $0x1a8] sm:$0xff]
    %v2048 = vld [vmem:[#allocation14 + $0x1b0] sm:$0xff]
    %v2049 = vld [vmem:[#allocation14 + $0x1b8] sm:$0xff]
    %v2050 = vld [vmem:[#allocation14 + $0x1c0] sm:$0xff]
    %v2051 = vld [vmem:[#allocation14 + $0x1c8] sm:$0xff]
    %v2052 = vld [vmem:[#allocation14 + $0x1d0] sm:$0xff]
    %v2053 = vld [vmem:[#allocation14 + $0x1d8] sm:$0xff]
    %v2054 = vld [vmem:[#allocation14 + $0x1e0] sm:$0xff]
    %v2055 = vld [vmem:[#allocation14 + $0x1e8] sm:$0xff]
    %v2056 = vld [vmem:[#allocation14 + $0x1f0] sm:$0xff]
    %v2057 = vld [vmem:[#allocation14 + $0x1f8] sm:$0xff]
    %v2058 = vld [vmem:[#allocation14 + $0x200] sm:$0xff]
    %v2059 = vld [vmem:[#allocation14 + $0x208] sm:$0xff]
    %v2060 = vld [vmem:[#allocation14 + $0x210] sm:$0xff]
    %v2061 = vld [vmem:[#allocation14 + $0x218] sm:$0xff]
    %v2062 = vld [vmem:[#allocation14 + $0x220] sm:$0xff]
    %v2063 = vld [vmem:[#allocation14 + $0x228] sm:$0xff]
    %v2064 = vld [vmem:[#allocation14 + $0x230] sm:$0xff]
    %v2065 = vld [vmem:[#allocation14 + $0x238] sm:$0xff]
    %v2066 = vld [vmem:[#allocation14 + $0x240] sm:$0xff]
    %v2067 = vld [vmem:[#allocation14 + $0x248] sm:$0xff]
    %v2068 = vld [vmem:[#allocation14 + $0x250] sm:$0xff]
    %v2069 = vld [vmem:[#allocation14 + $0x258] sm:$0xff]
    %v2070 = vld [vmem:[#allocation14 + $0x260] sm:$0xff]
    %v2071 = vld [vmem:[#allocation14 + $0x268] sm:$0xff]
    %v2072 = vld [vmem:[#allocation14 + $0x270] sm:$0xff]
    %v2073 = vld [vmem:[#allocation14 + $0x278] sm:$0xff]
    %v2074 = vld [vmem:[#allocation14 + $0x280] sm:$0xff]
    %v2075 = vld [vmem:[#allocation14 + $0x288] sm:$0xff]
    %v2076 = vld [vmem:[#allocation14 + $0x290] sm:$0xff]
    %v2077 = vld [vmem:[#allocation14 + $0x298] sm:$0xff]
    %v2078 = vld [vmem:[#allocation14 + $0x2a0] sm:$0xff]
    %v2079 = vld [vmem:[#allocation14 + $0x2a8] sm:$0xff]
    %v2080 = vld [vmem:[#allocation14 + $0x2b0] sm:$0xff]
    %v2081 = vld [vmem:[#allocation14 + $0x2b8] sm:$0xff]
    %v2082 = vld [vmem:[#allocation14 + $0x2c0] sm:$0xff]
    %v2083 = vld [vmem:[#allocation14 + $0x2c8] sm:$0xff]
    %v2084 = vld [vmem:[#allocation14 + $0x2d0] sm:$0xff]
    %v2085 = vld [vmem:[#allocation14 + $0x2d8] sm:$0xff]
    %v2086 = vld [vmem:[#allocation14 + $0x2e0] sm:$0xff]
    %v2087 = vld [vmem:[#allocation14 + $0x2e8] sm:$0xff]
    %v2088 = vld [vmem:[#allocation14 + $0x2f0] sm:$0xff]
    %v2089 = vld [vmem:[#allocation14 + $0x2f8] sm:$0xff]
    %v2090 = vld [vmem:[#allocation14 + $0x300] sm:$0xff]
    %v2091 = vld [vmem:[#allocation14 + $0x308] sm:$0xff]
    %v2092 = vld [vmem:[#allocation14 + $0x310] sm:$0xff]
    %v2093 = vld [vmem:[#allocation14 + $0x318] sm:$0xff]
    %v2094 = vld [vmem:[#allocation14 + $0x320] sm:$0xff]
    %v2095 = vld [vmem:[#allocation14 + $0x328] sm:$0xff]
    %v2096 = vld [vmem:[#allocation14 + $0x330] sm:$0xff]
    %v2097 = vld [vmem:[#allocation14 + $0x338] sm:$0xff]
    %v2098 = vld [vmem:[#allocation14 + $0x340] sm:$0xff]
    %v2099 = vld [vmem:[#allocation14 + $0x348] sm:$0xff]
    %v2100 = vld [vmem:[#allocation14 + $0x350] sm:$0xff]
    %v2101 = vld [vmem:[#allocation14 + $0x358] sm:$0xff]
    %v2102 = vld [vmem:[#allocation14 + $0x360] sm:$0xff]
    %v2103 = vld [vmem:[#allocation14 + $0x368] sm:$0xff]
    %v2104 = vld [vmem:[#allocation14 + $0x370] sm:$0xff]
    %v2105 = vld [vmem:[#allocation14 + $0x378] sm:$0xff]
    %v2106 = vld [vmem:[#allocation14 + $0x380] sm:$0xff]
    %v2107 = vld [vmem:[#allocation14 + $0x388] sm:$0xff]
    %v2108 = vld [vmem:[#allocation14 + $0x390] sm:$0xff]
    %v2109 = vld [vmem:[#allocation14 + $0x398] sm:$0xff]
    %v2110 = vld [vmem:[#allocation14 + $0x3a0] sm:$0xff]
    %v2111 = vld [vmem:[#allocation14 + $0x3a8] sm:$0xff]
    %v2112 = vld [vmem:[#allocation14 + $0x3b0] sm:$0xff]
    %v2113 = vld [vmem:[#allocation14 + $0x3b8] sm:$0xff]
    %v2114 = vld [vmem:[#allocation14 + $0x3c0] sm:$0xff]
    %v2115 = vld [vmem:[#allocation14 + $0x3c8] sm:$0xff]
    %v2116 = vld [vmem:[#allocation14 + $0x3d0] sm:$0xff]
    %v2117 = vld [vmem:[#allocation14 + $0x3d8] sm:$0xff]
    %v2118 = vld [vmem:[#allocation14 + $0x3e0] sm:$0xff]
    %v2119 = vld [vmem:[#allocation14 + $0x3e8] sm:$0xff]
    %v2120 = vld [vmem:[#allocation14 + $0x3f0] sm:$0xff]
    %v2121 = vld [vmem:[#allocation14 + $0x3f8] sm:$0xff]
    %v2122 = vld [vmem:[#allocation14 + $0x400] sm:$0xff]
    %v2123 = vld [vmem:[#allocation14 + $0x408] sm:$0xff]
    %v2124 = vld [vmem:[#allocation14 + $0x410] sm:$0xff]
    %v2125 = vld [vmem:[#allocation14 + $0x418] sm:$0xff]
    %v2126 = vld [vmem:[#allocation14 + $0x420] sm:$0xff]
    %v2127 = vld [vmem:[#allocation14 + $0x428] sm:$0xff]
    %v2128 = vld [vmem:[#allocation14 + $0x430] sm:$0xff]
    %v2129 = vld [vmem:[#allocation14 + $0x438] sm:$0xff]
    %v2130 = vld [vmem:[#allocation14 + $0x440] sm:$0xff]
    %v2131 = vld [vmem:[#allocation14 + $0x448] sm:$0xff]
    %v2132 = vld [vmem:[#allocation14 + $0x450] sm:$0xff]
    %v2133 = vld [vmem:[#allocation14 + $0x458] sm:$0xff]
    %v2134 = vld [vmem:[#allocation14 + $0x460] sm:$0xff]
    %v2135 = vld [vmem:[#allocation14 + $0x468] sm:$0xff]
    %v2136 = vld [vmem:[#allocation14 + $0x470] sm:$0xff]
    %v2137 = vld [vmem:[#allocation14 + $0x478] sm:$0xff]
    %v2138 = vld [vmem:[#allocation14 + $0x480] sm:$0xff]
    %v2139 = vld [vmem:[#allocation14 + $0x488] sm:$0xff]
    %v2140 = vld [vmem:[#allocation14 + $0x490] sm:$0xff]
    %v2141 = vld [vmem:[#allocation14 + $0x498] sm:$0xff]
    %v2142 = vld [vmem:[#allocation14 + $0x4a0] sm:$0xff]
    %v2143 = vld [vmem:[#allocation14 + $0x4a8] sm:$0xff]
    %v2144 = vld [vmem:[#allocation14 + $0x4b0] sm:$0xff]
    %v2145 = vld [vmem:[#allocation14 + $0x4b8] sm:$0xff]
    %v2146 = vld [vmem:[#allocation14 + $0x4c0] sm:$0xff]
    %v2147 = vld [vmem:[#allocation14 + $0x4c8] sm:$0xff]
    %v2148 = vld [vmem:[#allocation14 + $0x4d0] sm:$0xff]
    %v2149 = vld [vmem:[#allocation14 + $0x4d8] sm:$0xff]
    %v2150 = vld [vmem:[#allocation14 + $0x4e0] sm:$0xff]
    %v2151 = vld [vmem:[#allocation14 + $0x4e8] sm:$0xff]
    %v2152 = vld [vmem:[#allocation14 + $0x4f0] sm:$0xff]
    %v2153 = vld [vmem:[#allocation14 + $0x4f8] sm:$0xff]
    %v2154 = vld [vmem:[#allocation14 + $0x500] sm:$0xff]
    %v2155 = vld [vmem:[#allocation14 + $0x508] sm:$0xff]
    %v2156 = vld [vmem:[#allocation14 + $0x510] sm:$0xff]
    %v2157 = vld [vmem:[#allocation14 + $0x518] sm:$0xff]
    %v2158 = vld [vmem:[#allocation14 + $0x520] sm:$0xff]
    %v2159 = vld [vmem:[#allocation14 + $0x528] sm:$0xff]
    %v2160 = vld [vmem:[#allocation14 + $0x530] sm:$0xff]
    %v2161 = vld [vmem:[#allocation14 + $0x538] sm:$0xff]
    %v2162 = vld [vmem:[#allocation14 + $0x540] sm:$0xff]
    %v2163 = vld [vmem:[#allocation14 + $0x548] sm:$0xff]
    %v2164 = vld [vmem:[#allocation14 + $0x550] sm:$0xff]
    %v2165 = vld [vmem:[#allocation14 + $0x558] sm:$0xff]
    %v2166 = vld [vmem:[#allocation14 + $0x560] sm:$0xff]
    %v2167 = vld [vmem:[#allocation14 + $0x568] sm:$0xff]
    %v2168 = vld [vmem:[#allocation14 + $0x570] sm:$0xff]
    %v2169 = vld [vmem:[#allocation14 + $0x578] sm:$0xff]
    %v2170 = vld [vmem:[#allocation14 + $0x580] sm:$0xff]
    %v2171 = vld [vmem:[#allocation14 + $0x588] sm:$0xff]
    %v2172 = vld [vmem:[#allocation14 + $0x590] sm:$0xff]
    %v2173 = vld [vmem:[#allocation14 + $0x598] sm:$0xff]
    %v2174 = vld [vmem:[#allocation14 + $0x5a0] sm:$0xff]
    %v2175 = vld [vmem:[#allocation14 + $0x5a8] sm:$0xff]
    %v2176 = vld [vmem:[#allocation14 + $0x5b0] sm:$0xff]
    %v2177 = vld [vmem:[#allocation14 + $0x5b8] sm:$0xff]
    %v2178 = vld [vmem:[#allocation14 + $0x5c0] sm:$0xff]
    %v2179 = vld [vmem:[#allocation14 + $0x5c8] sm:$0xff]
    %v2180 = vld [vmem:[#allocation14 + $0x5d0] sm:$0xff]
    %v2181 = vld [vmem:[#allocation14 + $0x5d8] sm:$0xff]
    %v2182 = vld [vmem:[#allocation14 + $0x5e0] sm:$0xff]
    %v2183 = vld [vmem:[#allocation14 + $0x5e8] sm:$0xff]
    %v2184 = vld [vmem:[#allocation14 + $0x5f0] sm:$0xff]
    %v2185 = vld [vmem:[#allocation14 + $0x5f8] sm:$0xff]
    %v2186 = vld [vmem:[#allocation14 + $0x600] sm:$0xff]
    %v2187 = vld [vmem:[#allocation14 + $0x608] sm:$0xff]
    %v2188 = vld [vmem:[#allocation14 + $0x610] sm:$0xff]
    %v2189 = vld [vmem:[#allocation14 + $0x618] sm:$0xff]
    %v2190 = vld [vmem:[#allocation14 + $0x620] sm:$0xff]
    %v2191 = vld [vmem:[#allocation14 + $0x628] sm:$0xff]
    %v2192 = vld [vmem:[#allocation14 + $0x630] sm:$0xff]
    %v2193 = vld [vmem:[#allocation14 + $0x638] sm:$0xff]
    %v2194 = vld [vmem:[#allocation14 + $0x640] sm:$0xff]
    %v2195 = vld [vmem:[#allocation14 + $0x648] sm:$0xff]
    %v2196 = vld [vmem:[#allocation14 + $0x650] sm:$0xff]
    %v2197 = vld [vmem:[#allocation14 + $0x658] sm:$0xff]
    %v2198 = vld [vmem:[#allocation14 + $0x660] sm:$0xff]
    %v2199 = vld [vmem:[#allocation14 + $0x668] sm:$0xff]
    %v2200 = vld [vmem:[#allocation14 + $0x670] sm:$0xff]
    %v2201 = vld [vmem:[#allocation14 + $0x678] sm:$0xff]
    %v2202 = vld [vmem:[#allocation14 + $0x680] sm:$0xff]
    %v2203 = vld [vmem:[#allocation14 + $0x688] sm:$0xff]
    %v2204 = vld [vmem:[#allocation14 + $0x690] sm:$0xff]
    %v2205 = vld [vmem:[#allocation14 + $0x698] sm:$0xff]
    %v2206 = vld [vmem:[#allocation14 + $0x6a0] sm:$0xff]
    %v2207 = vld [vmem:[#allocation14 + $0x6a8] sm:$0xff]
    %v2208 = vld [vmem:[#allocation14 + $0x6b0] sm:$0xff]
    %v2209 = vld [vmem:[#allocation14 + $0x6b8] sm:$0xff]
    %v2210 = vld [vmem:[#allocation14 + $0x6c0] sm:$0xff]
    %v2211 = vld [vmem:[#allocation14 + $0x6c8] sm:$0xff]
    %v2212 = vld [vmem:[#allocation14 + $0x6d0] sm:$0xff]
    %v2213 = vld [vmem:[#allocation14 + $0x6d8] sm:$0xff]
    %v2214 = vld [vmem:[#allocation14 + $0x6e0] sm:$0xff]
    %v2215 = vld [vmem:[#allocation14 + $0x6e8] sm:$0xff]
    %v2216 = vld [vmem:[#allocation14 + $0x6f0] sm:$0xff]
    %v2217 = vld [vmem:[#allocation14 + $0x6f8] sm:$0xff]
    %v2218 = vld [vmem:[#allocation14 + $0x700] sm:$0xff]
    %v2219 = vld [vmem:[#allocation14 + $0x708] sm:$0xff]
    %v2220 = vld [vmem:[#allocation14 + $0x710] sm:$0xff]
    %v2221 = vld [vmem:[#allocation14 + $0x718] sm:$0xff]
    %v2222 = vld [vmem:[#allocation14 + $0x720] sm:$0xff]
    %v2223 = vld [vmem:[#allocation14 + $0x728] sm:$0xff]
    %v2224 = vld [vmem:[#allocation14 + $0x730] sm:$0xff]
    %v2225 = vld [vmem:[#allocation14 + $0x738] sm:$0xff]
    %v2226 = vld [vmem:[#allocation14 + $0x740] sm:$0xff]
    %v2227 = vld [vmem:[#allocation14 + $0x748] sm:$0xff]
    %v2228 = vld [vmem:[#allocation14 + $0x750] sm:$0xff]
    %v2229 = vld [vmem:[#allocation14 + $0x758] sm:$0xff]
    %v2230 = vld [vmem:[#allocation14 + $0x760] sm:$0xff]
    %v2231 = vld [vmem:[#allocation14 + $0x768] sm:$0xff]
    %v2232 = vld [vmem:[#allocation14 + $0x770] sm:$0xff]
    %v2233 = vld [vmem:[#allocation14 + $0x778] sm:$0xff]
    %v2234 = vld [vmem:[#allocation14 + $0x780] sm:$0xff]
    %v2235 = vld [vmem:[#allocation14 + $0x788] sm:$0xff]
    %v2236 = vld [vmem:[#allocation14 + $0x790] sm:$0xff]
    %v2237 = vld [vmem:[#allocation14 + $0x798] sm:$0xff]
    %v2238 = vld [vmem:[#allocation14 + $0x7a0] sm:$0xff]
    %v2239 = vld [vmem:[#allocation14 + $0x7a8] sm:$0xff]
    %v2240 = vld [vmem:[#allocation14 + $0x7b0] sm:$0xff]
    %v2241 = vld [vmem:[#allocation14 + $0x7b8] sm:$0xff]
    %v2242 = vld [vmem:[#allocation14 + $0x7c0] sm:$0xff]
    %v2243 = vld [vmem:[#allocation14 + $0x7c8] sm:$0xff]
    %v2244 = vld [vmem:[#allocation14 + $0x7d0] sm:$0xff]
    %v2245 = vld [vmem:[#allocation14 + $0x7d8] sm:$0xff]
    %v2246 = vld [vmem:[#allocation14 + $0x7e0] sm:$0xff]
    %v2247 = vld [vmem:[#allocation14 + $0x7e8] sm:$0xff]
    %v2248 = vld [vmem:[#allocation14 + $0x7f0] sm:$0xff]
    %v2249 = vld [vmem:[#allocation14 + $0x7f8] sm:$0xff]
    %v2250 = vld [vmem:[#allocation14 + $0x800] sm:$0xff]
    %v2251 = vld [vmem:[#allocation14 + $0x808] sm:$0xff]
    %v2252 = vld [vmem:[#allocation14 + $0x810] sm:$0xff]
    %v2253 = vld [vmem:[#allocation14 + $0x818] sm:$0xff]
    %v2254 = vld [vmem:[#allocation14 + $0x820] sm:$0xff]
    %v2255 = vld [vmem:[#allocation14 + $0x828] sm:$0xff]
    %v2256 = vld [vmem:[#allocation14 + $0x830] sm:$0xff]
    %v2257 = vld [vmem:[#allocation14 + $0x838] sm:$0xff]
    %v2258 = vld [vmem:[#allocation14 + $0x840] sm:$0xff]
    %v2259 = vld [vmem:[#allocation14 + $0x848] sm:$0xff]
    %v2260 = vld [vmem:[#allocation14 + $0x850] sm:$0xff]
    %v2261 = vld [vmem:[#allocation14 + $0x858] sm:$0xff]
    %v2262 = vld [vmem:[#allocation14 + $0x860] sm:$0xff]
    %v2263 = vld [vmem:[#allocation14 + $0x868] sm:$0xff]
    %v2264 = vld [vmem:[#allocation14 + $0x870] sm:$0xff]
    %v2265 = vld [vmem:[#allocation14 + $0x878] sm:$0xff]
    %v2266 = vld [vmem:[#allocation14 + $0x880] sm:$0xff]
    %v2267 = vld [vmem:[#allocation14 + $0x888] sm:$0xff]
    %v2268 = vld [vmem:[#allocation14 + $0x890] sm:$0xff]
    %v2269 = vld [vmem:[#allocation14 + $0x898] sm:$0xff]
    %v2270 = vld [vmem:[#allocation14 + $0x8a0] sm:$0xff]
    %v2271 = vld [vmem:[#allocation14 + $0x8a8] sm:$0xff]
    %v2272 = vld [vmem:[#allocation14 + $0x8b0] sm:$0xff]
    %v2273 = vld [vmem:[#allocation14 + $0x8b8] sm:$0xff]
    %v2274 = vld [vmem:[#allocation14 + $0x8c0] sm:$0xff]
    %v2275 = vld [vmem:[#allocation14 + $0x8c8] sm:$0xff]
    %v2276 = vld [vmem:[#allocation14 + $0x8d0] sm:$0xff]
    %v2277 = vld [vmem:[#allocation14 + $0x8d8] sm:$0xff]
    %v2278 = vld [vmem:[#allocation14 + $0x8e0] sm:$0xff]
    %v2279 = vld [vmem:[#allocation14 + $0x8e8] sm:$0xff]
    %v2280 = vld [vmem:[#allocation14 + $0x8f0] sm:$0xff]
    %v2281 = vld [vmem:[#allocation14 + $0x8f8] sm:$0xff]
    %v2282 = vld [vmem:[#allocation14 + $0x900] sm:$0xff]
    %v2283 = vld [vmem:[#allocation14 + $0x908] sm:$0xff]
    %v2284 = vld [vmem:[#allocation14 + $0x910] sm:$0xff]
    %v2285 = vld [vmem:[#allocation14 + $0x918] sm:$0xff]
    %v2286 = vld [vmem:[#allocation14 + $0x920] sm:$0xff]
    %v2287 = vld [vmem:[#allocation14 + $0x928] sm:$0xff]
    %v2288 = vld [vmem:[#allocation14 + $0x930] sm:$0xff]
    %v2289 = vld [vmem:[#allocation14 + $0x938] sm:$0xff]
    %v2290 = vld [vmem:[#allocation14 + $0x940] sm:$0xff]
    %v2291 = vld [vmem:[#allocation14 + $0x948] sm:$0xff]
    %v2292 = vld [vmem:[#allocation14 + $0x950] sm:$0xff]
    %v2293 = vld [vmem:[#allocation14 + $0x958] sm:$0xff]
    %v2294 = vld [vmem:[#allocation14 + $0x960] sm:$0xff]
    %v2295 = vld [vmem:[#allocation14 + $0x968] sm:$0xff]
    %v2296 = vld [vmem:[#allocation14 + $0x970] sm:$0xff]
    %v2297 = vld [vmem:[#allocation14 + $0x978] sm:$0xff]
    %v2298 = vld [vmem:[#allocation14 + $0x980] sm:$0xff]
    %v2299 = vld [vmem:[#allocation14 + $0x988] sm:$0xff]
    %v2300 = vld [vmem:[#allocation14 + $0x990] sm:$0xff]
    %v2301 = vld [vmem:[#allocation14 + $0x998] sm:$0xff]
    %v2302 = vld [vmem:[#allocation14 + $0x9a0] sm:$0xff]
    %v2303 = vld [vmem:[#allocation14 + $0x9a8] sm:$0xff]
    %v2304 = vld [vmem:[#allocation14 + $0x9b0] sm:$0xff]
    %v2305 = vld [vmem:[#allocation14 + $0x9b8] sm:$0xff]
    %v2306 = vld [vmem:[#allocation14 + $0x9c0] sm:$0xff]
    %v2307 = vld [vmem:[#allocation14 + $0x9c8] sm:$0xff]
    %v2308 = vld [vmem:[#allocation14 + $0x9d0] sm:$0xff]
    %v2309 = vld [vmem:[#allocation14 + $0x9d8] sm:$0xff]
    %v2310 = vld [vmem:[#allocation14 + $0x9e0] sm:$0xff]
    %v2311 = vld [vmem:[#allocation14 + $0x9e8] sm:$0xff]
    %v2312 = vld [vmem:[#allocation14 + $0x9f0] sm:$0xff]
    %v2313 = vld [vmem:[#allocation14 + $0x9f8] sm:$0xff]
    %v2314 = vld [vmem:[#allocation14 + $0xa00] sm:$0xff]
    %v2315 = vld [vmem:[#allocation14 + $0xa08] sm:$0xff]
    %v2316 = vld [vmem:[#allocation14 + $0xa10] sm:$0xff]
    %v2317 = vld [vmem:[#allocation14 + $0xa18] sm:$0xff]
    %v2318 = vld [vmem:[#allocation14 + $0xa20] sm:$0xff]
    %v2319 = vld [vmem:[#allocation14 + $0xa28] sm:$0xff]
    %v2320 = vld [vmem:[#allocation14 + $0xa30] sm:$0xff]
    %v2321 = vld [vmem:[#allocation14 + $0xa38] sm:$0xff]
    %v2322 = vld [vmem:[#allocation14 + $0xa40] sm:$0xff]
    %v2323 = vld [vmem:[#allocation14 + $0xa48] sm:$0xff]
    %v2324 = vld [vmem:[#allocation14 + $0xa50] sm:$0xff]
    %v2325 = vld [vmem:[#allocation14 + $0xa58] sm:$0xff]
    %v2326 = vld [vmem:[#allocation14 + $0xa60] sm:$0xff]
    %v2327 = vld [vmem:[#allocation14 + $0xa68] sm:$0xff]
    %v2328 = vld [vmem:[#allocation14 + $0xa70] sm:$0xff]
    %v2329 = vld [vmem:[#allocation14 + $0xa78] sm:$0xff]
    %v2330 = vld [vmem:[#allocation14 + $0xa80] sm:$0xff]
    %v2331 = vld [vmem:[#allocation14 + $0xa88] sm:$0xff]
    %v2332 = vld [vmem:[#allocation14 + $0xa90] sm:$0xff]
    %v2333 = vld [vmem:[#allocation14 + $0xa98] sm:$0xff]
    %v2334 = vld [vmem:[#allocation14 + $0xaa0] sm:$0xff]
    %v2335 = vld [vmem:[#allocation14 + $0xaa8] sm:$0xff]
    %v2336 = vld [vmem:[#allocation14 + $0xab0] sm:$0xff]
    %v2337 = vld [vmem:[#allocation14 + $0xab8] sm:$0xff]
    %v2338 = vld [vmem:[#allocation14 + $0xac0] sm:$0xff]
    %v2339 = vld [vmem:[#allocation14 + $0xac8] sm:$0xff]
    %v2340 = vld [vmem:[#allocation14 + $0xad0] sm:$0xff]
    %v2341 = vld [vmem:[#allocation14 + $0xad8] sm:$0xff]
    %v2342 = vld [vmem:[#allocation14 + $0xae0] sm:$0xff]
    %v2343 = vld [vmem:[#allocation14 + $0xae8] sm:$0xff]
    %v2344 = vld [vmem:[#allocation14 + $0xaf0] sm:$0xff]
    %v2345 = vld [vmem:[#allocation14 + $0xaf8] sm:$0xff]
    %v2346 = vld [vmem:[#allocation14 + $0xb00] sm:$0xff]
    %v2347 = vld [vmem:[#allocation14 + $0xb08] sm:$0xff]
    %v2348 = vld [vmem:[#allocation14 + $0xb10] sm:$0xff]
    %v2349 = vld [vmem:[#allocation14 + $0xb18] sm:$0xff]
    %v2350 = vld [vmem:[#allocation14 + $0xb20] sm:$0xff]
    %v2351 = vld [vmem:[#allocation14 + $0xb28] sm:$0xff]
    %v2352 = vld [vmem:[#allocation14 + $0xb30] sm:$0xff]
    %v2353 = vld [vmem:[#allocation14 + $0xb38] sm:$0xff]
    %v2354 = vld [vmem:[#allocation14 + $0xb40] sm:$0xff]
    %v2355 = vld [vmem:[#allocation14 + $0xb48] sm:$0xff]
    %v2356 = vld [vmem:[#allocation14 + $0xb50] sm:$0xff]
    %v2357 = vld [vmem:[#allocation14 + $0xb58] sm:$0xff]
    %v2358 = vld [vmem:[#allocation14 + $0xb60] sm:$0xff]
    %v2359 = vld [vmem:[#allocation14 + $0xb68] sm:$0xff]
    %v2360 = vld [vmem:[#allocation14 + $0xb70] sm:$0xff]
    %v2361 = vld [vmem:[#allocation14 + $0xb78] sm:$0xff]
    %v2362 = vld [vmem:[#allocation14 + $0xb80] sm:$0xff]
    %v2363 = vld [vmem:[#allocation14 + $0xb88] sm:$0xff]
    %v2364 = vld [vmem:[#allocation14 + $0xb90] sm:$0xff]
    %v2365 = vld [vmem:[#allocation14 + $0xb98] sm:$0xff]
    %v2366 = vld [vmem:[#allocation14 + $0xba0] sm:$0xff]
    %v2367 = vld [vmem:[#allocation14 + $0xba8] sm:$0xff]
    %v2368 = vld [vmem:[#allocation14 + $0xbb0] sm:$0xff]
    %v2369 = vld [vmem:[#allocation14 + $0xbb8] sm:$0xff]
    %v2370 = vld [vmem:[#allocation14 + $0xbc0] sm:$0xff]
    %v2371 = vld [vmem:[#allocation14 + $0xbc8] sm:$0xff]
    %v2372 = vld [vmem:[#allocation14 + $0xbd0] sm:$0xff]
    %v2373 = vld [vmem:[#allocation14 + $0xbd8] sm:$0xff]
    %v2374 = vld [vmem:[#allocation14 + $0xbe0] sm:$0xff]
    %v2375 = vld [vmem:[#allocation14 + $0xbe8] sm:$0xff]
    %v2376 = vld [vmem:[#allocation14 + $0xbf0] sm:$0xff]
    %v2377 = vld [vmem:[#allocation14 + $0xbf8] sm:$0xff]
    %v2378 = vld [vmem:[#allocation14 + $0xc00] sm:$0xff]
    %v2379 = vld [vmem:[#allocation14 + $0xc08] sm:$0xff]
    %v2380 = vld [vmem:[#allocation14 + $0xc10] sm:$0xff]
    %v2381 = vld [vmem:[#allocation14 + $0xc18] sm:$0xff]
    %v2382 = vld [vmem:[#allocation14 + $0xc20] sm:$0xff]
    %v2383 = vld [vmem:[#allocation14 + $0xc28] sm:$0xff]
    %v2384 = vld [vmem:[#allocation14 + $0xc30] sm:$0xff]
    %v2385 = vld [vmem:[#allocation14 + $0xc38] sm:$0xff]
    %v2386 = vld [vmem:[#allocation14 + $0xc40] sm:$0xff]
    %v2387 = vld [vmem:[#allocation14 + $0xc48] sm:$0xff]
    %v2388 = vld [vmem:[#allocation14 + $0xc50] sm:$0xff]
    %v2389 = vld [vmem:[#allocation14 + $0xc58] sm:$0xff]
    %v2390 = vld [vmem:[#allocation14 + $0xc60] sm:$0xff]
    %v2391 = vld [vmem:[#allocation14 + $0xc68] sm:$0xff]
    %v2392 = vld [vmem:[#allocation14 + $0xc70] sm:$0xff]
    %v2393 = vld [vmem:[#allocation14 + $0xc78] sm:$0xff]
    %v2394 = vld [vmem:[#allocation14 + $0xc80] sm:$0xff]
    %v2395 = vld [vmem:[#allocation14 + $0xc88] sm:$0xff]
    %v2396 = vld [vmem:[#allocation14 + $0xc90] sm:$0xff]
    %v2397 = vld [vmem:[#allocation14 + $0xc98] sm:$0xff]
    %v2398 = vld [vmem:[#allocation14 + $0xca0] sm:$0xff]
    %v2399 = vld [vmem:[#allocation14 + $0xca8] sm:$0xff]
    %v2400 = vld [vmem:[#allocation14 + $0xcb0] sm:$0xff]
    %v2401 = vld [vmem:[#allocation14 + $0xcb8] sm:$0xff]
    %v2402 = vld [vmem:[#allocation14 + $0xcc0] sm:$0xff]
    %v2403 = vld [vmem:[#allocation14 + $0xcc8] sm:$0xff]
    %v2404 = vld [vmem:[#allocation14 + $0xcd0] sm:$0xff]
    %v2405 = vld [vmem:[#allocation14 + $0xcd8] sm:$0xff]
    %v2406 = vld [vmem:[#allocation14 + $0xce0] sm:$0xff]
    %v2407 = vld [vmem:[#allocation14 + $0xce8] sm:$0xff]
    %v2408 = vld [vmem:[#allocation14 + $0xcf0] sm:$0xff]
    %v2409 = vld [vmem:[#allocation14 + $0xcf8] sm:$0xff]
    %v2410 = vld [vmem:[#allocation14 + $0xd00] sm:$0xff]
    %v2411 = vld [vmem:[#allocation14 + $0xd08] sm:$0xff]
    %v2412 = vld [vmem:[#allocation14 + $0xd10] sm:$0xff]
    %v2413 = vld [vmem:[#allocation14 + $0xd18] sm:$0xff]
    %v2414 = vld [vmem:[#allocation14 + $0xd20] sm:$0xff]
    %v2415 = vld [vmem:[#allocation14 + $0xd28] sm:$0xff]
    %v2416 = vld [vmem:[#allocation14 + $0xd30] sm:$0xff]
    %v2417 = vld [vmem:[#allocation14 + $0xd38] sm:$0xff]
    %v2418 = vld [vmem:[#allocation14 + $0xd40] sm:$0xff]
    %v2419 = vld [vmem:[#allocation14 + $0xd48] sm:$0xff]
    %v2420 = vld [vmem:[#allocation14 + $0xd50] sm:$0xff]
    %v2421 = vld [vmem:[#allocation14 + $0xd58] sm:$0xff]
    %v2422 = vld [vmem:[#allocation14 + $0xd60] sm:$0xff]
    %v2423 = vld [vmem:[#allocation14 + $0xd68] sm:$0xff]
    %v2424 = vld [vmem:[#allocation14 + $0xd70] sm:$0xff]
    %v2425 = vld [vmem:[#allocation14 + $0xd78] sm:$0xff]
    %v2426 = vld [vmem:[#allocation14 + $0xd80] sm:$0xff]
    %v2427 = vld [vmem:[#allocation14 + $0xd88] sm:$0xff]
    %v2428 = vld [vmem:[#allocation14 + $0xd90] sm:$0xff]
    %v2429 = vld [vmem:[#allocation14 + $0xd98] sm:$0xff]
    %v2430 = vld [vmem:[#allocation14 + $0xda0] sm:$0xff]
    %v2431 = vld [vmem:[#allocation14 + $0xda8] sm:$0xff]
    %v2432 = vld [vmem:[#allocation14 + $0xdb0] sm:$0xff]
    %v2433 = vld [vmem:[#allocation14 + $0xdb8] sm:$0xff]
    %v2434 = vld [vmem:[#allocation14 + $0xdc0] sm:$0xff]
    %v2435 = vld [vmem:[#allocation14 + $0xdc8] sm:$0xff]
    %v2436 = vld [vmem:[#allocation14 + $0xdd0] sm:$0xff]
    %v2437 = vld [vmem:[#allocation14 + $0xdd8] sm:$0xff]
    %v2438 = vld [vmem:[#allocation14 + $0xde0] sm:$0xff]
    %v2439 = vld [vmem:[#allocation14 + $0xde8] sm:$0xff]
    %v2440 = vld [vmem:[#allocation14 + $0xdf0] sm:$0xff]
    %v2441 = vld [vmem:[#allocation14 + $0xdf8] sm:$0xff]
    %v2442 = vld [vmem:[#allocation14 + $0xe00] sm:$0xff]
    %v2443 = vld [vmem:[#allocation14 + $0xe08] sm:$0xff]
    %v2444 = vld [vmem:[#allocation14 + $0xe10] sm:$0xff]
    %v2445 = vld [vmem:[#allocation14 + $0xe18] sm:$0xff]
    %v2446 = vld [vmem:[#allocation14 + $0xe20] sm:$0xff]
    %v2447 = vld [vmem:[#allocation14 + $0xe28] sm:$0xff]
    %v2448 = vld [vmem:[#allocation14 + $0xe30] sm:$0xff]
    %v2449 = vld [vmem:[#allocation14 + $0xe38] sm:$0xff]
    %v2450 = vld [vmem:[#allocation14 + $0xe40] sm:$0xff]
    %v2451 = vld [vmem:[#allocation14 + $0xe48] sm:$0xff]
    %v2452 = vld [vmem:[#allocation14 + $0xe50] sm:$0xff]
    %v2453 = vld [vmem:[#allocation14 + $0xe58] sm:$0xff]
    %v2454 = vld [vmem:[#allocation14 + $0xe60] sm:$0xff]
    %v2455 = vld [vmem:[#allocation14 + $0xe68] sm:$0xff]
    %v2456 = vld [vmem:[#allocation14 + $0xe70] sm:$0xff]
    %v2457 = vld [vmem:[#allocation14 + $0xe78] sm:$0xff]
    %v2458 = vld [vmem:[#allocation14 + $0xe80] sm:$0xff]
    %v2459 = vld [vmem:[#allocation14 + $0xe88] sm:$0xff]
    %v2460 = vld [vmem:[#allocation14 + $0xe90] sm:$0xff]
    %v2461 = vld [vmem:[#allocation14 + $0xe98] sm:$0xff]
    %v2462 = vld [vmem:[#allocation14 + $0xea0] sm:$0xff]
    %v2463 = vld [vmem:[#allocation14 + $0xea8] sm:$0xff]
    %v2464 = vld [vmem:[#allocation14 + $0xeb0] sm:$0xff]
    %v2465 = vld [vmem:[#allocation14 + $0xeb8] sm:$0xff]
    %v2466 = vld [vmem:[#allocation14 + $0xec0] sm:$0xff]
    %v2467 = vld [vmem:[#allocation14 + $0xec8] sm:$0xff]
    %v2468 = vld [vmem:[#allocation14 + $0xed0] sm:$0xff]
    %v2469 = vld [vmem:[#allocation14 + $0xed8] sm:$0xff]
    %v2470 = vld [vmem:[#allocation14 + $0xee0] sm:$0xff]
    %v2471 = vld [vmem:[#allocation14 + $0xee8] sm:$0xff]
    %v2472 = vld [vmem:[#allocation14 + $0xef0] sm:$0xff]
    %v2473 = vld [vmem:[#allocation14 + $0xef8] sm:$0xff]
    %v2474 = vld [vmem:[#allocation14 + $0xf00] sm:$0xff]
    %v2475 = vld [vmem:[#allocation14 + $0xf08] sm:$0xff]
    %v2476 = vld [vmem:[#allocation14 + $0xf10] sm:$0xff]
    %v2477 = vld [vmem:[#allocation14 + $0xf18] sm:$0xff]
    %v2478 = vld [vmem:[#allocation14 + $0xf20] sm:$0xff]
    %v2479 = vld [vmem:[#allocation14 + $0xf28] sm:$0xff]
    %v2480 = vld [vmem:[#allocation14 + $0xf30] sm:$0xff]
    %v2481 = vld [vmem:[#allocation14 + $0xf38] sm:$0xff]
    %v2482 = vld [vmem:[#allocation14 + $0xf40] sm:$0xff]
    %v2483 = vld [vmem:[#allocation14 + $0xf48] sm:$0xff]
    %v2484 = vld [vmem:[#allocation14 + $0xf50] sm:$0xff]
    %v2485 = vld [vmem:[#allocation14 + $0xf58] sm:$0xff]
    %v2486 = vld [vmem:[#allocation14 + $0xf60] sm:$0xff]
    %v2487 = vld [vmem:[#allocation14 + $0xf68] sm:$0xff]
    %v2488 = vld [vmem:[#allocation14 + $0xf70] sm:$0xff]
    %v2489 = vld [vmem:[#allocation14 + $0xf78] sm:$0xff]
    %v2490 = vld [vmem:[#allocation14 + $0xf80] sm:$0xff]
    %v2491 = vld [vmem:[#allocation14 + $0xf88] sm:$0xff]
    %v2492 = vld [vmem:[#allocation14 + $0xf90] sm:$0xff]
    %v2493 = vld [vmem:[#allocation14 + $0xf98] sm:$0xff]
    %v2494 = vld [vmem:[#allocation14 + $0xfa0] sm:$0xff]
    %v2495 = vld [vmem:[#allocation14 + $0xfa8] sm:$0xff]
    %v2496 = vld [vmem:[#allocation14 + $0xfb0] sm:$0xff]
    %v2497 = vld [vmem:[#allocation14 + $0xfb8] sm:$0xff]
    %v2498 = vld [vmem:[#allocation14 + $0xfc0] sm:$0xff]
    %v2499 = vld [vmem:[#allocation14 + $0xfc8] sm:$0xff]
    %v2500 = vld [vmem:[#allocation14 + $0xfd0] sm:$0xff]
    %v2501 = vld [vmem:[#allocation14 + $0xfd8] sm:$0xff]
    %v2502 = vld [vmem:[#allocation14 + $0xfe0] sm:$0xff]
    %v2503 = vld [vmem:[#allocation14 + $0xfe8] sm:$0xff]
    %v2504 = vld [vmem:[#allocation14 + $0xff0] sm:$0xff]
    %v2505 = vld [vmem:[#allocation14 + $0xff8] sm:$0xff]
    %v2506 = vld [vmem:[#allocation16] sm:$0xff]
    %v2508 = vlaneseq
    %v2509 = vshrl.u32 %v2508, 7
    %v2510 = vsub.s32 0, %v2509
    %v2511 = vrot.slane %v2506, %v2510
    %v2512 = vlaneseq
    %v2513 = vshrl.u32 %v2512, 7
    %v2514 = vsub.s32 1, %v2513
    %v2515 = vrot.slane %v2506, %v2514
    %v2516 = vlaneseq
    %v2517 = vshrl.u32 %v2516, 7
    %v2518 = vsub.s32 2, %v2517
    %v2519 = vrot.slane %v2506, %v2518
    %v2520 = vlaneseq
    %v2521 = vshrl.u32 %v2520, 7
    %v2522 = vsub.s32 3, %v2521
    %v2523 = vrot.slane %v2506, %v2522
    %v2524 = vlaneseq
    %v2525 = vshrl.u32 %v2524, 7
    %v2526 = vsub.s32 4, %v2525
    %v2527 = vrot.slane %v2506, %v2526
    %v2528 = vlaneseq
    %v2529 = vshrl.u32 %v2528, 7
    %v2530 = vsub.s32 5, %v2529
    %v2531 = vrot.slane %v2506, %v2530
    %v2532 = vlaneseq
    %v2533 = vshrl.u32 %v2532, 7
    %v2534 = vsub.s32 6, %v2533
    %v2535 = vrot.slane %v2506, %v2534
    %v2536 = vlaneseq
    %v2537 = vshrl.u32 %v2536, 7
    %v2538 = vsub.s32 7, %v2537
    %v2539 = vrot.slane %v2506, %v2538
    %v3060 = vunpack.c.l.b16 %v1994
    %v3061 = vunpack.c.h.b16 %v1994
    %v3062 = vunpack.c.l.b16 %v1995
    %v3063 = vunpack.c.h.b16 %v1995
    %v3064 = vunpack.c.l.b16 %v1996
    %v3065 = vunpack.c.h.b16 %v1996
    %v3066 = vunpack.c.l.b16 %v1997
    %v3067 = vunpack.c.h.b16 %v1997
    %v3068 = vunpack.c.l.b16 %v1998
    %v3069 = vunpack.c.h.b16 %v1998
    %v3070 = vunpack.c.l.b16 %v1999
    %v3071 = vunpack.c.h.b16 %v1999
    %v3072 = vunpack.c.l.b16 %v2000
    %v3073 = vunpack.c.h.b16 %v2000
    %v3074 = vunpack.c.l.b16 %v2001
    %v3075 = vunpack.c.h.b16 %v2001
    %v3076 = vunpack.c.l.b16 %v2002
    %v3077 = vunpack.c.h.b16 %v2002
    %v3078 = vunpack.c.l.b16 %v2003
    %v3079 = vunpack.c.h.b16 %v2003
    %v3080 = vunpack.c.l.b16 %v2004
    %v3081 = vunpack.c.h.b16 %v2004
    %v3082 = vunpack.c.l.b16 %v2005
    %v3083 = vunpack.c.h.b16 %v2005
    %v3084 = vunpack.c.l.b16 %v2006
    %v3085 = vunpack.c.h.b16 %v2006
    %v3086 = vunpack.c.l.b16 %v2007
    %v3087 = vunpack.c.h.b16 %v2007
    %v3088 = vunpack.c.l.b16 %v2008
    %v3089 = vunpack.c.h.b16 %v2008
    %v3090 = vunpack.c.l.b16 %v2009
    %v3091 = vunpack.c.h.b16 %v2009
    %v3092 = vunpack.c.l.b16 %v2010
    %v3093 = vunpack.c.h.b16 %v2010
    %v3094 = vunpack.c.l.b16 %v2011
    %v3095 = vunpack.c.h.b16 %v2011
    %v3096 = vunpack.c.l.b16 %v2012
    %v3097 = vunpack.c.h.b16 %v2012
    %v3098 = vunpack.c.l.b16 %v2013
    %v3099 = vunpack.c.h.b16 %v2013
    %v3100 = vunpack.c.l.b16 %v2014
    %v3101 = vunpack.c.h.b16 %v2014
    %v3102 = vunpack.c.l.b16 %v2015
    %v3103 = vunpack.c.h.b16 %v2015
    %v3104 = vunpack.c.l.b16 %v2016
    %v3105 = vunpack.c.h.b16 %v2016
    %v3106 = vunpack.c.l.b16 %v2017
    %v3107 = vunpack.c.h.b16 %v2017
    %v3108 = vunpack.c.l.b16 %v2018
    %v3109 = vunpack.c.h.b16 %v2018
    %v3110 = vunpack.c.l.b16 %v2019
    %v3111 = vunpack.c.h.b16 %v2019
    %v3112 = vunpack.c.l.b16 %v2020
    %v3113 = vunpack.c.h.b16 %v2020
    %v3114 = vunpack.c.l.b16 %v2021
    %v3115 = vunpack.c.h.b16 %v2021
    %v3116 = vunpack.c.l.b16 %v2022
    %v3117 = vunpack.c.h.b16 %v2022
    %v3118 = vunpack.c.l.b16 %v2023
    %v3119 = vunpack.c.h.b16 %v2023
    %v3120 = vunpack.c.l.b16 %v2024
    %v3121 = vunpack.c.h.b16 %v2024
    %v3122 = vunpack.c.l.b16 %v2025
    %v3123 = vunpack.c.h.b16 %v2025
    %v3124 = vunpack.c.l.b16 %v2026
    %v3125 = vunpack.c.h.b16 %v2026
    %v3126 = vunpack.c.l.b16 %v2027
    %v3127 = vunpack.c.h.b16 %v2027
    %v3128 = vunpack.c.l.b16 %v2028
    %v3129 = vunpack.c.h.b16 %v2028
    %v3130 = vunpack.c.l.b16 %v2029
    %v3131 = vunpack.c.h.b16 %v2029
    %v3132 = vunpack.c.l.b16 %v2030
    %v3133 = vunpack.c.h.b16 %v2030
    %v3134 = vunpack.c.l.b16 %v2031
    %v3135 = vunpack.c.h.b16 %v2031
    %v3136 = vunpack.c.l.b16 %v2032
    %v3137 = vunpack.c.h.b16 %v2032
    %v3138 = vunpack.c.l.b16 %v2033
    %v3139 = vunpack.c.h.b16 %v2033
    %v3140 = vunpack.c.l.b16 %v2034
    %v3141 = vunpack.c.h.b16 %v2034
    %v3142 = vunpack.c.l.b16 %v2035
    %v3143 = vunpack.c.h.b16 %v2035
    %v3144 = vunpack.c.l.b16 %v2036
    %v3145 = vunpack.c.h.b16 %v2036
    %v3146 = vunpack.c.l.b16 %v2037
    %v3147 = vunpack.c.h.b16 %v2037
    %v3148 = vunpack.c.l.b16 %v2038
    %v3149 = vunpack.c.h.b16 %v2038
    %v3150 = vunpack.c.l.b16 %v2039
    %v3151 = vunpack.c.h.b16 %v2039
    %v3152 = vunpack.c.l.b16 %v2040
    %v3153 = vunpack.c.h.b16 %v2040
    %v3154 = vunpack.c.l.b16 %v2041
    %v3155 = vunpack.c.h.b16 %v2041
    %v3156 = vunpack.c.l.b16 %v2042
    %v3157 = vunpack.c.h.b16 %v2042
    %v3158 = vunpack.c.l.b16 %v2043
    %v3159 = vunpack.c.h.b16 %v2043
    %v3160 = vunpack.c.l.b16 %v2044
    %v3161 = vunpack.c.h.b16 %v2044
    %v3162 = vunpack.c.l.b16 %v2045
    %v3163 = vunpack.c.h.b16 %v2045
    %v3164 = vunpack.c.l.b16 %v2046
    %v3165 = vunpack.c.h.b16 %v2046
    %v3166 = vunpack.c.l.b16 %v2047
    %v3167 = vunpack.c.h.b16 %v2047
    %v3168 = vunpack.c.l.b16 %v2048
    %v3169 = vunpack.c.h.b16 %v2048
    %v3170 = vunpack.c.l.b16 %v2049
    %v3171 = vunpack.c.h.b16 %v2049
    %v3172 = vunpack.c.l.b16 %v2050
    %v3173 = vunpack.c.h.b16 %v2050
    %v3174 = vunpack.c.l.b16 %v2051
    %v3175 = vunpack.c.h.b16 %v2051
    %v3176 = vunpack.c.l.b16 %v2052
    %v3177 = vunpack.c.h.b16 %v2052
    %v3178 = vunpack.c.l.b16 %v2053
    %v3179 = vunpack.c.h.b16 %v2053
    %v3180 = vunpack.c.l.b16 %v2054
    %v3181 = vunpack.c.h.b16 %v2054
    %v3182 = vunpack.c.l.b16 %v2055
    %v3183 = vunpack.c.h.b16 %v2055
    %v3184 = vunpack.c.l.b16 %v2056
    %v3185 = vunpack.c.h.b16 %v2056
    %v3186 = vunpack.c.l.b16 %v2057
    %v3187 = vunpack.c.h.b16 %v2057
    %v3188 = vunpack.c.l.b16 %v2058
    %v3189 = vunpack.c.h.b16 %v2058
    %v3190 = vunpack.c.l.b16 %v2059
    %v3191 = vunpack.c.h.b16 %v2059
    %v3192 = vunpack.c.l.b16 %v2060
    %v3193 = vunpack.c.h.b16 %v2060
    %v3194 = vunpack.c.l.b16 %v2061
    %v3195 = vunpack.c.h.b16 %v2061
    %v3196 = vunpack.c.l.b16 %v2062
    %v3197 = vunpack.c.h.b16 %v2062
    %v3198 = vunpack.c.l.b16 %v2063
    %v3199 = vunpack.c.h.b16 %v2063
    %v3200 = vunpack.c.l.b16 %v2064
    %v3201 = vunpack.c.h.b16 %v2064
    %v3202 = vunpack.c.l.b16 %v2065
    %v3203 = vunpack.c.h.b16 %v2065
    %v3204 = vunpack.c.l.b16 %v2066
    %v3205 = vunpack.c.h.b16 %v2066
    %v3206 = vunpack.c.l.b16 %v2067
    %v3207 = vunpack.c.h.b16 %v2067
    %v3208 = vunpack.c.l.b16 %v2068
    %v3209 = vunpack.c.h.b16 %v2068
    %v3210 = vunpack.c.l.b16 %v2069
    %v3211 = vunpack.c.h.b16 %v2069
    %v3212 = vunpack.c.l.b16 %v2070
    %v3213 = vunpack.c.h.b16 %v2070
    %v3214 = vunpack.c.l.b16 %v2071
    %v3215 = vunpack.c.h.b16 %v2071
    %v3216 = vunpack.c.l.b16 %v2072
    %v3217 = vunpack.c.h.b16 %v2072
    %v3218 = vunpack.c.l.b16 %v2073
    %v3219 = vunpack.c.h.b16 %v2073
    %v3220 = vunpack.c.l.b16 %v2074
    %v3221 = vunpack.c.h.b16 %v2074
    %v3222 = vunpack.c.l.b16 %v2075
    %v3223 = vunpack.c.h.b16 %v2075
    %v3224 = vunpack.c.l.b16 %v2076
    %v3225 = vunpack.c.h.b16 %v2076
    %v3226 = vunpack.c.l.b16 %v2077
    %v3227 = vunpack.c.h.b16 %v2077
    %v3228 = vunpack.c.l.b16 %v2078
    %v3229 = vunpack.c.h.b16 %v2078
    %v3230 = vunpack.c.l.b16 %v2079
    %v3231 = vunpack.c.h.b16 %v2079
    %v3232 = vunpack.c.l.b16 %v2080
    %v3233 = vunpack.c.h.b16 %v2080
    %v3234 = vunpack.c.l.b16 %v2081
    %v3235 = vunpack.c.h.b16 %v2081
    %v3236 = vunpack.c.l.b16 %v2082
    %v3237 = vunpack.c.h.b16 %v2082
    %v3238 = vunpack.c.l.b16 %v2083
    %v3239 = vunpack.c.h.b16 %v2083
    %v3240 = vunpack.c.l.b16 %v2084
    %v3241 = vunpack.c.h.b16 %v2084
    %v3242 = vunpack.c.l.b16 %v2085
    %v3243 = vunpack.c.h.b16 %v2085
    %v3244 = vunpack.c.l.b16 %v2086
    %v3245 = vunpack.c.h.b16 %v2086
    %v3246 = vunpack.c.l.b16 %v2087
    %v3247 = vunpack.c.h.b16 %v2087
    %v3248 = vunpack.c.l.b16 %v2088
    %v3249 = vunpack.c.h.b16 %v2088
    %v3250 = vunpack.c.l.b16 %v2089
    %v3251 = vunpack.c.h.b16 %v2089
    %v3252 = vunpack.c.l.b16 %v2090
    %v3253 = vunpack.c.h.b16 %v2090
    %v3254 = vunpack.c.l.b16 %v2091
    %v3255 = vunpack.c.h.b16 %v2091
    %v3256 = vunpack.c.l.b16 %v2092
    %v3257 = vunpack.c.h.b16 %v2092
    %v3258 = vunpack.c.l.b16 %v2093
    %v3259 = vunpack.c.h.b16 %v2093
    %v3260 = vunpack.c.l.b16 %v2094
    %v3261 = vunpack.c.h.b16 %v2094
    %v3262 = vunpack.c.l.b16 %v2095
    %v3263 = vunpack.c.h.b16 %v2095
    %v3264 = vunpack.c.l.b16 %v2096
    %v3265 = vunpack.c.h.b16 %v2096
    %v3266 = vunpack.c.l.b16 %v2097
    %v3267 = vunpack.c.h.b16 %v2097
    %v3268 = vunpack.c.l.b16 %v2098
    %v3269 = vunpack.c.h.b16 %v2098
    %v3270 = vunpack.c.l.b16 %v2099
    %v3271 = vunpack.c.h.b16 %v2099
    %v3272 = vunpack.c.l.b16 %v2100
    %v3273 = vunpack.c.h.b16 %v2100
    %v3274 = vunpack.c.l.b16 %v2101
    %v3275 = vunpack.c.h.b16 %v2101
    %v3276 = vunpack.c.l.b16 %v2102
    %v3277 = vunpack.c.h.b16 %v2102
    %v3278 = vunpack.c.l.b16 %v2103
    %v3279 = vunpack.c.h.b16 %v2103
    %v3280 = vunpack.c.l.b16 %v2104
    %v3281 = vunpack.c.h.b16 %v2104
    %v3282 = vunpack.c.l.b16 %v2105
    %v3283 = vunpack.c.h.b16 %v2105
    %v3284 = vunpack.c.l.b16 %v2106
    %v3285 = vunpack.c.h.b16 %v2106
    %v3286 = vunpack.c.l.b16 %v2107
    %v3287 = vunpack.c.h.b16 %v2107
    %v3288 = vunpack.c.l.b16 %v2108
    %v3289 = vunpack.c.h.b16 %v2108
    %v3290 = vunpack.c.l.b16 %v2109
    %v3291 = vunpack.c.h.b16 %v2109
    %v3292 = vunpack.c.l.b16 %v2110
    %v3293 = vunpack.c.h.b16 %v2110
    %v3294 = vunpack.c.l.b16 %v2111
    %v3295 = vunpack.c.h.b16 %v2111
    %v3296 = vunpack.c.l.b16 %v2112
    %v3297 = vunpack.c.h.b16 %v2112
    %v3298 = vunpack.c.l.b16 %v2113
    %v3299 = vunpack.c.h.b16 %v2113
    %v3300 = vunpack.c.l.b16 %v2114
    %v3301 = vunpack.c.h.b16 %v2114
    %v3302 = vunpack.c.l.b16 %v2115
    %v3303 = vunpack.c.h.b16 %v2115
    %v3304 = vunpack.c.l.b16 %v2116
    %v3305 = vunpack.c.h.b16 %v2116
    %v3306 = vunpack.c.l.b16 %v2117
    %v3307 = vunpack.c.h.b16 %v2117
    %v3308 = vunpack.c.l.b16 %v2118
    %v3309 = vunpack.c.h.b16 %v2118
    %v3310 = vunpack.c.l.b16 %v2119
    %v3311 = vunpack.c.h.b16 %v2119
    %v3312 = vunpack.c.l.b16 %v2120
    %v3313 = vunpack.c.h.b16 %v2120
    %v3314 = vunpack.c.l.b16 %v2121
    %v3315 = vunpack.c.h.b16 %v2121
    %v3316 = vunpack.c.l.b16 %v2122
    %v3317 = vunpack.c.h.b16 %v2122
    %v3318 = vunpack.c.l.b16 %v2123
    %v3319 = vunpack.c.h.b16 %v2123
    %v3320 = vunpack.c.l.b16 %v2124
    %v3321 = vunpack.c.h.b16 %v2124
    %v3322 = vunpack.c.l.b16 %v2125
    %v3323 = vunpack.c.h.b16 %v2125
    %v3324 = vunpack.c.l.b16 %v2126
    %v3325 = vunpack.c.h.b16 %v2126
    %v3326 = vunpack.c.l.b16 %v2127
    %v3327 = vunpack.c.h.b16 %v2127
    %v3328 = vunpack.c.l.b16 %v2128
    %v3329 = vunpack.c.h.b16 %v2128
    %v3330 = vunpack.c.l.b16 %v2129
    %v3331 = vunpack.c.h.b16 %v2129
    %v3332 = vunpack.c.l.b16 %v2130
    %v3333 = vunpack.c.h.b16 %v2130
    %v3334 = vunpack.c.l.b16 %v2131
    %v3335 = vunpack.c.h.b16 %v2131
    %v3336 = vunpack.c.l.b16 %v2132
    %v3337 = vunpack.c.h.b16 %v2132
    %v3338 = vunpack.c.l.b16 %v2133
    %v3339 = vunpack.c.h.b16 %v2133
    %v3340 = vunpack.c.l.b16 %v2134
    %v3341 = vunpack.c.h.b16 %v2134
    %v3342 = vunpack.c.l.b16 %v2135
    %v3343 = vunpack.c.h.b16 %v2135
    %v3344 = vunpack.c.l.b16 %v2136
    %v3345 = vunpack.c.h.b16 %v2136
    %v3346 = vunpack.c.l.b16 %v2137
    %v3347 = vunpack.c.h.b16 %v2137
    %v3348 = vunpack.c.l.b16 %v2138
    %v3349 = vunpack.c.h.b16 %v2138
    %v3350 = vunpack.c.l.b16 %v2139
    %v3351 = vunpack.c.h.b16 %v2139
    %v3352 = vunpack.c.l.b16 %v2140
    %v3353 = vunpack.c.h.b16 %v2140
    %v3354 = vunpack.c.l.b16 %v2141
    %v3355 = vunpack.c.h.b16 %v2141
    %v3356 = vunpack.c.l.b16 %v2142
    %v3357 = vunpack.c.h.b16 %v2142
    %v3358 = vunpack.c.l.b16 %v2143
    %v3359 = vunpack.c.h.b16 %v2143
    %v3360 = vunpack.c.l.b16 %v2144
    %v3361 = vunpack.c.h.b16 %v2144
    %v3362 = vunpack.c.l.b16 %v2145
    %v3363 = vunpack.c.h.b16 %v2145
    %v3364 = vunpack.c.l.b16 %v2146
    %v3365 = vunpack.c.h.b16 %v2146
    %v3366 = vunpack.c.l.b16 %v2147
    %v3367 = vunpack.c.h.b16 %v2147
    %v3368 = vunpack.c.l.b16 %v2148
    %v3369 = vunpack.c.h.b16 %v2148
    %v3370 = vunpack.c.l.b16 %v2149
    %v3371 = vunpack.c.h.b16 %v2149
    %v3372 = vunpack.c.l.b16 %v2150
    %v3373 = vunpack.c.h.b16 %v2150
    %v3374 = vunpack.c.l.b16 %v2151
    %v3375 = vunpack.c.h.b16 %v2151
    %v3376 = vunpack.c.l.b16 %v2152
    %v3377 = vunpack.c.h.b16 %v2152
    %v3378 = vunpack.c.l.b16 %v2153
    %v3379 = vunpack.c.h.b16 %v2153
    %v3380 = vunpack.c.l.b16 %v2154
    %v3381 = vunpack.c.h.b16 %v2154
    %v3382 = vunpack.c.l.b16 %v2155
    %v3383 = vunpack.c.h.b16 %v2155
    %v3384 = vunpack.c.l.b16 %v2156
    %v3385 = vunpack.c.h.b16 %v2156
    %v3386 = vunpack.c.l.b16 %v2157
    %v3387 = vunpack.c.h.b16 %v2157
    %v3388 = vunpack.c.l.b16 %v2158
    %v3389 = vunpack.c.h.b16 %v2158
    %v3390 = vunpack.c.l.b16 %v2159
    %v3391 = vunpack.c.h.b16 %v2159
    %v3392 = vunpack.c.l.b16 %v2160
    %v3393 = vunpack.c.h.b16 %v2160
    %v3394 = vunpack.c.l.b16 %v2161
    %v3395 = vunpack.c.h.b16 %v2161
    %v3396 = vunpack.c.l.b16 %v2162
    %v3397 = vunpack.c.h.b16 %v2162
    %v3398 = vunpack.c.l.b16 %v2163
    %v3399 = vunpack.c.h.b16 %v2163
    %v3400 = vunpack.c.l.b16 %v2164
    %v3401 = vunpack.c.h.b16 %v2164
    %v3402 = vunpack.c.l.b16 %v2165
    %v3403 = vunpack.c.h.b16 %v2165
    %v3404 = vunpack.c.l.b16 %v2166
    %v3405 = vunpack.c.h.b16 %v2166
    %v3406 = vunpack.c.l.b16 %v2167
    %v3407 = vunpack.c.h.b16 %v2167
    %v3408 = vunpack.c.l.b16 %v2168
    %v3409 = vunpack.c.h.b16 %v2168
    %v3410 = vunpack.c.l.b16 %v2169
    %v3411 = vunpack.c.h.b16 %v2169
    %v3412 = vunpack.c.l.b16 %v2170
    %v3413 = vunpack.c.h.b16 %v2170
    %v3414 = vunpack.c.l.b16 %v2171
    %v3415 = vunpack.c.h.b16 %v2171
    %v3416 = vunpack.c.l.b16 %v2172
    %v3417 = vunpack.c.h.b16 %v2172
    %v3418 = vunpack.c.l.b16 %v2173
    %v3419 = vunpack.c.h.b16 %v2173
    %v3420 = vunpack.c.l.b16 %v2174
    %v3421 = vunpack.c.h.b16 %v2174
    %v3422 = vunpack.c.l.b16 %v2175
    %v3423 = vunpack.c.h.b16 %v2175
    %v3424 = vunpack.c.l.b16 %v2176
    %v3425 = vunpack.c.h.b16 %v2176
    %v3426 = vunpack.c.l.b16 %v2177
    %v3427 = vunpack.c.h.b16 %v2177
    %v3428 = vunpack.c.l.b16 %v2178
    %v3429 = vunpack.c.h.b16 %v2178
    %v3430 = vunpack.c.l.b16 %v2179
    %v3431 = vunpack.c.h.b16 %v2179
    %v3432 = vunpack.c.l.b16 %v2180
    %v3433 = vunpack.c.h.b16 %v2180
    %v3434 = vunpack.c.l.b16 %v2181
    %v3435 = vunpack.c.h.b16 %v2181
    %v3436 = vunpack.c.l.b16 %v2182
    %v3437 = vunpack.c.h.b16 %v2182
    %v3438 = vunpack.c.l.b16 %v2183
    %v3439 = vunpack.c.h.b16 %v2183
    %v3440 = vunpack.c.l.b16 %v2184
    %v3441 = vunpack.c.h.b16 %v2184
    %v3442 = vunpack.c.l.b16 %v2185
    %v3443 = vunpack.c.h.b16 %v2185
    %v3444 = vunpack.c.l.b16 %v2186
    %v3445 = vunpack.c.h.b16 %v2186
    %v3446 = vunpack.c.l.b16 %v2187
    %v3447 = vunpack.c.h.b16 %v2187
    %v3448 = vunpack.c.l.b16 %v2188
    %v3449 = vunpack.c.h.b16 %v2188
    %v3450 = vunpack.c.l.b16 %v2189
    %v3451 = vunpack.c.h.b16 %v2189
    %v3452 = vunpack.c.l.b16 %v2190
    %v3453 = vunpack.c.h.b16 %v2190
    %v3454 = vunpack.c.l.b16 %v2191
    %v3455 = vunpack.c.h.b16 %v2191
    %v3456 = vunpack.c.l.b16 %v2192
    %v3457 = vunpack.c.h.b16 %v2192
    %v3458 = vunpack.c.l.b16 %v2193
    %v3459 = vunpack.c.h.b16 %v2193
    %v3460 = vunpack.c.l.b16 %v2194
    %v3461 = vunpack.c.h.b16 %v2194
    %v3462 = vunpack.c.l.b16 %v2195
    %v3463 = vunpack.c.h.b16 %v2195
    %v3464 = vunpack.c.l.b16 %v2196
    %v3465 = vunpack.c.h.b16 %v2196
    %v3466 = vunpack.c.l.b16 %v2197
    %v3467 = vunpack.c.h.b16 %v2197
    %v3468 = vunpack.c.l.b16 %v2198
    %v3469 = vunpack.c.h.b16 %v2198
    %v3470 = vunpack.c.l.b16 %v2199
    %v3471 = vunpack.c.h.b16 %v2199
    %v3472 = vunpack.c.l.b16 %v2200
    %v3473 = vunpack.c.h.b16 %v2200
    %v3474 = vunpack.c.l.b16 %v2201
    %v3475 = vunpack.c.h.b16 %v2201
    %v3476 = vunpack.c.l.b16 %v2202
    %v3477 = vunpack.c.h.b16 %v2202
    %v3478 = vunpack.c.l.b16 %v2203
    %v3479 = vunpack.c.h.b16 %v2203
    %v3480 = vunpack.c.l.b16 %v2204
    %v3481 = vunpack.c.h.b16 %v2204
    %v3482 = vunpack.c.l.b16 %v2205
    %v3483 = vunpack.c.h.b16 %v2205
    %v3484 = vunpack.c.l.b16 %v2206
    %v3485 = vunpack.c.h.b16 %v2206
    %v3486 = vunpack.c.l.b16 %v2207
    %v3487 = vunpack.c.h.b16 %v2207
    %v3488 = vunpack.c.l.b16 %v2208
    %v3489 = vunpack.c.h.b16 %v2208
    %v3490 = vunpack.c.l.b16 %v2209
    %v3491 = vunpack.c.h.b16 %v2209
    %v3492 = vunpack.c.l.b16 %v2210
    %v3493 = vunpack.c.h.b16 %v2210
    %v3494 = vunpack.c.l.b16 %v2211
    %v3495 = vunpack.c.h.b16 %v2211
    %v3496 = vunpack.c.l.b16 %v2212
    %v3497 = vunpack.c.h.b16 %v2212
    %v3498 = vunpack.c.l.b16 %v2213
    %v3499 = vunpack.c.h.b16 %v2213
    %v3500 = vunpack.c.l.b16 %v2214
    %v3501 = vunpack.c.h.b16 %v2214
    %v3502 = vunpack.c.l.b16 %v2215
    %v3503 = vunpack.c.h.b16 %v2215
    %v3504 = vunpack.c.l.b16 %v2216
    %v3505 = vunpack.c.h.b16 %v2216
    %v3506 = vunpack.c.l.b16 %v2217
    %v3507 = vunpack.c.h.b16 %v2217
    %v3508 = vunpack.c.l.b16 %v2218
    %v3509 = vunpack.c.h.b16 %v2218
    %v3510 = vunpack.c.l.b16 %v2219
    %v3511 = vunpack.c.h.b16 %v2219
    %v3512 = vunpack.c.l.b16 %v2220
    %v3513 = vunpack.c.h.b16 %v2220
    %v3514 = vunpack.c.l.b16 %v2221
    %v3515 = vunpack.c.h.b16 %v2221
    %v3516 = vunpack.c.l.b16 %v2222
    %v3517 = vunpack.c.h.b16 %v2222
    %v3518 = vunpack.c.l.b16 %v2223
    %v3519 = vunpack.c.h.b16 %v2223
    %v3520 = vunpack.c.l.b16 %v2224
    %v3521 = vunpack.c.h.b16 %v2224
    %v3522 = vunpack.c.l.b16 %v2225
    %v3523 = vunpack.c.h.b16 %v2225
    %v3524 = vunpack.c.l.b16 %v2226
    %v3525 = vunpack.c.h.b16 %v2226
    %v3526 = vunpack.c.l.b16 %v2227
    %v3527 = vunpack.c.h.b16 %v2227
    %v3528 = vunpack.c.l.b16 %v2228
    %v3529 = vunpack.c.h.b16 %v2228
    %v3530 = vunpack.c.l.b16 %v2229
    %v3531 = vunpack.c.h.b16 %v2229
    %v3532 = vunpack.c.l.b16 %v2230
    %v3533 = vunpack.c.h.b16 %v2230
    %v3534 = vunpack.c.l.b16 %v2231
    %v3535 = vunpack.c.h.b16 %v2231
    %v3536 = vunpack.c.l.b16 %v2232
    %v3537 = vunpack.c.h.b16 %v2232
    %v3538 = vunpack.c.l.b16 %v2233
    %v3539 = vunpack.c.h.b16 %v2233
    %v3540 = vunpack.c.l.b16 %v2234
    %v3541 = vunpack.c.h.b16 %v2234
    %v3542 = vunpack.c.l.b16 %v2235
    %v3543 = vunpack.c.h.b16 %v2235
    %v3544 = vunpack.c.l.b16 %v2236
    %v3545 = vunpack.c.h.b16 %v2236
    %v3546 = vunpack.c.l.b16 %v2237
    %v3547 = vunpack.c.h.b16 %v2237
    %v3548 = vunpack.c.l.b16 %v2238
    %v3549 = vunpack.c.h.b16 %v2238
    %v3550 = vunpack.c.l.b16 %v2239
    %v3551 = vunpack.c.h.b16 %v2239
    %v3552 = vunpack.c.l.b16 %v2240
    %v3553 = vunpack.c.h.b16 %v2240
    %v3554 = vunpack.c.l.b16 %v2241
    %v3555 = vunpack.c.h.b16 %v2241
    %v3556 = vunpack.c.l.b16 %v2242
    %v3557 = vunpack.c.h.b16 %v2242
    %v3558 = vunpack.c.l.b16 %v2243
    %v3559 = vunpack.c.h.b16 %v2243
    %v3560 = vunpack.c.l.b16 %v2244
    %v3561 = vunpack.c.h.b16 %v2244
    %v3562 = vunpack.c.l.b16 %v2245
    %v3563 = vunpack.c.h.b16 %v2245
    %v3564 = vunpack.c.l.b16 %v2246
    %v3565 = vunpack.c.h.b16 %v2246
    %v3566 = vunpack.c.l.b16 %v2247
    %v3567 = vunpack.c.h.b16 %v2247
    %v3568 = vunpack.c.l.b16 %v2248
    %v3569 = vunpack.c.h.b16 %v2248
    %v3570 = vunpack.c.l.b16 %v2249
    %v3571 = vunpack.c.h.b16 %v2249
    %v3572 = vunpack.c.l.b16 %v2250
    %v3573 = vunpack.c.h.b16 %v2250
    %v3574 = vunpack.c.l.b16 %v2251
    %v3575 = vunpack.c.h.b16 %v2251
    %v3576 = vunpack.c.l.b16 %v2252
    %v3577 = vunpack.c.h.b16 %v2252
    %v3578 = vunpack.c.l.b16 %v2253
    %v3579 = vunpack.c.h.b16 %v2253
    %v3580 = vunpack.c.l.b16 %v2254
    %v3581 = vunpack.c.h.b16 %v2254
    %v3582 = vunpack.c.l.b16 %v2255
    %v3583 = vunpack.c.h.b16 %v2255
    %v3584 = vunpack.c.l.b16 %v2256
    %v3585 = vunpack.c.h.b16 %v2256
    %v3586 = vunpack.c.l.b16 %v2257
    %v3587 = vunpack.c.h.b16 %v2257
    %v3588 = vunpack.c.l.b16 %v2258
    %v3589 = vunpack.c.h.b16 %v2258
    %v3590 = vunpack.c.l.b16 %v2259
    %v3591 = vunpack.c.h.b16 %v2259
    %v3592 = vunpack.c.l.b16 %v2260
    %v3593 = vunpack.c.h.b16 %v2260
    %v3594 = vunpack.c.l.b16 %v2261
    %v3595 = vunpack.c.h.b16 %v2261
    %v3596 = vunpack.c.l.b16 %v2262
    %v3597 = vunpack.c.h.b16 %v2262
    %v3598 = vunpack.c.l.b16 %v2263
    %v3599 = vunpack.c.h.b16 %v2263
    %v3600 = vunpack.c.l.b16 %v2264
    %v3601 = vunpack.c.h.b16 %v2264
    %v3602 = vunpack.c.l.b16 %v2265
    %v3603 = vunpack.c.h.b16 %v2265
    %v3604 = vunpack.c.l.b16 %v2266
    %v3605 = vunpack.c.h.b16 %v2266
    %v3606 = vunpack.c.l.b16 %v2267
    %v3607 = vunpack.c.h.b16 %v2267
    %v3608 = vunpack.c.l.b16 %v2268
    %v3609 = vunpack.c.h.b16 %v2268
    %v3610 = vunpack.c.l.b16 %v2269
    %v3611 = vunpack.c.h.b16 %v2269
    %v3612 = vunpack.c.l.b16 %v2270
    %v3613 = vunpack.c.h.b16 %v2270
    %v3614 = vunpack.c.l.b16 %v2271
    %v3615 = vunpack.c.h.b16 %v2271
    %v3616 = vunpack.c.l.b16 %v2272
    %v3617 = vunpack.c.h.b16 %v2272
    %v3618 = vunpack.c.l.b16 %v2273
    %v3619 = vunpack.c.h.b16 %v2273
    %v3620 = vunpack.c.l.b16 %v2274
    %v3621 = vunpack.c.h.b16 %v2274
    %v3622 = vunpack.c.l.b16 %v2275
    %v3623 = vunpack.c.h.b16 %v2275
    %v3624 = vunpack.c.l.b16 %v2276
    %v3625 = vunpack.c.h.b16 %v2276
    %v3626 = vunpack.c.l.b16 %v2277
    %v3627 = vunpack.c.h.b16 %v2277
    %v3628 = vunpack.c.l.b16 %v2278
    %v3629 = vunpack.c.h.b16 %v2278
    %v3630 = vunpack.c.l.b16 %v2279
    %v3631 = vunpack.c.h.b16 %v2279
    %v3632 = vunpack.c.l.b16 %v2280
    %v3633 = vunpack.c.h.b16 %v2280
    %v3634 = vunpack.c.l.b16 %v2281
    %v3635 = vunpack.c.h.b16 %v2281
    %v3636 = vunpack.c.l.b16 %v2282
    %v3637 = vunpack.c.h.b16 %v2282
    %v3638 = vunpack.c.l.b16 %v2283
    %v3639 = vunpack.c.h.b16 %v2283
    %v3640 = vunpack.c.l.b16 %v2284
    %v3641 = vunpack.c.h.b16 %v2284
    %v3642 = vunpack.c.l.b16 %v2285
    %v3643 = vunpack.c.h.b16 %v2285
    %v3644 = vunpack.c.l.b16 %v2286
    %v3645 = vunpack.c.h.b16 %v2286
    %v3646 = vunpack.c.l.b16 %v2287
    %v3647 = vunpack.c.h.b16 %v2287
    %v3648 = vunpack.c.l.b16 %v2288
    %v3649 = vunpack.c.h.b16 %v2288
    %v3650 = vunpack.c.l.b16 %v2289
    %v3651 = vunpack.c.h.b16 %v2289
    %v3652 = vunpack.c.l.b16 %v2290
    %v3653 = vunpack.c.h.b16 %v2290
    %v3654 = vunpack.c.l.b16 %v2291
    %v3655 = vunpack.c.h.b16 %v2291
    %v3656 = vunpack.c.l.b16 %v2292
    %v3657 = vunpack.c.h.b16 %v2292
    %v3658 = vunpack.c.l.b16 %v2293
    %v3659 = vunpack.c.h.b16 %v2293
    %v3660 = vunpack.c.l.b16 %v2294
    %v3661 = vunpack.c.h.b16 %v2294
    %v3662 = vunpack.c.l.b16 %v2295
    %v3663 = vunpack.c.h.b16 %v2295
    %v3664 = vunpack.c.l.b16 %v2296
    %v3665 = vunpack.c.h.b16 %v2296
    %v3666 = vunpack.c.l.b16 %v2297
    %v3667 = vunpack.c.h.b16 %v2297
    %v3668 = vunpack.c.l.b16 %v2298
    %v3669 = vunpack.c.h.b16 %v2298
    %v3670 = vunpack.c.l.b16 %v2299
    %v3671 = vunpack.c.h.b16 %v2299
    %v3672 = vunpack.c.l.b16 %v2300
    %v3673 = vunpack.c.h.b16 %v2300
    %v3674 = vunpack.c.l.b16 %v2301
    %v3675 = vunpack.c.h.b16 %v2301
    %v3676 = vunpack.c.l.b16 %v2302
    %v3677 = vunpack.c.h.b16 %v2302
    %v3678 = vunpack.c.l.b16 %v2303
    %v3679 = vunpack.c.h.b16 %v2303
    %v3680 = vunpack.c.l.b16 %v2304
    %v3681 = vunpack.c.h.b16 %v2304
    %v3682 = vunpack.c.l.b16 %v2305
    %v3683 = vunpack.c.h.b16 %v2305
    %v3684 = vunpack.c.l.b16 %v2306
    %v3685 = vunpack.c.h.b16 %v2306
    %v3686 = vunpack.c.l.b16 %v2307
    %v3687 = vunpack.c.h.b16 %v2307
    %v3688 = vunpack.c.l.b16 %v2308
    %v3689 = vunpack.c.h.b16 %v2308
    %v3690 = vunpack.c.l.b16 %v2309
    %v3691 = vunpack.c.h.b16 %v2309
    %v3692 = vunpack.c.l.b16 %v2310
    %v3693 = vunpack.c.h.b16 %v2310
    %v3694 = vunpack.c.l.b16 %v2311
    %v3695 = vunpack.c.h.b16 %v2311
    %v3696 = vunpack.c.l.b16 %v2312
    %v3697 = vunpack.c.h.b16 %v2312
    %v3698 = vunpack.c.l.b16 %v2313
    %v3699 = vunpack.c.h.b16 %v2313
    %v3700 = vunpack.c.l.b16 %v2314
    %v3701 = vunpack.c.h.b16 %v2314
    %v3702 = vunpack.c.l.b16 %v2315
    %v3703 = vunpack.c.h.b16 %v2315
    %v3704 = vunpack.c.l.b16 %v2316
    %v3705 = vunpack.c.h.b16 %v2316
    %v3706 = vunpack.c.l.b16 %v2317
    %v3707 = vunpack.c.h.b16 %v2317
    %v3708 = vunpack.c.l.b16 %v2318
    %v3709 = vunpack.c.h.b16 %v2318
    %v3710 = vunpack.c.l.b16 %v2319
    %v3711 = vunpack.c.h.b16 %v2319
    %v3712 = vunpack.c.l.b16 %v2320
    %v3713 = vunpack.c.h.b16 %v2320
    %v3714 = vunpack.c.l.b16 %v2321
    %v3715 = vunpack.c.h.b16 %v2321
    %v3716 = vunpack.c.l.b16 %v2322
    %v3717 = vunpack.c.h.b16 %v2322
    %v3718 = vunpack.c.l.b16 %v2323
    %v3719 = vunpack.c.h.b16 %v2323
    %v3720 = vunpack.c.l.b16 %v2324
    %v3721 = vunpack.c.h.b16 %v2324
    %v3722 = vunpack.c.l.b16 %v2325
    %v3723 = vunpack.c.h.b16 %v2325
    %v3724 = vunpack.c.l.b16 %v2326
    %v3725 = vunpack.c.h.b16 %v2326
    %v3726 = vunpack.c.l.b16 %v2327
    %v3727 = vunpack.c.h.b16 %v2327
    %v3728 = vunpack.c.l.b16 %v2328
    %v3729 = vunpack.c.h.b16 %v2328
    %v3730 = vunpack.c.l.b16 %v2329
    %v3731 = vunpack.c.h.b16 %v2329
    %v3732 = vunpack.c.l.b16 %v2330
    %v3733 = vunpack.c.h.b16 %v2330
    %v3734 = vunpack.c.l.b16 %v2331
    %v3735 = vunpack.c.h.b16 %v2331
    %v3736 = vunpack.c.l.b16 %v2332
    %v3737 = vunpack.c.h.b16 %v2332
    %v3738 = vunpack.c.l.b16 %v2333
    %v3739 = vunpack.c.h.b16 %v2333
    %v3740 = vunpack.c.l.b16 %v2334
    %v3741 = vunpack.c.h.b16 %v2334
    %v3742 = vunpack.c.l.b16 %v2335
    %v3743 = vunpack.c.h.b16 %v2335
    %v3744 = vunpack.c.l.b16 %v2336
    %v3745 = vunpack.c.h.b16 %v2336
    %v3746 = vunpack.c.l.b16 %v2337
    %v3747 = vunpack.c.h.b16 %v2337
    %v3748 = vunpack.c.l.b16 %v2338
    %v3749 = vunpack.c.h.b16 %v2338
    %v3750 = vunpack.c.l.b16 %v2339
    %v3751 = vunpack.c.h.b16 %v2339
    %v3752 = vunpack.c.l.b16 %v2340
    %v3753 = vunpack.c.h.b16 %v2340
    %v3754 = vunpack.c.l.b16 %v2341
    %v3755 = vunpack.c.h.b16 %v2341
    %v3756 = vunpack.c.l.b16 %v2342
    %v3757 = vunpack.c.h.b16 %v2342
    %v3758 = vunpack.c.l.b16 %v2343
    %v3759 = vunpack.c.h.b16 %v2343
    %v3760 = vunpack.c.l.b16 %v2344
    %v3761 = vunpack.c.h.b16 %v2344
    %v3762 = vunpack.c.l.b16 %v2345
    %v3763 = vunpack.c.h.b16 %v2345
    %v3764 = vunpack.c.l.b16 %v2346
    %v3765 = vunpack.c.h.b16 %v2346
    %v3766 = vunpack.c.l.b16 %v2347
    %v3767 = vunpack.c.h.b16 %v2347
    %v3768 = vunpack.c.l.b16 %v2348
    %v3769 = vunpack.c.h.b16 %v2348
    %v3770 = vunpack.c.l.b16 %v2349
    %v3771 = vunpack.c.h.b16 %v2349
    %v3772 = vunpack.c.l.b16 %v2350
    %v3773 = vunpack.c.h.b16 %v2350
    %v3774 = vunpack.c.l.b16 %v2351
    %v3775 = vunpack.c.h.b16 %v2351
    %v3776 = vunpack.c.l.b16 %v2352
    %v3777 = vunpack.c.h.b16 %v2352
    %v3778 = vunpack.c.l.b16 %v2353
    %v3779 = vunpack.c.h.b16 %v2353
    %v3780 = vunpack.c.l.b16 %v2354
    %v3781 = vunpack.c.h.b16 %v2354
    %v3782 = vunpack.c.l.b16 %v2355
    %v3783 = vunpack.c.h.b16 %v2355
    %v3784 = vunpack.c.l.b16 %v2356
    %v3785 = vunpack.c.h.b16 %v2356
    %v3786 = vunpack.c.l.b16 %v2357
    %v3787 = vunpack.c.h.b16 %v2357
    %v3788 = vunpack.c.l.b16 %v2358
    %v3789 = vunpack.c.h.b16 %v2358
    %v3790 = vunpack.c.l.b16 %v2359
    %v3791 = vunpack.c.h.b16 %v2359
    %v3792 = vunpack.c.l.b16 %v2360
    %v3793 = vunpack.c.h.b16 %v2360
    %v3794 = vunpack.c.l.b16 %v2361
    %v3795 = vunpack.c.h.b16 %v2361
    %v3796 = vunpack.c.l.b16 %v2362
    %v3797 = vunpack.c.h.b16 %v2362
    %v3798 = vunpack.c.l.b16 %v2363
    %v3799 = vunpack.c.h.b16 %v2363
    %v3800 = vunpack.c.l.b16 %v2364
    %v3801 = vunpack.c.h.b16 %v2364
    %v3802 = vunpack.c.l.b16 %v2365
    %v3803 = vunpack.c.h.b16 %v2365
    %v3804 = vunpack.c.l.b16 %v2366
    %v3805 = vunpack.c.h.b16 %v2366
    %v3806 = vunpack.c.l.b16 %v2367
    %v3807 = vunpack.c.h.b16 %v2367
    %v3808 = vunpack.c.l.b16 %v2368
    %v3809 = vunpack.c.h.b16 %v2368
    %v3810 = vunpack.c.l.b16 %v2369
    %v3811 = vunpack.c.h.b16 %v2369
    %v3812 = vunpack.c.l.b16 %v2370
    %v3813 = vunpack.c.h.b16 %v2370
    %v3814 = vunpack.c.l.b16 %v2371
    %v3815 = vunpack.c.h.b16 %v2371
    %v3816 = vunpack.c.l.b16 %v2372
    %v3817 = vunpack.c.h.b16 %v2372
    %v3818 = vunpack.c.l.b16 %v2373
    %v3819 = vunpack.c.h.b16 %v2373
    %v3820 = vunpack.c.l.b16 %v2374
    %v3821 = vunpack.c.h.b16 %v2374
    %v3822 = vunpack.c.l.b16 %v2375
    %v3823 = vunpack.c.h.b16 %v2375
    %v3824 = vunpack.c.l.b16 %v2376
    %v3825 = vunpack.c.h.b16 %v2376
    %v3826 = vunpack.c.l.b16 %v2377
    %v3827 = vunpack.c.h.b16 %v2377
    %v3828 = vunpack.c.l.b16 %v2378
    %v3829 = vunpack.c.h.b16 %v2378
    %v3830 = vunpack.c.l.b16 %v2379
    %v3831 = vunpack.c.h.b16 %v2379
    %v3832 = vunpack.c.l.b16 %v2380
    %v3833 = vunpack.c.h.b16 %v2380
    %v3834 = vunpack.c.l.b16 %v2381
    %v3835 = vunpack.c.h.b16 %v2381
    %v3836 = vunpack.c.l.b16 %v2382
    %v3837 = vunpack.c.h.b16 %v2382
    %v3838 = vunpack.c.l.b16 %v2383
    %v3839 = vunpack.c.h.b16 %v2383
    %v3840 = vunpack.c.l.b16 %v2384
    %v3841 = vunpack.c.h.b16 %v2384
    %v3842 = vunpack.c.l.b16 %v2385
    %v3843 = vunpack.c.h.b16 %v2385
    %v3844 = vunpack.c.l.b16 %v2386
    %v3845 = vunpack.c.h.b16 %v2386
    %v3846 = vunpack.c.l.b16 %v2387
    %v3847 = vunpack.c.h.b16 %v2387
    %v3848 = vunpack.c.l.b16 %v2388
    %v3849 = vunpack.c.h.b16 %v2388
    %v3850 = vunpack.c.l.b16 %v2389
    %v3851 = vunpack.c.h.b16 %v2389
    %v3852 = vunpack.c.l.b16 %v2390
    %v3853 = vunpack.c.h.b16 %v2390
    %v3854 = vunpack.c.l.b16 %v2391
    %v3855 = vunpack.c.h.b16 %v2391
    %v3856 = vunpack.c.l.b16 %v2392
    %v3857 = vunpack.c.h.b16 %v2392
    %v3858 = vunpack.c.l.b16 %v2393
    %v3859 = vunpack.c.h.b16 %v2393
    %v3860 = vunpack.c.l.b16 %v2394
    %v3861 = vunpack.c.h.b16 %v2394
    %v3862 = vunpack.c.l.b16 %v2395
    %v3863 = vunpack.c.h.b16 %v2395
    %v3864 = vunpack.c.l.b16 %v2396
    %v3865 = vunpack.c.h.b16 %v2396
    %v3866 = vunpack.c.l.b16 %v2397
    %v3867 = vunpack.c.h.b16 %v2397
    %v3868 = vunpack.c.l.b16 %v2398
    %v3869 = vunpack.c.h.b16 %v2398
    %v3870 = vunpack.c.l.b16 %v2399
    %v3871 = vunpack.c.h.b16 %v2399
    %v3872 = vunpack.c.l.b16 %v2400
    %v3873 = vunpack.c.h.b16 %v2400
    %v3874 = vunpack.c.l.b16 %v2401
    %v3875 = vunpack.c.h.b16 %v2401
    %v3876 = vunpack.c.l.b16 %v2402
    %v3877 = vunpack.c.h.b16 %v2402
    %v3878 = vunpack.c.l.b16 %v2403
    %v3879 = vunpack.c.h.b16 %v2403
    %v3880 = vunpack.c.l.b16 %v2404
    %v3881 = vunpack.c.h.b16 %v2404
    %v3882 = vunpack.c.l.b16 %v2405
    %v3883 = vunpack.c.h.b16 %v2405
    %v3884 = vunpack.c.l.b16 %v2406
    %v3885 = vunpack.c.h.b16 %v2406
    %v3886 = vunpack.c.l.b16 %v2407
    %v3887 = vunpack.c.h.b16 %v2407
    %v3888 = vunpack.c.l.b16 %v2408
    %v3889 = vunpack.c.h.b16 %v2408
    %v3890 = vunpack.c.l.b16 %v2409
    %v3891 = vunpack.c.h.b16 %v2409
    %v3892 = vunpack.c.l.b16 %v2410
    %v3893 = vunpack.c.h.b16 %v2410
    %v3894 = vunpack.c.l.b16 %v2411
    %v3895 = vunpack.c.h.b16 %v2411
    %v3896 = vunpack.c.l.b16 %v2412
    %v3897 = vunpack.c.h.b16 %v2412
    %v3898 = vunpack.c.l.b16 %v2413
    %v3899 = vunpack.c.h.b16 %v2413
    %v3900 = vunpack.c.l.b16 %v2414
    %v3901 = vunpack.c.h.b16 %v2414
    %v3902 = vunpack.c.l.b16 %v2415
    %v3903 = vunpack.c.h.b16 %v2415
    %v3904 = vunpack.c.l.b16 %v2416
    %v3905 = vunpack.c.h.b16 %v2416
    %v3906 = vunpack.c.l.b16 %v2417
    %v3907 = vunpack.c.h.b16 %v2417
    %v3908 = vunpack.c.l.b16 %v2418
    %v3909 = vunpack.c.h.b16 %v2418
    %v3910 = vunpack.c.l.b16 %v2419
    %v3911 = vunpack.c.h.b16 %v2419
    %v3912 = vunpack.c.l.b16 %v2420
    %v3913 = vunpack.c.h.b16 %v2420
    %v3914 = vunpack.c.l.b16 %v2421
    %v3915 = vunpack.c.h.b16 %v2421
    %v3916 = vunpack.c.l.b16 %v2422
    %v3917 = vunpack.c.h.b16 %v2422
    %v3918 = vunpack.c.l.b16 %v2423
    %v3919 = vunpack.c.h.b16 %v2423
    %v3920 = vunpack.c.l.b16 %v2424
    %v3921 = vunpack.c.h.b16 %v2424
    %v3922 = vunpack.c.l.b16 %v2425
    %v3923 = vunpack.c.h.b16 %v2425
    %v3924 = vunpack.c.l.b16 %v2426
    %v3925 = vunpack.c.h.b16 %v2426
    %v3926 = vunpack.c.l.b16 %v2427
    %v3927 = vunpack.c.h.b16 %v2427
    %v3928 = vunpack.c.l.b16 %v2428
    %v3929 = vunpack.c.h.b16 %v2428
    %v3930 = vunpack.c.l.b16 %v2429
    %v3931 = vunpack.c.h.b16 %v2429
    %v3932 = vunpack.c.l.b16 %v2430
    %v3933 = vunpack.c.h.b16 %v2430
    %v3934 = vunpack.c.l.b16 %v2431
    %v3935 = vunpack.c.h.b16 %v2431
    %v3936 = vunpack.c.l.b16 %v2432
    %v3937 = vunpack.c.h.b16 %v2432
    %v3938 = vunpack.c.l.b16 %v2433
    %v3939 = vunpack.c.h.b16 %v2433
    %v3940 = vunpack.c.l.b16 %v2434
    %v3941 = vunpack.c.h.b16 %v2434
    %v3942 = vunpack.c.l.b16 %v2435
    %v3943 = vunpack.c.h.b16 %v2435
    %v3944 = vunpack.c.l.b16 %v2436
    %v3945 = vunpack.c.h.b16 %v2436
    %v3946 = vunpack.c.l.b16 %v2437
    %v3947 = vunpack.c.h.b16 %v2437
    %v3948 = vunpack.c.l.b16 %v2438
    %v3949 = vunpack.c.h.b16 %v2438
    %v3950 = vunpack.c.l.b16 %v2439
    %v3951 = vunpack.c.h.b16 %v2439
    %v3952 = vunpack.c.l.b16 %v2440
    %v3953 = vunpack.c.h.b16 %v2440
    %v3954 = vunpack.c.l.b16 %v2441
    %v3955 = vunpack.c.h.b16 %v2441
    %v3956 = vunpack.c.l.b16 %v2442
    %v3957 = vunpack.c.h.b16 %v2442
    %v3958 = vunpack.c.l.b16 %v2443
    %v3959 = vunpack.c.h.b16 %v2443
    %v3960 = vunpack.c.l.b16 %v2444
    %v3961 = vunpack.c.h.b16 %v2444
    %v3962 = vunpack.c.l.b16 %v2445
    %v3963 = vunpack.c.h.b16 %v2445
    %v3964 = vunpack.c.l.b16 %v2446
    %v3965 = vunpack.c.h.b16 %v2446
    %v3966 = vunpack.c.l.b16 %v2447
    %v3967 = vunpack.c.h.b16 %v2447
    %v3968 = vunpack.c.l.b16 %v2448
    %v3969 = vunpack.c.h.b16 %v2448
    %v3970 = vunpack.c.l.b16 %v2449
    %v3971 = vunpack.c.h.b16 %v2449
    %v3972 = vunpack.c.l.b16 %v2450
    %v3973 = vunpack.c.h.b16 %v2450
    %v3974 = vunpack.c.l.b16 %v2451
    %v3975 = vunpack.c.h.b16 %v2451
    %v3976 = vunpack.c.l.b16 %v2452
    %v3977 = vunpack.c.h.b16 %v2452
    %v3978 = vunpack.c.l.b16 %v2453
    %v3979 = vunpack.c.h.b16 %v2453
    %v3980 = vunpack.c.l.b16 %v2454
    %v3981 = vunpack.c.h.b16 %v2454
    %v3982 = vunpack.c.l.b16 %v2455
    %v3983 = vunpack.c.h.b16 %v2455
    %v3984 = vunpack.c.l.b16 %v2456
    %v3985 = vunpack.c.h.b16 %v2456
    %v3986 = vunpack.c.l.b16 %v2457
    %v3987 = vunpack.c.h.b16 %v2457
    %v3988 = vunpack.c.l.b16 %v2458
    %v3989 = vunpack.c.h.b16 %v2458
    %v3990 = vunpack.c.l.b16 %v2459
    %v3991 = vunpack.c.h.b16 %v2459
    %v3992 = vunpack.c.l.b16 %v2460
    %v3993 = vunpack.c.h.b16 %v2460
    %v3994 = vunpack.c.l.b16 %v2461
    %v3995 = vunpack.c.h.b16 %v2461
    %v3996 = vunpack.c.l.b16 %v2462
    %v3997 = vunpack.c.h.b16 %v2462
    %v3998 = vunpack.c.l.b16 %v2463
    %v3999 = vunpack.c.h.b16 %v2463
    %v4000 = vunpack.c.l.b16 %v2464
    %v4001 = vunpack.c.h.b16 %v2464
    %v4002 = vunpack.c.l.b16 %v2465
    %v4003 = vunpack.c.h.b16 %v2465
    %v4004 = vunpack.c.l.b16 %v2466
    %v4005 = vunpack.c.h.b16 %v2466
    %v4006 = vunpack.c.l.b16 %v2467
    %v4007 = vunpack.c.h.b16 %v2467
    %v4008 = vunpack.c.l.b16 %v2468
    %v4009 = vunpack.c.h.b16 %v2468
    %v4010 = vunpack.c.l.b16 %v2469
    %v4011 = vunpack.c.h.b16 %v2469
    %v4012 = vunpack.c.l.b16 %v2470
    %v4013 = vunpack.c.h.b16 %v2470
    %v4014 = vunpack.c.l.b16 %v2471
    %v4015 = vunpack.c.h.b16 %v2471
    %v4016 = vunpack.c.l.b16 %v2472
    %v4017 = vunpack.c.h.b16 %v2472
    %v4018 = vunpack.c.l.b16 %v2473
    %v4019 = vunpack.c.h.b16 %v2473
    %v4020 = vunpack.c.l.b16 %v2474
    %v4021 = vunpack.c.h.b16 %v2474
    %v4022 = vunpack.c.l.b16 %v2475
    %v4023 = vunpack.c.h.b16 %v2475
    %v4024 = vunpack.c.l.b16 %v2476
    %v4025 = vunpack.c.h.b16 %v2476
    %v4026 = vunpack.c.l.b16 %v2477
    %v4027 = vunpack.c.h.b16 %v2477
    %v4028 = vunpack.c.l.b16 %v2478
    %v4029 = vunpack.c.h.b16 %v2478
    %v4030 = vunpack.c.l.b16 %v2479
    %v4031 = vunpack.c.h.b16 %v2479
    %v4032 = vunpack.c.l.b16 %v2480
    %v4033 = vunpack.c.h.b16 %v2480
    %v4034 = vunpack.c.l.b16 %v2481
    %v4035 = vunpack.c.h.b16 %v2481
    %v4036 = vunpack.c.l.b16 %v2482
    %v4037 = vunpack.c.h.b16 %v2482
    %v4038 = vunpack.c.l.b16 %v2483
    %v4039 = vunpack.c.h.b16 %v2483
    %v4040 = vunpack.c.l.b16 %v2484
    %v4041 = vunpack.c.h.b16 %v2484
    %v4042 = vunpack.c.l.b16 %v2485
    %v4043 = vunpack.c.h.b16 %v2485
    %v4044 = vunpack.c.l.b16 %v2486
    %v4045 = vunpack.c.h.b16 %v2486
    %v4046 = vunpack.c.l.b16 %v2487
    %v4047 = vunpack.c.h.b16 %v2487
    %v4048 = vunpack.c.l.b16 %v2488
    %v4049 = vunpack.c.h.b16 %v2488
    %v4050 = vunpack.c.l.b16 %v2489
    %v4051 = vunpack.c.h.b16 %v2489
    %v4052 = vunpack.c.l.b16 %v2490
    %v4053 = vunpack.c.h.b16 %v2490
    %v4054 = vunpack.c.l.b16 %v2491
    %v4055 = vunpack.c.h.b16 %v2491
    %v4056 = vunpack.c.l.b16 %v2492
    %v4057 = vunpack.c.h.b16 %v2492
    %v4058 = vunpack.c.l.b16 %v2493
    %v4059 = vunpack.c.h.b16 %v2493
    %v4060 = vunpack.c.l.b16 %v2494
    %v4061 = vunpack.c.h.b16 %v2494
    %v4062 = vunpack.c.l.b16 %v2495
    %v4063 = vunpack.c.h.b16 %v2495
    %v4064 = vunpack.c.l.b16 %v2496
    %v4065 = vunpack.c.h.b16 %v2496
    %v4066 = vunpack.c.l.b16 %v2497
    %v4067 = vunpack.c.h.b16 %v2497
    %v4068 = vunpack.c.l.b16 %v2498
    %v4069 = vunpack.c.h.b16 %v2498
    %v4070 = vunpack.c.l.b16 %v2499
    %v4071 = vunpack.c.h.b16 %v2499
    %v4072 = vunpack.c.l.b16 %v2500
    %v4073 = vunpack.c.h.b16 %v2500
    %v4074 = vunpack.c.l.b16 %v2501
    %v4075 = vunpack.c.h.b16 %v2501
    %v4076 = vunpack.c.l.b16 %v2502
    %v4077 = vunpack.c.h.b16 %v2502
    %v4078 = vunpack.c.l.b16 %v2503
    %v4079 = vunpack.c.h.b16 %v2503
    %v4080 = vunpack.c.l.b16 %v2504
    %v4081 = vunpack.c.h.b16 %v2504
    %v4082 = vunpack.c.l.b16 %v2505
    %v4083 = vunpack.c.h.b16 %v2505
    %v4084 = vpack.c.b16 %v3068, %v3060
    %v4085 = vpack.c.b16 %v3069, %v3061
    %v4086 = vpack.c.b16 %v3070, %v3062
    %v4087 = vpack.c.b16 %v3071, %v3063
    %v4088 = vpack.c.b16 %v3072, %v3064
    %v4089 = vpack.c.b16 %v3073, %v3065
    %v4090 = vpack.c.b16 %v3074, %v3066
    %v4091 = vpack.c.b16 %v3075, %v3067
    %v4092 = vpack.c.b16 %v3084, %v3076
    %v4093 = vpack.c.b16 %v3085, %v3077
    %v4094 = vpack.c.b16 %v3086, %v3078
    %v4095 = vpack.c.b16 %v3087, %v3079
    %v4096 = vpack.c.b16 %v3088, %v3080
    %v4097 = vpack.c.b16 %v3089, %v3081
    %v4098 = vpack.c.b16 %v3090, %v3082
    %v4099 = vpack.c.b16 %v3091, %v3083
    %v4100 = vpack.c.b16 %v3100, %v3092
    %v4101 = vpack.c.b16 %v3101, %v3093
    %v4102 = vpack.c.b16 %v3102, %v3094
    %v4103 = vpack.c.b16 %v3103, %v3095
    %v4104 = vpack.c.b16 %v3104, %v3096
    %v4105 = vpack.c.b16 %v3105, %v3097
    %v4106 = vpack.c.b16 %v3106, %v3098
    %v4107 = vpack.c.b16 %v3107, %v3099
    %v4108 = vpack.c.b16 %v3116, %v3108
    %v4109 = vpack.c.b16 %v3117, %v3109
    %v4110 = vpack.c.b16 %v3118, %v3110
    %v4111 = vpack.c.b16 %v3119, %v3111
    %v4112 = vpack.c.b16 %v3120, %v3112
    %v4113 = vpack.c.b16 %v3121, %v3113
    %v4114 = vpack.c.b16 %v3122, %v3114
    %v4115 = vpack.c.b16 %v3123, %v3115
    %v4116 = vpack.c.b16 %v3132, %v3124
    %v4117 = vpack.c.b16 %v3133, %v3125
    %v4118 = vpack.c.b16 %v3134, %v3126
    %v4119 = vpack.c.b16 %v3135, %v3127
    %v4120 = vpack.c.b16 %v3136, %v3128
    %v4121 = vpack.c.b16 %v3137, %v3129
    %v4122 = vpack.c.b16 %v3138, %v3130
    %v4123 = vpack.c.b16 %v3139, %v3131
    %v4124 = vpack.c.b16 %v3148, %v3140
    %v4125 = vpack.c.b16 %v3149, %v3141
    %v4126 = vpack.c.b16 %v3150, %v3142
    %v4127 = vpack.c.b16 %v3151, %v3143
    %v4128 = vpack.c.b16 %v3152, %v3144
    %v4129 = vpack.c.b16 %v3153, %v3145
    %v4130 = vpack.c.b16 %v3154, %v3146
    %v4131 = vpack.c.b16 %v3155, %v3147
    %v4132 = vpack.c.b16 %v3164, %v3156
    %v4133 = vpack.c.b16 %v3165, %v3157
    %v4134 = vpack.c.b16 %v3166, %v3158
    %v4135 = vpack.c.b16 %v3167, %v3159
    %v4136 = vpack.c.b16 %v3168, %v3160
    %v4137 = vpack.c.b16 %v3169, %v3161
    %v4138 = vpack.c.b16 %v3170, %v3162
    %v4139 = vpack.c.b16 %v3171, %v3163
    %v4140 = vpack.c.b16 %v3180, %v3172
    %v4141 = vpack.c.b16 %v3181, %v3173
    %v4142 = vpack.c.b16 %v3182, %v3174
    %v4143 = vpack.c.b16 %v3183, %v3175
    %v4144 = vpack.c.b16 %v3184, %v3176
    %v4145 = vpack.c.b16 %v3185, %v3177
    %v4146 = vpack.c.b16 %v3186, %v3178
    %v4147 = vpack.c.b16 %v3187, %v3179
    %v4148 = vpack.c.b16 %v3196, %v3188
    %v4149 = vpack.c.b16 %v3197, %v3189
    %v4150 = vpack.c.b16 %v3198, %v3190
    %v4151 = vpack.c.b16 %v3199, %v3191
    %v4152 = vpack.c.b16 %v3200, %v3192
    %v4153 = vpack.c.b16 %v3201, %v3193
    %v4154 = vpack.c.b16 %v3202, %v3194
    %v4155 = vpack.c.b16 %v3203, %v3195
    %v4156 = vpack.c.b16 %v3212, %v3204
    %v4157 = vpack.c.b16 %v3213, %v3205
    %v4158 = vpack.c.b16 %v3214, %v3206
    %v4159 = vpack.c.b16 %v3215, %v3207
    %v4160 = vpack.c.b16 %v3216, %v3208
    %v4161 = vpack.c.b16 %v3217, %v3209
    %v4162 = vpack.c.b16 %v3218, %v3210
    %v4163 = vpack.c.b16 %v3219, %v3211
    %v4164 = vpack.c.b16 %v3228, %v3220
    %v4165 = vpack.c.b16 %v3229, %v3221
    %v4166 = vpack.c.b16 %v3230, %v3222
    %v4167 = vpack.c.b16 %v3231, %v3223
    %v4168 = vpack.c.b16 %v3232, %v3224
    %v4169 = vpack.c.b16 %v3233, %v3225
    %v4170 = vpack.c.b16 %v3234, %v3226
    %v4171 = vpack.c.b16 %v3235, %v3227
    %v4172 = vpack.c.b16 %v3244, %v3236
    %v4173 = vpack.c.b16 %v3245, %v3237
    %v4174 = vpack.c.b16 %v3246, %v3238
    %v4175 = vpack.c.b16 %v3247, %v3239
    %v4176 = vpack.c.b16 %v3248, %v3240
    %v4177 = vpack.c.b16 %v3249, %v3241
    %v4178 = vpack.c.b16 %v3250, %v3242
    %v4179 = vpack.c.b16 %v3251, %v3243
    %v4180 = vpack.c.b16 %v3260, %v3252
    %v4181 = vpack.c.b16 %v3261, %v3253
    %v4182 = vpack.c.b16 %v3262, %v3254
    %v4183 = vpack.c.b16 %v3263, %v3255
    %v4184 = vpack.c.b16 %v3264, %v3256
    %v4185 = vpack.c.b16 %v3265, %v3257
    %v4186 = vpack.c.b16 %v3266, %v3258
    %v4187 = vpack.c.b16 %v3267, %v3259
    %v4188 = vpack.c.b16 %v3276, %v3268
    %v4189 = vpack.c.b16 %v3277, %v3269
    %v4190 = vpack.c.b16 %v3278, %v3270
    %v4191 = vpack.c.b16 %v3279, %v3271
    %v4192 = vpack.c.b16 %v3280, %v3272
    %v4193 = vpack.c.b16 %v3281, %v3273
    %v4194 = vpack.c.b16 %v3282, %v3274
    %v4195 = vpack.c.b16 %v3283, %v3275
    %v4196 = vpack.c.b16 %v3292, %v3284
    %v4197 = vpack.c.b16 %v3293, %v3285
    %v4198 = vpack.c.b16 %v3294, %v3286
    %v4199 = vpack.c.b16 %v3295, %v3287
    %v4200 = vpack.c.b16 %v3296, %v3288
    %v4201 = vpack.c.b16 %v3297, %v3289
    %v4202 = vpack.c.b16 %v3298, %v3290
    %v4203 = vpack.c.b16 %v3299, %v3291
    %v4204 = vpack.c.b16 %v3308, %v3300
    %v4205 = vpack.c.b16 %v3309, %v3301
    %v4206 = vpack.c.b16 %v3310, %v3302
    %v4207 = vpack.c.b16 %v3311, %v3303
    %v4208 = vpack.c.b16 %v3312, %v3304
    %v4209 = vpack.c.b16 %v3313, %v3305
    %v4210 = vpack.c.b16 %v3314, %v3306
    %v4211 = vpack.c.b16 %v3315, %v3307
    %v4212 = vpack.c.b16 %v3324, %v3316
    %v4213 = vpack.c.b16 %v3325, %v3317
    %v4214 = vpack.c.b16 %v3326, %v3318
    %v4215 = vpack.c.b16 %v3327, %v3319
    %v4216 = vpack.c.b16 %v3328, %v3320
    %v4217 = vpack.c.b16 %v3329, %v3321
    %v4218 = vpack.c.b16 %v3330, %v3322
    %v4219 = vpack.c.b16 %v3331, %v3323
    %v4220 = vpack.c.b16 %v3340, %v3332
    %v4221 = vpack.c.b16 %v3341, %v3333
    %v4222 = vpack.c.b16 %v3342, %v3334
    %v4223 = vpack.c.b16 %v3343, %v3335
    %v4224 = vpack.c.b16 %v3344, %v3336
    %v4225 = vpack.c.b16 %v3345, %v3337
    %v4226 = vpack.c.b16 %v3346, %v3338
    %v4227 = vpack.c.b16 %v3347, %v3339
    %v4228 = vpack.c.b16 %v3356, %v3348
    %v4229 = vpack.c.b16 %v3357, %v3349
    %v4230 = vpack.c.b16 %v3358, %v3350
    %v4231 = vpack.c.b16 %v3359, %v3351
    %v4232 = vpack.c.b16 %v3360, %v3352
    %v4233 = vpack.c.b16 %v3361, %v3353
    %v4234 = vpack.c.b16 %v3362, %v3354
    %v4235 = vpack.c.b16 %v3363, %v3355
    %v4236 = vpack.c.b16 %v3372, %v3364
    %v4237 = vpack.c.b16 %v3373, %v3365
    %v4238 = vpack.c.b16 %v3374, %v3366
    %v4239 = vpack.c.b16 %v3375, %v3367
    %v4240 = vpack.c.b16 %v3376, %v3368
    %v4241 = vpack.c.b16 %v3377, %v3369
    %v4242 = vpack.c.b16 %v3378, %v3370
    %v4243 = vpack.c.b16 %v3379, %v3371
    %v4244 = vpack.c.b16 %v3388, %v3380
    %v4245 = vpack.c.b16 %v3389, %v3381
    %v4246 = vpack.c.b16 %v3390, %v3382
    %v4247 = vpack.c.b16 %v3391, %v3383
    %v4248 = vpack.c.b16 %v3392, %v3384
    %v4249 = vpack.c.b16 %v3393, %v3385
    %v4250 = vpack.c.b16 %v3394, %v3386
    %v4251 = vpack.c.b16 %v3395, %v3387
    %v4252 = vpack.c.b16 %v3404, %v3396
    %v4253 = vpack.c.b16 %v3405, %v3397
    %v4254 = vpack.c.b16 %v3406, %v3398
    %v4255 = vpack.c.b16 %v3407, %v3399
    %v4256 = vpack.c.b16 %v3408, %v3400
    %v4257 = vpack.c.b16 %v3409, %v3401
    %v4258 = vpack.c.b16 %v3410, %v3402
    %v4259 = vpack.c.b16 %v3411, %v3403
    %v4260 = vpack.c.b16 %v3420, %v3412
    %v4261 = vpack.c.b16 %v3421, %v3413
    %v4262 = vpack.c.b16 %v3422, %v3414
    %v4263 = vpack.c.b16 %v3423, %v3415
    %v4264 = vpack.c.b16 %v3424, %v3416
    %v4265 = vpack.c.b16 %v3425, %v3417
    %v4266 = vpack.c.b16 %v3426, %v3418
    %v4267 = vpack.c.b16 %v3427, %v3419
    %v4268 = vpack.c.b16 %v3436, %v3428
    %v4269 = vpack.c.b16 %v3437, %v3429
    %v4270 = vpack.c.b16 %v3438, %v3430
    %v4271 = vpack.c.b16 %v3439, %v3431
    %v4272 = vpack.c.b16 %v3440, %v3432
    %v4273 = vpack.c.b16 %v3441, %v3433
    %v4274 = vpack.c.b16 %v3442, %v3434
    %v4275 = vpack.c.b16 %v3443, %v3435
    %v4276 = vpack.c.b16 %v3452, %v3444
    %v4277 = vpack.c.b16 %v3453, %v3445
    %v4278 = vpack.c.b16 %v3454, %v3446
    %v4279 = vpack.c.b16 %v3455, %v3447
    %v4280 = vpack.c.b16 %v3456, %v3448
    %v4281 = vpack.c.b16 %v3457, %v3449
    %v4282 = vpack.c.b16 %v3458, %v3450
    %v4283 = vpack.c.b16 %v3459, %v3451
    %v4284 = vpack.c.b16 %v3468, %v3460
    %v4285 = vpack.c.b16 %v3469, %v3461
    %v4286 = vpack.c.b16 %v3470, %v3462
    %v4287 = vpack.c.b16 %v3471, %v3463
    %v4288 = vpack.c.b16 %v3472, %v3464
    %v4289 = vpack.c.b16 %v3473, %v3465
    %v4290 = vpack.c.b16 %v3474, %v3466
    %v4291 = vpack.c.b16 %v3475, %v3467
    %v4292 = vpack.c.b16 %v3484, %v3476
    %v4293 = vpack.c.b16 %v3485, %v3477
    %v4294 = vpack.c.b16 %v3486, %v3478
    %v4295 = vpack.c.b16 %v3487, %v3479
    %v4296 = vpack.c.b16 %v3488, %v3480
    %v4297 = vpack.c.b16 %v3489, %v3481
    %v4298 = vpack.c.b16 %v3490, %v3482
    %v4299 = vpack.c.b16 %v3491, %v3483
    %v4300 = vpack.c.b16 %v3500, %v3492
    %v4301 = vpack.c.b16 %v3501, %v3493
    %v4302 = vpack.c.b16 %v3502, %v3494
    %v4303 = vpack.c.b16 %v3503, %v3495
    %v4304 = vpack.c.b16 %v3504, %v3496
    %v4305 = vpack.c.b16 %v3505, %v3497
    %v4306 = vpack.c.b16 %v3506, %v3498
    %v4307 = vpack.c.b16 %v3507, %v3499
    %v4308 = vpack.c.b16 %v3516, %v3508
    %v4309 = vpack.c.b16 %v3517, %v3509
    %v4310 = vpack.c.b16 %v3518, %v3510
    %v4311 = vpack.c.b16 %v3519, %v3511
    %v4312 = vpack.c.b16 %v3520, %v3512
    %v4313 = vpack.c.b16 %v3521, %v3513
    %v4314 = vpack.c.b16 %v3522, %v3514
    %v4315 = vpack.c.b16 %v3523, %v3515
    %v4316 = vpack.c.b16 %v3532, %v3524
    %v4317 = vpack.c.b16 %v3533, %v3525
    %v4318 = vpack.c.b16 %v3534, %v3526
    %v4319 = vpack.c.b16 %v3535, %v3527
    %v4320 = vpack.c.b16 %v3536, %v3528
    %v4321 = vpack.c.b16 %v3537, %v3529
    %v4322 = vpack.c.b16 %v3538, %v3530
    %v4323 = vpack.c.b16 %v3539, %v3531
    %v4324 = vpack.c.b16 %v3548, %v3540
    %v4325 = vpack.c.b16 %v3549, %v3541
    %v4326 = vpack.c.b16 %v3550, %v3542
    %v4327 = vpack.c.b16 %v3551, %v3543
    %v4328 = vpack.c.b16 %v3552, %v3544
    %v4329 = vpack.c.b16 %v3553, %v3545
    %v4330 = vpack.c.b16 %v3554, %v3546
    %v4331 = vpack.c.b16 %v3555, %v3547
    %v4332 = vpack.c.b16 %v3564, %v3556
    %v4333 = vpack.c.b16 %v3565, %v3557
    %v4334 = vpack.c.b16 %v3566, %v3558
    %v4335 = vpack.c.b16 %v3567, %v3559
    %v4336 = vpack.c.b16 %v3568, %v3560
    %v4337 = vpack.c.b16 %v3569, %v3561
    %v4338 = vpack.c.b16 %v3570, %v3562
    %v4339 = vpack.c.b16 %v3571, %v3563
    %v4340 = vpack.c.b16 %v3580, %v3572
    %v4341 = vpack.c.b16 %v3581, %v3573
    %v4342 = vpack.c.b16 %v3582, %v3574
    %v4343 = vpack.c.b16 %v3583, %v3575
    %v4344 = vpack.c.b16 %v3584, %v3576
    %v4345 = vpack.c.b16 %v3585, %v3577
    %v4346 = vpack.c.b16 %v3586, %v3578
    %v4347 = vpack.c.b16 %v3587, %v3579
    %v4348 = vpack.c.b16 %v3596, %v3588
    %v4349 = vpack.c.b16 %v3597, %v3589
    %v4350 = vpack.c.b16 %v3598, %v3590
    %v4351 = vpack.c.b16 %v3599, %v3591
    %v4352 = vpack.c.b16 %v3600, %v3592
    %v4353 = vpack.c.b16 %v3601, %v3593
    %v4354 = vpack.c.b16 %v3602, %v3594
    %v4355 = vpack.c.b16 %v3603, %v3595
    %v4356 = vpack.c.b16 %v3612, %v3604
    %v4357 = vpack.c.b16 %v3613, %v3605
    %v4358 = vpack.c.b16 %v3614, %v3606
    %v4359 = vpack.c.b16 %v3615, %v3607
    %v4360 = vpack.c.b16 %v3616, %v3608
    %v4361 = vpack.c.b16 %v3617, %v3609
    %v4362 = vpack.c.b16 %v3618, %v3610
    %v4363 = vpack.c.b16 %v3619, %v3611
    %v4364 = vpack.c.b16 %v3628, %v3620
    %v4365 = vpack.c.b16 %v3629, %v3621
    %v4366 = vpack.c.b16 %v3630, %v3622
    %v4367 = vpack.c.b16 %v3631, %v3623
    %v4368 = vpack.c.b16 %v3632, %v3624
    %v4369 = vpack.c.b16 %v3633, %v3625
    %v4370 = vpack.c.b16 %v3634, %v3626
    %v4371 = vpack.c.b16 %v3635, %v3627
    %v4372 = vpack.c.b16 %v3644, %v3636
    %v4373 = vpack.c.b16 %v3645, %v3637
    %v4374 = vpack.c.b16 %v3646, %v3638
    %v4375 = vpack.c.b16 %v3647, %v3639
    %v4376 = vpack.c.b16 %v3648, %v3640
    %v4377 = vpack.c.b16 %v3649, %v3641
    %v4378 = vpack.c.b16 %v3650, %v3642
    %v4379 = vpack.c.b16 %v3651, %v3643
    %v4380 = vpack.c.b16 %v3660, %v3652
    %v4381 = vpack.c.b16 %v3661, %v3653
    %v4382 = vpack.c.b16 %v3662, %v3654
    %v4383 = vpack.c.b16 %v3663, %v3655
    %v4384 = vpack.c.b16 %v3664, %v3656
    %v4385 = vpack.c.b16 %v3665, %v3657
    %v4386 = vpack.c.b16 %v3666, %v3658
    %v4387 = vpack.c.b16 %v3667, %v3659
    %v4388 = vpack.c.b16 %v3676, %v3668
    %v4389 = vpack.c.b16 %v3677, %v3669
    %v4390 = vpack.c.b16 %v3678, %v3670
    %v4391 = vpack.c.b16 %v3679, %v3671
    %v4392 = vpack.c.b16 %v3680, %v3672
    %v4393 = vpack.c.b16 %v3681, %v3673
    %v4394 = vpack.c.b16 %v3682, %v3674
    %v4395 = vpack.c.b16 %v3683, %v3675
    %v4396 = vpack.c.b16 %v3692, %v3684
    %v4397 = vpack.c.b16 %v3693, %v3685
    %v4398 = vpack.c.b16 %v3694, %v3686
    %v4399 = vpack.c.b16 %v3695, %v3687
    %v4400 = vpack.c.b16 %v3696, %v3688
    %v4401 = vpack.c.b16 %v3697, %v3689
    %v4402 = vpack.c.b16 %v3698, %v3690
    %v4403 = vpack.c.b16 %v3699, %v3691
    %v4404 = vpack.c.b16 %v3708, %v3700
    %v4405 = vpack.c.b16 %v3709, %v3701
    %v4406 = vpack.c.b16 %v3710, %v3702
    %v4407 = vpack.c.b16 %v3711, %v3703
    %v4408 = vpack.c.b16 %v3712, %v3704
    %v4409 = vpack.c.b16 %v3713, %v3705
    %v4410 = vpack.c.b16 %v3714, %v3706
    %v4411 = vpack.c.b16 %v3715, %v3707
    %v4412 = vpack.c.b16 %v3724, %v3716
    %v4413 = vpack.c.b16 %v3725, %v3717
    %v4414 = vpack.c.b16 %v3726, %v3718
    %v4415 = vpack.c.b16 %v3727, %v3719
    %v4416 = vpack.c.b16 %v3728, %v3720
    %v4417 = vpack.c.b16 %v3729, %v3721
    %v4418 = vpack.c.b16 %v3730, %v3722
    %v4419 = vpack.c.b16 %v3731, %v3723
    %v4420 = vpack.c.b16 %v3740, %v3732
    %v4421 = vpack.c.b16 %v3741, %v3733
    %v4422 = vpack.c.b16 %v3742, %v3734
    %v4423 = vpack.c.b16 %v3743, %v3735
    %v4424 = vpack.c.b16 %v3744, %v3736
    %v4425 = vpack.c.b16 %v3745, %v3737
    %v4426 = vpack.c.b16 %v3746, %v3738
    %v4427 = vpack.c.b16 %v3747, %v3739
    %v4428 = vpack.c.b16 %v3756, %v3748
    %v4429 = vpack.c.b16 %v3757, %v3749
    %v4430 = vpack.c.b16 %v3758, %v3750
    %v4431 = vpack.c.b16 %v3759, %v3751
    %v4432 = vpack.c.b16 %v3760, %v3752
    %v4433 = vpack.c.b16 %v3761, %v3753
    %v4434 = vpack.c.b16 %v3762, %v3754
    %v4435 = vpack.c.b16 %v3763, %v3755
    %v4436 = vpack.c.b16 %v3772, %v3764
    %v4437 = vpack.c.b16 %v3773, %v3765
    %v4438 = vpack.c.b16 %v3774, %v3766
    %v4439 = vpack.c.b16 %v3775, %v3767
    %v4440 = vpack.c.b16 %v3776, %v3768
    %v4441 = vpack.c.b16 %v3777, %v3769
    %v4442 = vpack.c.b16 %v3778, %v3770
    %v4443 = vpack.c.b16 %v3779, %v3771
    %v4444 = vpack.c.b16 %v3788, %v3780
    %v4445 = vpack.c.b16 %v3789, %v3781
    %v4446 = vpack.c.b16 %v3790, %v3782
    %v4447 = vpack.c.b16 %v3791, %v3783
    %v4448 = vpack.c.b16 %v3792, %v3784
    %v4449 = vpack.c.b16 %v3793, %v3785
    %v4450 = vpack.c.b16 %v3794, %v3786
    %v4451 = vpack.c.b16 %v3795, %v3787
    %v4452 = vpack.c.b16 %v3804, %v3796
    %v4453 = vpack.c.b16 %v3805, %v3797
    %v4454 = vpack.c.b16 %v3806, %v3798
    %v4455 = vpack.c.b16 %v3807, %v3799
    %v4456 = vpack.c.b16 %v3808, %v3800
    %v4457 = vpack.c.b16 %v3809, %v3801
    %v4458 = vpack.c.b16 %v3810, %v3802
    %v4459 = vpack.c.b16 %v3811, %v3803
    %v4460 = vpack.c.b16 %v3820, %v3812
    %v4461 = vpack.c.b16 %v3821, %v3813
    %v4462 = vpack.c.b16 %v3822, %v3814
    %v4463 = vpack.c.b16 %v3823, %v3815
    %v4464 = vpack.c.b16 %v3824, %v3816
    %v4465 = vpack.c.b16 %v3825, %v3817
    %v4466 = vpack.c.b16 %v3826, %v3818
    %v4467 = vpack.c.b16 %v3827, %v3819
    %v4468 = vpack.c.b16 %v3836, %v3828
    %v4469 = vpack.c.b16 %v3837, %v3829
    %v4470 = vpack.c.b16 %v3838, %v3830
    %v4471 = vpack.c.b16 %v3839, %v3831
    %v4472 = vpack.c.b16 %v3840, %v3832
    %v4473 = vpack.c.b16 %v3841, %v3833
    %v4474 = vpack.c.b16 %v3842, %v3834
    %v4475 = vpack.c.b16 %v3843, %v3835
    %v4476 = vpack.c.b16 %v3852, %v3844
    %v4477 = vpack.c.b16 %v3853, %v3845
    %v4478 = vpack.c.b16 %v3854, %v3846
    %v4479 = vpack.c.b16 %v3855, %v3847
    %v4480 = vpack.c.b16 %v3856, %v3848
    %v4481 = vpack.c.b16 %v3857, %v3849
    %v4482 = vpack.c.b16 %v3858, %v3850
    %v4483 = vpack.c.b16 %v3859, %v3851
    %v4484 = vpack.c.b16 %v3868, %v3860
    %v4485 = vpack.c.b16 %v3869, %v3861
    %v4486 = vpack.c.b16 %v3870, %v3862
    %v4487 = vpack.c.b16 %v3871, %v3863
    %v4488 = vpack.c.b16 %v3872, %v3864
    %v4489 = vpack.c.b16 %v3873, %v3865
    %v4490 = vpack.c.b16 %v3874, %v3866
    %v4491 = vpack.c.b16 %v3875, %v3867
    %v4492 = vpack.c.b16 %v3884, %v3876
    %v4493 = vpack.c.b16 %v3885, %v3877
    %v4494 = vpack.c.b16 %v3886, %v3878
    %v4495 = vpack.c.b16 %v3887, %v3879
    %v4496 = vpack.c.b16 %v3888, %v3880
    %v4497 = vpack.c.b16 %v3889, %v3881
    %v4498 = vpack.c.b16 %v3890, %v3882
    %v4499 = vpack.c.b16 %v3891, %v3883
    %v4500 = vpack.c.b16 %v3900, %v3892
    %v4501 = vpack.c.b16 %v3901, %v3893
    %v4502 = vpack.c.b16 %v3902, %v3894
    %v4503 = vpack.c.b16 %v3903, %v3895
    %v4504 = vpack.c.b16 %v3904, %v3896
    %v4505 = vpack.c.b16 %v3905, %v3897
    %v4506 = vpack.c.b16 %v3906, %v3898
    %v4507 = vpack.c.b16 %v3907, %v3899
    %v4508 = vpack.c.b16 %v3916, %v3908
    %v4509 = vpack.c.b16 %v3917, %v3909
    %v4510 = vpack.c.b16 %v3918, %v3910
    %v4511 = vpack.c.b16 %v3919, %v3911
    %v4512 = vpack.c.b16 %v3920, %v3912
    %v4513 = vpack.c.b16 %v3921, %v3913
    %v4514 = vpack.c.b16 %v3922, %v3914
    %v4515 = vpack.c.b16 %v3923, %v3915
    %v4516 = vpack.c.b16 %v3932, %v3924
    %v4517 = vpack.c.b16 %v3933, %v3925
    %v4518 = vpack.c.b16 %v3934, %v3926
    %v4519 = vpack.c.b16 %v3935, %v3927
    %v4520 = vpack.c.b16 %v3936, %v3928
    %v4521 = vpack.c.b16 %v3937, %v3929
    %v4522 = vpack.c.b16 %v3938, %v3930
    %v4523 = vpack.c.b16 %v3939, %v3931
    %v4524 = vpack.c.b16 %v3948, %v3940
    %v4525 = vpack.c.b16 %v3949, %v3941
    %v4526 = vpack.c.b16 %v3950, %v3942
    %v4527 = vpack.c.b16 %v3951, %v3943
    %v4528 = vpack.c.b16 %v3952, %v3944
    %v4529 = vpack.c.b16 %v3953, %v3945
    %v4530 = vpack.c.b16 %v3954, %v3946
    %v4531 = vpack.c.b16 %v3955, %v3947
    %v4532 = vpack.c.b16 %v3964, %v3956
    %v4533 = vpack.c.b16 %v3965, %v3957
    %v4534 = vpack.c.b16 %v3966, %v3958
    %v4535 = vpack.c.b16 %v3967, %v3959
    %v4536 = vpack.c.b16 %v3968, %v3960
    %v4537 = vpack.c.b16 %v3969, %v3961
    %v4538 = vpack.c.b16 %v3970, %v3962
    %v4539 = vpack.c.b16 %v3971, %v3963
    %v4540 = vpack.c.b16 %v3980, %v3972
    %v4541 = vpack.c.b16 %v3981, %v3973
    %v4542 = vpack.c.b16 %v3982, %v3974
    %v4543 = vpack.c.b16 %v3983, %v3975
    %v4544 = vpack.c.b16 %v3984, %v3976
    %v4545 = vpack.c.b16 %v3985, %v3977
    %v4546 = vpack.c.b16 %v3986, %v3978
    %v4547 = vpack.c.b16 %v3987, %v3979
    %v4548 = vpack.c.b16 %v3996, %v3988
    %v4549 = vpack.c.b16 %v3997, %v3989
    %v4550 = vpack.c.b16 %v3998, %v3990
    %v4551 = vpack.c.b16 %v3999, %v3991
    %v4552 = vpack.c.b16 %v4000, %v3992
    %v4553 = vpack.c.b16 %v4001, %v3993
    %v4554 = vpack.c.b16 %v4002, %v3994
    %v4555 = vpack.c.b16 %v4003, %v3995
    %v4556 = vpack.c.b16 %v4012, %v4004
    %v4557 = vpack.c.b16 %v4013, %v4005
    %v4558 = vpack.c.b16 %v4014, %v4006
    %v4559 = vpack.c.b16 %v4015, %v4007
    %v4560 = vpack.c.b16 %v4016, %v4008
    %v4561 = vpack.c.b16 %v4017, %v4009
    %v4562 = vpack.c.b16 %v4018, %v4010
    %v4563 = vpack.c.b16 %v4019, %v4011
    %v4564 = vpack.c.b16 %v4028, %v4020
    %v4565 = vpack.c.b16 %v4029, %v4021
    %v4566 = vpack.c.b16 %v4030, %v4022
    %v4567 = vpack.c.b16 %v4031, %v4023
    %v4568 = vpack.c.b16 %v4032, %v4024
    %v4569 = vpack.c.b16 %v4033, %v4025
    %v4570 = vpack.c.b16 %v4034, %v4026
    %v4571 = vpack.c.b16 %v4035, %v4027
    %v4572 = vpack.c.b16 %v4044, %v4036
    %v4573 = vpack.c.b16 %v4045, %v4037
    %v4574 = vpack.c.b16 %v4046, %v4038
    %v4575 = vpack.c.b16 %v4047, %v4039
    %v4576 = vpack.c.b16 %v4048, %v4040
    %v4577 = vpack.c.b16 %v4049, %v4041
    %v4578 = vpack.c.b16 %v4050, %v4042
    %v4579 = vpack.c.b16 %v4051, %v4043
    %v4580 = vpack.c.b16 %v4060, %v4052
    %v4581 = vpack.c.b16 %v4061, %v4053
    %v4582 = vpack.c.b16 %v4062, %v4054
    %v4583 = vpack.c.b16 %v4063, %v4055
    %v4584 = vpack.c.b16 %v4064, %v4056
    %v4585 = vpack.c.b16 %v4065, %v4057
    %v4586 = vpack.c.b16 %v4066, %v4058
    %v4587 = vpack.c.b16 %v4067, %v4059
    %v4588 = vpack.c.b16 %v4076, %v4068
    %v4589 = vpack.c.b16 %v4077, %v4069
    %v4590 = vpack.c.b16 %v4078, %v4070
    %v4591 = vpack.c.b16 %v4079, %v4071
    %v4592 = vpack.c.b16 %v4080, %v4072
    %v4593 = vpack.c.b16 %v4081, %v4073
    %v4594 = vpack.c.b16 %v4082, %v4074
    %v4595 = vpack.c.b16 %v4083, %v4075
    %5108 = vmatprep.subr.bf16.mxu0 %v4085
    %5109 = vmatpush1.bf16.msra.mxu0 %v4084
    %5110 = vmatprep.subr.bf16.mxu0 %v4093
    %5111 = vmatpush1.bf16.msra.mxu0 %v4092
    %5112 = vmatprep.subr.bf16.mxu0 %v4101
    %5113 = vmatpush1.bf16.msra.mxu0 %v4100
    %5114 = vmatprep.subr.bf16.mxu0 %v4109
    %5115 = vmatpush1.bf16.msra.mxu0 %v4108
    %5116 = vmatprep.subr.bf16.mxu0 %v4117
    %5117 = vmatpush1.bf16.msra.mxu0 %v4116
    %5118 = vmatprep.subr.bf16.mxu0 %v4125
    %5119 = vmatpush1.bf16.msra.mxu0 %v4124
    %5120 = vmatprep.subr.bf16.mxu0 %v4133
    %5121 = vmatpush1.bf16.msra.mxu0 %v4132
    %5122 = vmatprep.subr.bf16.mxu0 %v4141
    %5123 = vmatpush1.bf16.msra.mxu0 %v4140
    %5124 = vmatprep.subr.bf16.mxu0 %v4149
    %5125 = vmatpush1.bf16.msra.mxu0 %v4148
    %5126 = vmatprep.subr.bf16.mxu0 %v4157
    %5127 = vmatpush1.bf16.msra.mxu0 %v4156
    %5128 = vmatprep.subr.bf16.mxu0 %v4165
    %5129 = vmatpush1.bf16.msra.mxu0 %v4164
    %5130 = vmatprep.subr.bf16.mxu0 %v4173
    %5131 = vmatpush1.bf16.msra.mxu0 %v4172
    %5132 = vmatprep.subr.bf16.mxu0 %v4181
    %5133 = vmatpush1.bf16.msra.mxu0 %v4180
    %5134 = vmatprep.subr.bf16.mxu0 %v4189
    %5135 = vmatpush1.bf16.msra.mxu0 %v4188
    %5136 = vmatprep.subr.bf16.mxu0 %v4197
    %5137 = vmatpush1.bf16.msra.mxu0 %v4196
    %5138 = vmatprep.subr.bf16.mxu0 %v4205
    %5139 = vmatpush1.bf16.msra.mxu0 %v4204
    %5140 = vmatprep.mubr.bf16.mxu0 %v1987
    %5141 = vmatmul.mubr.bf16.gmra.mrb[0].mxu0 %v1986
    %v5142 = vpop.f32.mrb[0].mxu0
    %v5143 = vadd.f32 %v2511, %v5142
    %v5144 = vpop.f32.mrb[0].mxu0
    %v5145 = vadd.f32 %v2515, %v5144
    %v5146 = vpop.f32.mrb[0].mxu0
    %v5147 = vpop.f32.mrb[0].mxu0
    %5148 = vdwg.mxu0
    %5149 = vmatprep.subr.bf16.mxu0 %v4213
    %5150 = vmatpush1.bf16.msra.mxu0 %v4212
    %5151 = vmatprep.subr.bf16.mxu0 %v4221
    %5152 = vmatpush1.bf16.msra.mxu0 %v4220
    %5153 = vmatprep.subr.bf16.mxu0 %v4229
    %5154 = vmatpush1.bf16.msra.mxu0 %v4228
    %5155 = vmatprep.subr.bf16.mxu0 %v4237
    %5156 = vmatpush1.bf16.msra.mxu0 %v4236
    %5157 = vmatprep.subr.bf16.mxu0 %v4245
    %5158 = vmatpush1.bf16.msra.mxu0 %v4244
    %5159 = vmatprep.subr.bf16.mxu0 %v4253
    %5160 = vmatpush1.bf16.msra.mxu0 %v4252
    %5161 = vmatprep.subr.bf16.mxu0 %v4261
    %5162 = vmatpush1.bf16.msra.mxu0 %v4260
    %5163 = vmatprep.subr.bf16.mxu0 %v4269
    %5164 = vmatpush1.bf16.msra.mxu0 %v4268
    %5165 = vmatprep.subr.bf16.mxu0 %v4277
    %5166 = vmatpush1.bf16.msra.mxu0 %v4276
    %5167 = vmatprep.subr.bf16.mxu0 %v4285
    %5168 = vmatpush1.bf16.msra.mxu0 %v4284
    %5169 = vmatprep.subr.bf16.mxu0 %v4293
    %5170 = vmatpush1.bf16.msra.mxu0 %v4292
    %5171 = vmatprep.subr.bf16.mxu0 %v4301
    %5172 = vmatpush1.bf16.msra.mxu0 %v4300
    %5173 = vmatprep.subr.bf16.mxu0 %v4309
    %5174 = vmatpush1.bf16.msra.mxu0 %v4308
    %5175 = vmatprep.subr.bf16.mxu0 %v4317
    %5176 = vmatpush1.bf16.msra.mxu0 %v4316
    %5177 = vmatprep.subr.bf16.mxu0 %v4325
    %5178 = vmatpush1.bf16.msra.mxu0 %v4324
    %5179 = vmatprep.subr.bf16.mxu0 %v4333
    %5180 = vmatpush1.bf16.msra.mxu0 %v4332
    %5181 = vmatprep.mubr.bf16.mxu0 %v1989
    %5182 = vmatmul.mubr.bf16.gmra.mrb[0].mxu0 %v1988
    %v5183 = vpop.f32.mrb[0].mxu0
    %v5184 = vadd.f32 %v5143, %v5183
    %v5185 = vpop.f32.mrb[0].mxu0
    %v5186 = vadd.f32 %v5145, %v5185
    %v5187 = vpop.f32.mrb[0].mxu0
    %v5188 = vpop.f32.mrb[0].mxu0
    %5189 = vdwg.mxu0
    %5190 = vmatprep.subr.bf16.mxu0 %v4341
    %5191 = vmatpush1.bf16.msra.mxu0 %v4340
    %5192 = vmatprep.subr.bf16.mxu0 %v4349
    %5193 = vmatpush1.bf16.msra.mxu0 %v4348
    %5194 = vmatprep.subr.bf16.mxu0 %v4357
    %5195 = vmatpush1.bf16.msra.mxu0 %v4356
    %5196 = vmatprep.subr.bf16.mxu0 %v4365
    %5197 = vmatpush1.bf16.msra.mxu0 %v4364
    %5198 = vmatprep.subr.bf16.mxu0 %v4373
    %5199 = vmatpush1.bf16.msra.mxu0 %v4372
    %5200 = vmatprep.subr.bf16.mxu0 %v4381
    %5201 = vmatpush1.bf16.msra.mxu0 %v4380
    %5202 = vmatprep.subr.bf16.mxu0 %v4389
    %5203 = vmatpush1.bf16.msra.mxu0 %v4388
    %5204 = vmatprep.subr.bf16.mxu0 %v4397
    %5205 = vmatpush1.bf16.msra.mxu0 %v4396
    %5206 = vmatprep.subr.bf16.mxu0 %v4405
    %5207 = vmatpush1.bf16.msra.mxu0 %v4404
    %5208 = vmatprep.subr.bf16.mxu0 %v4413
    %5209 = vmatpush1.bf16.msra.mxu0 %v4412
    %5210 = vmatprep.subr.bf16.mxu0 %v4421
    %5211 = vmatpush1.bf16.msra.mxu0 %v4420
    %5212 = vmatprep.subr.bf16.mxu0 %v4429
    %5213 = vmatpush1.bf16.msra.mxu0 %v4428
    %5214 = vmatprep.subr.bf16.mxu0 %v4437
    %5215 = vmatpush1.bf16.msra.mxu0 %v4436
    %5216 = vmatprep.subr.bf16.mxu0 %v4445
    %5217 = vmatpush1.bf16.msra.mxu0 %v4444
    %5218 = vmatprep.subr.bf16.mxu0 %v4453
    %5219 = vmatpush1.bf16.msra.mxu0 %v4452
    %5220 = vmatprep.subr.bf16.mxu0 %v4461
    %5221 = vmatpush1.bf16.msra.mxu0 %v4460
    %5222 = vmatprep.mubr.bf16.mxu0 %v1991
    %5223 = vmatmul.mubr.bf16.gmra.mrb[0].mxu0 %v1990
    %v5224 = vpop.f32.mrb[0].mxu0
    %v5225 = vadd.f32 %v5184, %v5224
    %v5226 = vpop.f32.mrb[0].mxu0
    %v5227 = vadd.f32 %v5186, %v5226
    %v5228 = vpop.f32.mrb[0].mxu0
    %v5229 = vpop.f32.mrb[0].mxu0
    %5230 = vdwg.mxu0
    %5231 = vmatprep.subr.bf16.mxu0 %v4469
    %5232 = vmatpush1.bf16.msra.mxu0 %v4468
    %5233 = vmatprep.subr.bf16.mxu0 %v4477
    %5234 = vmatpush1.bf16.msra.mxu0 %v4476
    %5235 = vmatprep.subr.bf16.mxu0 %v4485
    %5236 = vmatpush1.bf16.msra.mxu0 %v4484
    %5237 = vmatprep.subr.bf16.mxu0 %v4493
    %5238 = vmatpush1.bf16.msra.mxu0 %v4492
    %5239 = vmatprep.subr.bf16.mxu0 %v4501
    %5240 = vmatpush1.bf16.msra.mxu0 %v4500
    %5241 = vmatprep.subr.bf16.mxu0 %v4509
    %5242 = vmatpush1.bf16.msra.mxu0 %v4508
    %5243 = vmatprep.subr.bf16.mxu0 %v4517
    %5244 = vmatpush1.bf16.msra.mxu0 %v4516
    %5245 = vmatprep.subr.bf16.mxu0 %v4525
    %5246 = vmatpush1.bf16.msra.mxu0 %v4524
    %5247 = vmatprep.subr.bf16.mxu0 %v4533
    %5248 = vmatpush1.bf16.msra.mxu0 %v4532
    %5249 = vmatprep.subr.bf16.mxu0 %v4541
    %5250 = vmatpush1.bf16.msra.mxu0 %v4540
    %5251 = vmatprep.subr.bf16.mxu0 %v4549
    %5252 = vmatpush1.bf16.msra.mxu0 %v4548
    %5253 = vmatprep.subr.bf16.mxu0 %v4557
    %5254 = vmatpush1.bf16.msra.mxu0 %v4556
    %5255 = vmatprep.subr.bf16.mxu0 %v4565
    %5256 = vmatpush1.bf16.msra.mxu0 %v4564
    %5257 = vmatprep.subr.bf16.mxu0 %v4573
    %5258 = vmatpush1.bf16.msra.mxu0 %v4572
    %5259 = vmatprep.subr.bf16.mxu0 %v4581
    %5260 = vmatpush1.bf16.msra.mxu0 %v4580
    %5261 = vmatprep.subr.bf16.mxu0 %v4589
    %5262 = vmatpush1.bf16.msra.mxu0 %v4588
    %5263 = vmatprep.mubr.bf16.mxu0 %v1993
    %5264 = vmatmul.mubr.bf16.gmra.mrb[0].mxu0 %v1992
    %v5265 = vpop.f32.mrb[0].mxu0
    %v5266 = vadd.f32 %v5225, %v5265
    %v5267 = vpop.f32.mrb[0].mxu0
    %v5268 = vadd.f32 %v5227, %v5267
    %v5269 = vpop.f32.mrb[0].mxu0
    %v5270 = vpop.f32.mrb[0].mxu0
    %5271 = vdwg.mxu0
    %5272 = vmatprep.subr.bf16.mxu0 %v4087
    %5273 = vmatpush1.bf16.msra.mxu0 %v4086
    %5274 = vmatprep.subr.bf16.mxu0 %v4095
    %5275 = vmatpush1.bf16.msra.mxu0 %v4094
    %5276 = vmatprep.subr.bf16.mxu0 %v4103
    %5277 = vmatpush1.bf16.msra.mxu0 %v4102
    %5278 = vmatprep.subr.bf16.mxu0 %v4111
    %5279 = vmatpush1.bf16.msra.mxu0 %v4110
    %5280 = vmatprep.subr.bf16.mxu0 %v4119
    %5281 = vmatpush1.bf16.msra.mxu0 %v4118
    %5282 = vmatprep.subr.bf16.mxu0 %v4127
    %5283 = vmatpush1.bf16.msra.mxu0 %v4126
    %5284 = vmatprep.subr.bf16.mxu0 %v4135
    %5285 = vmatpush1.bf16.msra.mxu0 %v4134
    %5286 = vmatprep.subr.bf16.mxu0 %v4143
    %5287 = vmatpush1.bf16.msra.mxu0 %v4142
    %5288 = vmatprep.subr.bf16.mxu0 %v4151
    %5289 = vmatpush1.bf16.msra.mxu0 %v4150
    %5290 = vmatprep.subr.bf16.mxu0 %v4159
    %5291 = vmatpush1.bf16.msra.mxu0 %v4158
    %5292 = vmatprep.subr.bf16.mxu0 %v4167
    %5293 = vmatpush1.bf16.msra.mxu0 %v4166
    %5294 = vmatprep.subr.bf16.mxu0 %v4175
    %5295 = vmatpush1.bf16.msra.mxu0 %v4174
    %5296 = vmatprep.subr.bf16.mxu0 %v4183
    %5297 = vmatpush1.bf16.msra.mxu0 %v4182
    %5298 = vmatprep.subr.bf16.mxu0 %v4191
    %5299 = vmatpush1.bf16.msra.mxu0 %v4190
    %5300 = vmatprep.subr.bf16.mxu0 %v4199
    %5301 = vmatpush1.bf16.msra.mxu0 %v4198
    %5302 = vmatprep.subr.bf16.mxu0 %v4207
    %5303 = vmatpush1.bf16.msra.mxu0 %v4206
    %5304 = vmatprep.mubr.bf16.mxu0 %v1987
    %5305 = vmatmul.mubr.bf16.gmra.mrb[0].mxu0 %v1986
    %v5306 = vpop.f32.mrb[0].mxu0
    %v5307 = vadd.f32 %v2519, %v5306
    %v5308 = vpop.f32.mrb[0].mxu0
    %v5309 = vadd.f32 %v2523, %v5308
    %v5310 = vpop.f32.mrb[0].mxu0
    %v5311 = vpop.f32.mrb[0].mxu0
    %5312 = vdwg.mxu0
    %5313 = vmatprep.subr.bf16.mxu0 %v4215
    %5314 = vmatpush1.bf16.msra.mxu0 %v4214
    %5315 = vmatprep.subr.bf16.mxu0 %v4223
    %5316 = vmatpush1.bf16.msra.mxu0 %v4222
    %5317 = vmatprep.subr.bf16.mxu0 %v4231
    %5318 = vmatpush1.bf16.msra.mxu0 %v4230
    %5319 = vmatprep.subr.bf16.mxu0 %v4239
    %5320 = vmatpush1.bf16.msra.mxu0 %v4238
    %5321 = vmatprep.subr.bf16.mxu0 %v4247
    %5322 = vmatpush1.bf16.msra.mxu0 %v4246
    %5323 = vmatprep.subr.bf16.mxu0 %v4255
    %5324 = vmatpush1.bf16.msra.mxu0 %v4254
    %5325 = vmatprep.subr.bf16.mxu0 %v4263
    %5326 = vmatpush1.bf16.msra.mxu0 %v4262
    %5327 = vmatprep.subr.bf16.mxu0 %v4271
    %5328 = vmatpush1.bf16.msra.mxu0 %v4270
    %5329 = vmatprep.subr.bf16.mxu0 %v4279
    %5330 = vmatpush1.bf16.msra.mxu0 %v4278
    %5331 = vmatprep.subr.bf16.mxu0 %v4287
    %5332 = vmatpush1.bf16.msra.mxu0 %v4286
    %5333 = vmatprep.subr.bf16.mxu0 %v4295
    %5334 = vmatpush1.bf16.msra.mxu0 %v4294
    %5335 = vmatprep.subr.bf16.mxu0 %v4303
    %5336 = vmatpush1.bf16.msra.mxu0 %v4302
    %5337 = vmatprep.subr.bf16.mxu0 %v4311
    %5338 = vmatpush1.bf16.msra.mxu0 %v4310
    %5339 = vmatprep.subr.bf16.mxu0 %v4319
    %5340 = vmatpush1.bf16.msra.mxu0 %v4318
    %5341 = vmatprep.subr.bf16.mxu0 %v4327
    %5342 = vmatpush1.bf16.msra.mxu0 %v4326
    %5343 = vmatprep.subr.bf16.mxu0 %v4335
    %5344 = vmatpush1.bf16.msra.mxu0 %v4334
    %5345 = vmatprep.mubr.bf16.mxu0 %v1989
    %5346 = vmatmul.mubr.bf16.gmra.mrb[0].mxu0 %v1988
    %v5347 = vpop.f32.mrb[0].mxu0
    %v5348 = vadd.f32 %v5307, %v5347
    %v5349 = vpop.f32.mrb[0].mxu0
    %v5350 = vadd.f32 %v5309, %v5349
    %v5351 = vpop.f32.mrb[0].mxu0
    %v5352 = vpop.f32.mrb[0].mxu0
    %5353 = vdwg.mxu0
    %5354 = vmatprep.subr.bf16.mxu0 %v4343
    %5355 = vmatpush1.bf16.msra.mxu0 %v4342
    %5356 = vmatprep.subr.bf16.mxu0 %v4351
    %5357 = vmatpush1.bf16.msra.mxu0 %v4350
    %5358 = vmatprep.subr.bf16.mxu0 %v4359
    %5359 = vmatpush1.bf16.msra.mxu0 %v4358
    %5360 = vmatprep.subr.bf16.mxu0 %v4367
    %5361 = vmatpush1.bf16.msra.mxu0 %v4366
    %5362 = vmatprep.subr.bf16.mxu0 %v4375
    %5363 = vmatpush1.bf16.msra.mxu0 %v4374
    %5364 = vmatprep.subr.bf16.mxu0 %v4383
    %5365 = vmatpush1.bf16.msra.mxu0 %v4382
    %5366 = vmatprep.subr.bf16.mxu0 %v4391
    %5367 = vmatpush1.bf16.msra.mxu0 %v4390
    %5368 = vmatprep.subr.bf16.mxu0 %v4399
    %5369 = vmatpush1.bf16.msra.mxu0 %v4398
    %5370 = vmatprep.subr.bf16.mxu0 %v4407
    %5371 = vmatpush1.bf16.msra.mxu0 %v4406
    %5372 = vmatprep.subr.bf16.mxu0 %v4415
    %5373 = vmatpush1.bf16.msra.mxu0 %v4414
    %5374 = vmatprep.subr.bf16.mxu0 %v4423
    %5375 = vmatpush1.bf16.msra.mxu0 %v4422
    %5376 = vmatprep.subr.bf16.mxu0 %v4431
    %5377 = vmatpush1.bf16.msra.mxu0 %v4430
    %5378 = vmatprep.subr.bf16.mxu0 %v4439
    %5379 = vmatpush1.bf16.msra.mxu0 %v4438
    %5380 = vmatprep.subr.bf16.mxu0 %v4447
    %5381 = vmatpush1.bf16.msra.mxu0 %v4446
    %5382 = vmatprep.subr.bf16.mxu0 %v4455
    %5383 = vmatpush1.bf16.msra.mxu0 %v4454
    %5384 = vmatprep.subr.bf16.mxu0 %v4463
    %5385 = vmatpush1.bf16.msra.mxu0 %v4462
    %5386 = vmatprep.mubr.bf16.mxu0 %v1991
    %5387 = vmatmul.mubr.bf16.gmra.mrb[0].mxu0 %v1990
    %v5388 = vpop.f32.mrb[0].mxu0
    %v5389 = vadd.f32 %v5348, %v5388
    %v5390 = vpop.f32.mrb[0].mxu0
    %v5391 = vadd.f32 %v5350, %v5390
    %v5392 = vpop.f32.mrb[0].mxu0
    %v5393 = vpop.f32.mrb[0].mxu0
    %5394 = vdwg.mxu0
    %5395 = vmatprep.subr.bf16.mxu0 %v4471
    %5396 = vmatpush1.bf16.msra.mxu0 %v4470
    %5397 = vmatprep.subr.bf16.mxu0 %v4479
    %5398 = vmatpush1.bf16.msra.mxu0 %v4478
    %5399 = vmatprep.subr.bf16.mxu0 %v4487
    %5400 = vmatpush1.bf16.msra.mxu0 %v4486
    %5401 = vmatprep.subr.bf16.mxu0 %v4495
    %5402 = vmatpush1.bf16.msra.mxu0 %v4494
    %5403 = vmatprep.subr.bf16.mxu0 %v4503
    %5404 = vmatpush1.bf16.msra.mxu0 %v4502
    %5405 = vmatprep.subr.bf16.mxu0 %v4511
    %5406 = vmatpush1.bf16.msra.mxu0 %v4510
    %5407 = vmatprep.subr.bf16.mxu0 %v4519
    %5408 = vmatpush1.bf16.msra.mxu0 %v4518
    %5409 = vmatprep.subr.bf16.mxu0 %v4527
    %5410 = vmatpush1.bf16.msra.mxu0 %v4526
    %5411 = vmatprep.subr.bf16.mxu0 %v4535
    %5412 = vmatpush1.bf16.msra.mxu0 %v4534
    %5413 = vmatprep.subr.bf16.mxu0 %v4543
    %5414 = vmatpush1.bf16.msra.mxu0 %v4542
    %5415 = vmatprep.subr.bf16.mxu0 %v4551
    %5416 = vmatpush1.bf16.msra.mxu0 %v4550
    %5417 = vmatprep.subr.bf16.mxu0 %v4559
    %5418 = vmatpush1.bf16.msra.mxu0 %v4558
    %5419 = vmatprep.subr.bf16.mxu0 %v4567
    %5420 = vmatpush1.bf16.msra.mxu0 %v4566
    %5421 = vmatprep.subr.bf16.mxu0 %v4575
    %5422 = vmatpush1.bf16.msra.mxu0 %v4574
    %5423 = vmatprep.subr.bf16.mxu0 %v4583
    %5424 = vmatpush1.bf16.msra.mxu0 %v4582
    %5425 = vmatprep.subr.bf16.mxu0 %v4591
    %5426 = vmatpush1.bf16.msra.mxu0 %v4590
    %5427 = vmatprep.mubr.bf16.mxu0 %v1993
    %5428 = vmatmul.mubr.bf16.gmra.mrb[0].mxu0 %v1992
    %v5429 = vpop.f32.mrb[0].mxu0
    %v5430 = vadd.f32 %v5389, %v5429
    %v5431 = vpop.f32.mrb[0].mxu0
    %v5432 = vadd.f32 %v5391, %v5431
    %v5433 = vpop.f32.mrb[0].mxu0
    %v5434 = vpop.f32.mrb[0].mxu0
    %5435 = vdwg.mxu0
    %5436 = vmatprep.subr.bf16.mxu0 %v4089
    %5437 = vmatpush1.bf16.msra.mxu0 %v4088
    %5438 = vmatprep.subr.bf16.mxu0 %v4097
    %5439 = vmatpush1.bf16.msra.mxu0 %v4096
    %5440 = vmatprep.subr.bf16.mxu0 %v4105
    %5441 = vmatpush1.bf16.msra.mxu0 %v4104
    %5442 = vmatprep.subr.bf16.mxu0 %v4113
    %5443 = vmatpush1.bf16.msra.mxu0 %v4112
    %5444 = vmatprep.subr.bf16.mxu0 %v4121
    %5445 = vmatpush1.bf16.msra.mxu0 %v4120
    %5446 = vmatprep.subr.bf16.mxu0 %v4129
    %5447 = vmatpush1.bf16.msra.mxu0 %v4128
    %5448 = vmatprep.subr.bf16.mxu0 %v4137
    %5449 = vmatpush1.bf16.msra.mxu0 %v4136
    %5450 = vmatprep.subr.bf16.mxu0 %v4145
    %5451 = vmatpush1.bf16.msra.mxu0 %v4144
    %5452 = vmatprep.subr.bf16.mxu0 %v4153
    %5453 = vmatpush1.bf16.msra.mxu0 %v4152
    %5454 = vmatprep.subr.bf16.mxu0 %v4161
    %5455 = vmatpush1.bf16.msra.mxu0 %v4160
    %5456 = vmatprep.subr.bf16.mxu0 %v4169
    %5457 = vmatpush1.bf16.msra.mxu0 %v4168
    %5458 = vmatprep.subr.bf16.mxu0 %v4177
    %5459 = vmatpush1.bf16.msra.mxu0 %v4176
    %5460 = vmatprep.subr.bf16.mxu0 %v4185
    %5461 = vmatpush1.bf16.msra.mxu0 %v4184
    %5462 = vmatprep.subr.bf16.mxu0 %v4193
    %5463 = vmatpush1.bf16.msra.mxu0 %v4192
    %5464 = vmatprep.subr.bf16.mxu0 %v4201
    %5465 = vmatpush1.bf16.msra.mxu0 %v4200
    %5466 = vmatprep.subr.bf16.mxu0 %v4209
    %5467 = vmatpush1.bf16.msra.mxu0 %v4208
    %5468 = vmatprep.mubr.bf16.mxu0 %v1987
    %5469 = vmatmul.mubr.bf16.gmra.mrb[0].mxu0 %v1986
    %v5470 = vpop.f32.mrb[0].mxu0
    %v5471 = vadd.f32 %v2527, %v5470
    %v5472 = vpop.f32.mrb[0].mxu0
    %v5473 = vadd.f32 %v2531, %v5472
    %v5474 = vpop.f32.mrb[0].mxu0
    %v5475 = vpop.f32.mrb[0].mxu0
    %5476 = vdwg.mxu0
    %5477 = vmatprep.subr.bf16.mxu0 %v4217
    %5478 = vmatpush1.bf16.msra.mxu0 %v4216
    %5479 = vmatprep.subr.bf16.mxu0 %v4225
    %5480 = vmatpush1.bf16.msra.mxu0 %v4224
    %5481 = vmatprep.subr.bf16.mxu0 %v4233
    %5482 = vmatpush1.bf16.msra.mxu0 %v4232
    %5483 = vmatprep.subr.bf16.mxu0 %v4241
    %5484 = vmatpush1.bf16.msra.mxu0 %v4240
    %5485 = vmatprep.subr.bf16.mxu0 %v4249
    %5486 = vmatpush1.bf16.msra.mxu0 %v4248
    %5487 = vmatprep.subr.bf16.mxu0 %v4257
    %5488 = vmatpush1.bf16.msra.mxu0 %v4256
    %5489 = vmatprep.subr.bf16.mxu0 %v4265
    %5490 = vmatpush1.bf16.msra.mxu0 %v4264
    %5491 = vmatprep.subr.bf16.mxu0 %v4273
    %5492 = vmatpush1.bf16.msra.mxu0 %v4272
    %5493 = vmatprep.subr.bf16.mxu0 %v4281
    %5494 = vmatpush1.bf16.msra.mxu0 %v4280
    %5495 = vmatprep.subr.bf16.mxu0 %v4289
    %5496 = vmatpush1.bf16.msra.mxu0 %v4288
    %5497 = vmatprep.subr.bf16.mxu0 %v4297
    %5498 = vmatpush1.bf16.msra.mxu0 %v4296
    %5499 = vmatprep.subr.bf16.mxu0 %v4305
    %5500 = vmatpush1.bf16.msra.mxu0 %v4304
    %5501 = vmatprep.subr.bf16.mxu0 %v4313
    %5502 = vmatpush1.bf16.msra.mxu0 %v4312
    %5503 = vmatprep.subr.bf16.mxu0 %v4321
    %5504 = vmatpush1.bf16.msra.mxu0 %v4320
    %5505 = vmatprep.subr.bf16.mxu0 %v4329
    %5506 = vmatpush1.bf16.msra.mxu0 %v4328
    %5507 = vmatprep.subr.bf16.mxu0 %v4337
    %5508 = vmatpush1.bf16.msra.mxu0 %v4336
    %5509 = vmatprep.mubr.bf16.mxu0 %v1989
    %5510 = vmatmul.mubr.bf16.gmra.mrb[0].mxu0 %v1988
    %v5511 = vpop.f32.mrb[0].mxu0
    %v5512 = vadd.f32 %v5471, %v5511
    %v5513 = vpop.f32.mrb[0].mxu0
    %v5514 = vadd.f32 %v5473, %v5513
    %v5515 = vpop.f32.mrb[0].mxu0
    %v5516 = vpop.f32.mrb[0].mxu0
    %5517 = vdwg.mxu0
    %5518 = vmatprep.subr.bf16.mxu0 %v4345
    %5519 = vmatpush1.bf16.msra.mxu0 %v4344
    %5520 = vmatprep.subr.bf16.mxu0 %v4353
    %5521 = vmatpush1.bf16.msra.mxu0 %v4352
    %5522 = vmatprep.subr.bf16.mxu0 %v4361
    %5523 = vmatpush1.bf16.msra.mxu0 %v4360
    %5524 = vmatprep.subr.bf16.mxu0 %v4369
    %5525 = vmatpush1.bf16.msra.mxu0 %v4368
    %5526 = vmatprep.subr.bf16.mxu0 %v4377
    %5527 = vmatpush1.bf16.msra.mxu0 %v4376
    %5528 = vmatprep.subr.bf16.mxu0 %v4385
    %5529 = vmatpush1.bf16.msra.mxu0 %v4384
    %5530 = vmatprep.subr.bf16.mxu0 %v4393
    %5531 = vmatpush1.bf16.msra.mxu0 %v4392
    %5532 = vmatprep.subr.bf16.mxu0 %v4401
    %5533 = vmatpush1.bf16.msra.mxu0 %v4400
    %5534 = vmatprep.subr.bf16.mxu0 %v4409
    %5535 = vmatpush1.bf16.msra.mxu0 %v4408
    %5536 = vmatprep.subr.bf16.mxu0 %v4417
    %5537 = vmatpush1.bf16.msra.mxu0 %v4416
    %5538 = vmatprep.subr.bf16.mxu0 %v4425
    %5539 = vmatpush1.bf16.msra.mxu0 %v4424
    %5540 = vmatprep.subr.bf16.mxu0 %v4433
    %5541 = vmatpush1.bf16.msra.mxu0 %v4432
    %5542 = vmatprep.subr.bf16.mxu0 %v4441
    %5543 = vmatpush1.bf16.msra.mxu0 %v4440
    %5544 = vmatprep.subr.bf16.mxu0 %v4449
    %5545 = vmatpush1.bf16.msra.mxu0 %v4448
    %5546 = vmatprep.subr.bf16.mxu0 %v4457
    %5547 = vmatpush1.bf16.msra.mxu0 %v4456
    %5548 = vmatprep.subr.bf16.mxu0 %v4465
    %5549 = vmatpush1.bf16.msra.mxu0 %v4464
    %5550 = vmatprep.mubr.bf16.mxu0 %v1991
    %5551 = vmatmul.mubr.bf16.gmra.mrb[0].mxu0 %v1990
    %v5552 = vpop.f32.mrb[0].mxu0
    %v5553 = vadd.f32 %v5512, %v5552
    %v5554 = vpop.f32.mrb[0].mxu0
    %v5555 = vadd.f32 %v5514, %v5554
    %v5556 = vpop.f32.mrb[0].mxu0
    %v5557 = vpop.f32.mrb[0].mxu0
    %5558 = vdwg.mxu0
    %5559 = vmatprep.subr.bf16.mxu0 %v4473
    %5560 = vmatpush1.bf16.msra.mxu0 %v4472
    %5561 = vmatprep.subr.bf16.mxu0 %v4481
    %5562 = vmatpush1.bf16.msra.mxu0 %v4480
    %5563 = vmatprep.subr.bf16.mxu0 %v4489
    %5564 = vmatpush1.bf16.msra.mxu0 %v4488
    %5565 = vmatprep.subr.bf16.mxu0 %v4497
    %5566 = vmatpush1.bf16.msra.mxu0 %v4496
    %5567 = vmatprep.subr.bf16.mxu0 %v4505
    %5568 = vmatpush1.bf16.msra.mxu0 %v4504
    %5569 = vmatprep.subr.bf16.mxu0 %v4513
    %5570 = vmatpush1.bf16.msra.mxu0 %v4512
    %5571 = vmatprep.subr.bf16.mxu0 %v4521
    %5572 = vmatpush1.bf16.msra.mxu0 %v4520
    %5573 = vmatprep.subr.bf16.mxu0 %v4529
    %5574 = vmatpush1.bf16.msra.mxu0 %v4528
    %5575 = vmatprep.subr.bf16.mxu0 %v4537
    %5576 = vmatpush1.bf16.msra.mxu0 %v4536
    %5577 = vmatprep.subr.bf16.mxu0 %v4545
    %5578 = vmatpush1.bf16.msra.mxu0 %v4544
    %5579 = vmatprep.subr.bf16.mxu0 %v4553
    %5580 = vmatpush1.bf16.msra.mxu0 %v4552
    %5581 = vmatprep.subr.bf16.mxu0 %v4561
    %5582 = vmatpush1.bf16.msra.mxu0 %v4560
    %5583 = vmatprep.subr.bf16.mxu0 %v4569
    %5584 = vmatpush1.bf16.msra.mxu0 %v4568
    %5585 = vmatprep.subr.bf16.mxu0 %v4577
    %5586 = vmatpush1.bf16.msra.mxu0 %v4576
    %5587 = vmatprep.subr.bf16.mxu0 %v4585
    %5588 = vmatpush1.bf16.msra.mxu0 %v4584
    %5589 = vmatprep.subr.bf16.mxu0 %v4593
    %5590 = vmatpush1.bf16.msra.mxu0 %v4592
    %5591 = vmatprep.mubr.bf16.mxu0 %v1993
    %5592 = vmatmul.mubr.bf16.gmra.mrb[0].mxu0 %v1992
    %v5593 = vpop.f32.mrb[0].mxu0
    %v5594 = vadd.f32 %v5553, %v5593
    %v5595 = vpop.f32.mrb[0].mxu0
    %v5596 = vadd.f32 %v5555, %v5595
    %v5597 = vpop.f32.mrb[0].mxu0
    %v5598 = vpop.f32.mrb[0].mxu0
    %5599 = vdwg.mxu0
    %5600 = vmatprep.subr.bf16.mxu0 %v4091
    %5601 = vmatpush1.bf16.msra.mxu0 %v4090
    %5602 = vmatprep.subr.bf16.mxu0 %v4099
    %5603 = vmatpush1.bf16.msra.mxu0 %v4098
    %5604 = vmatprep.subr.bf16.mxu0 %v4107
    %5605 = vmatpush1.bf16.msra.mxu0 %v4106
    %5606 = vmatprep.subr.bf16.mxu0 %v4115
    %5607 = vmatpush1.bf16.msra.mxu0 %v4114
    %5608 = vmatprep.subr.bf16.mxu0 %v4123
    %5609 = vmatpush1.bf16.msra.mxu0 %v4122
    %5610 = vmatprep.subr.bf16.mxu0 %v4131
    %5611 = vmatpush1.bf16.msra.mxu0 %v4130
    %5612 = vmatprep.subr.bf16.mxu0 %v4139
    %5613 = vmatpush1.bf16.msra.mxu0 %v4138
    %5614 = vmatprep.subr.bf16.mxu0 %v4147
    %5615 = vmatpush1.bf16.msra.mxu0 %v4146
    %5616 = vmatprep.subr.bf16.mxu0 %v4155
    %5617 = vmatpush1.bf16.msra.mxu0 %v4154
    %5618 = vmatprep.subr.bf16.mxu0 %v4163
    %5619 = vmatpush1.bf16.msra.mxu0 %v4162
    %5620 = vmatprep.subr.bf16.mxu0 %v4171
    %5621 = vmatpush1.bf16.msra.mxu0 %v4170
    %5622 = vmatprep.subr.bf16.mxu0 %v4179
    %5623 = vmatpush1.bf16.msra.mxu0 %v4178
    %5624 = vmatprep.subr.bf16.mxu0 %v4187
    %5625 = vmatpush1.bf16.msra.mxu0 %v4186
    %5626 = vmatprep.subr.bf16.mxu0 %v4195
    %5627 = vmatpush1.bf16.msra.mxu0 %v4194
    %5628 = vmatprep.subr.bf16.mxu0 %v4203
    %5629 = vmatpush1.bf16.msra.mxu0 %v4202
    %5630 = vmatprep.subr.bf16.mxu0 %v4211
    %5631 = vmatpush1.bf16.msra.mxu0 %v4210
    %5632 = vmatprep.mubr.bf16.mxu0 %v1987
    %5633 = vmatmul.mubr.bf16.gmra.mrb[0].mxu0 %v1986
    %v5634 = vpop.f32.mrb[0].mxu0
    %v5635 = vadd.f32 %v2535, %v5634
    %v5636 = vpop.f32.mrb[0].mxu0
    %v5637 = vadd.f32 %v2539, %v5636
    %v5638 = vpop.f32.mrb[0].mxu0
    %v5639 = vpop.f32.mrb[0].mxu0
    %5640 = vdwg.mxu0
    %5641 = vmatprep.subr.bf16.mxu0 %v4219
    %5642 = vmatpush1.bf16.msra.mxu0 %v4218
    %5643 = vmatprep.subr.bf16.mxu0 %v4227
    %5644 = vmatpush1.bf16.msra.mxu0 %v4226
    %5645 = vmatprep.subr.bf16.mxu0 %v4235
    %5646 = vmatpush1.bf16.msra.mxu0 %v4234
    %5647 = vmatprep.subr.bf16.mxu0 %v4243
    %5648 = vmatpush1.bf16.msra.mxu0 %v4242
    %5649 = vmatprep.subr.bf16.mxu0 %v4251
    %5650 = vmatpush1.bf16.msra.mxu0 %v4250
    %5651 = vmatprep.subr.bf16.mxu0 %v4259
    %5652 = vmatpush1.bf16.msra.mxu0 %v4258
    %5653 = vmatprep.subr.bf16.mxu0 %v4267
    %5654 = vmatpush1.bf16.msra.mxu0 %v4266
    %5655 = vmatprep.subr.bf16.mxu0 %v4275
    %5656 = vmatpush1.bf16.msra.mxu0 %v4274
    %5657 = vmatprep.subr.bf16.mxu0 %v4283
    %5658 = vmatpush1.bf16.msra.mxu0 %v4282
    %5659 = vmatprep.subr.bf16.mxu0 %v4291
    %5660 = vmatpush1.bf16.msra.mxu0 %v4290
    %5661 = vmatprep.subr.bf16.mxu0 %v4299
    %5662 = vmatpush1.bf16.msra.mxu0 %v4298
    %5663 = vmatprep.subr.bf16.mxu0 %v4307
    %5664 = vmatpush1.bf16.msra.mxu0 %v4306
    %5665 = vmatprep.subr.bf16.mxu0 %v4315
    %5666 = vmatpush1.bf16.msra.mxu0 %v4314
    %5667 = vmatprep.subr.bf16.mxu0 %v4323
    %5668 = vmatpush1.bf16.msra.mxu0 %v4322
    %5669 = vmatprep.subr.bf16.mxu0 %v4331
    %5670 = vmatpush1.bf16.msra.mxu0 %v4330
    %5671 = vmatprep.subr.bf16.mxu0 %v4339
    %5672 = vmatpush1.bf16.msra.mxu0 %v4338
    %5673 = vmatprep.mubr.bf16.mxu0 %v1989
    %5674 = vmatmul.mubr.bf16.gmra.mrb[0].mxu0 %v1988
    %v5675 = vpop.f32.mrb[0].mxu0
    %v5676 = vadd.f32 %v5635, %v5675
    %v5677 = vpop.f32.mrb[0].mxu0
    %v5678 = vadd.f32 %v5637, %v5677
    %v5679 = vpop.f32.mrb[0].mxu0
    %v5680 = vpop.f32.mrb[0].mxu0
    %5681 = vdwg.mxu0
    %5682 = vmatprep.subr.bf16.mxu0 %v4347
    %5683 = vmatpush1.bf16.msra.mxu0 %v4346
    %5684 = vmatprep.subr.bf16.mxu0 %v4355
    %5685 = vmatpush1.bf16.msra.mxu0 %v4354
    %5686 = vmatprep.subr.bf16.mxu0 %v4363
    %5687 = vmatpush1.bf16.msra.mxu0 %v4362
    %5688 = vmatprep.subr.bf16.mxu0 %v4371
    %5689 = vmatpush1.bf16.msra.mxu0 %v4370
    %5690 = vmatprep.subr.bf16.mxu0 %v4379
    %5691 = vmatpush1.bf16.msra.mxu0 %v4378
    %5692 = vmatprep.subr.bf16.mxu0 %v4387
    %5693 = vmatpush1.bf16.msra.mxu0 %v4386
    %5694 = vmatprep.subr.bf16.mxu0 %v4395
    %5695 = vmatpush1.bf16.msra.mxu0 %v4394
    %5696 = vmatprep.subr.bf16.mxu0 %v4403
    %5697 = vmatpush1.bf16.msra.mxu0 %v4402
    %5698 = vmatprep.subr.bf16.mxu0 %v4411
    %5699 = vmatpush1.bf16.msra.mxu0 %v4410
    %5700 = vmatprep.subr.bf16.mxu0 %v4419
    %5701 = vmatpush1.bf16.msra.mxu0 %v4418
    %5702 = vmatprep.subr.bf16.mxu0 %v4427
    %5703 = vmatpush1.bf16.msra.mxu0 %v4426
    %5704 = vmatprep.subr.bf16.mxu0 %v4435
    %5705 = vmatpush1.bf16.msra.mxu0 %v4434
    %5706 = vmatprep.subr.bf16.mxu0 %v4443
    %5707 = vmatpush1.bf16.msra.mxu0 %v4442
    %5708 = vmatprep.subr.bf16.mxu0 %v4451
    %5709 = vmatpush1.bf16.msra.mxu0 %v4450
    %5710 = vmatprep.subr.bf16.mxu0 %v4459
    %5711 = vmatpush1.bf16.msra.mxu0 %v4458
    %5712 = vmatprep.subr.bf16.mxu0 %v4467
    %5713 = vmatpush1.bf16.msra.mxu0 %v4466
    %5714 = vmatprep.mubr.bf16.mxu0 %v1991
    %5715 = vmatmul.mubr.bf16.gmra.mrb[0].mxu0 %v1990
    %v5716 = vpop.f32.mrb[0].mxu0
    %v5717 = vadd.f32 %v5676, %v5716
    %v5718 = vpop.f32.mrb[0].mxu0
    %v5719 = vadd.f32 %v5678, %v5718
    %v5720 = vpop.f32.mrb[0].mxu0
    %v5721 = vpop.f32.mrb[0].mxu0
    %5722 = vdwg.mxu0
    %5723 = vmatprep.subr.bf16.mxu0 %v4475
    %5724 = vmatpush1.bf16.msra.mxu0 %v4474
    %5725 = vmatprep.subr.bf16.mxu0 %v4483
    %5726 = vmatpush1.bf16.msra.mxu0 %v4482
    %5727 = vmatprep.subr.bf16.mxu0 %v4491
    %5728 = vmatpush1.bf16.msra.mxu0 %v4490
    %5729 = vmatprep.subr.bf16.mxu0 %v4499
    %5730 = vmatpush1.bf16.msra.mxu0 %v4498
    %5731 = vmatprep.subr.bf16.mxu0 %v4507
    %5732 = vmatpush1.bf16.msra.mxu0 %v4506
    %5733 = vmatprep.subr.bf16.mxu0 %v4515
    %5734 = vmatpush1.bf16.msra.mxu0 %v4514
    %5735 = vmatprep.subr.bf16.mxu0 %v4523
    %5736 = vmatpush1.bf16.msra.mxu0 %v4522
    %5737 = vmatprep.subr.bf16.mxu0 %v4531
    %5738 = vmatpush1.bf16.msra.mxu0 %v4530
    %5739 = vmatprep.subr.bf16.mxu0 %v4539
    %5740 = vmatpush1.bf16.msra.mxu0 %v4538
    %5741 = vmatprep.subr.bf16.mxu0 %v4547
    %5742 = vmatpush1.bf16.msra.mxu0 %v4546
    %5743 = vmatprep.subr.bf16.mxu0 %v4555
    %5744 = vmatpush1.bf16.msra.mxu0 %v4554
    %5745 = vmatprep.subr.bf16.mxu0 %v4563
    %5746 = vmatpush1.bf16.msra.mxu0 %v4562
    %5747 = vmatprep.subr.bf16.mxu0 %v4571
    %5748 = vmatpush1.bf16.msra.mxu0 %v4570
    %5749 = vmatprep.subr.bf16.mxu0 %v4579
    %5750 = vmatpush1.bf16.msra.mxu0 %v4578
    %5751 = vmatprep.subr.bf16.mxu0 %v4587
    %5752 = vmatpush1.bf16.msra.mxu0 %v4586
    %5753 = vmatprep.subr.bf16.mxu0 %v4595
    %5754 = vmatpush1.bf16.msra.mxu0 %v4594
    %5755 = vmatprep.mubr.bf16.mxu0 %v1993
    %5756 = vmatmul.mubr.bf16.gmra.mrb[0].mxu0 %v1992
    %v5757 = vpop.f32.mrb[0].mxu0
    %v5758 = vadd.f32 %v5717, %v5757
    %v5759 = vpop.f32.mrb[0].mxu0
    %v5760 = vadd.f32 %v5719, %v5759
    %v5761 = vpop.f32.mrb[0].mxu0
    %v5762 = vpop.f32.mrb[0].mxu0
    %5763 = vdwg.mxu0
    %v5764 = vmax.f32 %v5266, 0.0
    %v5765 = vmax.f32 %v5268, 0.0
    %v5766 = vmax.f32 %v5430, 0.0
    %v5767 = vmax.f32 %v5432, 0.0
    %v5768 = vmax.f32 %v5594, 0.0
    %v5769 = vmax.f32 %v5596, 0.0
    %v5770 = vmax.f32 %v5758, 0.0
    %v5771 = vmax.f32 %v5760, 0.0
    %v5772 = vsel %vm1716, %v5764, 0.0
    %v5773 = vrot.slane %v5772, 4
    %v5774 = vadd.f32 %v5772, %v5773
    %v5775 = vrot.slane %v5774, 2
    %v5776 = vadd.f32 %v5774, %v5775
    %v5777 = vrot.slane %v5776, 1
    %v5778 = vadd.f32 %v5776, %v5777
    %v5779 = vsel %vm1716, %v5765, 0.0
    %v5780 = vrot.slane %v5779, 4
    %v5781 = vadd.f32 %v5779, %v5780
    %v5782 = vrot.slane %v5781, 2
    %v5783 = vadd.f32 %v5781, %v5782
    %v5784 = vrot.slane %v5783, 1
    %v5785 = vadd.f32 %v5783, %v5784
    %v5786 = vsel %vm1716, %v5766, 0.0
    %v5787 = vrot.slane %v5786, 4
    %v5788 = vadd.f32 %v5786, %v5787
    %v5789 = vrot.slane %v5788, 2
    %v5790 = vadd.f32 %v5788, %v5789
    %v5791 = vrot.slane %v5790, 1
    %v5792 = vadd.f32 %v5790, %v5791
    %v5793 = vsel %vm1716, %v5767, 0.0
    %v5794 = vrot.slane %v5793, 4
    %v5795 = vadd.f32 %v5793, %v5794
    %v5796 = vrot.slane %v5795, 2
    %v5797 = vadd.f32 %v5795, %v5796
    %v5798 = vrot.slane %v5797, 1
    %v5799 = vadd.f32 %v5797, %v5798
    %v5800 = vsel %vm1716, %v5768, 0.0
    %v5801 = vrot.slane %v5800, 4
    %v5802 = vadd.f32 %v5800, %v5801
    %v5803 = vrot.slane %v5802, 2
    %v5804 = vadd.f32 %v5802, %v5803
    %v5805 = vrot.slane %v5804, 1
    %v5806 = vadd.f32 %v5804, %v5805
    %v5807 = vsel %vm1716, %v5769, 0.0
    %v5808 = vrot.slane %v5807, 4
    %v5809 = vadd.f32 %v5807, %v5808
    %v5810 = vrot.slane %v5809, 2
    %v5811 = vadd.f32 %v5809, %v5810
    %v5812 = vrot.slane %v5811, 1
    %v5813 = vadd.f32 %v5811, %v5812
    %v5814 = vsel %vm1716, %v5770, 0.0
    %v5815 = vrot.slane %v5814, 4
    %v5816 = vadd.f32 %v5814, %v5815
    %v5817 = vrot.slane %v5816, 2
    %v5818 = vadd.f32 %v5816, %v5817
    %v5819 = vrot.slane %v5818, 1
    %v5820 = vadd.f32 %v5818, %v5819
    %v5821 = vsel %vm1716, %v5771, 0.0
    %v5822 = vrot.slane %v5821, 4
    %v5823 = vadd.f32 %v5821, %v5822
    %v5824 = vrot.slane %v5823, 2
    %v5825 = vadd.f32 %v5823, %v5824
    %v5826 = vrot.slane %v5825, 1
    %v5827 = vadd.f32 %v5825, %v5826
    %v5828 = vmul.f32 %v5778, %v1773
    %v5829 = vmul.f32 %v5785, %v1773
    %v5830 = vmul.f32 %v5792, %v1773
    %v5831 = vmul.f32 %v5799, %v1773
    %v5832 = vmul.f32 %v5806, %v1773
    %v5833 = vmul.f32 %v5813, %v1773
    %v5834 = vmul.f32 %v5820, %v1773
    %v5835 = vmul.f32 %v5827, %v1773
    %v5836 = vsub.f32 %v5764, %v5828
    %v5837 = vsub.f32 %v5765, %v5829
    %v5838 = vsub.f32 %v5766, %v5830
    %v5839 = vsub.f32 %v5767, %v5831
    %v5840 = vsub.f32 %v5768, %v5832
    %v5841 = vsub.f32 %v5769, %v5833
    %v5842 = vsub.f32 %v5770, %v5834
    %v5843 = vsub.f32 %v5771, %v5835
    %v5844 = vmul.f32 %v5836, %v5836
    %v5845 = vmul.f32 %v5837, %v5837
    %v5846 = vmul.f32 %v5838, %v5838
    %v5847 = vmul.f32 %v5839, %v5839
    %v5848 = vmul.f32 %v5840, %v5840
    %v5849 = vmul.f32 %v5841, %v5841
    %v5850 = vmul.f32 %v5842, %v5842
    %v5851 = vmul.f32 %v5843, %v5843
    %v5852 = vsel %vm1716, %v5844, 0.0
    %v5853 = vrot.slane %v5852, 4
    %v5854 = vadd.f32 %v5852, %v5853
    %v5855 = vrot.slane %v5854, 2
    %v5856 = vadd.f32 %v5854, %v5855
    %v5857 = vrot.slane %v5856, 1
    %v5858 = vadd.f32 %v5856, %v5857
    %v5859 = vsel %vm1716, %v5845, 0.0
    %v5860 = vrot.slane %v5859, 4
    %v5861 = vadd.f32 %v5859, %v5860
    %v5862 = vrot.slane %v5861, 2
    %v5863 = vadd.f32 %v5861, %v5862
    %v5864 = vrot.slane %v5863, 1
    %v5865 = vadd.f32 %v5863, %v5864
    %v5866 = vsel %vm1716, %v5846, 0.0
    %v5867 = vrot.slane %v5866, 4
    %v5868 = vadd.f32 %v5866, %v5867
    %v5869 = vrot.slane %v5868, 2
    %v5870 = vadd.f32 %v5868, %v5869
    %v5871 = vrot.slane %v5870, 1
    %v5872 = vadd.f32 %v5870, %v5871
    %v5873 = vsel %vm1716, %v5847, 0.0
    %v5874 = vrot.slane %v5873, 4
    %v5875 = vadd.f32 %v5873, %v5874
    %v5876 = vrot.slane %v5875, 2
    %v5877 = vadd.f32 %v5875, %v5876
    %v5878 = vrot.slane %v5877, 1
    %v5879 = vadd.f32 %v5877, %v5878
    %v5880 = vsel %vm1716, %v5848, 0.0
    %v5881 = vrot.slane %v5880, 4
    %v5882 = vadd.f32 %v5880, %v5881
    %v5883 = vrot.slane %v5882, 2
    %v5884 = vadd.f32 %v5882, %v5883
    %v5885 = vrot.slane %v5884, 1
    %v5886 = vadd.f32 %v5884, %v5885
    %v5887 = vsel %vm1716, %v5849, 0.0
    %v5888 = vrot.slane %v5887, 4
    %v5889 = vadd.f32 %v5887, %v5888
    %v5890 = vrot.slane %v5889, 2
    %v5891 = vadd.f32 %v5889, %v5890
    %v5892 = vrot.slane %v5891, 1
    %v5893 = vadd.f32 %v5891, %v5892
    %v5894 = vsel %vm1716, %v5850, 0.0
    %v5895 = vrot.slane %v5894, 4
    %v5896 = vadd.f32 %v5894, %v5895
    %v5897 = vrot.slane %v5896, 2
    %v5898 = vadd.f32 %v5896, %v5897
    %v5899 = vrot.slane %v5898, 1
    %v5900 = vadd.f32 %v5898, %v5899
    %v5901 = vsel %vm1716, %v5851, 0.0
    %v5902 = vrot.slane %v5901, 4
    %v5903 = vadd.f32 %v5901, %v5902
    %v5904 = vrot.slane %v5903, 2
    %v5905 = vadd.f32 %v5903, %v5904
    %v5906 = vrot.slane %v5905, 1
    %v5907 = vadd.f32 %v5905, %v5906
    %v5908 = vmul.f32 %v5858, %v1773
    %v5909 = vmul.f32 %v5865, %v1773
    %v5910 = vmul.f32 %v5872, %v1773
    %v5911 = vmul.f32 %v5879, %v1773
    %v5912 = vmul.f32 %v5886, %v1773
    %v5913 = vmul.f32 %v5893, %v1773
    %v5914 = vmul.f32 %v5900, %v1773
    %v5915 = vmul.f32 %v5907, %v1773
    %v5916 = vadd.f32 %v5908, 1e-05
    %v5917 = vadd.f32 %v5909, 1e-05
    %v5918 = vadd.f32 %v5910, 1e-05
    %v5919 = vadd.f32 %v5911, 1e-05
    %v5920 = vadd.f32 %v5912, 1e-05
    %v5921 = vadd.f32 %v5913, 1e-05
    %v5922 = vadd.f32 %v5914, 1e-05
    %v5923 = vadd.f32 %v5915, 1e-05
    %v5924 = vrsqrt.pop %v5916
    %v5925 = vrsqrt.pop %v5917
    %v5926 = vrsqrt.pop %v5918
    %v5927 = vrsqrt.pop %v5919
    %v5928 = vrsqrt.pop %v5920
    %v5929 = vrsqrt.pop %v5921
    %v5930 = vrsqrt.pop %v5922
    %v5931 = vrsqrt.pop %v5923
    %v5932 = vmul.f32 %v5836, %v5924
    %v5933 = vmul.f32 %v5837, %v5925
    %v5934 = vmul.f32 %v5838, %v5926
    %v5935 = vmul.f32 %v5839, %v5927
    %v5936 = vmul.f32 %v5840, %v5928
    %v5937 = vmul.f32 %v5841, %v5929
    %v5938 = vmul.f32 %v5842, %v5930
    %v5939 = vmul.f32 %v5843, %v5931
    %v5940 = vld [vmem:[#allocation17] sm:$0xff]
    %v5942 = vlaneseq
    %v5943 = vshrl.u32 %v5942, 7
    %v5944 = vsub.s32 0, %v5943
    %v5945 = vrot.slane %v5940, %v5944
    %v5946 = vlaneseq
    %v5947 = vshrl.u32 %v5946, 7
    %v5948 = vsub.s32 1, %v5947
    %v5949 = vrot.slane %v5940, %v5948
    %v5950 = vlaneseq
    %v5951 = vshrl.u32 %v5950, 7
    %v5952 = vsub.s32 2, %v5951
    %v5953 = vrot.slane %v5940, %v5952
    %v5954 = vlaneseq
    %v5955 = vshrl.u32 %v5954, 7
    %v5956 = vsub.s32 3, %v5955
    %v5957 = vrot.slane %v5940, %v5956
    %v5958 = vlaneseq
    %v5959 = vshrl.u32 %v5958, 7
    %v5960 = vsub.s32 4, %v5959
    %v5961 = vrot.slane %v5940, %v5960
    %v5962 = vlaneseq
    %v5963 = vshrl.u32 %v5962, 7
    %v5964 = vsub.s32 5, %v5963
    %v5965 = vrot.slane %v5940, %v5964
    %v5966 = vlaneseq
    %v5967 = vshrl.u32 %v5966, 7
    %v5968 = vsub.s32 6, %v5967
    %v5969 = vrot.slane %v5940, %v5968
    %v5970 = vlaneseq
    %v5971 = vshrl.u32 %v5970, 7
    %v5972 = vsub.s32 7, %v5971
    %v5973 = vrot.slane %v5940, %v5972
    %v5982 = vmul.f32 %v5932, %v5945
    %v5983 = vmul.f32 %v5933, %v5949
    %v5984 = vmul.f32 %v5934, %v5953
    %v5985 = vmul.f32 %v5935, %v5957
    %v5986 = vmul.f32 %v5936, %v5961
    %v5987 = vmul.f32 %v5937, %v5965
    %v5988 = vmul.f32 %v5938, %v5969
    %v5989 = vmul.f32 %v5939, %v5973
    %v5990 = vld [vmem:[#allocation19] sm:$0xff]
    %v5992 = vlaneseq
    %v5993 = vshrl.u32 %v5992, 7
    %v5994 = vsub.s32 0, %v5993
    %v5995 = vrot.slane %v5990, %v5994
    %v5996 = vlaneseq
    %v5997 = vshrl.u32 %v5996, 7
    %v5998 = vsub.s32 1, %v5997
    %v5999 = vrot.slane %v5990, %v5998
    %v6000 = vlaneseq
    %v6001 = vshrl.u32 %v6000, 7
    %v6002 = vsub.s32 2, %v6001
    %v6003 = vrot.slane %v5990, %v6002
    %v6004 = vlaneseq
    %v6005 = vshrl.u32 %v6004, 7
    %v6006 = vsub.s32 3, %v6005
    %v6007 = vrot.slane %v5990, %v6006
    %v6008 = vlaneseq
    %v6009 = vshrl.u32 %v6008, 7
    %v6010 = vsub.s32 4, %v6009
    %v6011 = vrot.slane %v5990, %v6010
    %v6012 = vlaneseq
    %v6013 = vshrl.u32 %v6012, 7
    %v6014 = vsub.s32 5, %v6013
    %v6015 = vrot.slane %v5990, %v6014
    %v6016 = vlaneseq
    %v6017 = vshrl.u32 %v6016, 7
    %v6018 = vsub.s32 6, %v6017
    %v6019 = vrot.slane %v5990, %v6018
    %v6020 = vlaneseq
    %v6021 = vshrl.u32 %v6020, 7
    %v6022 = vsub.s32 7, %v6021
    %v6023 = vrot.slane %v5990, %v6022
    %v6032 = vadd.f32 %v5982, %v5995
    %v6033 = vadd.f32 %v5983, %v5999
    %v6034 = vadd.f32 %v5984, %v6003
    %v6035 = vadd.f32 %v5985, %v6007
    %v6036 = vadd.f32 %v5986, %v6011
    %v6037 = vadd.f32 %v5987, %v6015
    %v6038 = vadd.f32 %v5988, %v6019
    %v6039 = vadd.f32 %v5989, %v6023
    %v6040 = vpack.c.bf16 %v6032, %v6032
    %v6041 = vpack.c.bf16 %v6033, %v6033
    %v6042 = vpack.c.bf16 %v6034, %v6034
    %v6043 = vpack.c.bf16 %v6035, %v6035
    %v6044 = vpack.c.bf16 %v6036, %v6036
    %v6045 = vpack.c.bf16 %v6037, %v6037
    %v6046 = vpack.c.bf16 %v6038, %v6038
    %v6047 = vpack.c.bf16 %v6039, %v6039
    %v6048 = vld [vmem:[#allocation20] sm:$0xff]
    %v6049 = vld [vmem:[#allocation20 + $0x8] sm:$0xff]
    %v6050 = vld [vmem:[#allocation20 + $0x10] sm:$0xff]
    %v6051 = vld [vmem:[#allocation20 + $0x18] sm:$0xff]
    %v6052 = vld [vmem:[#allocation20 + $0x20] sm:$0xff]
    %v6053 = vld [vmem:[#allocation20 + $0x28] sm:$0xff]
    %v6054 = vld [vmem:[#allocation20 + $0x30] sm:$0xff]
    %v6055 = vld [vmem:[#allocation20 + $0x38] sm:$0xff]
    %v6056 = vld [vmem:[#allocation20 + $0x40] sm:$0xff]
    %v6057 = vld [vmem:[#allocation20 + $0x48] sm:$0xff]
    %v6058 = vld [vmem:[#allocation20 + $0x50] sm:$0xff]
    %v6059 = vld [vmem:[#allocation20 + $0x58] sm:$0xff]
    %v6060 = vld [vmem:[#allocation20 + $0x60] sm:$0xff]
    %v6061 = vld [vmem:[#allocation20 + $0x68] sm:$0xff]
    %v6062 = vld [vmem:[#allocation20 + $0x70] sm:$0xff]
    %v6063 = vld [vmem:[#allocation20 + $0x78] sm:$0xff]
    %v6064 = vld [vmem:[#allocation20 + $0x80] sm:$0xff]
    %v6065 = vld [vmem:[#allocation20 + $0x88] sm:$0xff]
    %v6066 = vld [vmem:[#allocation20 + $0x90] sm:$0xff]
    %v6067 = vld [vmem:[#allocation20 + $0x98] sm:$0xff]
    %v6068 = vld [vmem:[#allocation20 + $0xa0] sm:$0xff]
    %v6069 = vld [vmem:[#allocation20 + $0xa8] sm:$0xff]
    %v6070 = vld [vmem:[#allocation20 + $0xb0] sm:$0xff]
    %v6071 = vld [vmem:[#allocation20 + $0xb8] sm:$0xff]
    %v6072 = vld [vmem:[#allocation20 + $0xc0] sm:$0xff]
    %v6073 = vld [vmem:[#allocation20 + $0xc8] sm:$0xff]
    %v6074 = vld [vmem:[#allocation20 + $0xd0] sm:$0xff]
    %v6075 = vld [vmem:[#allocation20 + $0xd8] sm:$0xff]
    %v6076 = vld [vmem:[#allocation20 + $0xe0] sm:$0xff]
    %v6077 = vld [vmem:[#allocation20 + $0xe8] sm:$0xff]
    %v6078 = vld [vmem:[#allocation20 + $0xf0] sm:$0xff]
    %v6079 = vld [vmem:[#allocation20 + $0xf8] sm:$0xff]
    %v6080 = vld [vmem:[#allocation20 + $0x100] sm:$0xff]
    %v6081 = vld [vmem:[#allocation20 + $0x108] sm:$0xff]
    %v6082 = vld [vmem:[#allocation20 + $0x110] sm:$0xff]
    %v6083 = vld [vmem:[#allocation20 + $0x118] sm:$0xff]
    %v6084 = vld [vmem:[#allocation20 + $0x120] sm:$0xff]
    %v6085 = vld [vmem:[#allocation20 + $0x128] sm:$0xff]
    %v6086 = vld [vmem:[#allocation20 + $0x130] sm:$0xff]
    %v6087 = vld [vmem:[#allocation20 + $0x138] sm:$0xff]
    %v6088 = vld [vmem:[#allocation20 + $0x140] sm:$0xff]
    %v6089 = vld [vmem:[#allocation20 + $0x148] sm:$0xff]
    %v6090 = vld [vmem:[#allocation20 + $0x150] sm:$0xff]
    %v6091 = vld [vmem:[#allocation20 + $0x158] sm:$0xff]
    %v6092 = vld [vmem:[#allocation20 + $0x160] sm:$0xff]
    %v6093 = vld [vmem:[#allocation20 + $0x168] sm:$0xff]
    %v6094 = vld [vmem:[#allocation20 + $0x170] sm:$0xff]
    %v6095 = vld [vmem:[#allocation20 + $0x178] sm:$0xff]
    %v6096 = vld [vmem:[#allocation20 + $0x180] sm:$0xff]
    %v6097 = vld [vmem:[#allocation20 + $0x188] sm:$0xff]
    %v6098 = vld [vmem:[#allocation20 + $0x190] sm:$0xff]
    %v6099 = vld [vmem:[#allocation20 + $0x198] sm:$0xff]
    %v6100 = vld [vmem:[#allocation20 + $0x1a0] sm:$0xff]
    %v6101 = vld [vmem:[#allocation20 + $0x1a8] sm:$0xff]
    %v6102 = vld [vmem:[#allocation20 + $0x1b0] sm:$0xff]
    %v6103 = vld [vmem:[#allocation20 + $0x1b8] sm:$0xff]
    %v6104 = vld [vmem:[#allocation20 + $0x1c0] sm:$0xff]
    %v6105 = vld [vmem:[#allocation20 + $0x1c8] sm:$0xff]
    %v6106 = vld [vmem:[#allocation20 + $0x1d0] sm:$0xff]
    %v6107 = vld [vmem:[#allocation20 + $0x1d8] sm:$0xff]
    %v6108 = vld [vmem:[#allocation20 + $0x1e0] sm:$0xff]
    %v6109 = vld [vmem:[#allocation20 + $0x1e8] sm:$0xff]
    %v6110 = vld [vmem:[#allocation20 + $0x1f0] sm:$0xff]
    %v6111 = vld [vmem:[#allocation20 + $0x1f8] sm:$0xff]
    %v6112 = vld [vmem:[#allocation20 + $0x200] sm:$0xff]
    %v6113 = vld [vmem:[#allocation20 + $0x208] sm:$0xff]
    %v6114 = vld [vmem:[#allocation20 + $0x210] sm:$0xff]
    %v6115 = vld [vmem:[#allocation20 + $0x218] sm:$0xff]
    %v6116 = vld [vmem:[#allocation20 + $0x220] sm:$0xff]
    %v6117 = vld [vmem:[#allocation20 + $0x228] sm:$0xff]
    %v6118 = vld [vmem:[#allocation20 + $0x230] sm:$0xff]
    %v6119 = vld [vmem:[#allocation20 + $0x238] sm:$0xff]
    %v6120 = vld [vmem:[#allocation20 + $0x240] sm:$0xff]
    %v6121 = vld [vmem:[#allocation20 + $0x248] sm:$0xff]
    %v6122 = vld [vmem:[#allocation20 + $0x250] sm:$0xff]
    %v6123 = vld [vmem:[#allocation20 + $0x258] sm:$0xff]
    %v6124 = vld [vmem:[#allocation20 + $0x260] sm:$0xff]
    %v6125 = vld [vmem:[#allocation20 + $0x268] sm:$0xff]
    %v6126 = vld [vmem:[#allocation20 + $0x270] sm:$0xff]
    %v6127 = vld [vmem:[#allocation20 + $0x278] sm:$0xff]
    %v6128 = vld [vmem:[#allocation20 + $0x280] sm:$0xff]
    %v6129 = vld [vmem:[#allocation20 + $0x288] sm:$0xff]
    %v6130 = vld [vmem:[#allocation20 + $0x290] sm:$0xff]
    %v6131 = vld [vmem:[#allocation20 + $0x298] sm:$0xff]
    %v6132 = vld [vmem:[#allocation20 + $0x2a0] sm:$0xff]
    %v6133 = vld [vmem:[#allocation20 + $0x2a8] sm:$0xff]
    %v6134 = vld [vmem:[#allocation20 + $0x2b0] sm:$0xff]
    %v6135 = vld [vmem:[#allocation20 + $0x2b8] sm:$0xff]
    %v6136 = vld [vmem:[#allocation20 + $0x2c0] sm:$0xff]
    %v6137 = vld [vmem:[#allocation20 + $0x2c8] sm:$0xff]
    %v6138 = vld [vmem:[#allocation20 + $0x2d0] sm:$0xff]
    %v6139 = vld [vmem:[#allocation20 + $0x2d8] sm:$0xff]
    %v6140 = vld [vmem:[#allocation20 + $0x2e0] sm:$0xff]
    %v6141 = vld [vmem:[#allocation20 + $0x2e8] sm:$0xff]
    %v6142 = vld [vmem:[#allocation20 + $0x2f0] sm:$0xff]
    %v6143 = vld [vmem:[#allocation20 + $0x2f8] sm:$0xff]
    %v6144 = vld [vmem:[#allocation20 + $0x300] sm:$0xff]
    %v6145 = vld [vmem:[#allocation20 + $0x308] sm:$0xff]
    %v6146 = vld [vmem:[#allocation20 + $0x310] sm:$0xff]
    %v6147 = vld [vmem:[#allocation20 + $0x318] sm:$0xff]
    %v6148 = vld [vmem:[#allocation20 + $0x320] sm:$0xff]
    %v6149 = vld [vmem:[#allocation20 + $0x328] sm:$0xff]
    %v6150 = vld [vmem:[#allocation20 + $0x330] sm:$0xff]
    %v6151 = vld [vmem:[#allocation20 + $0x338] sm:$0xff]
    %v6152 = vld [vmem:[#allocation20 + $0x340] sm:$0xff]
    %v6153 = vld [vmem:[#allocation20 + $0x348] sm:$0xff]
    %v6154 = vld [vmem:[#allocation20 + $0x350] sm:$0xff]
    %v6155 = vld [vmem:[#allocation20 + $0x358] sm:$0xff]
    %v6156 = vld [vmem:[#allocation20 + $0x360] sm:$0xff]
    %v6157 = vld [vmem:[#allocation20 + $0x368] sm:$0xff]
    %v6158 = vld [vmem:[#allocation20 + $0x370] sm:$0xff]
    %v6159 = vld [vmem:[#allocation20 + $0x378] sm:$0xff]
    %v6160 = vld [vmem:[#allocation20 + $0x380] sm:$0xff]
    %v6161 = vld [vmem:[#allocation20 + $0x388] sm:$0xff]
    %v6162 = vld [vmem:[#allocation20 + $0x390] sm:$0xff]
    %v6163 = vld [vmem:[#allocation20 + $0x398] sm:$0xff]
    %v6164 = vld [vmem:[#allocation20 + $0x3a0] sm:$0xff]
    %v6165 = vld [vmem:[#allocation20 + $0x3a8] sm:$0xff]
    %v6166 = vld [vmem:[#allocation20 + $0x3b0] sm:$0xff]
    %v6167 = vld [vmem:[#allocation20 + $0x3b8] sm:$0xff]
    %v6168 = vld [vmem:[#allocation20 + $0x3c0] sm:$0xff]
    %v6169 = vld [vmem:[#allocation20 + $0x3c8] sm:$0xff]
    %v6170 = vld [vmem:[#allocation20 + $0x3d0] sm:$0xff]
    %v6171 = vld [vmem:[#allocation20 + $0x3d8] sm:$0xff]
    %v6172 = vld [vmem:[#allocation20 + $0x3e0] sm:$0xff]
    %v6173 = vld [vmem:[#allocation20 + $0x3e8] sm:$0xff]
    %v6174 = vld [vmem:[#allocation20 + $0x3f0] sm:$0xff]
    %v6175 = vld [vmem:[#allocation20 + $0x3f8] sm:$0xff]
    %v6176 = vld [vmem:[#allocation22] sm:$0x3]
    %v6178 = vlaneseq
    %v6179 = vshrl.u32 %v6178, 7
    %v6180 = vsub.s32 0, %v6179
    %v6181 = vrot.slane %v6176, %v6180
    %v6182 = vlaneseq
    %v6183 = vshrl.u32 %v6182, 7
    %v6184 = vsub.s32 1, %v6183
    %v6185 = vrot.slane %v6176, %v6184
    %v6316 = vunpack.c.l.b16 %v6048
    %v6317 = vunpack.c.h.b16 %v6048
    %v6318 = vunpack.c.l.b16 %v6049
    %v6319 = vunpack.c.h.b16 %v6049
    %v6320 = vunpack.c.l.b16 %v6050
    %v6321 = vunpack.c.h.b16 %v6050
    %v6322 = vunpack.c.l.b16 %v6051
    %v6323 = vunpack.c.h.b16 %v6051
    %v6324 = vunpack.c.l.b16 %v6052
    %v6325 = vunpack.c.h.b16 %v6052
    %v6326 = vunpack.c.l.b16 %v6053
    %v6327 = vunpack.c.h.b16 %v6053
    %v6328 = vunpack.c.l.b16 %v6054
    %v6329 = vunpack.c.h.b16 %v6054
    %v6330 = vunpack.c.l.b16 %v6055
    %v6331 = vunpack.c.h.b16 %v6055
    %v6332 = vunpack.c.l.b16 %v6056
    %v6333 = vunpack.c.h.b16 %v6056
    %v6334 = vunpack.c.l.b16 %v6057
    %v6335 = vunpack.c.h.b16 %v6057
    %v6336 = vunpack.c.l.b16 %v6058
    %v6337 = vunpack.c.h.b16 %v6058
    %v6338 = vunpack.c.l.b16 %v6059
    %v6339 = vunpack.c.h.b16 %v6059
    %v6340 = vunpack.c.l.b16 %v6060
    %v6341 = vunpack.c.h.b16 %v6060
    %v6342 = vunpack.c.l.b16 %v6061
    %v6343 = vunpack.c.h.b16 %v6061
    %v6344 = vunpack.c.l.b16 %v6062
    %v6345 = vunpack.c.h.b16 %v6062
    %v6346 = vunpack.c.l.b16 %v6063
    %v6347 = vunpack.c.h.b16 %v6063
    %v6348 = vunpack.c.l.b16 %v6064
    %v6349 = vunpack.c.h.b16 %v6064
    %v6350 = vunpack.c.l.b16 %v6065
    %v6351 = vunpack.c.h.b16 %v6065
    %v6352 = vunpack.c.l.b16 %v6066
    %v6353 = vunpack.c.h.b16 %v6066
    %v6354 = vunpack.c.l.b16 %v6067
    %v6355 = vunpack.c.h.b16 %v6067
    %v6356 = vunpack.c.l.b16 %v6068
    %v6357 = vunpack.c.h.b16 %v6068
    %v6358 = vunpack.c.l.b16 %v6069
    %v6359 = vunpack.c.h.b16 %v6069
    %v6360 = vunpack.c.l.b16 %v6070
    %v6361 = vunpack.c.h.b16 %v6070
    %v6362 = vunpack.c.l.b16 %v6071
    %v6363 = vunpack.c.h.b16 %v6071
    %v6364 = vunpack.c.l.b16 %v6072
    %v6365 = vunpack.c.h.b16 %v6072
    %v6366 = vunpack.c.l.b16 %v6073
    %v6367 = vunpack.c.h.b16 %v6073
    %v6368 = vunpack.c.l.b16 %v6074
    %v6369 = vunpack.c.h.b16 %v6074
    %v6370 = vunpack.c.l.b16 %v6075
    %v6371 = vunpack.c.h.b16 %v6075
    %v6372 = vunpack.c.l.b16 %v6076
    %v6373 = vunpack.c.h.b16 %v6076
    %v6374 = vunpack.c.l.b16 %v6077
    %v6375 = vunpack.c.h.b16 %v6077
    %v6376 = vunpack.c.l.b16 %v6078
    %v6377 = vunpack.c.h.b16 %v6078
    %v6378 = vunpack.c.l.b16 %v6079
    %v6379 = vunpack.c.h.b16 %v6079
    %v6380 = vunpack.c.l.b16 %v6080
    %v6381 = vunpack.c.h.b16 %v6080
    %v6382 = vunpack.c.l.b16 %v6081
    %v6383 = vunpack.c.h.b16 %v6081
    %v6384 = vunpack.c.l.b16 %v6082
    %v6385 = vunpack.c.h.b16 %v6082
    %v6386 = vunpack.c.l.b16 %v6083
    %v6387 = vunpack.c.h.b16 %v6083
    %v6388 = vunpack.c.l.b16 %v6084
    %v6389 = vunpack.c.h.b16 %v6084
    %v6390 = vunpack.c.l.b16 %v6085
    %v6391 = vunpack.c.h.b16 %v6085
    %v6392 = vunpack.c.l.b16 %v6086
    %v6393 = vunpack.c.h.b16 %v6086
    %v6394 = vunpack.c.l.b16 %v6087
    %v6395 = vunpack.c.h.b16 %v6087
    %v6396 = vunpack.c.l.b16 %v6088
    %v6397 = vunpack.c.h.b16 %v6088
    %v6398 = vunpack.c.l.b16 %v6089
    %v6399 = vunpack.c.h.b16 %v6089
    %v6400 = vunpack.c.l.b16 %v6090
    %v6401 = vunpack.c.h.b16 %v6090
    %v6402 = vunpack.c.l.b16 %v6091
    %v6403 = vunpack.c.h.b16 %v6091
    %v6404 = vunpack.c.l.b16 %v6092
    %v6405 = vunpack.c.h.b16 %v6092
    %v6406 = vunpack.c.l.b16 %v6093
    %v6407 = vunpack.c.h.b16 %v6093
    %v6408 = vunpack.c.l.b16 %v6094
    %v6409 = vunpack.c.h.b16 %v6094
    %v6410 = vunpack.c.l.b16 %v6095
    %v6411 = vunpack.c.h.b16 %v6095
    %v6412 = vunpack.c.l.b16 %v6096
    %v6413 = vunpack.c.h.b16 %v6096
    %v6414 = vunpack.c.l.b16 %v6097
    %v6415 = vunpack.c.h.b16 %v6097
    %v6416 = vunpack.c.l.b16 %v6098
    %v6417 = vunpack.c.h.b16 %v6098
    %v6418 = vunpack.c.l.b16 %v6099
    %v6419 = vunpack.c.h.b16 %v6099
    %v6420 = vunpack.c.l.b16 %v6100
    %v6421 = vunpack.c.h.b16 %v6100
    %v6422 = vunpack.c.l.b16 %v6101
    %v6423 = vunpack.c.h.b16 %v6101
    %v6424 = vunpack.c.l.b16 %v6102
    %v6425 = vunpack.c.h.b16 %v6102
    %v6426 = vunpack.c.l.b16 %v6103
    %v6427 = vunpack.c.h.b16 %v6103
    %v6428 = vunpack.c.l.b16 %v6104
    %v6429 = vunpack.c.h.b16 %v6104
    %v6430 = vunpack.c.l.b16 %v6105
    %v6431 = vunpack.c.h.b16 %v6105
    %v6432 = vunpack.c.l.b16 %v6106
    %v6433 = vunpack.c.h.b16 %v6106
    %v6434 = vunpack.c.l.b16 %v6107
    %v6435 = vunpack.c.h.b16 %v6107
    %v6436 = vunpack.c.l.b16 %v6108
    %v6437 = vunpack.c.h.b16 %v6108
    %v6438 = vunpack.c.l.b16 %v6109
    %v6439 = vunpack.c.h.b16 %v6109
    %v6440 = vunpack.c.l.b16 %v6110
    %v6441 = vunpack.c.h.b16 %v6110
    %v6442 = vunpack.c.l.b16 %v6111
    %v6443 = vunpack.c.h.b16 %v6111
    %v6444 = vunpack.c.l.b16 %v6112
    %v6445 = vunpack.c.h.b16 %v6112
    %v6446 = vunpack.c.l.b16 %v6113
    %v6447 = vunpack.c.h.b16 %v6113
    %v6448 = vunpack.c.l.b16 %v6114
    %v6449 = vunpack.c.h.b16 %v6114
    %v6450 = vunpack.c.l.b16 %v6115
    %v6451 = vunpack.c.h.b16 %v6115
    %v6452 = vunpack.c.l.b16 %v6116
    %v6453 = vunpack.c.h.b16 %v6116
    %v6454 = vunpack.c.l.b16 %v6117
    %v6455 = vunpack.c.h.b16 %v6117
    %v6456 = vunpack.c.l.b16 %v6118
    %v6457 = vunpack.c.h.b16 %v6118
    %v6458 = vunpack.c.l.b16 %v6119
    %v6459 = vunpack.c.h.b16 %v6119
    %v6460 = vunpack.c.l.b16 %v6120
    %v6461 = vunpack.c.h.b16 %v6120
    %v6462 = vunpack.c.l.b16 %v6121
    %v6463 = vunpack.c.h.b16 %v6121
    %v6464 = vunpack.c.l.b16 %v6122
    %v6465 = vunpack.c.h.b16 %v6122
    %v6466 = vunpack.c.l.b16 %v6123
    %v6467 = vunpack.c.h.b16 %v6123
    %v6468 = vunpack.c.l.b16 %v6124
    %v6469 = vunpack.c.h.b16 %v6124
    %v6470 = vunpack.c.l.b16 %v6125
    %v6471 = vunpack.c.h.b16 %v6125
    %v6472 = vunpack.c.l.b16 %v6126
    %v6473 = vunpack.c.h.b16 %v6126
    %v6474 = vunpack.c.l.b16 %v6127
    %v6475 = vunpack.c.h.b16 %v6127
    %v6476 = vunpack.c.l.b16 %v6128
    %v6477 = vunpack.c.h.b16 %v6128
    %v6478 = vunpack.c.l.b16 %v6129
    %v6479 = vunpack.c.h.b16 %v6129
    %v6480 = vunpack.c.l.b16 %v6130
    %v6481 = vunpack.c.h.b16 %v6130
    %v6482 = vunpack.c.l.b16 %v6131
    %v6483 = vunpack.c.h.b16 %v6131
    %v6484 = vunpack.c.l.b16 %v6132
    %v6485 = vunpack.c.h.b16 %v6132
    %v6486 = vunpack.c.l.b16 %v6133
    %v6487 = vunpack.c.h.b16 %v6133
    %v6488 = vunpack.c.l.b16 %v6134
    %v6489 = vunpack.c.h.b16 %v6134
    %v6490 = vunpack.c.l.b16 %v6135
    %v6491 = vunpack.c.h.b16 %v6135
    %v6492 = vunpack.c.l.b16 %v6136
    %v6493 = vunpack.c.h.b16 %v6136
    %v6494 = vunpack.c.l.b16 %v6137
    %v6495 = vunpack.c.h.b16 %v6137
    %v6496 = vunpack.c.l.b16 %v6138
    %v6497 = vunpack.c.h.b16 %v6138
    %v6498 = vunpack.c.l.b16 %v6139
    %v6499 = vunpack.c.h.b16 %v6139
    %v6500 = vunpack.c.l.b16 %v6140
    %v6501 = vunpack.c.h.b16 %v6140
    %v6502 = vunpack.c.l.b16 %v6141
    %v6503 = vunpack.c.h.b16 %v6141
    %v6504 = vunpack.c.l.b16 %v6142
    %v6505 = vunpack.c.h.b16 %v6142
    %v6506 = vunpack.c.l.b16 %v6143
    %v6507 = vunpack.c.h.b16 %v6143
    %v6508 = vunpack.c.l.b16 %v6144
    %v6509 = vunpack.c.h.b16 %v6144
    %v6510 = vunpack.c.l.b16 %v6145
    %v6511 = vunpack.c.h.b16 %v6145
    %v6512 = vunpack.c.l.b16 %v6146
    %v6513 = vunpack.c.h.b16 %v6146
    %v6514 = vunpack.c.l.b16 %v6147
    %v6515 = vunpack.c.h.b16 %v6147
    %v6516 = vunpack.c.l.b16 %v6148
    %v6517 = vunpack.c.h.b16 %v6148
    %v6518 = vunpack.c.l.b16 %v6149
    %v6519 = vunpack.c.h.b16 %v6149
    %v6520 = vunpack.c.l.b16 %v6150
    %v6521 = vunpack.c.h.b16 %v6150
    %v6522 = vunpack.c.l.b16 %v6151
    %v6523 = vunpack.c.h.b16 %v6151
    %v6524 = vunpack.c.l.b16 %v6152
    %v6525 = vunpack.c.h.b16 %v6152
    %v6526 = vunpack.c.l.b16 %v6153
    %v6527 = vunpack.c.h.b16 %v6153
    %v6528 = vunpack.c.l.b16 %v6154
    %v6529 = vunpack.c.h.b16 %v6154
    %v6530 = vunpack.c.l.b16 %v6155
    %v6531 = vunpack.c.h.b16 %v6155
    %v6532 = vunpack.c.l.b16 %v6156
    %v6533 = vunpack.c.h.b16 %v6156
    %v6534 = vunpack.c.l.b16 %v6157
    %v6535 = vunpack.c.h.b16 %v6157
    %v6536 = vunpack.c.l.b16 %v6158
    %v6537 = vunpack.c.h.b16 %v6158
    %v6538 = vunpack.c.l.b16 %v6159
    %v6539 = vunpack.c.h.b16 %v6159
    %v6540 = vunpack.c.l.b16 %v6160
    %v6541 = vunpack.c.h.b16 %v6160
    %v6542 = vunpack.c.l.b16 %v6161
    %v6543 = vunpack.c.h.b16 %v6161
    %v6544 = vunpack.c.l.b16 %v6162
    %v6545 = vunpack.c.h.b16 %v6162
    %v6546 = vunpack.c.l.b16 %v6163
    %v6547 = vunpack.c.h.b16 %v6163
    %v6548 = vunpack.c.l.b16 %v6164
    %v6549 = vunpack.c.h.b16 %v6164
    %v6550 = vunpack.c.l.b16 %v6165
    %v6551 = vunpack.c.h.b16 %v6165
    %v6552 = vunpack.c.l.b16 %v6166
    %v6553 = vunpack.c.h.b16 %v6166
    %v6554 = vunpack.c.l.b16 %v6167
    %v6555 = vunpack.c.h.b16 %v6167
    %v6556 = vunpack.c.l.b16 %v6168
    %v6557 = vunpack.c.h.b16 %v6168
    %v6558 = vunpack.c.l.b16 %v6169
    %v6559 = vunpack.c.h.b16 %v6169
    %v6560 = vunpack.c.l.b16 %v6170
    %v6561 = vunpack.c.h.b16 %v6170
    %v6562 = vunpack.c.l.b16 %v6171
    %v6563 = vunpack.c.h.b16 %v6171
    %v6564 = vunpack.c.l.b16 %v6172
    %v6565 = vunpack.c.h.b16 %v6172
    %v6566 = vunpack.c.l.b16 %v6173
    %v6567 = vunpack.c.h.b16 %v6173
    %v6568 = vunpack.c.l.b16 %v6174
    %v6569 = vunpack.c.h.b16 %v6174
    %v6570 = vunpack.c.l.b16 %v6175
    %v6571 = vunpack.c.h.b16 %v6175
    %v6572 = vpack.c.b16 %v6318, %v6316
    %v6573 = vpack.c.b16 %v6319, %v6317
    %v6574 = vpack.c.b16 %v6322, %v6320
    %v6575 = vpack.c.b16 %v6323, %v6321
    %v6576 = vpack.c.b16 %v6326, %v6324
    %v6577 = vpack.c.b16 %v6327, %v6325
    %v6578 = vpack.c.b16 %v6330, %v6328
    %v6579 = vpack.c.b16 %v6331, %v6329
    %v6580 = vpack.c.b16 %v6334, %v6332
    %v6581 = vpack.c.b16 %v6335, %v6333
    %v6582 = vpack.c.b16 %v6338, %v6336
    %v6583 = vpack.c.b16 %v6339, %v6337
    %v6584 = vpack.c.b16 %v6342, %v6340
    %v6585 = vpack.c.b16 %v6343, %v6341
    %v6586 = vpack.c.b16 %v6346, %v6344
    %v6587 = vpack.c.b16 %v6347, %v6345
    %v6588 = vpack.c.b16 %v6350, %v6348
    %v6589 = vpack.c.b16 %v6351, %v6349
    %v6590 = vpack.c.b16 %v6354, %v6352
    %v6591 = vpack.c.b16 %v6355, %v6353
    %v6592 = vpack.c.b16 %v6358, %v6356
    %v6593 = vpack.c.b16 %v6359, %v6357
    %v6594 = vpack.c.b16 %v6362, %v6360
    %v6595 = vpack.c.b16 %v6363, %v6361
    %v6596 = vpack.c.b16 %v6366, %v6364
    %v6597 = vpack.c.b16 %v6367, %v6365
    %v6598 = vpack.c.b16 %v6370, %v6368
    %v6599 = vpack.c.b16 %v6371, %v6369
    %v6600 = vpack.c.b16 %v6374, %v6372
    %v6601 = vpack.c.b16 %v6375, %v6373
    %v6602 = vpack.c.b16 %v6378, %v6376
    %v6603 = vpack.c.b16 %v6379, %v6377
    %v6604 = vpack.c.b16 %v6382, %v6380
    %v6605 = vpack.c.b16 %v6383, %v6381
    %v6606 = vpack.c.b16 %v6386, %v6384
    %v6607 = vpack.c.b16 %v6387, %v6385
    %v6608 = vpack.c.b16 %v6390, %v6388
    %v6609 = vpack.c.b16 %v6391, %v6389
    %v6610 = vpack.c.b16 %v6394, %v6392
    %v6611 = vpack.c.b16 %v6395, %v6393
    %v6612 = vpack.c.b16 %v6398, %v6396
    %v6613 = vpack.c.b16 %v6399, %v6397
    %v6614 = vpack.c.b16 %v6402, %v6400
    %v6615 = vpack.c.b16 %v6403, %v6401
    %v6616 = vpack.c.b16 %v6406, %v6404
    %v6617 = vpack.c.b16 %v6407, %v6405
    %v6618 = vpack.c.b16 %v6410, %v6408
    %v6619 = vpack.c.b16 %v6411, %v6409
    %v6620 = vpack.c.b16 %v6414, %v6412
    %v6621 = vpack.c.b16 %v6415, %v6413
    %v6622 = vpack.c.b16 %v6418, %v6416
    %v6623 = vpack.c.b16 %v6419, %v6417
    %v6624 = vpack.c.b16 %v6422, %v6420
    %v6625 = vpack.c.b16 %v6423, %v6421
    %v6626 = vpack.c.b16 %v6426, %v6424
    %v6627 = vpack.c.b16 %v6427, %v6425
    %v6628 = vpack.c.b16 %v6430, %v6428
    %v6629 = vpack.c.b16 %v6431, %v6429
    %v6630 = vpack.c.b16 %v6434, %v6432
    %v6631 = vpack.c.b16 %v6435, %v6433
    %v6632 = vpack.c.b16 %v6438, %v6436
    %v6633 = vpack.c.b16 %v6439, %v6437
    %v6634 = vpack.c.b16 %v6442, %v6440
    %v6635 = vpack.c.b16 %v6443, %v6441
    %v6636 = vpack.c.b16 %v6446, %v6444
    %v6637 = vpack.c.b16 %v6447, %v6445
    %v6638 = vpack.c.b16 %v6450, %v6448
    %v6639 = vpack.c.b16 %v6451, %v6449
    %v6640 = vpack.c.b16 %v6454, %v6452
    %v6641 = vpack.c.b16 %v6455, %v6453
    %v6642 = vpack.c.b16 %v6458, %v6456
    %v6643 = vpack.c.b16 %v6459, %v6457
    %v6644 = vpack.c.b16 %v6462, %v6460
    %v6645 = vpack.c.b16 %v6463, %v6461
    %v6646 = vpack.c.b16 %v6466, %v6464
    %v6647 = vpack.c.b16 %v6467, %v6465
    %v6648 = vpack.c.b16 %v6470, %v6468
    %v6649 = vpack.c.b16 %v6471, %v6469
    %v6650 = vpack.c.b16 %v6474, %v6472
    %v6651 = vpack.c.b16 %v6475, %v6473
    %v6652 = vpack.c.b16 %v6478, %v6476
    %v6653 = vpack.c.b16 %v6479, %v6477
    %v6654 = vpack.c.b16 %v6482, %v6480
    %v6655 = vpack.c.b16 %v6483, %v6481
    %v6656 = vpack.c.b16 %v6486, %v6484
    %v6657 = vpack.c.b16 %v6487, %v6485
    %v6658 = vpack.c.b16 %v6490, %v6488
    %v6659 = vpack.c.b16 %v6491, %v6489
    %v6660 = vpack.c.b16 %v6494, %v6492
    %v6661 = vpack.c.b16 %v6495, %v6493
    %v6662 = vpack.c.b16 %v6498, %v6496
    %v6663 = vpack.c.b16 %v6499, %v6497
    %v6664 = vpack.c.b16 %v6502, %v6500
    %v6665 = vpack.c.b16 %v6503, %v6501
    %v6666 = vpack.c.b16 %v6506, %v6504
    %v6667 = vpack.c.b16 %v6507, %v6505
    %v6668 = vpack.c.b16 %v6510, %v6508
    %v6669 = vpack.c.b16 %v6511, %v6509
    %v6670 = vpack.c.b16 %v6514, %v6512
    %v6671 = vpack.c.b16 %v6515, %v6513
    %v6672 = vpack.c.b16 %v6518, %v6516
    %v6673 = vpack.c.b16 %v6519, %v6517
    %v6674 = vpack.c.b16 %v6522, %v6520
    %v6675 = vpack.c.b16 %v6523, %v6521
    %v6676 = vpack.c.b16 %v6526, %v6524
    %v6677 = vpack.c.b16 %v6527, %v6525
    %v6678 = vpack.c.b16 %v6530, %v6528
    %v6679 = vpack.c.b16 %v6531, %v6529
    %v6680 = vpack.c.b16 %v6534, %v6532
    %v6681 = vpack.c.b16 %v6535, %v6533
    %v6682 = vpack.c.b16 %v6538, %v6536
    %v6683 = vpack.c.b16 %v6539, %v6537
    %v6684 = vpack.c.b16 %v6542, %v6540
    %v6685 = vpack.c.b16 %v6543, %v6541
    %v6686 = vpack.c.b16 %v6546, %v6544
    %v6687 = vpack.c.b16 %v6547, %v6545
    %v6688 = vpack.c.b16 %v6550, %v6548
    %v6689 = vpack.c.b16 %v6551, %v6549
    %v6690 = vpack.c.b16 %v6554, %v6552
    %v6691 = vpack.c.b16 %v6555, %v6553
    %v6692 = vpack.c.b16 %v6558, %v6556
    %v6693 = vpack.c.b16 %v6559, %v6557
    %v6694 = vpack.c.b16 %v6562, %v6560
    %v6695 = vpack.c.b16 %v6563, %v6561
    %v6696 = vpack.c.b16 %v6566, %v6564
    %v6697 = vpack.c.b16 %v6567, %v6565
    %v6698 = vpack.c.b16 %v6570, %v6568
    %v6699 = vpack.c.b16 %v6571, %v6569
    %6828 = vmatprep.subr.bf16.mxu0 %v6573
    %6829 = vmatpush1.bf16.msra.mxu0 %v6572
    %6830 = vmatprep.subr.bf16.mxu0 %v6575
    %6831 = vmatpush1.bf16.msra.mxu0 %v6574
    %6832 = vmatprep.subr.bf16.mxu0 %v6577
    %6833 = vmatpush1.bf16.msra.mxu0 %v6576
    %6834 = vmatprep.subr.bf16.mxu0 %v6579
    %6835 = vmatpush1.bf16.msra.mxu0 %v6578
    %6836 = vmatprep.subr.bf16.mxu0 %v6581
    %6837 = vmatpush1.bf16.msra.mxu0 %v6580
    %6838 = vmatprep.subr.bf16.mxu0 %v6583
    %6839 = vmatpush1.bf16.msra.mxu0 %v6582
    %6840 = vmatprep.subr.bf16.mxu0 %v6585
    %6841 = vmatpush1.bf16.msra.mxu0 %v6584
    %6842 = vmatprep.subr.bf16.mxu0 %v6587
    %6843 = vmatpush1.bf16.msra.mxu0 %v6586
    %6844 = vmatprep.subr.bf16.mxu0 %v6589
    %6845 = vmatpush1.bf16.msra.mxu0 %v6588
    %6846 = vmatprep.subr.bf16.mxu0 %v6591
    %6847 = vmatpush1.bf16.msra.mxu0 %v6590
    %6848 = vmatprep.subr.bf16.mxu0 %v6593
    %6849 = vmatpush1.bf16.msra.mxu0 %v6592
    %6850 = vmatprep.subr.bf16.mxu0 %v6595
    %6851 = vmatpush1.bf16.msra.mxu0 %v6594
    %6852 = vmatprep.subr.bf16.mxu0 %v6597
    %6853 = vmatpush1.bf16.msra.mxu0 %v6596
    %6854 = vmatprep.subr.bf16.mxu0 %v6599
    %6855 = vmatpush1.bf16.msra.mxu0 %v6598
    %6856 = vmatprep.subr.bf16.mxu0 %v6601
    %6857 = vmatpush1.bf16.msra.mxu0 %v6600
    %6858 = vmatprep.subr.bf16.mxu0 %v6603
    %6859 = vmatpush1.bf16.msra.mxu0 %v6602
    %6860 = vmatprep.mubr.bf16.mxu0 %v6041
    %6861 = vmatmul.mubr.bf16.gmra.mrb[0].mxu0 %v6040
    %v6862 = vpop.f32.mrb[0].mxu0
    %v6863 = vadd.f32 %v6181, %v6862
    %v6864 = vpop.f32.mrb[0].mxu0
    %v6865 = vadd.f32 %v6185, %v6864
    %v6866 = vpop.f32.mrb[0].mxu0
    %v6867 = vpop.f32.mrb[0].mxu0
    %6868 = vdwg.mxu0
    %6869 = vmatprep.subr.bf16.mxu0 %v6605
    %6870 = vmatpush1.bf16.msra.mxu0 %v6604
    %6871 = vmatprep.subr.bf16.mxu0 %v6607
    %6872 = vmatpush1.bf16.msra.mxu0 %v6606
    %6873 = vmatprep.subr.bf16.mxu0 %v6609
    %6874 = vmatpush1.bf16.msra.mxu0 %v6608
    %6875 = vmatprep.subr.bf16.mxu0 %v6611
    %6876 = vmatpush1.bf16.msra.mxu0 %v6610
    %6877 = vmatprep.subr.bf16.mxu0 %v6613
    %6878 = vmatpush1.bf16.msra.mxu0 %v6612
    %6879 = vmatprep.subr.bf16.mxu0 %v6615
    %6880 = vmatpush1.bf16.msra.mxu0 %v6614
    %6881 = vmatprep.subr.bf16.mxu0 %v6617
    %6882 = vmatpush1.bf16.msra.mxu0 %v6616
    %6883 = vmatprep.subr.bf16.mxu0 %v6619
    %6884 = vmatpush1.bf16.msra.mxu0 %v6618
    %6885 = vmatprep.subr.bf16.mxu0 %v6621
    %6886 = vmatpush1.bf16.msra.mxu0 %v6620
    %6887 = vmatprep.subr.bf16.mxu0 %v6623
    %6888 = vmatpush1.bf16.msra.mxu0 %v6622
    %6889 = vmatprep.subr.bf16.mxu0 %v6625
    %6890 = vmatpush1.bf16.msra.mxu0 %v6624
    %6891 = vmatprep.subr.bf16.mxu0 %v6627
    %6892 = vmatpush1.bf16.msra.mxu0 %v6626
    %6893 = vmatprep.subr.bf16.mxu0 %v6629
    %6894 = vmatpush1.bf16.msra.mxu0 %v6628
    %6895 = vmatprep.subr.bf16.mxu0 %v6631
    %6896 = vmatpush1.bf16.msra.mxu0 %v6630
    %6897 = vmatprep.subr.bf16.mxu0 %v6633
    %6898 = vmatpush1.bf16.msra.mxu0 %v6632
    %6899 = vmatprep.subr.bf16.mxu0 %v6635
    %6900 = vmatpush1.bf16.msra.mxu0 %v6634
    %6901 = vmatprep.mubr.bf16.mxu0 %v6043
    %6902 = vmatmul.mubr.bf16.gmra.mrb[0].mxu0 %v6042
    %v6903 = vpop.f32.mrb[0].mxu0
    %v6904 = vadd.f32 %v6863, %v6903
    %v6905 = vpop.f32.mrb[0].mxu0
    %v6906 = vadd.f32 %v6865, %v6905
    %v6907 = vpop.f32.mrb[0].mxu0
    %v6908 = vpop.f32.mrb[0].mxu0
    %6909 = vdwg.mxu0
    %6910 = vmatprep.subr.bf16.mxu0 %v6637
    %6911 = vmatpush1.bf16.msra.mxu0 %v6636
    %6912 = vmatprep.subr.bf16.mxu0 %v6639
    %6913 = vmatpush1.bf16.msra.mxu0 %v6638
    %6914 = vmatprep.subr.bf16.mxu0 %v6641
    %6915 = vmatpush1.bf16.msra.mxu0 %v6640
    %6916 = vmatprep.subr.bf16.mxu0 %v6643
    %6917 = vmatpush1.bf16.msra.mxu0 %v6642
    %6918 = vmatprep.subr.bf16.mxu0 %v6645
    %6919 = vmatpush1.bf16.msra.mxu0 %v6644
    %6920 = vmatprep.subr.bf16.mxu0 %v6647
    %6921 = vmatpush1.bf16.msra.mxu0 %v6646
    %6922 = vmatprep.subr.bf16.mxu0 %v6649
    %6923 = vmatpush1.bf16.msra.mxu0 %v6648
    %6924 = vmatprep.subr.bf16.mxu0 %v6651
    %6925 = vmatpush1.bf16.msra.mxu0 %v6650
    %6926 = vmatprep.subr.bf16.mxu0 %v6653
    %6927 = vmatpush1.bf16.msra.mxu0 %v6652
    %6928 = vmatprep.subr.bf16.mxu0 %v6655
    %6929 = vmatpush1.bf16.msra.mxu0 %v6654
    %6930 = vmatprep.subr.bf16.mxu0 %v6657
    %6931 = vmatpush1.bf16.msra.mxu0 %v6656
    %6932 = vmatprep.subr.bf16.mxu0 %v6659
    %6933 = vmatpush1.bf16.msra.mxu0 %v6658
    %6934 = vmatprep.subr.bf16.mxu0 %v6661
    %6935 = vmatpush1.bf16.msra.mxu0 %v6660
    %6936 = vmatprep.subr.bf16.mxu0 %v6663
    %6937 = vmatpush1.bf16.msra.mxu0 %v6662
    %6938 = vmatprep.subr.bf16.mxu0 %v6665
    %6939 = vmatpush1.bf16.msra.mxu0 %v6664
    %6940 = vmatprep.subr.bf16.mxu0 %v6667
    %6941 = vmatpush1.bf16.msra.mxu0 %v6666
    %6942 = vmatprep.mubr.bf16.mxu0 %v6045
    %6943 = vmatmul.mubr.bf16.gmra.mrb[0].mxu0 %v6044
    %v6944 = vpop.f32.mrb[0].mxu0
    %v6945 = vadd.f32 %v6904, %v6944
    %v6946 = vpop.f32.mrb[0].mxu0
    %v6947 = vadd.f32 %v6906, %v6946
    %v6948 = vpop.f32.mrb[0].mxu0
    %v6949 = vpop.f32.mrb[0].mxu0
    %6950 = vdwg.mxu0
    %6951 = vmatprep.subr.bf16.mxu0 %v6669
    %6952 = vmatpush1.bf16.msra.mxu0 %v6668
    %6953 = vmatprep.subr.bf16.mxu0 %v6671
    %6954 = vmatpush1.bf16.msra.mxu0 %v6670
    %6955 = vmatprep.subr.bf16.mxu0 %v6673
    %6956 = vmatpush1.bf16.msra.mxu0 %v6672
    %6957 = vmatprep.subr.bf16.mxu0 %v6675
    %6958 = vmatpush1.bf16.msra.mxu0 %v6674
    %6959 = vmatprep.subr.bf16.mxu0 %v6677
    %6960 = vmatpush1.bf16.msra.mxu0 %v6676
    %6961 = vmatprep.subr.bf16.mxu0 %v6679
    %6962 = vmatpush1.bf16.msra.mxu0 %v6678
    %6963 = vmatprep.subr.bf16.mxu0 %v6681
    %6964 = vmatpush1.bf16.msra.mxu0 %v6680
    %6965 = vmatprep.subr.bf16.mxu0 %v6683
    %6966 = vmatpush1.bf16.msra.mxu0 %v6682
    %6967 = vmatprep.subr.bf16.mxu0 %v6685
    %6968 = vmatpush1.bf16.msra.mxu0 %v6684
    %6969 = vmatprep.subr.bf16.mxu0 %v6687
    %6970 = vmatpush1.bf16.msra.mxu0 %v6686
    %6971 = vmatprep.subr.bf16.mxu0 %v6689
    %6972 = vmatpush1.bf16.msra.mxu0 %v6688
    %6973 = vmatprep.subr.bf16.mxu0 %v6691
    %6974 = vmatpush1.bf16.msra.mxu0 %v6690
    %6975 = vmatprep.subr.bf16.mxu0 %v6693
    %6976 = vmatpush1.bf16.msra.mxu0 %v6692
    %6977 = vmatprep.subr.bf16.mxu0 %v6695
    %6978 = vmatpush1.bf16.msra.mxu0 %v6694
    %6979 = vmatprep.subr.bf16.mxu0 %v6697
    %6980 = vmatpush1.bf16.msra.mxu0 %v6696
    %6981 = vmatprep.subr.bf16.mxu0 %v6699
    %6982 = vmatpush1.bf16.msra.mxu0 %v6698
    %6983 = vmatprep.mubr.bf16.mxu0 %v6047
    %6984 = vmatmul.mubr.bf16.gmra.mrb[0].mxu0 %v6046
    %v6985 = vpop.f32.mrb[0].mxu0
    %v6986 = vadd.f32 %v6945, %v6985
    %v6987 = vpop.f32.mrb[0].mxu0
    %v6988 = vadd.f32 %v6947, %v6987
    %v6989 = vpop.f32.mrb[0].mxu0
    %v6990 = vpop.f32.mrb[0].mxu0
    %6991 = vdwg.mxu0
    %v6992 = vmax.f32 %v6986, 0.0
    %v6993 = vmax.f32 %v6988, 0.0
    %v6994 = vsel %vm1716, %v6992, 0.0
    %v6995 = vrot.slane %v6994, 4
    %v6996 = vadd.f32 %v6994, %v6995
    %v6997 = vrot.slane %v6996, 2
    %v6998 = vadd.f32 %v6996, %v6997
    %v6999 = vrot.slane %v6998, 1
    %v7000 = vadd.f32 %v6998, %v6999
    %v7001 = vsel %vm1716, %v6993, 0.0
    %v7002 = vrot.slane %v7001, 4
    %v7003 = vadd.f32 %v7001, %v7002
    %v7004 = vrot.slane %v7003, 2
    %v7005 = vadd.f32 %v7003, %v7004
    %v7006 = vrot.slane %v7005, 1
    %v7007 = vadd.f32 %v7005, %v7006
    %v7008 = vmul.f32 %v7000, %v1773
    %v7009 = vmul.f32 %v7007, %v1773
    %v7010 = vsub.f32 %v6992, %v7008
    %v7011 = vsub.f32 %v6993, %v7009
    %v7012 = vmul.f32 %v7010, %v7010
    %v7013 = vmul.f32 %v7011, %v7011
    %v7014 = vsel %vm1716, %v7012, 0.0
    %v7015 = vrot.slane %v7014, 4
    %v7016 = vadd.f32 %v7014, %v7015
    %v7017 = vrot.slane %v7016, 2
    %v7018 = vadd.f32 %v7016, %v7017
    %v7019 = vrot.slane %v7018, 1
    %v7020 = vadd.f32 %v7018, %v7019
    %v7021 = vsel %vm1716, %v7013, 0.0
    %v7022 = vrot.slane %v7021, 4
    %v7023 = vadd.f32 %v7021, %v7022
    %v7024 = vrot.slane %v7023, 2
    %v7025 = vadd.f32 %v7023, %v7024
    %v7026 = vrot.slane %v7025, 1
    %v7027 = vadd.f32 %v7025, %v7026
    %v7028 = vmul.f32 %v7020, %v1773
    %v7029 = vmul.f32 %v7027, %v1773
    %v7030 = vadd.f32 %v7028, 1e-05
    %v7031 = vadd.f32 %v7029, 1e-05
    %v7032 = vrsqrt.pop %v7030
    %v7033 = vrsqrt.pop %v7031
    %v7034 = vmul.f32 %v7010, %v7032
    %v7035 = vmul.f32 %v7011, %v7033
    %v7036 = vld [vmem:[#allocation23] sm:$0x3]
    %v7038 = vlaneseq
    %v7039 = vshrl.u32 %v7038, 7
    %v7040 = vsub.s32 0, %v7039
    %v7041 = vrot.slane %v7036, %v7040
    %v7042 = vlaneseq
    %v7043 = vshrl.u32 %v7042, 7
    %v7044 = vsub.s32 1, %v7043
    %v7045 = vrot.slane %v7036, %v7044
    %v7048 = vmul.f32 %v7034, %v7041
    %v7049 = vmul.f32 %v7035, %v7045
    %v7050 = vld [vmem:[#allocation25] sm:$0x3]
    %v7052 = vlaneseq
    %v7053 = vshrl.u32 %v7052, 7
    %v7054 = vsub.s32 0, %v7053
    %v7055 = vrot.slane %v7050, %v7054
    %v7056 = vlaneseq
    %v7057 = vshrl.u32 %v7056, 7
    %v7058 = vsub.s32 1, %v7057
    %v7059 = vrot.slane %v7050, %v7058
    %v7062 = vadd.f32 %v7048, %v7055
    %v7063 = vadd.f32 %v7049, %v7059
    %v7064 = vpack.c.bf16 %v7062, %v7062
    %v7065 = vpack.c.bf16 %v7063, %v7063
    %v7066 = vld [vmem:[%s19] sm:$0xf]
    %v7067 = vld [vmem:[%s19 + $0x4] sm:$0xf]
    %v7068 = vld [vmem:[%s19 + $0x8] sm:$0xf]
    %v7069 = vld [vmem:[%s19 + $0xc] sm:$0xf]
    %v7070 = vld [vmem:[%s19 + $0x10] sm:$0xf]
    %v7071 = vld [vmem:[%s19 + $0x14] sm:$0xf]
    %v7072 = vld [vmem:[%s19 + $0x18] sm:$0xf]
    %v7073 = vld [vmem:[%s19 + $0x1c] sm:$0xf]
    %v7074 = vld [vmem:[%s19 + $0x20] sm:$0xf]
    %v7075 = vld [vmem:[%s19 + $0x24] sm:$0xf]
    %v7076 = vld [vmem:[%s19 + $0x28] sm:$0xf]
    %v7077 = vld [vmem:[%s19 + $0x2c] sm:$0xf]
    %v7078 = vld [vmem:[%s19 + $0x30] sm:$0xf]
    %v7079 = vld [vmem:[%s19 + $0x34] sm:$0xf]
    %v7080 = vld [vmem:[%s19 + $0x38] sm:$0xf]
    %v7081 = vld [vmem:[%s19 + $0x3c] sm:$0xf]
    %v7082 = vld [vmem:[%s19 + $0x40] sm:$0xf]
    %v7083 = vld [vmem:[%s19 + $0x44] sm:$0xf]
    %v7084 = vld [vmem:[%s19 + $0x48] sm:$0xf]
    %v7085 = vld [vmem:[%s19 + $0x4c] sm:$0xf]
    %v7086 = vld [vmem:[%s19 + $0x50] sm:$0xf]
    %v7087 = vld [vmem:[%s19 + $0x54] sm:$0xf]
    %v7088 = vld [vmem:[%s19 + $0x58] sm:$0xf]
    %v7089 = vld [vmem:[%s19 + $0x5c] sm:$0xf]
    %v7090 = vld [vmem:[%s19 + $0x60] sm:$0xf]
    %v7091 = vld [vmem:[%s19 + $0x64] sm:$0xf]
    %v7092 = vld [vmem:[%s19 + $0x68] sm:$0xf]
    %v7093 = vld [vmem:[%s19 + $0x6c] sm:$0xf]
    %v7094 = vld [vmem:[%s19 + $0x70] sm:$0xf]
    %v7095 = vld [vmem:[%s19 + $0x74] sm:$0xf]
    %v7096 = vld [vmem:[%s19 + $0x78] sm:$0xf]
    %v7097 = vld [vmem:[%s19 + $0x7c] sm:$0xf]
    %v7098 = vld [vmem:[#allocation2] sm:$0x1]
    %v7100 = vlaneseq
    %v7101 = vshrl.u32 %v7100, 7
    %v7102 = vsub.s32 0, %v7101
    %v7103 = vrot.slane %v7098, %v7102
    %v7137 = vunpack.c.l.b16 %v7066
    %v7138 = vunpack.c.l.b16 %v7067
    %v7139 = vunpack.c.l.b16 %v7068
    %v7140 = vunpack.c.l.b16 %v7069
    %v7141 = vunpack.c.l.b16 %v7070
    %v7142 = vunpack.c.l.b16 %v7071
    %v7143 = vunpack.c.l.b16 %v7072
    %v7144 = vunpack.c.l.b16 %v7073
    %v7145 = vunpack.c.l.b16 %v7074
    %v7146 = vunpack.c.l.b16 %v7075
    %v7147 = vunpack.c.l.b16 %v7076
    %v7148 = vunpack.c.l.b16 %v7077
    %v7149 = vunpack.c.l.b16 %v7078
    %v7150 = vunpack.c.l.b16 %v7079
    %v7151 = vunpack.c.l.b16 %v7080
    %v7152 = vunpack.c.l.b16 %v7081
    %v7153 = vunpack.c.l.b16 %v7082
    %v7154 = vunpack.c.l.b16 %v7083
    %v7155 = vunpack.c.l.b16 %v7084
    %v7156 = vunpack.c.l.b16 %v7085
    %v7157 = vunpack.c.l.b16 %v7086
    %v7158 = vunpack.c.l.b16 %v7087
    %v7159 = vunpack.c.l.b16 %v7088
    %v7160 = vunpack.c.l.b16 %v7089
    %v7161 = vunpack.c.l.b16 %v7090
    %v7162 = vunpack.c.l.b16 %v7091
    %v7163 = vunpack.c.l.b16 %v7092
    %v7164 = vunpack.c.l.b16 %v7093
    %v7165 = vunpack.c.l.b16 %v7094
    %v7166 = vunpack.c.l.b16 %v7095
    %v7167 = vunpack.c.l.b16 %v7096
    %v7168 = vunpack.c.l.b16 %v7097
    %v7169 = vpack.c.b16 %v7138, %v7137
    %v7170 = vpack.c.b16 %v7140, %v7139
    %v7171 = vpack.c.b16 %v7142, %v7141
    %v7172 = vpack.c.b16 %v7144, %v7143
    %v7173 = vpack.c.b16 %v7146, %v7145
    %v7174 = vpack.c.b16 %v7148, %v7147
    %v7175 = vpack.c.b16 %v7150, %v7149
    %v7176 = vpack.c.b16 %v7152, %v7151
    %v7177 = vpack.c.b16 %v7154, %v7153
    %v7178 = vpack.c.b16 %v7156, %v7155
    %v7179 = vpack.c.b16 %v7158, %v7157
    %v7180 = vpack.c.b16 %v7160, %v7159
    %v7181 = vpack.c.b16 %v7162, %v7161
    %v7182 = vpack.c.b16 %v7164, %v7163
    %v7183 = vpack.c.b16 %v7166, %v7165
    %v7184 = vpack.c.b16 %v7168, %v7167
    %7201 = vmatprep.subr.bf16.mxu0 0
    %7202 = vmatpush1.bf16.msra.mxu0 %v7169
    %7203 = vmatprep.subr.bf16.mxu0 0
    %7204 = vmatpush1.bf16.msra.mxu0 %v7170
    %7205 = vmatprep.subr.bf16.mxu0 0
    %7206 = vmatpush1.bf16.msra.mxu0 %v7171
    %7207 = vmatprep.subr.bf16.mxu0 0
    %7208 = vmatpush1.bf16.msra.mxu0 %v7172
    %7209 = vmatprep.subr.bf16.mxu0 0
    %7210 = vmatpush1.bf16.msra.mxu0 %v7173
    %7211 = vmatprep.subr.bf16.mxu0 0
    %7212 = vmatpush1.bf16.msra.mxu0 %v7174
    %7213 = vmatprep.subr.bf16.mxu0 0
    %7214 = vmatpush1.bf16.msra.mxu0 %v7175
    %7215 = vmatprep.subr.bf16.mxu0 0
    %7216 = vmatpush1.bf16.msra.mxu0 %v7176
    %7217 = vmatprep.subr.bf16.mxu0 0
    %7218 = vmatpush1.bf16.msra.mxu0 %v7177
    %7219 = vmatprep.subr.bf16.mxu0 0
    %7220 = vmatpush1.bf16.msra.mxu0 %v7178
    %7221 = vmatprep.subr.bf16.mxu0 0
    %7222 = vmatpush1.bf16.msra.mxu0 %v7179
    %7223 = vmatprep.subr.bf16.mxu0 0
    %7224 = vmatpush1.bf16.msra.mxu0 %v7180
    %7225 = vmatprep.subr.bf16.mxu0 0
    %7226 = vmatpush1.bf16.msra.mxu0 %v7181
    %7227 = vmatprep.subr.bf16.mxu0 0
    %7228 = vmatpush1.bf16.msra.mxu0 %v7182
    %7229 = vmatprep.subr.bf16.mxu0 0
    %7230 = vmatpush1.bf16.msra.mxu0 %v7183
    %7231 = vmatprep.subr.bf16.mxu0 0
    %7232 = vmatpush1.bf16.msra.mxu0 %v7184
    %7233 = vmatprep.mubr.bf16.mxu0 %v7065
    %7234 = vmatmul.mubr.bf16.gmra.mrb[0].mxu0 %v7064
    %v7235 = vpop.f32.mrb[0].mxu0
    %v7236 = vadd.f32 %v7103, %v7235
    %v7237 = vpop.f32.mrb[0].mxu0
    %v7238 = vpop.f32.mrb[0].mxu0
    %v7239 = vpop.f32.mrb[0].mxu0
    %7240 = vdwg.mxu0
    %vm7241 = vcmask 1024
    %7242 = vst.msk [vmem:[%s21] sm:$0x3] %vm7241, %v7236
    // Predicated region
    $region146: #{model_forward.7} parent=1 // pred_check
      _
    $region147: #{model_forward.7} parent=1 // pred_check_branch
      %7244 = sbr.rel (0) target = $region149
    $region148: #{model_forward.7} parent=1 // pred_region
      _
    $region149: #{model_forward.7} parent=1 // pred_fallthru
      _
    // Predicated region
    $region150: #{model_forward.7} parent=1 // pred_check
      _
    $region151: #{model_forward.7} parent=1 // pred_check_branch
      %7246 = sbr.rel (0) target = $region153
    $region152: #{model_forward.7} parent=1 // pred_region
      _
    $region153: #{model_forward.7} parent=1 // pred_fallthru
      _
    %7247 = vsyncpa [#allocation4], 1
    %7248 = vsyncpa [#allocation6], 1
    %7249 = vsyncpa [#allocation9], 1
    %7250 = vsyncpa [#allocation12], 1
    %7251 = vsyncpa [#allocation15], 1
    %7252 = vsyncpa [#allocation18], 1
    %7253 = vsyncpa [#allocation21], 1
    %7254 = vsyncpa [#allocation24], 1

</llo_original>
